<compile_context>
chip_gen: v7x
topology: tpu7x:2x2x1
jax: 0.10.0
libtpu: 0.0.40
codegen_flags: <defaults>
</compile_context>

<pallas_src>
import jax
import jax.numpy as jnp
from jax.experimental import pallas as pl
from jax.experimental.pallas import tpu as pltpu

FEAT_DIM = 4032      # NASNet-A-Large feature channels (fixed by the module)
BOTTLENECK = 512     # ClassBlock num_bottleneck
BN_EPS = 1e-5
LANE = 128
SUBLANE = 8


def _round_up(x, m):
    return ((x + m - 1) // m) * m


def _head_kernel(x_ref, w1_ref, b1_ref, w2_ref, b2_ref, out_ref):
    # grid = (batch_tiles,)
    # x_ref:   (TB, HW, 4032) native dtype (f32 or bf16)  post-backbone features
    # w1_ref:  (4032, 512)    bf16  Linear(4032,512) with BN affine and 1/HW folded in
    #                               (constant index_map -> fetched into VMEM once)
    # b1_ref:  (1, 512)       f32   folded bias
    # w2_ref:  (512, Npad)    bf16  Linear(512, class_num), lane-padded
    # b2_ref:  (1, Npad)      f32
    # out_ref: (TB, Npad)     f32
    #
    # AdaptiveAvgPool2d((1,1)) == mean over spatial; the 1/HW scale lives in w1, so the
    # kernel only needs a sum.  Widen to f32 for the VPU reduction (v5e has no bf16
    # VPU), feed bf16 into the MXU.
    pooled = jnp.sum(x_ref[...].astype(jnp.float32), axis=1)            # (TB, 4032)
    h = jnp.dot(pooled.astype(w1_ref.dtype), w1_ref[...],
                preferred_element_type=jnp.float32) + b1_ref[...]       # Linear + BN
    # Dropout(p=0.5) -> identity in eval mode.
    logits = jnp.dot(h.astype(w2_ref.dtype), w2_ref[...],
                     preferred_element_type=jnp.float32) + b2_ref[...]
    out_ref[...] = logits.astype(out_ref.dtype)


def prepare_head_params(params, hw):
    """Fold BatchNorm1d (eval, running stats) + the 1/HW pooling scale into the first
    Linear, lane-pad the classes, and cast the streamed weights to bf16 (one-time,
    host-side)."""
    w1, b1 = params["w1"], params["b1"]                    # (4032, 512), (1, 512)
    gamma, beta = params["gamma"], params["beta"]          # (1, 512)
    rmean, rvar = params["running_mean"], params["running_var"]
    w2, b2 = params["w2"], params["b2"]                    # (512, N), (1, N)

    scale = gamma / jnp.sqrt(rvar + BN_EPS)                # per-channel BN affine
    w1_fold = (w1 * scale) / float(hw)                     # absorb mean-pool scale
    b1_fold = (b1 - rmean) * scale + beta

    class_num = w2.shape[1]
    n_pad = _round_up(class_num, LANE)
    w2_p = jnp.pad(w2, ((0, 0), (0, n_pad - class_num)))
    b2_p = jnp.pad(b2, ((0, 0), (0, n_pad - class_num)))

    return {
        "w1": w1_fold.astype(jnp.bfloat16),                # (4032, 512) -- no K padding
        "b1": b1_fold.astype(jnp.float32),
        "w2": w2_p.astype(jnp.bfloat16),
        "b2": b2_p.astype(jnp.float32),
        "class_num": class_num,
        "n_pad": n_pad,
    }


def ft_net_nas_head(feat_nhwc, prepared, *, tb=None):
    """feat_nhwc: (B, H, W, 4032) post-backbone features (NHWC), any float dtype.
    Returns (B, class_num) float32 logits."""
    B, H, W, C = feat_nhwc.shape
    assert C == FEAT_DIM
    hw = H * W
    n_pad, class_num = prepared["n_pad"], prepared["class_num"]
    x_bytes = jnp.dtype(feat_nhwc.dtype).itemsize

    # Metadata-only reshape (contiguous dims merged) -- no HBM copy, no cast, no pad.
    x = feat_nhwc.reshape(B, hw, C)

    # --- batch tiling: full-extent for small B (no padding), 8-row tiles otherwise ---
    if tb is None:
        tb = B if B <= SUBLANE else SUBLANE

    def vmem_est(tb_):
        return (2 * tb_ * hw * FEAT_DIM * x_bytes        # double-buffered x tiles
                + 2 * FEAT_DIM * BOTTLENECK * 2          # w1 buffers (DMA'd once)
                + 2 * BOTTLENECK * n_pad * 2             # w2
                + 2 * (BOTTLENECK + n_pad) * 4           # biases
                + 2 * tb_ * n_pad * 4)                   # output tiles

    VMEM_CAP = 44 << 20                                   # v7x-safe (< 64 MiB physical)
    while vmem_est(tb) > VMEM_CAP and tb > 1:
        tb = max(1, tb // 2)

    if B % tb:
        b_pad = _round_up(B, tb)
        x = jnp.pad(x, ((0, b_pad - B), (0, 0), (0, 0)))  # only when actually tiling
    else:
        b_pad = B
    n_btiles = b_pad // tb

    w1, b1, w2, b2 = prepared["w1"], prepared["b1"], prepared["w2"], prepared["b2"]

    # Advisory cost estimate so XLA schedules this small, HBM-bound call sensibly.
    flops = int(b_pad * hw * FEAT_DIM                      # spatial sum
                + 2 * b_pad * (FEAT_DIM * BOTTLENECK + BOTTLENECK * n_pad))
    bytes_accessed = int(x.size * x_bytes + w1.size * 2 + w2.size * 2
                         + (b1.size + b2.size) * 4 + b_pad * n_pad * 4)
    cost = pl.CostEstimate(flops=flops, transcendentals=0,
                           bytes_accessed=bytes_accessed)

    vmem_limit = int(min(max(int(vmem_est(tb) * 1.5), 16 << 20), 48 << 20))

    # TODO(synk): on v7x with a single batch tile the second TensorCore idles; a
    # core-parallel split-K over the 4032 channels would recover it but is not worth
    # the complexity at these sizes.
    out = pl.pallas_call(
        _head_kernel,
        out_shape=jax.ShapeDtypeStruct((b_pad, n_pad), jnp.float32),
        grid_spec=pltpu.PrefetchScalarGridSpec(
            num_scalar_prefetch=0,
            grid=(n_btiles,),
            in_specs=[
                pl.BlockSpec((tb, hw, FEAT_DIM), lambda b: (b, 0, 0)),
                pl.BlockSpec((FEAT_DIM, BOTTLENECK), lambda b: (0, 0)),   # resident
                pl.BlockSpec((1, BOTTLENECK), lambda b: (0, 0)),
                pl.BlockSpec((BOTTLENECK, n_pad), lambda b: (0, 0)),      # resident
                pl.BlockSpec((1, n_pad), lambda b: (0, 0)),
            ],
            out_specs=pl.BlockSpec((tb, n_pad), lambda b: (b, 0)),
        ),
        compiler_params=pltpu.CompilerParams(
            dimension_semantics=("parallel",),
            vmem_limit_bytes=vmem_limit,
        ),
        cost_estimate=cost,
    )(x, w1, b1, w2, b2)

    return out[:B, :class_num]


def init_params(key, class_num):
    """Deterministic init mirroring weights_init_kaiming / weights_init_classifier,
    with BatchNorm1d running stats (fresh: mean=0, var=1)."""
    k1, k2, k3 = jax.random.split(key, 3)
    # Linear(4032, 512): kaiming_normal_, mode='fan_out' -> std = sqrt(2 / fan_out)
    std1 = (2.0 / BOTTLENECK) ** 0.5
    w1 = std1 * jax.random.normal(k1, (FEAT_DIM, BOTTLENECK), jnp.float32)  # stored (in, out)
    b1 = jnp.zeros((1, BOTTLENECK), jnp.float32)
    # BatchNorm1d(512): weight ~ N(1, 0.02), bias = 0, running stats = (0, 1)
    gamma = 1.0 + 0.02 * jax.random.normal(k2, (1, BOTTLENECK), jnp.float32)
    beta = jnp.zeros((1, BOTTLENECK), jnp.float32)
    running_mean = jnp.zeros((1, BOTTLENECK), jnp.float32)
    running_var = jnp.ones((1, BOTTLENECK), jnp.float32)
    # Linear(512, class_num): weight ~ N(0, 0.001), bias = 0
    w2 = 0.001 * jax.random.normal(k3, (BOTTLENECK, class_num), jnp.float32)  # (in, out)
    b2 = jnp.zeros((1, class_num), jnp.float32)
    return {"w1": w1, "b1": b1, "gamma": gamma, "beta": beta,
            "running_mean": running_mean, "running_var": running_var,
            "w2": w2, "b2": b2}


def _reference_f32(feat_nhwc, params):
    """Pure-JAX float32 reference of the PyTorch head (eval semantics)."""
    B, H, W, C = feat_nhwc.shape
    pooled = feat_nhwc.reshape(B, H * W, C).mean(axis=1)                 # AdaptiveAvgPool2d
    h = pooled @ params["w1"] + params["b1"]                             # Linear(4032,512)
    h = (h - params["running_mean"]) / jnp.sqrt(params["running_var"] + BN_EPS)
    h = h * params["gamma"] + params["beta"]                             # BatchNorm1d (eval)
    # Dropout(p=0.5) -> identity in eval mode.
    return h @ params["w2"] + params["b2"]                               # Linear(512, N)


if __name__ == "__main__":
    key = jax.random.PRNGKey(0)
    k_feat, k_param = jax.random.split(key)

    B, Hf, Wf = 2, 8, 8          # small spatial size for the post-backbone feature map
    class_num = 128

    feat = jax.random.normal(k_feat, (B, Hf, Wf, FEAT_DIM), jnp.float32)
    params = init_params(k_param, class_num)
    prepared = prepare_head_params(params, Hf * Wf)

    out = ft_net_nas_head(feat, prepared)
    jax.block_until_ready(out)

    ref = _reference_f32(feat, params)   # true float32 reference (no bf16 replica)

    assert out.shape == (B, class_num)
    max_err = float(jnp.max(jnp.abs(out - ref)))
    assert jnp.allclose(out, ref, atol=2e-3, rtol=2e-2), max_err

    print("KERNEL_OK")
</pallas_src>

<mosaic_0001>
module attributes {stable_mosaic.version = 11 : i64} {
  func.func @_head_kernel(%arg0: i32, %arg1: memref<2x64x4032xf32, #tpu.memory_space<vmem>>, %arg2: memref<4032x512xbf16, #tpu.memory_space<vmem>>, %arg3: memref<1x512xf32, #tpu.memory_space<vmem>>, %arg4: memref<512x128xbf16, #tpu.memory_space<vmem>>, %arg5: memref<1x128xf32, #tpu.memory_space<vmem>>, %arg6: memref<2x128xf32, #tpu.memory_space<vmem>>) attributes {dimension_semantics = [#tpu.dimension_semantics<parallel>], iteration_bounds = array<i64: 1>, scalar_prefetch = 0 : i64, scratch_operands = 0 : i64, tpu.core_type = #tpu.core_type<tc>, window_params = [{transform_indices = @transform_0, window_bounds = array<i64: 2, 64, 4032>}, {pipeline_mode = #tpu.pipeline_mode<synchronous>, transform_indices = @transform_1, window_bounds = array<i64: 4032, 512>}, {pipeline_mode = #tpu.pipeline_mode<synchronous>, transform_indices = @transform_2, window_bounds = array<i64: 1, 512>}, {pipeline_mode = #tpu.pipeline_mode<synchronous>, transform_indices = @transform_3, window_bounds = array<i64: 512, 128>}, {pipeline_mode = #tpu.pipeline_mode<synchronous>, transform_indices = @transform_4, window_bounds = array<i64: 1, 128>}, {transform_indices = @transform_5, window_bounds = array<i64: 2, 128>}]} {
    %c0 = arith.constant 0 : index
    %c0_0 = arith.constant 0 : index
    %c0_1 = arith.constant 0 : index
    %0 = vector.load %arg1[%c0, %c0_0, %c0_1] : memref<2x64x4032xf32, #tpu.memory_space<vmem>>, vector<2x64x4032xf32>
    %cst = arith.constant dense<0.000000e+00> : vector<2x4032xf32>
    %1 = vector.multi_reduction <add>, %0, %cst [1] : vector<2x64x4032xf32> to vector<2x4032xf32>
    %2 = arith.truncf %1 : vector<2x4032xf32> to vector<2x4032xbf16>
    %c0_2 = arith.constant 0 : index
    %c0_3 = arith.constant 0 : index
    %3 = vector.load %arg2[%c0_2, %c0_3] : memref<4032x512xbf16, #tpu.memory_space<vmem>>, vector<4032x512xbf16>
    %cst_4 = arith.constant dense<0.000000e+00> : vector<2x512xf32>
    %4 = tpu.matmul %2, %3, %cst_4 {dimension_numbers = #tpu.dot_dimension_numbers<[1], [0], [0], [1], [0, 0, 1, 1], [], []>} : vector<2x4032xbf16>, vector<4032x512xbf16>, vector<2x512xf32> -> vector<2x512xf32>
    %c0_5 = arith.constant 0 : index
    %c0_6 = arith.constant 0 : index
    %5 = vector.load %arg3[%c0_5, %c0_6] : memref<1x512xf32, #tpu.memory_space<vmem>>, vector<1x512xf32>
    %6 = vector.broadcast %5 : vector<1x512xf32> to vector<2x512xf32>
    %7 = arith.addf %4, %6 : vector<2x512xf32>
    %8 = arith.truncf %7 : vector<2x512xf32> to vector<2x512xbf16>
    %c0_7 = arith.constant 0 : index
    %c0_8 = arith.constant 0 : index
    %9 = vector.load %arg4[%c0_7, %c0_8] : memref<512x128xbf16, #tpu.memory_space<vmem>>, vector<512x128xbf16>
    %cst_9 = arith.constant dense<0.000000e+00> : vector<2x128xf32>
    %10 = tpu.matmul %8, %9, %cst_9 {dimension_numbers = #tpu.dot_dimension_numbers<[1], [0], [0], [1], [0, 0, 1, 1], [], []>} : vector<2x512xbf16>, vector<512x128xbf16>, vector<2x128xf32> -> vector<2x128xf32>
    %c0_10 = arith.constant 0 : index
    %c0_11 = arith.constant 0 : index
    %11 = vector.load %arg5[%c0_10, %c0_11] : memref<1x128xf32, #tpu.memory_space<vmem>>, vector<1x128xf32>
    %12 = vector.broadcast %11 : vector<1x128xf32> to vector<2x128xf32>
    %13 = arith.addf %10, %12 : vector<2x128xf32>
    %c0_12 = arith.constant 0 : index
    %c0_13 = arith.constant 0 : index
    %14 = vector.load %arg6[%c0_12, %c0_13] : memref<2x128xf32, #tpu.memory_space<vmem>>, vector<2x128xf32>
    tpu.vector_store %arg6[%c0_12, %c0_13], %13 {strides = array<i32>} : memref<2x128xf32, #tpu.memory_space<vmem>>, vector<2x128xf32>,
    return
  }
  func.func @transform_0(%arg0: i32) -> (i32, i32, i32) {
    %c0_i32 = arith.constant 0 : i32
    %c0_i32_0 = arith.constant 0 : i32
    %c0_i32_1 = arith.constant 0 : i32
    return %arg0, %c0_i32, %c0_i32_0 : i32, i32, i32
  }
  func.func @transform_1(%arg0: i32) -> (i32, i32) {
    %c0_i32 = arith.constant 0 : i32
    %c0_i32_0 = arith.constant 0 : i32
    %c0_i32_1 = arith.constant 0 : i32
    return %c0_i32, %c0_i32_0 : i32, i32
  }
  func.func @transform_2(%arg0: i32) -> (i32, i32) {
    %c0_i32 = arith.constant 0 : i32
    %c0_i32_0 = arith.constant 0 : i32
    %c0_i32_1 = arith.constant 0 : i32
    return %c0_i32, %c0_i32_0 : i32, i32
  }
  func.func @transform_3(%arg0: i32) -> (i32, i32) {
    %c0_i32 = arith.constant 0 : i32
    %c0_i32_0 = arith.constant 0 : i32
    %c0_i32_1 = arith.constant 0 : i32
    return %c0_i32, %c0_i32_0 : i32, i32
  }
  func.func @transform_4(%arg0: i32) -> (i32, i32) {
    %c0_i32 = arith.constant 0 : i32
    %c0_i32_0 = arith.constant 0 : i32
    %c0_i32_1 = arith.constant 0 : i32
    return %c0_i32, %c0_i32_0 : i32, i32
  }
  func.func @transform_5(%arg0: i32) -> (i32, i32) {
    %c0_i32 = arith.constant 0 : i32
    %c0_i32_0 = arith.constant 0 : i32
    return %arg0, %c0_i32 : i32, i32
  }
}

</mosaic_0001>

<llo_original>
// kernel: tpu_custom_call.1
$region0: #{tpu_custom_call.1}
  #allocation0 [shape = 'u32[]', space=smem, size = 0x4, offset = 0x4, fixed_abs, tag = 'smem constant byte address 0x4 - core index']
  #allocation1 [shape = 'u32[144,128]{1,0:T(1,128)}', space=vmem, size = 0x12000, scoped, tag = 'internal scratch']
  %s0 = inlined_call_operand.hbm [shape: f32[2,64,4032], index: 0, kind: input, shape index: {}]
  %s1 = inlined_call_operand.hbm [shape: bf16[4032,512], index: 1, kind: input, shape index: {}]
  %s2 = inlined_call_operand.hbm [shape: f32[1,512], index: 2, kind: input, shape index: {}]
  %s3 = inlined_call_operand.hbm [shape: bf16[512,128], index: 3, kind: input, shape index: {}]
  %s4 = inlined_call_operand.hbm [shape: f32[1,128], index: 4, kind: input, shape index: {}]
  %s5 = inlined_call_operand.hbm [shape: f32[2,128], index: 5, kind: output, shape index: {}]
  %s6 = sld [smem:[#allocation0]]
  $region50: #{tpu_custom_call.1} parent=0
    _
  %s8 = ssub.s32 1, %s6
  %s9 = scalar_select 0, %s8, %s6
  $region1: #{tpu_custom_call.1} parent=0
    #allocation2 [shape = 'u8[2097152]{0}', space=vmem, size = 0x200000, scoped, tag = 'input window, operand 0, single buffered']
    #allocation3 [shape = 's32[1]{0}', space=sflag, size = 0x4, scoped, tag = 'scoped memory for tpu_custom_call.1']
    #allocation4 [shape = 's32[1]{0}', space=sflag, size = 0x4, scoped, tag = 'scoped memory for tpu_custom_call.1']
    #allocation5 [shape = 'u8[4128768]{0}', space=vmem, size = 0x3f0000, scoped, tag = 'input window, operand 1, single buffered']
    #allocation6 [shape = 's32[1]{0}', space=sflag, size = 0x4, scoped, tag = 'scoped memory for tpu_custom_call.1']
    #allocation7 [shape = 'u8[2048]{0}', space=vmem, size = 0x800, scoped, tag = 'input window, operand 2, single buffered']
    #allocation8 [shape = 'u8[131072]{0}', space=vmem, size = 0x20000, scoped, tag = 'input window, operand 3, single buffered']
    #allocation9 [shape = 's32[1]{0}', space=sflag, size = 0x4, scoped, tag = 'scoped memory for tpu_custom_call.1']
    #allocation10 [shape = 'u8[512]{0}', space=vmem, size = 0x400, scoped, tag = 'input window, operand 4, single buffered']
    #allocation11 [shape = 'u8[1024]{0}', space=vmem, size = 0x400, scoped, tag = 'output window, operand 0, single buffered']
    %10 = vsyncpa [#allocation3], 0
    %11 = vsyncpa [#allocation6], 0
    %12 = vsyncpa [#allocation9], 0
    %13 = vsyncpa [#allocation4], 0
    // Predicated region
    $region2: #{tpu_custom_call.1} parent=1 // pred_check
      _
    $region3: #{tpu_custom_call.1} parent=1 // pred_check_branch
      %15 = sbr.rel (0) target = $region5
    $region4: #{tpu_custom_call.1} parent=1 // pred_region
      %s17 = ssub.s32 65536, 65536
      %18 = vsyncadd [#allocation3], %s17
      %s19 = sshll.u32 [#allocation2], 4
      %s20 = int_to_ptr.vmem [resolvable:$true] %s19
      %25 = dma.hbm_to_vmem [thread:$0]  %s0, 65536, %s20, [#allocation3], 4096, 4096, 256
    $region5: #{tpu_custom_call.1} parent=1 // pred_fallthru
      _
    // Predicated region
    $region6: #{tpu_custom_call.1} parent=1 // pred_check
      _
    $region7: #{tpu_custom_call.1} parent=1 // pred_check_branch
      %27 = sbr.rel (0) target = $region9
    $region8: #{tpu_custom_call.1} parent=1 // pred_region
      %s29 = ssub.s32 129024, 129024
      %30 = vsyncadd [#allocation6], %s29
      %s31 = sshll.u32 [#allocation5], 4
      %s32 = int_to_ptr.vmem [resolvable:$true] %s31
      %37 = dma.hbm_to_vmem [thread:$0]  %s1, 129024, %s32, [#allocation6], 256, 256, 16
    $region9: #{tpu_custom_call.1} parent=1 // pred_fallthru
      _
    // Predicated region
    $region10: #{tpu_custom_call.1} parent=1 // pred_check
      _
    $region11: #{tpu_custom_call.1} parent=1 // pred_check_branch
      %39 = sbr.rel (0) target = $region13
    $region12: #{tpu_custom_call.1} parent=1 // pred_region
      %s41 = ssub.s32 64, 64
      %42 = vsyncadd [#allocation6], %s41
      %s44 = sshll.u32 [#allocation7], 4
      %s45 = int_to_ptr.vmem [resolvable:$true] %s44
      %47 = dma.hbm_to_vmem [thread:$0]  %s2, 64, %s45, [#allocation6]
    $region13: #{tpu_custom_call.1} parent=1 // pred_fallthru
      _
    // Predicated region
    $region14: #{tpu_custom_call.1} parent=1 // pred_check
      _
    $region15: #{tpu_custom_call.1} parent=1 // pred_check_branch
      %49 = sbr.rel (0) target = $region17
    $region16: #{tpu_custom_call.1} parent=1 // pred_region
      %s51 = ssub.s32 4096, 4096
      %52 = vsyncadd [#allocation9], %s51
      %s53 = sshll.u32 [#allocation8], 4
      %s54 = int_to_ptr.vmem [resolvable:$true] %s53
      %59 = dma.hbm_to_vmem [thread:$0]  %s3, 4096, %s54, [#allocation9], 64, 64, 4
    $region17: #{tpu_custom_call.1} parent=1 // pred_fallthru
      _
    // Predicated region
    $region18: #{tpu_custom_call.1} parent=1 // pred_check
      _
    $region19: #{tpu_custom_call.1} parent=1 // pred_check_branch
      %61 = sbr.rel (0) target = $region21
    $region20: #{tpu_custom_call.1} parent=1 // pred_region
      %s63 = ssub.s32 16, 16
      %64 = vsyncadd [#allocation9], %s63
      %s66 = sshll.u32 [#allocation10], 4
      %s67 = int_to_ptr.vmem [resolvable:$true] %s66
      %69 = dma.hbm_to_vmem [thread:$0]  %s4, 16, %s67, [#allocation9]
    $region21: #{tpu_custom_call.1} parent=1 // pred_fallthru
      _
    // Predicated region
    $region22: #{tpu_custom_call.1} parent=1 // pred_check
      _
    $region23: #{tpu_custom_call.1} parent=1 // pred_check_branch
      %71 = sbr.rel (0) target = $region25
    $region24: #{tpu_custom_call.1} parent=1 // pred_region
      %72 = dma.done [#allocation3], 65536
    $region25: #{tpu_custom_call.1} parent=1 // pred_fallthru
      _
    // Predicated region
    $region26: #{tpu_custom_call.1} parent=1 // pred_check
      _
    $region27: #{tpu_custom_call.1} parent=1 // pred_check_branch
      %74 = sbr.rel (0) target = $region29
    $region28: #{tpu_custom_call.1} parent=1 // pred_region
      %75 = dma.done [#allocation6], 129024
    $region29: #{tpu_custom_call.1} parent=1 // pred_fallthru
      _
    // Predicated region
    $region30: #{tpu_custom_call.1} parent=1 // pred_check
      _
    $region31: #{tpu_custom_call.1} parent=1 // pred_check_branch
      %77 = sbr.rel (0) target = $region33
    $region32: #{tpu_custom_call.1} parent=1 // pred_region
      %78 = dma.done [#allocation6], 64
    $region33: #{tpu_custom_call.1} parent=1 // pred_fallthru
      _
    // Predicated region
    $region34: #{tpu_custom_call.1} parent=1 // pred_check
      _
    $region35: #{tpu_custom_call.1} parent=1 // pred_check_branch
      %80 = sbr.rel (0) target = $region37
    $region36: #{tpu_custom_call.1} parent=1 // pred_region
      %81 = dma.done [#allocation9], 4096
    $region37: #{tpu_custom_call.1} parent=1 // pred_fallthru
      _
    // Predicated region
    $region38: #{tpu_custom_call.1} parent=1 // pred_check
      _
    $region39: #{tpu_custom_call.1} parent=1 // pred_check_branch
      %83 = sbr.rel (0) target = $region41
    $region40: #{tpu_custom_call.1} parent=1 // pred_region
      %84 = dma.done [#allocation9], 16
    $region41: #{tpu_custom_call.1} parent=1 // pred_fallthru
      _
    %v86 = vld [vmem:[#allocation2] sm:$0xff]
    %v87 = vld [vmem:[#allocation2 + $0x8] sm:$0xff]
    %v88 = vld [vmem:[#allocation2 + $0x10] sm:$0xff]
    %v89 = vld [vmem:[#allocation2 + $0x18] sm:$0xff]
    %v90 = vld [vmem:[#allocation2 + $0x20] sm:$0xff]
    %v91 = vld [vmem:[#allocation2 + $0x28] sm:$0xff]
    %v92 = vld [vmem:[#allocation2 + $0x30] sm:$0xff]
    %v93 = vld [vmem:[#allocation2 + $0x38] sm:$0xff]
    %v94 = vld [vmem:[#allocation2 + $0x40] sm:$0xff]
    %v95 = vld [vmem:[#allocation2 + $0x48] sm:$0xff]
    %v96 = vld [vmem:[#allocation2 + $0x50] sm:$0xff]
    %v97 = vld [vmem:[#allocation2 + $0x58] sm:$0xff]
    %v98 = vld [vmem:[#allocation2 + $0x60] sm:$0xff]
    %v99 = vld [vmem:[#allocation2 + $0x68] sm:$0xff]
    %v100 = vld [vmem:[#allocation2 + $0x70] sm:$0xff]
    %v101 = vld [vmem:[#allocation2 + $0x78] sm:$0xff]
    %v102 = vld [vmem:[#allocation2 + $0x80] sm:$0xff]
    %v103 = vld [vmem:[#allocation2 + $0x88] sm:$0xff]
    %v104 = vld [vmem:[#allocation2 + $0x90] sm:$0xff]
    %v105 = vld [vmem:[#allocation2 + $0x98] sm:$0xff]
    %v106 = vld [vmem:[#allocation2 + $0xa0] sm:$0xff]
    %v107 = vld [vmem:[#allocation2 + $0xa8] sm:$0xff]
    %v108 = vld [vmem:[#allocation2 + $0xb0] sm:$0xff]
    %v109 = vld [vmem:[#allocation2 + $0xb8] sm:$0xff]
    %v110 = vld [vmem:[#allocation2 + $0xc0] sm:$0xff]
    %v111 = vld [vmem:[#allocation2 + $0xc8] sm:$0xff]
    %v112 = vld [vmem:[#allocation2 + $0xd0] sm:$0xff]
    %v113 = vld [vmem:[#allocation2 + $0xd8] sm:$0xff]
    %v114 = vld [vmem:[#allocation2 + $0xe0] sm:$0xff]
    %v115 = vld [vmem:[#allocation2 + $0xe8] sm:$0xff]
    %v116 = vld [vmem:[#allocation2 + $0xf0] sm:$0xff]
    %v117 = vld [vmem:[#allocation2 + $0xf8] sm:$0xff]
    %v118 = vld [vmem:[#allocation2 + $0x100] sm:$0xff]
    %v119 = vld [vmem:[#allocation2 + $0x108] sm:$0xff]
    %v120 = vld [vmem:[#allocation2 + $0x110] sm:$0xff]
    %v121 = vld [vmem:[#allocation2 + $0x118] sm:$0xff]
    %v122 = vld [vmem:[#allocation2 + $0x120] sm:$0xff]
    %v123 = vld [vmem:[#allocation2 + $0x128] sm:$0xff]
    %v124 = vld [vmem:[#allocation2 + $0x130] sm:$0xff]
    %v125 = vld [vmem:[#allocation2 + $0x138] sm:$0xff]
    %v126 = vld [vmem:[#allocation2 + $0x140] sm:$0xff]
    %v127 = vld [vmem:[#allocation2 + $0x148] sm:$0xff]
    %v128 = vld [vmem:[#allocation2 + $0x150] sm:$0xff]
    %v129 = vld [vmem:[#allocation2 + $0x158] sm:$0xff]
    %v130 = vld [vmem:[#allocation2 + $0x160] sm:$0xff]
    %v131 = vld [vmem:[#allocation2 + $0x168] sm:$0xff]
    %v132 = vld [vmem:[#allocation2 + $0x170] sm:$0xff]
    %v133 = vld [vmem:[#allocation2 + $0x178] sm:$0xff]
    %v134 = vld [vmem:[#allocation2 + $0x180] sm:$0xff]
    %v135 = vld [vmem:[#allocation2 + $0x188] sm:$0xff]
    %v136 = vld [vmem:[#allocation2 + $0x190] sm:$0xff]
    %v137 = vld [vmem:[#allocation2 + $0x198] sm:$0xff]
    %v138 = vld [vmem:[#allocation2 + $0x1a0] sm:$0xff]
    %v139 = vld [vmem:[#allocation2 + $0x1a8] sm:$0xff]
    %v140 = vld [vmem:[#allocation2 + $0x1b0] sm:$0xff]
    %v141 = vld [vmem:[#allocation2 + $0x1b8] sm:$0xff]
    %v142 = vld [vmem:[#allocation2 + $0x1c0] sm:$0xff]
    %v143 = vld [vmem:[#allocation2 + $0x1c8] sm:$0xff]
    %v144 = vld [vmem:[#allocation2 + $0x1d0] sm:$0xff]
    %v145 = vld [vmem:[#allocation2 + $0x1d8] sm:$0xff]
    %v146 = vld [vmem:[#allocation2 + $0x1e0] sm:$0xff]
    %v147 = vld [vmem:[#allocation2 + $0x1e8] sm:$0xff]
    %v148 = vld [vmem:[#allocation2 + $0x1f0] sm:$0xff]
    %v149 = vld [vmem:[#allocation2 + $0x1f8] sm:$0xff]
    %v150 = vld [vmem:[#allocation2 + $0x200] sm:$0xff]
    %v151 = vld [vmem:[#allocation2 + $0x208] sm:$0xff]
    %v152 = vld [vmem:[#allocation2 + $0x210] sm:$0xff]
    %v153 = vld [vmem:[#allocation2 + $0x218] sm:$0xff]
    %v154 = vld [vmem:[#allocation2 + $0x220] sm:$0xff]
    %v155 = vld [vmem:[#allocation2 + $0x228] sm:$0xff]
    %v156 = vld [vmem:[#allocation2 + $0x230] sm:$0xff]
    %v157 = vld [vmem:[#allocation2 + $0x238] sm:$0xff]
    %v158 = vld [vmem:[#allocation2 + $0x240] sm:$0xff]
    %v159 = vld [vmem:[#allocation2 + $0x248] sm:$0xff]
    %v160 = vld [vmem:[#allocation2 + $0x250] sm:$0xff]
    %v161 = vld [vmem:[#allocation2 + $0x258] sm:$0xff]
    %v162 = vld [vmem:[#allocation2 + $0x260] sm:$0xff]
    %v163 = vld [vmem:[#allocation2 + $0x268] sm:$0xff]
    %v164 = vld [vmem:[#allocation2 + $0x270] sm:$0xff]
    %v165 = vld [vmem:[#allocation2 + $0x278] sm:$0xff]
    %v166 = vld [vmem:[#allocation2 + $0x280] sm:$0xff]
    %v167 = vld [vmem:[#allocation2 + $0x288] sm:$0xff]
    %v168 = vld [vmem:[#allocation2 + $0x290] sm:$0xff]
    %v169 = vld [vmem:[#allocation2 + $0x298] sm:$0xff]
    %v170 = vld [vmem:[#allocation2 + $0x2a0] sm:$0xff]
    %v171 = vld [vmem:[#allocation2 + $0x2a8] sm:$0xff]
    %v172 = vld [vmem:[#allocation2 + $0x2b0] sm:$0xff]
    %v173 = vld [vmem:[#allocation2 + $0x2b8] sm:$0xff]
    %v174 = vld [vmem:[#allocation2 + $0x2c0] sm:$0xff]
    %v175 = vld [vmem:[#allocation2 + $0x2c8] sm:$0xff]
    %v176 = vld [vmem:[#allocation2 + $0x2d0] sm:$0xff]
    %v177 = vld [vmem:[#allocation2 + $0x2d8] sm:$0xff]
    %v178 = vld [vmem:[#allocation2 + $0x2e0] sm:$0xff]
    %v179 = vld [vmem:[#allocation2 + $0x2e8] sm:$0xff]
    %v180 = vld [vmem:[#allocation2 + $0x2f0] sm:$0xff]
    %v181 = vld [vmem:[#allocation2 + $0x2f8] sm:$0xff]
    %v182 = vld [vmem:[#allocation2 + $0x300] sm:$0xff]
    %v183 = vld [vmem:[#allocation2 + $0x308] sm:$0xff]
    %v184 = vld [vmem:[#allocation2 + $0x310] sm:$0xff]
    %v185 = vld [vmem:[#allocation2 + $0x318] sm:$0xff]
    %v186 = vld [vmem:[#allocation2 + $0x320] sm:$0xff]
    %v187 = vld [vmem:[#allocation2 + $0x328] sm:$0xff]
    %v188 = vld [vmem:[#allocation2 + $0x330] sm:$0xff]
    %v189 = vld [vmem:[#allocation2 + $0x338] sm:$0xff]
    %v190 = vld [vmem:[#allocation2 + $0x340] sm:$0xff]
    %v191 = vld [vmem:[#allocation2 + $0x348] sm:$0xff]
    %v192 = vld [vmem:[#allocation2 + $0x350] sm:$0xff]
    %v193 = vld [vmem:[#allocation2 + $0x358] sm:$0xff]
    %v194 = vld [vmem:[#allocation2 + $0x360] sm:$0xff]
    %v195 = vld [vmem:[#allocation2 + $0x368] sm:$0xff]
    %v196 = vld [vmem:[#allocation2 + $0x370] sm:$0xff]
    %v197 = vld [vmem:[#allocation2 + $0x378] sm:$0xff]
    %v198 = vld [vmem:[#allocation2 + $0x380] sm:$0xff]
    %v199 = vld [vmem:[#allocation2 + $0x388] sm:$0xff]
    %v200 = vld [vmem:[#allocation2 + $0x390] sm:$0xff]
    %v201 = vld [vmem:[#allocation2 + $0x398] sm:$0xff]
    %v202 = vld [vmem:[#allocation2 + $0x3a0] sm:$0xff]
    %v203 = vld [vmem:[#allocation2 + $0x3a8] sm:$0xff]
    %v204 = vld [vmem:[#allocation2 + $0x3b0] sm:$0xff]
    %v205 = vld [vmem:[#allocation2 + $0x3b8] sm:$0xff]
    %v206 = vld [vmem:[#allocation2 + $0x3c0] sm:$0xff]
    %v207 = vld [vmem:[#allocation2 + $0x3c8] sm:$0xff]
    %v208 = vld [vmem:[#allocation2 + $0x3d0] sm:$0xff]
    %v209 = vld [vmem:[#allocation2 + $0x3d8] sm:$0xff]
    %v210 = vld [vmem:[#allocation2 + $0x3e0] sm:$0xff]
    %v211 = vld [vmem:[#allocation2 + $0x3e8] sm:$0xff]
    %v212 = vld [vmem:[#allocation2 + $0x3f0] sm:$0xff]
    %v213 = vld [vmem:[#allocation2 + $0x3f8] sm:$0xff]
    %v214 = vld [vmem:[#allocation2 + $0x400] sm:$0xff]
    %v215 = vld [vmem:[#allocation2 + $0x408] sm:$0xff]
    %v216 = vld [vmem:[#allocation2 + $0x410] sm:$0xff]
    %v217 = vld [vmem:[#allocation2 + $0x418] sm:$0xff]
    %v218 = vld [vmem:[#allocation2 + $0x420] sm:$0xff]
    %v219 = vld [vmem:[#allocation2 + $0x428] sm:$0xff]
    %v220 = vld [vmem:[#allocation2 + $0x430] sm:$0xff]
    %v221 = vld [vmem:[#allocation2 + $0x438] sm:$0xff]
    %v222 = vld [vmem:[#allocation2 + $0x440] sm:$0xff]
    %v223 = vld [vmem:[#allocation2 + $0x448] sm:$0xff]
    %v224 = vld [vmem:[#allocation2 + $0x450] sm:$0xff]
    %v225 = vld [vmem:[#allocation2 + $0x458] sm:$0xff]
    %v226 = vld [vmem:[#allocation2 + $0x460] sm:$0xff]
    %v227 = vld [vmem:[#allocation2 + $0x468] sm:$0xff]
    %v228 = vld [vmem:[#allocation2 + $0x470] sm:$0xff]
    %v229 = vld [vmem:[#allocation2 + $0x478] sm:$0xff]
    %v230 = vld [vmem:[#allocation2 + $0x480] sm:$0xff]
    %v231 = vld [vmem:[#allocation2 + $0x488] sm:$0xff]
    %v232 = vld [vmem:[#allocation2 + $0x490] sm:$0xff]
    %v233 = vld [vmem:[#allocation2 + $0x498] sm:$0xff]
    %v234 = vld [vmem:[#allocation2 + $0x4a0] sm:$0xff]
    %v235 = vld [vmem:[#allocation2 + $0x4a8] sm:$0xff]
    %v236 = vld [vmem:[#allocation2 + $0x4b0] sm:$0xff]
    %v237 = vld [vmem:[#allocation2 + $0x4b8] sm:$0xff]
    %v238 = vld [vmem:[#allocation2 + $0x4c0] sm:$0xff]
    %v239 = vld [vmem:[#allocation2 + $0x4c8] sm:$0xff]
    %v240 = vld [vmem:[#allocation2 + $0x4d0] sm:$0xff]
    %v241 = vld [vmem:[#allocation2 + $0x4d8] sm:$0xff]
    %v242 = vld [vmem:[#allocation2 + $0x4e0] sm:$0xff]
    %v243 = vld [vmem:[#allocation2 + $0x4e8] sm:$0xff]
    %v244 = vld [vmem:[#allocation2 + $0x4f0] sm:$0xff]
    %v245 = vld [vmem:[#allocation2 + $0x4f8] sm:$0xff]
    %v246 = vld [vmem:[#allocation2 + $0x500] sm:$0xff]
    %v247 = vld [vmem:[#allocation2 + $0x508] sm:$0xff]
    %v248 = vld [vmem:[#allocation2 + $0x510] sm:$0xff]
    %v249 = vld [vmem:[#allocation2 + $0x518] sm:$0xff]
    %v250 = vld [vmem:[#allocation2 + $0x520] sm:$0xff]
    %v251 = vld [vmem:[#allocation2 + $0x528] sm:$0xff]
    %v252 = vld [vmem:[#allocation2 + $0x530] sm:$0xff]
    %v253 = vld [vmem:[#allocation2 + $0x538] sm:$0xff]
    %v254 = vld [vmem:[#allocation2 + $0x540] sm:$0xff]
    %v255 = vld [vmem:[#allocation2 + $0x548] sm:$0xff]
    %v256 = vld [vmem:[#allocation2 + $0x550] sm:$0xff]
    %v257 = vld [vmem:[#allocation2 + $0x558] sm:$0xff]
    %v258 = vld [vmem:[#allocation2 + $0x560] sm:$0xff]
    %v259 = vld [vmem:[#allocation2 + $0x568] sm:$0xff]
    %v260 = vld [vmem:[#allocation2 + $0x570] sm:$0xff]
    %v261 = vld [vmem:[#allocation2 + $0x578] sm:$0xff]
    %v262 = vld [vmem:[#allocation2 + $0x580] sm:$0xff]
    %v263 = vld [vmem:[#allocation2 + $0x588] sm:$0xff]
    %v264 = vld [vmem:[#allocation2 + $0x590] sm:$0xff]
    %v265 = vld [vmem:[#allocation2 + $0x598] sm:$0xff]
    %v266 = vld [vmem:[#allocation2 + $0x5a0] sm:$0xff]
    %v267 = vld [vmem:[#allocation2 + $0x5a8] sm:$0xff]
    %v268 = vld [vmem:[#allocation2 + $0x5b0] sm:$0xff]
    %v269 = vld [vmem:[#allocation2 + $0x5b8] sm:$0xff]
    %v270 = vld [vmem:[#allocation2 + $0x5c0] sm:$0xff]
    %v271 = vld [vmem:[#allocation2 + $0x5c8] sm:$0xff]
    %v272 = vld [vmem:[#allocation2 + $0x5d0] sm:$0xff]
    %v273 = vld [vmem:[#allocation2 + $0x5d8] sm:$0xff]
    %v274 = vld [vmem:[#allocation2 + $0x5e0] sm:$0xff]
    %v275 = vld [vmem:[#allocation2 + $0x5e8] sm:$0xff]
    %v276 = vld [vmem:[#allocation2 + $0x5f0] sm:$0xff]
    %v277 = vld [vmem:[#allocation2 + $0x5f8] sm:$0xff]
    %v278 = vld [vmem:[#allocation2 + $0x600] sm:$0xff]
    %v279 = vld [vmem:[#allocation2 + $0x608] sm:$0xff]
    %v280 = vld [vmem:[#allocation2 + $0x610] sm:$0xff]
    %v281 = vld [vmem:[#allocation2 + $0x618] sm:$0xff]
    %v282 = vld [vmem:[#allocation2 + $0x620] sm:$0xff]
    %v283 = vld [vmem:[#allocation2 + $0x628] sm:$0xff]
    %v284 = vld [vmem:[#allocation2 + $0x630] sm:$0xff]
    %v285 = vld [vmem:[#allocation2 + $0x638] sm:$0xff]
    %v286 = vld [vmem:[#allocation2 + $0x640] sm:$0xff]
    %v287 = vld [vmem:[#allocation2 + $0x648] sm:$0xff]
    %v288 = vld [vmem:[#allocation2 + $0x650] sm:$0xff]
    %v289 = vld [vmem:[#allocation2 + $0x658] sm:$0xff]
    %v290 = vld [vmem:[#allocation2 + $0x660] sm:$0xff]
    %v291 = vld [vmem:[#allocation2 + $0x668] sm:$0xff]
    %v292 = vld [vmem:[#allocation2 + $0x670] sm:$0xff]
    %v293 = vld [vmem:[#allocation2 + $0x678] sm:$0xff]
    %v294 = vld [vmem:[#allocation2 + $0x680] sm:$0xff]
    %v295 = vld [vmem:[#allocation2 + $0x688] sm:$0xff]
    %v296 = vld [vmem:[#allocation2 + $0x690] sm:$0xff]
    %v297 = vld [vmem:[#allocation2 + $0x698] sm:$0xff]
    %v298 = vld [vmem:[#allocation2 + $0x6a0] sm:$0xff]
    %v299 = vld [vmem:[#allocation2 + $0x6a8] sm:$0xff]
    %v300 = vld [vmem:[#allocation2 + $0x6b0] sm:$0xff]
    %v301 = vld [vmem:[#allocation2 + $0x6b8] sm:$0xff]
    %v302 = vld [vmem:[#allocation2 + $0x6c0] sm:$0xff]
    %v303 = vld [vmem:[#allocation2 + $0x6c8] sm:$0xff]
    %v304 = vld [vmem:[#allocation2 + $0x6d0] sm:$0xff]
    %v305 = vld [vmem:[#allocation2 + $0x6d8] sm:$0xff]
    %v306 = vld [vmem:[#allocation2 + $0x6e0] sm:$0xff]
    %v307 = vld [vmem:[#allocation2 + $0x6e8] sm:$0xff]
    %v308 = vld [vmem:[#allocation2 + $0x6f0] sm:$0xff]
    %v309 = vld [vmem:[#allocation2 + $0x6f8] sm:$0xff]
    %v310 = vld [vmem:[#allocation2 + $0x700] sm:$0xff]
    %v311 = vld [vmem:[#allocation2 + $0x708] sm:$0xff]
    %v312 = vld [vmem:[#allocation2 + $0x710] sm:$0xff]
    %v313 = vld [vmem:[#allocation2 + $0x718] sm:$0xff]
    %v314 = vld [vmem:[#allocation2 + $0x720] sm:$0xff]
    %v315 = vld [vmem:[#allocation2 + $0x728] sm:$0xff]
    %v316 = vld [vmem:[#allocation2 + $0x730] sm:$0xff]
    %v317 = vld [vmem:[#allocation2 + $0x738] sm:$0xff]
    %v318 = vld [vmem:[#allocation2 + $0x740] sm:$0xff]
    %v319 = vld [vmem:[#allocation2 + $0x748] sm:$0xff]
    %v320 = vld [vmem:[#allocation2 + $0x750] sm:$0xff]
    %v321 = vld [vmem:[#allocation2 + $0x758] sm:$0xff]
    %v322 = vld [vmem:[#allocation2 + $0x760] sm:$0xff]
    %v323 = vld [vmem:[#allocation2 + $0x768] sm:$0xff]
    %v324 = vld [vmem:[#allocation2 + $0x770] sm:$0xff]
    %v325 = vld [vmem:[#allocation2 + $0x778] sm:$0xff]
    %v326 = vld [vmem:[#allocation2 + $0x780] sm:$0xff]
    %v327 = vld [vmem:[#allocation2 + $0x788] sm:$0xff]
    %v328 = vld [vmem:[#allocation2 + $0x790] sm:$0xff]
    %v329 = vld [vmem:[#allocation2 + $0x798] sm:$0xff]
    %v330 = vld [vmem:[#allocation2 + $0x7a0] sm:$0xff]
    %v331 = vld [vmem:[#allocation2 + $0x7a8] sm:$0xff]
    %v332 = vld [vmem:[#allocation2 + $0x7b0] sm:$0xff]
    %v333 = vld [vmem:[#allocation2 + $0x7b8] sm:$0xff]
    %v334 = vld [vmem:[#allocation2 + $0x7c0] sm:$0xff]
    %v335 = vld [vmem:[#allocation2 + $0x7c8] sm:$0xff]
    %v336 = vld [vmem:[#allocation2 + $0x7d0] sm:$0xff]
    %v337 = vld [vmem:[#allocation2 + $0x7d8] sm:$0xff]
    %v338 = vld [vmem:[#allocation2 + $0x7e0] sm:$0xff]
    %v339 = vld [vmem:[#allocation2 + $0x7e8] sm:$0xff]
    %v340 = vld [vmem:[#allocation2 + $0x7f0] sm:$0xff]
    %v341 = vld [vmem:[#allocation2 + $0x7f8] sm:$0xff]
    %v342 = vld [vmem:[#allocation2 + $0x800] sm:$0xff]
    %v343 = vld [vmem:[#allocation2 + $0x808] sm:$0xff]
    %v344 = vld [vmem:[#allocation2 + $0x810] sm:$0xff]
    %v345 = vld [vmem:[#allocation2 + $0x818] sm:$0xff]
    %v346 = vld [vmem:[#allocation2 + $0x820] sm:$0xff]
    %v347 = vld [vmem:[#allocation2 + $0x828] sm:$0xff]
    %v348 = vld [vmem:[#allocation2 + $0x830] sm:$0xff]
    %v349 = vld [vmem:[#allocation2 + $0x838] sm:$0xff]
    %v350 = vld [vmem:[#allocation2 + $0x840] sm:$0xff]
    %v351 = vld [vmem:[#allocation2 + $0x848] sm:$0xff]
    %v352 = vld [vmem:[#allocation2 + $0x850] sm:$0xff]
    %v353 = vld [vmem:[#allocation2 + $0x858] sm:$0xff]
    %v354 = vld [vmem:[#allocation2 + $0x860] sm:$0xff]
    %v355 = vld [vmem:[#allocation2 + $0x868] sm:$0xff]
    %v356 = vld [vmem:[#allocation2 + $0x870] sm:$0xff]
    %v357 = vld [vmem:[#allocation2 + $0x878] sm:$0xff]
    %v358 = vld [vmem:[#allocation2 + $0x880] sm:$0xff]
    %v359 = vld [vmem:[#allocation2 + $0x888] sm:$0xff]
    %v360 = vld [vmem:[#allocation2 + $0x890] sm:$0xff]
    %v361 = vld [vmem:[#allocation2 + $0x898] sm:$0xff]
    %v362 = vld [vmem:[#allocation2 + $0x8a0] sm:$0xff]
    %v363 = vld [vmem:[#allocation2 + $0x8a8] sm:$0xff]
    %v364 = vld [vmem:[#allocation2 + $0x8b0] sm:$0xff]
    %v365 = vld [vmem:[#allocation2 + $0x8b8] sm:$0xff]
    %v366 = vld [vmem:[#allocation2 + $0x8c0] sm:$0xff]
    %v367 = vld [vmem:[#allocation2 + $0x8c8] sm:$0xff]
    %v368 = vld [vmem:[#allocation2 + $0x8d0] sm:$0xff]
    %v369 = vld [vmem:[#allocation2 + $0x8d8] sm:$0xff]
    %v370 = vld [vmem:[#allocation2 + $0x8e0] sm:$0xff]
    %v371 = vld [vmem:[#allocation2 + $0x8e8] sm:$0xff]
    %v372 = vld [vmem:[#allocation2 + $0x8f0] sm:$0xff]
    %v373 = vld [vmem:[#allocation2 + $0x8f8] sm:$0xff]
    %v374 = vld [vmem:[#allocation2 + $0x900] sm:$0xff]
    %v375 = vld [vmem:[#allocation2 + $0x908] sm:$0xff]
    %v376 = vld [vmem:[#allocation2 + $0x910] sm:$0xff]
    %v377 = vld [vmem:[#allocation2 + $0x918] sm:$0xff]
    %v378 = vld [vmem:[#allocation2 + $0x920] sm:$0xff]
    %v379 = vld [vmem:[#allocation2 + $0x928] sm:$0xff]
    %v380 = vld [vmem:[#allocation2 + $0x930] sm:$0xff]
    %v381 = vld [vmem:[#allocation2 + $0x938] sm:$0xff]
    %v382 = vld [vmem:[#allocation2 + $0x940] sm:$0xff]
    %v383 = vld [vmem:[#allocation2 + $0x948] sm:$0xff]
    %v384 = vld [vmem:[#allocation2 + $0x950] sm:$0xff]
    %v385 = vld [vmem:[#allocation2 + $0x958] sm:$0xff]
    %v386 = vld [vmem:[#allocation2 + $0x960] sm:$0xff]
    %v387 = vld [vmem:[#allocation2 + $0x968] sm:$0xff]
    %v388 = vld [vmem:[#allocation2 + $0x970] sm:$0xff]
    %v389 = vld [vmem:[#allocation2 + $0x978] sm:$0xff]
    %v390 = vld [vmem:[#allocation2 + $0x980] sm:$0xff]
    %v391 = vld [vmem:[#allocation2 + $0x988] sm:$0xff]
    %v392 = vld [vmem:[#allocation2 + $0x990] sm:$0xff]
    %v393 = vld [vmem:[#allocation2 + $0x998] sm:$0xff]
    %v394 = vld [vmem:[#allocation2 + $0x9a0] sm:$0xff]
    %v395 = vld [vmem:[#allocation2 + $0x9a8] sm:$0xff]
    %v396 = vld [vmem:[#allocation2 + $0x9b0] sm:$0xff]
    %v397 = vld [vmem:[#allocation2 + $0x9b8] sm:$0xff]
    %v398 = vld [vmem:[#allocation2 + $0x9c0] sm:$0xff]
    %v399 = vld [vmem:[#allocation2 + $0x9c8] sm:$0xff]
    %v400 = vld [vmem:[#allocation2 + $0x9d0] sm:$0xff]
    %v401 = vld [vmem:[#allocation2 + $0x9d8] sm:$0xff]
    %v402 = vld [vmem:[#allocation2 + $0x9e0] sm:$0xff]
    %v403 = vld [vmem:[#allocation2 + $0x9e8] sm:$0xff]
    %v404 = vld [vmem:[#allocation2 + $0x9f0] sm:$0xff]
    %v405 = vld [vmem:[#allocation2 + $0x9f8] sm:$0xff]
    %v406 = vld [vmem:[#allocation2 + $0xa00] sm:$0xff]
    %v407 = vld [vmem:[#allocation2 + $0xa08] sm:$0xff]
    %v408 = vld [vmem:[#allocation2 + $0xa10] sm:$0xff]
    %v409 = vld [vmem:[#allocation2 + $0xa18] sm:$0xff]
    %v410 = vld [vmem:[#allocation2 + $0xa20] sm:$0xff]
    %v411 = vld [vmem:[#allocation2 + $0xa28] sm:$0xff]
    %v412 = vld [vmem:[#allocation2 + $0xa30] sm:$0xff]
    %v413 = vld [vmem:[#allocation2 + $0xa38] sm:$0xff]
    %v414 = vld [vmem:[#allocation2 + $0xa40] sm:$0xff]
    %v415 = vld [vmem:[#allocation2 + $0xa48] sm:$0xff]
    %v416 = vld [vmem:[#allocation2 + $0xa50] sm:$0xff]
    %v417 = vld [vmem:[#allocation2 + $0xa58] sm:$0xff]
    %v418 = vld [vmem:[#allocation2 + $0xa60] sm:$0xff]
    %v419 = vld [vmem:[#allocation2 + $0xa68] sm:$0xff]
    %v420 = vld [vmem:[#allocation2 + $0xa70] sm:$0xff]
    %v421 = vld [vmem:[#allocation2 + $0xa78] sm:$0xff]
    %v422 = vld [vmem:[#allocation2 + $0xa80] sm:$0xff]
    %v423 = vld [vmem:[#allocation2 + $0xa88] sm:$0xff]
    %v424 = vld [vmem:[#allocation2 + $0xa90] sm:$0xff]
    %v425 = vld [vmem:[#allocation2 + $0xa98] sm:$0xff]
    %v426 = vld [vmem:[#allocation2 + $0xaa0] sm:$0xff]
    %v427 = vld [vmem:[#allocation2 + $0xaa8] sm:$0xff]
    %v428 = vld [vmem:[#allocation2 + $0xab0] sm:$0xff]
    %v429 = vld [vmem:[#allocation2 + $0xab8] sm:$0xff]
    %v430 = vld [vmem:[#allocation2 + $0xac0] sm:$0xff]
    %v431 = vld [vmem:[#allocation2 + $0xac8] sm:$0xff]
    %v432 = vld [vmem:[#allocation2 + $0xad0] sm:$0xff]
    %v433 = vld [vmem:[#allocation2 + $0xad8] sm:$0xff]
    %v434 = vld [vmem:[#allocation2 + $0xae0] sm:$0xff]
    %v435 = vld [vmem:[#allocation2 + $0xae8] sm:$0xff]
    %v436 = vld [vmem:[#allocation2 + $0xaf0] sm:$0xff]
    %v437 = vld [vmem:[#allocation2 + $0xaf8] sm:$0xff]
    %v438 = vld [vmem:[#allocation2 + $0xb00] sm:$0xff]
    %v439 = vld [vmem:[#allocation2 + $0xb08] sm:$0xff]
    %v440 = vld [vmem:[#allocation2 + $0xb10] sm:$0xff]
    %v441 = vld [vmem:[#allocation2 + $0xb18] sm:$0xff]
    %v442 = vld [vmem:[#allocation2 + $0xb20] sm:$0xff]
    %v443 = vld [vmem:[#allocation2 + $0xb28] sm:$0xff]
    %v444 = vld [vmem:[#allocation2 + $0xb30] sm:$0xff]
    %v445 = vld [vmem:[#allocation2 + $0xb38] sm:$0xff]
    %v446 = vld [vmem:[#allocation2 + $0xb40] sm:$0xff]
    %v447 = vld [vmem:[#allocation2 + $0xb48] sm:$0xff]
    %v448 = vld [vmem:[#allocation2 + $0xb50] sm:$0xff]
    %v449 = vld [vmem:[#allocation2 + $0xb58] sm:$0xff]
    %v450 = vld [vmem:[#allocation2 + $0xb60] sm:$0xff]
    %v451 = vld [vmem:[#allocation2 + $0xb68] sm:$0xff]
    %v452 = vld [vmem:[#allocation2 + $0xb70] sm:$0xff]
    %v453 = vld [vmem:[#allocation2 + $0xb78] sm:$0xff]
    %v454 = vld [vmem:[#allocation2 + $0xb80] sm:$0xff]
    %v455 = vld [vmem:[#allocation2 + $0xb88] sm:$0xff]
    %v456 = vld [vmem:[#allocation2 + $0xb90] sm:$0xff]
    %v457 = vld [vmem:[#allocation2 + $0xb98] sm:$0xff]
    %v458 = vld [vmem:[#allocation2 + $0xba0] sm:$0xff]
    %v459 = vld [vmem:[#allocation2 + $0xba8] sm:$0xff]
    %v460 = vld [vmem:[#allocation2 + $0xbb0] sm:$0xff]
    %v461 = vld [vmem:[#allocation2 + $0xbb8] sm:$0xff]
    %v462 = vld [vmem:[#allocation2 + $0xbc0] sm:$0xff]
    %v463 = vld [vmem:[#allocation2 + $0xbc8] sm:$0xff]
    %v464 = vld [vmem:[#allocation2 + $0xbd0] sm:$0xff]
    %v465 = vld [vmem:[#allocation2 + $0xbd8] sm:$0xff]
    %v466 = vld [vmem:[#allocation2 + $0xbe0] sm:$0xff]
    %v467 = vld [vmem:[#allocation2 + $0xbe8] sm:$0xff]
    %v468 = vld [vmem:[#allocation2 + $0xbf0] sm:$0xff]
    %v469 = vld [vmem:[#allocation2 + $0xbf8] sm:$0xff]
    %v470 = vld [vmem:[#allocation2 + $0xc00] sm:$0xff]
    %v471 = vld [vmem:[#allocation2 + $0xc08] sm:$0xff]
    %v472 = vld [vmem:[#allocation2 + $0xc10] sm:$0xff]
    %v473 = vld [vmem:[#allocation2 + $0xc18] sm:$0xff]
    %v474 = vld [vmem:[#allocation2 + $0xc20] sm:$0xff]
    %v475 = vld [vmem:[#allocation2 + $0xc28] sm:$0xff]
    %v476 = vld [vmem:[#allocation2 + $0xc30] sm:$0xff]
    %v477 = vld [vmem:[#allocation2 + $0xc38] sm:$0xff]
    %v478 = vld [vmem:[#allocation2 + $0xc40] sm:$0xff]
    %v479 = vld [vmem:[#allocation2 + $0xc48] sm:$0xff]
    %v480 = vld [vmem:[#allocation2 + $0xc50] sm:$0xff]
    %v481 = vld [vmem:[#allocation2 + $0xc58] sm:$0xff]
    %v482 = vld [vmem:[#allocation2 + $0xc60] sm:$0xff]
    %v483 = vld [vmem:[#allocation2 + $0xc68] sm:$0xff]
    %v484 = vld [vmem:[#allocation2 + $0xc70] sm:$0xff]
    %v485 = vld [vmem:[#allocation2 + $0xc78] sm:$0xff]
    %v486 = vld [vmem:[#allocation2 + $0xc80] sm:$0xff]
    %v487 = vld [vmem:[#allocation2 + $0xc88] sm:$0xff]
    %v488 = vld [vmem:[#allocation2 + $0xc90] sm:$0xff]
    %v489 = vld [vmem:[#allocation2 + $0xc98] sm:$0xff]
    %v490 = vld [vmem:[#allocation2 + $0xca0] sm:$0xff]
    %v491 = vld [vmem:[#allocation2 + $0xca8] sm:$0xff]
    %v492 = vld [vmem:[#allocation2 + $0xcb0] sm:$0xff]
    %v493 = vld [vmem:[#allocation2 + $0xcb8] sm:$0xff]
    %v494 = vld [vmem:[#allocation2 + $0xcc0] sm:$0xff]
    %v495 = vld [vmem:[#allocation2 + $0xcc8] sm:$0xff]
    %v496 = vld [vmem:[#allocation2 + $0xcd0] sm:$0xff]
    %v497 = vld [vmem:[#allocation2 + $0xcd8] sm:$0xff]
    %v498 = vld [vmem:[#allocation2 + $0xce0] sm:$0xff]
    %v499 = vld [vmem:[#allocation2 + $0xce8] sm:$0xff]
    %v500 = vld [vmem:[#allocation2 + $0xcf0] sm:$0xff]
    %v501 = vld [vmem:[#allocation2 + $0xcf8] sm:$0xff]
    %v502 = vld [vmem:[#allocation2 + $0xd00] sm:$0xff]
    %v503 = vld [vmem:[#allocation2 + $0xd08] sm:$0xff]
    %v504 = vld [vmem:[#allocation2 + $0xd10] sm:$0xff]
    %v505 = vld [vmem:[#allocation2 + $0xd18] sm:$0xff]
    %v506 = vld [vmem:[#allocation2 + $0xd20] sm:$0xff]
    %v507 = vld [vmem:[#allocation2 + $0xd28] sm:$0xff]
    %v508 = vld [vmem:[#allocation2 + $0xd30] sm:$0xff]
    %v509 = vld [vmem:[#allocation2 + $0xd38] sm:$0xff]
    %v510 = vld [vmem:[#allocation2 + $0xd40] sm:$0xff]
    %v511 = vld [vmem:[#allocation2 + $0xd48] sm:$0xff]
    %v512 = vld [vmem:[#allocation2 + $0xd50] sm:$0xff]
    %v513 = vld [vmem:[#allocation2 + $0xd58] sm:$0xff]
    %v514 = vld [vmem:[#allocation2 + $0xd60] sm:$0xff]
    %v515 = vld [vmem:[#allocation2 + $0xd68] sm:$0xff]
    %v516 = vld [vmem:[#allocation2 + $0xd70] sm:$0xff]
    %v517 = vld [vmem:[#allocation2 + $0xd78] sm:$0xff]
    %v518 = vld [vmem:[#allocation2 + $0xd80] sm:$0xff]
    %v519 = vld [vmem:[#allocation2 + $0xd88] sm:$0xff]
    %v520 = vld [vmem:[#allocation2 + $0xd90] sm:$0xff]
    %v521 = vld [vmem:[#allocation2 + $0xd98] sm:$0xff]
    %v522 = vld [vmem:[#allocation2 + $0xda0] sm:$0xff]
    %v523 = vld [vmem:[#allocation2 + $0xda8] sm:$0xff]
    %v524 = vld [vmem:[#allocation2 + $0xdb0] sm:$0xff]
    %v525 = vld [vmem:[#allocation2 + $0xdb8] sm:$0xff]
    %v526 = vld [vmem:[#allocation2 + $0xdc0] sm:$0xff]
    %v527 = vld [vmem:[#allocation2 + $0xdc8] sm:$0xff]
    %v528 = vld [vmem:[#allocation2 + $0xdd0] sm:$0xff]
    %v529 = vld [vmem:[#allocation2 + $0xdd8] sm:$0xff]
    %v530 = vld [vmem:[#allocation2 + $0xde0] sm:$0xff]
    %v531 = vld [vmem:[#allocation2 + $0xde8] sm:$0xff]
    %v532 = vld [vmem:[#allocation2 + $0xdf0] sm:$0xff]
    %v533 = vld [vmem:[#allocation2 + $0xdf8] sm:$0xff]
    %v534 = vld [vmem:[#allocation2 + $0xe00] sm:$0xff]
    %v535 = vld [vmem:[#allocation2 + $0xe08] sm:$0xff]
    %v536 = vld [vmem:[#allocation2 + $0xe10] sm:$0xff]
    %v537 = vld [vmem:[#allocation2 + $0xe18] sm:$0xff]
    %v538 = vld [vmem:[#allocation2 + $0xe20] sm:$0xff]
    %v539 = vld [vmem:[#allocation2 + $0xe28] sm:$0xff]
    %v540 = vld [vmem:[#allocation2 + $0xe30] sm:$0xff]
    %v541 = vld [vmem:[#allocation2 + $0xe38] sm:$0xff]
    %v542 = vld [vmem:[#allocation2 + $0xe40] sm:$0xff]
    %v543 = vld [vmem:[#allocation2 + $0xe48] sm:$0xff]
    %v544 = vld [vmem:[#allocation2 + $0xe50] sm:$0xff]
    %v545 = vld [vmem:[#allocation2 + $0xe58] sm:$0xff]
    %v546 = vld [vmem:[#allocation2 + $0xe60] sm:$0xff]
    %v547 = vld [vmem:[#allocation2 + $0xe68] sm:$0xff]
    %v548 = vld [vmem:[#allocation2 + $0xe70] sm:$0xff]
    %v549 = vld [vmem:[#allocation2 + $0xe78] sm:$0xff]
    %v550 = vld [vmem:[#allocation2 + $0xe80] sm:$0xff]
    %v551 = vld [vmem:[#allocation2 + $0xe88] sm:$0xff]
    %v552 = vld [vmem:[#allocation2 + $0xe90] sm:$0xff]
    %v553 = vld [vmem:[#allocation2 + $0xe98] sm:$0xff]
    %v554 = vld [vmem:[#allocation2 + $0xea0] sm:$0xff]
    %v555 = vld [vmem:[#allocation2 + $0xea8] sm:$0xff]
    %v556 = vld [vmem:[#allocation2 + $0xeb0] sm:$0xff]
    %v557 = vld [vmem:[#allocation2 + $0xeb8] sm:$0xff]
    %v558 = vld [vmem:[#allocation2 + $0xec0] sm:$0xff]
    %v559 = vld [vmem:[#allocation2 + $0xec8] sm:$0xff]
    %v560 = vld [vmem:[#allocation2 + $0xed0] sm:$0xff]
    %v561 = vld [vmem:[#allocation2 + $0xed8] sm:$0xff]
    %v562 = vld [vmem:[#allocation2 + $0xee0] sm:$0xff]
    %v563 = vld [vmem:[#allocation2 + $0xee8] sm:$0xff]
    %v564 = vld [vmem:[#allocation2 + $0xef0] sm:$0xff]
    %v565 = vld [vmem:[#allocation2 + $0xef8] sm:$0xff]
    %v566 = vld [vmem:[#allocation2 + $0xf00] sm:$0xff]
    %v567 = vld [vmem:[#allocation2 + $0xf08] sm:$0xff]
    %v568 = vld [vmem:[#allocation2 + $0xf10] sm:$0xff]
    %v569 = vld [vmem:[#allocation2 + $0xf18] sm:$0xff]
    %v570 = vld [vmem:[#allocation2 + $0xf20] sm:$0xff]
    %v571 = vld [vmem:[#allocation2 + $0xf28] sm:$0xff]
    %v572 = vld [vmem:[#allocation2 + $0xf30] sm:$0xff]
    %v573 = vld [vmem:[#allocation2 + $0xf38] sm:$0xff]
    %v574 = vld [vmem:[#allocation2 + $0xf40] sm:$0xff]
    %v575 = vld [vmem:[#allocation2 + $0xf48] sm:$0xff]
    %v576 = vld [vmem:[#allocation2 + $0xf50] sm:$0xff]
    %v577 = vld [vmem:[#allocation2 + $0xf58] sm:$0xff]
    %v578 = vld [vmem:[#allocation2 + $0xf60] sm:$0xff]
    %v579 = vld [vmem:[#allocation2 + $0xf68] sm:$0xff]
    %v580 = vld [vmem:[#allocation2 + $0xf70] sm:$0xff]
    %v581 = vld [vmem:[#allocation2 + $0xf78] sm:$0xff]
    %v582 = vld [vmem:[#allocation2 + $0xf80] sm:$0xff]
    %v583 = vld [vmem:[#allocation2 + $0xf88] sm:$0xff]
    %v584 = vld [vmem:[#allocation2 + $0xf90] sm:$0xff]
    %v585 = vld [vmem:[#allocation2 + $0xf98] sm:$0xff]
    %v586 = vld [vmem:[#allocation2 + $0xfa0] sm:$0xff]
    %v587 = vld [vmem:[#allocation2 + $0xfa8] sm:$0xff]
    %v588 = vld [vmem:[#allocation2 + $0xfb0] sm:$0xff]
    %v589 = vld [vmem:[#allocation2 + $0xfb8] sm:$0xff]
    %v590 = vld [vmem:[#allocation2 + $0xfc0] sm:$0xff]
    %v591 = vld [vmem:[#allocation2 + $0xfc8] sm:$0xff]
    %v592 = vld [vmem:[#allocation2 + $0xfd0] sm:$0xff]
    %v593 = vld [vmem:[#allocation2 + $0xfd8] sm:$0xff]
    %v594 = vld [vmem:[#allocation2 + $0xfe0] sm:$0xff]
    %v595 = vld [vmem:[#allocation2 + $0xfe8] sm:$0xff]
    %v596 = vld [vmem:[#allocation2 + $0xff0] sm:$0xff]
    %v597 = vld [vmem:[#allocation2 + $0xff8] sm:$0xff]
    %v598 = vadd.f32 %v86, %v118
    %v599 = vadd.f32 %v598, %v150
    %v600 = vadd.f32 %v599, %v182
    %v601 = vadd.f32 %v600, %v214
    %v602 = vadd.f32 %v601, %v246
    %v603 = vadd.f32 %v602, %v278
    %v604 = vadd.f32 %v603, %v310
    %v605 = vrot.slane %v604, 4
    %v606 = vadd.f32 %v604, %v605
    %v607 = vrot.slane %v606, 2
    %v608 = vadd.f32 %v606, %v607
    %v609 = vrot.slane %v608, 1
    %v610 = vadd.f32 %v608, %v609
    %v611 = vadd.f32 %v87, %v119
    %v612 = vadd.f32 %v611, %v151
    %v613 = vadd.f32 %v612, %v183
    %v614 = vadd.f32 %v613, %v215
    %v615 = vadd.f32 %v614, %v247
    %v616 = vadd.f32 %v615, %v279
    %v617 = vadd.f32 %v616, %v311
    %v618 = vrot.slane %v617, 4
    %v619 = vadd.f32 %v617, %v618
    %v620 = vrot.slane %v619, 2
    %v621 = vadd.f32 %v619, %v620
    %v622 = vrot.slane %v621, 1
    %v623 = vadd.f32 %v621, %v622
    %v624 = vadd.f32 %v88, %v120
    %v625 = vadd.f32 %v624, %v152
    %v626 = vadd.f32 %v625, %v184
    %v627 = vadd.f32 %v626, %v216
    %v628 = vadd.f32 %v627, %v248
    %v629 = vadd.f32 %v628, %v280
    %v630 = vadd.f32 %v629, %v312
    %v631 = vrot.slane %v630, 4
    %v632 = vadd.f32 %v630, %v631
    %v633 = vrot.slane %v632, 2
    %v634 = vadd.f32 %v632, %v633
    %v635 = vrot.slane %v634, 1
    %v636 = vadd.f32 %v634, %v635
    %v637 = vadd.f32 %v89, %v121
    %v638 = vadd.f32 %v637, %v153
    %v639 = vadd.f32 %v638, %v185
    %v640 = vadd.f32 %v639, %v217
    %v641 = vadd.f32 %v640, %v249
    %v642 = vadd.f32 %v641, %v281
    %v643 = vadd.f32 %v642, %v313
    %v644 = vrot.slane %v643, 4
    %v645 = vadd.f32 %v643, %v644
    %v646 = vrot.slane %v645, 2
    %v647 = vadd.f32 %v645, %v646
    %v648 = vrot.slane %v647, 1
    %v649 = vadd.f32 %v647, %v648
    %v650 = vadd.f32 %v90, %v122
    %v651 = vadd.f32 %v650, %v154
    %v652 = vadd.f32 %v651, %v186
    %v653 = vadd.f32 %v652, %v218
    %v654 = vadd.f32 %v653, %v250
    %v655 = vadd.f32 %v654, %v282
    %v656 = vadd.f32 %v655, %v314
    %v657 = vrot.slane %v656, 4
    %v658 = vadd.f32 %v656, %v657
    %v659 = vrot.slane %v658, 2
    %v660 = vadd.f32 %v658, %v659
    %v661 = vrot.slane %v660, 1
    %v662 = vadd.f32 %v660, %v661
    %v663 = vadd.f32 %v91, %v123
    %v664 = vadd.f32 %v663, %v155
    %v665 = vadd.f32 %v664, %v187
    %v666 = vadd.f32 %v665, %v219
    %v667 = vadd.f32 %v666, %v251
    %v668 = vadd.f32 %v667, %v283
    %v669 = vadd.f32 %v668, %v315
    %v670 = vrot.slane %v669, 4
    %v671 = vadd.f32 %v669, %v670
    %v672 = vrot.slane %v671, 2
    %v673 = vadd.f32 %v671, %v672
    %v674 = vrot.slane %v673, 1
    %v675 = vadd.f32 %v673, %v674
    %v676 = vadd.f32 %v92, %v124
    %v677 = vadd.f32 %v676, %v156
    %v678 = vadd.f32 %v677, %v188
    %v679 = vadd.f32 %v678, %v220
    %v680 = vadd.f32 %v679, %v252
    %v681 = vadd.f32 %v680, %v284
    %v682 = vadd.f32 %v681, %v316
    %v683 = vrot.slane %v682, 4
    %v684 = vadd.f32 %v682, %v683
    %v685 = vrot.slane %v684, 2
    %v686 = vadd.f32 %v684, %v685
    %v687 = vrot.slane %v686, 1
    %v688 = vadd.f32 %v686, %v687
    %v689 = vadd.f32 %v93, %v125
    %v690 = vadd.f32 %v689, %v157
    %v691 = vadd.f32 %v690, %v189
    %v692 = vadd.f32 %v691, %v221
    %v693 = vadd.f32 %v692, %v253
    %v694 = vadd.f32 %v693, %v285
    %v695 = vadd.f32 %v694, %v317
    %v696 = vrot.slane %v695, 4
    %v697 = vadd.f32 %v695, %v696
    %v698 = vrot.slane %v697, 2
    %v699 = vadd.f32 %v697, %v698
    %v700 = vrot.slane %v699, 1
    %v701 = vadd.f32 %v699, %v700
    %v702 = vadd.f32 %v94, %v126
    %v703 = vadd.f32 %v702, %v158
    %v704 = vadd.f32 %v703, %v190
    %v705 = vadd.f32 %v704, %v222
    %v706 = vadd.f32 %v705, %v254
    %v707 = vadd.f32 %v706, %v286
    %v708 = vadd.f32 %v707, %v318
    %v709 = vrot.slane %v708, 4
    %v710 = vadd.f32 %v708, %v709
    %v711 = vrot.slane %v710, 2
    %v712 = vadd.f32 %v710, %v711
    %v713 = vrot.slane %v712, 1
    %v714 = vadd.f32 %v712, %v713
    %v715 = vadd.f32 %v95, %v127
    %v716 = vadd.f32 %v715, %v159
    %v717 = vadd.f32 %v716, %v191
    %v718 = vadd.f32 %v717, %v223
    %v719 = vadd.f32 %v718, %v255
    %v720 = vadd.f32 %v719, %v287
    %v721 = vadd.f32 %v720, %v319
    %v722 = vrot.slane %v721, 4
    %v723 = vadd.f32 %v721, %v722
    %v724 = vrot.slane %v723, 2
    %v725 = vadd.f32 %v723, %v724
    %v726 = vrot.slane %v725, 1
    %v727 = vadd.f32 %v725, %v726
    %v728 = vadd.f32 %v96, %v128
    %v729 = vadd.f32 %v728, %v160
    %v730 = vadd.f32 %v729, %v192
    %v731 = vadd.f32 %v730, %v224
    %v732 = vadd.f32 %v731, %v256
    %v733 = vadd.f32 %v732, %v288
    %v734 = vadd.f32 %v733, %v320
    %v735 = vrot.slane %v734, 4
    %v736 = vadd.f32 %v734, %v735
    %v737 = vrot.slane %v736, 2
    %v738 = vadd.f32 %v736, %v737
    %v739 = vrot.slane %v738, 1
    %v740 = vadd.f32 %v738, %v739
    %v741 = vadd.f32 %v97, %v129
    %v742 = vadd.f32 %v741, %v161
    %v743 = vadd.f32 %v742, %v193
    %v744 = vadd.f32 %v743, %v225
    %v745 = vadd.f32 %v744, %v257
    %v746 = vadd.f32 %v745, %v289
    %v747 = vadd.f32 %v746, %v321
    %v748 = vrot.slane %v747, 4
    %v749 = vadd.f32 %v747, %v748
    %v750 = vrot.slane %v749, 2
    %v751 = vadd.f32 %v749, %v750
    %v752 = vrot.slane %v751, 1
    %v753 = vadd.f32 %v751, %v752
    %v754 = vadd.f32 %v98, %v130
    %v755 = vadd.f32 %v754, %v162
    %v756 = vadd.f32 %v755, %v194
    %v757 = vadd.f32 %v756, %v226
    %v758 = vadd.f32 %v757, %v258
    %v759 = vadd.f32 %v758, %v290
    %v760 = vadd.f32 %v759, %v322
    %v761 = vrot.slane %v760, 4
    %v762 = vadd.f32 %v760, %v761
    %v763 = vrot.slane %v762, 2
    %v764 = vadd.f32 %v762, %v763
    %v765 = vrot.slane %v764, 1
    %v766 = vadd.f32 %v764, %v765
    %v767 = vadd.f32 %v99, %v131
    %v768 = vadd.f32 %v767, %v163
    %v769 = vadd.f32 %v768, %v195
    %v770 = vadd.f32 %v769, %v227
    %v771 = vadd.f32 %v770, %v259
    %v772 = vadd.f32 %v771, %v291
    %v773 = vadd.f32 %v772, %v323
    %v774 = vrot.slane %v773, 4
    %v775 = vadd.f32 %v773, %v774
    %v776 = vrot.slane %v775, 2
    %v777 = vadd.f32 %v775, %v776
    %v778 = vrot.slane %v777, 1
    %v779 = vadd.f32 %v777, %v778
    %v780 = vadd.f32 %v100, %v132
    %v781 = vadd.f32 %v780, %v164
    %v782 = vadd.f32 %v781, %v196
    %v783 = vadd.f32 %v782, %v228
    %v784 = vadd.f32 %v783, %v260
    %v785 = vadd.f32 %v784, %v292
    %v786 = vadd.f32 %v785, %v324
    %v787 = vrot.slane %v786, 4
    %v788 = vadd.f32 %v786, %v787
    %v789 = vrot.slane %v788, 2
    %v790 = vadd.f32 %v788, %v789
    %v791 = vrot.slane %v790, 1
    %v792 = vadd.f32 %v790, %v791
    %v793 = vadd.f32 %v101, %v133
    %v794 = vadd.f32 %v793, %v165
    %v795 = vadd.f32 %v794, %v197
    %v796 = vadd.f32 %v795, %v229
    %v797 = vadd.f32 %v796, %v261
    %v798 = vadd.f32 %v797, %v293
    %v799 = vadd.f32 %v798, %v325
    %v800 = vrot.slane %v799, 4
    %v801 = vadd.f32 %v799, %v800
    %v802 = vrot.slane %v801, 2
    %v803 = vadd.f32 %v801, %v802
    %v804 = vrot.slane %v803, 1
    %v805 = vadd.f32 %v803, %v804
    %v806 = vadd.f32 %v102, %v134
    %v807 = vadd.f32 %v806, %v166
    %v808 = vadd.f32 %v807, %v198
    %v809 = vadd.f32 %v808, %v230
    %v810 = vadd.f32 %v809, %v262
    %v811 = vadd.f32 %v810, %v294
    %v812 = vadd.f32 %v811, %v326
    %v813 = vrot.slane %v812, 4
    %v814 = vadd.f32 %v812, %v813
    %v815 = vrot.slane %v814, 2
    %v816 = vadd.f32 %v814, %v815
    %v817 = vrot.slane %v816, 1
    %v818 = vadd.f32 %v816, %v817
    %v819 = vadd.f32 %v103, %v135
    %v820 = vadd.f32 %v819, %v167
    %v821 = vadd.f32 %v820, %v199
    %v822 = vadd.f32 %v821, %v231
    %v823 = vadd.f32 %v822, %v263
    %v824 = vadd.f32 %v823, %v295
    %v825 = vadd.f32 %v824, %v327
    %v826 = vrot.slane %v825, 4
    %v827 = vadd.f32 %v825, %v826
    %v828 = vrot.slane %v827, 2
    %v829 = vadd.f32 %v827, %v828
    %v830 = vrot.slane %v829, 1
    %v831 = vadd.f32 %v829, %v830
    %v832 = vadd.f32 %v104, %v136
    %v833 = vadd.f32 %v832, %v168
    %v834 = vadd.f32 %v833, %v200
    %v835 = vadd.f32 %v834, %v232
    %v836 = vadd.f32 %v835, %v264
    %v837 = vadd.f32 %v836, %v296
    %v838 = vadd.f32 %v837, %v328
    %v839 = vrot.slane %v838, 4
    %v840 = vadd.f32 %v838, %v839
    %v841 = vrot.slane %v840, 2
    %v842 = vadd.f32 %v840, %v841
    %v843 = vrot.slane %v842, 1
    %v844 = vadd.f32 %v842, %v843
    %v845 = vadd.f32 %v105, %v137
    %v846 = vadd.f32 %v845, %v169
    %v847 = vadd.f32 %v846, %v201
    %v848 = vadd.f32 %v847, %v233
    %v849 = vadd.f32 %v848, %v265
    %v850 = vadd.f32 %v849, %v297
    %v851 = vadd.f32 %v850, %v329
    %v852 = vrot.slane %v851, 4
    %v853 = vadd.f32 %v851, %v852
    %v854 = vrot.slane %v853, 2
    %v855 = vadd.f32 %v853, %v854
    %v856 = vrot.slane %v855, 1
    %v857 = vadd.f32 %v855, %v856
    %v858 = vadd.f32 %v106, %v138
    %v859 = vadd.f32 %v858, %v170
    %v860 = vadd.f32 %v859, %v202
    %v861 = vadd.f32 %v860, %v234
    %v862 = vadd.f32 %v861, %v266
    %v863 = vadd.f32 %v862, %v298
    %v864 = vadd.f32 %v863, %v330
    %v865 = vrot.slane %v864, 4
    %v866 = vadd.f32 %v864, %v865
    %v867 = vrot.slane %v866, 2
    %v868 = vadd.f32 %v866, %v867
    %v869 = vrot.slane %v868, 1
    %v870 = vadd.f32 %v868, %v869
    %v871 = vadd.f32 %v107, %v139
    %v872 = vadd.f32 %v871, %v171
    %v873 = vadd.f32 %v872, %v203
    %v874 = vadd.f32 %v873, %v235
    %v875 = vadd.f32 %v874, %v267
    %v876 = vadd.f32 %v875, %v299
    %v877 = vadd.f32 %v876, %v331
    %v878 = vrot.slane %v877, 4
    %v879 = vadd.f32 %v877, %v878
    %v880 = vrot.slane %v879, 2
    %v881 = vadd.f32 %v879, %v880
    %v882 = vrot.slane %v881, 1
    %v883 = vadd.f32 %v881, %v882
    %v884 = vadd.f32 %v108, %v140
    %v885 = vadd.f32 %v884, %v172
    %v886 = vadd.f32 %v885, %v204
    %v887 = vadd.f32 %v886, %v236
    %v888 = vadd.f32 %v887, %v268
    %v889 = vadd.f32 %v888, %v300
    %v890 = vadd.f32 %v889, %v332
    %v891 = vrot.slane %v890, 4
    %v892 = vadd.f32 %v890, %v891
    %v893 = vrot.slane %v892, 2
    %v894 = vadd.f32 %v892, %v893
    %v895 = vrot.slane %v894, 1
    %v896 = vadd.f32 %v894, %v895
    %v897 = vadd.f32 %v109, %v141
    %v898 = vadd.f32 %v897, %v173
    %v899 = vadd.f32 %v898, %v205
    %v900 = vadd.f32 %v899, %v237
    %v901 = vadd.f32 %v900, %v269
    %v902 = vadd.f32 %v901, %v301
    %v903 = vadd.f32 %v902, %v333
    %v904 = vrot.slane %v903, 4
    %v905 = vadd.f32 %v903, %v904
    %v906 = vrot.slane %v905, 2
    %v907 = vadd.f32 %v905, %v906
    %v908 = vrot.slane %v907, 1
    %v909 = vadd.f32 %v907, %v908
    %v910 = vadd.f32 %v110, %v142
    %v911 = vadd.f32 %v910, %v174
    %v912 = vadd.f32 %v911, %v206
    %v913 = vadd.f32 %v912, %v238
    %v914 = vadd.f32 %v913, %v270
    %v915 = vadd.f32 %v914, %v302
    %v916 = vadd.f32 %v915, %v334
    %v917 = vrot.slane %v916, 4
    %v918 = vadd.f32 %v916, %v917
    %v919 = vrot.slane %v918, 2
    %v920 = vadd.f32 %v918, %v919
    %v921 = vrot.slane %v920, 1
    %v922 = vadd.f32 %v920, %v921
    %v923 = vadd.f32 %v111, %v143
    %v924 = vadd.f32 %v923, %v175
    %v925 = vadd.f32 %v924, %v207
    %v926 = vadd.f32 %v925, %v239
    %v927 = vadd.f32 %v926, %v271
    %v928 = vadd.f32 %v927, %v303
    %v929 = vadd.f32 %v928, %v335
    %v930 = vrot.slane %v929, 4
    %v931 = vadd.f32 %v929, %v930
    %v932 = vrot.slane %v931, 2
    %v933 = vadd.f32 %v931, %v932
    %v934 = vrot.slane %v933, 1
    %v935 = vadd.f32 %v933, %v934
    %v936 = vadd.f32 %v112, %v144
    %v937 = vadd.f32 %v936, %v176
    %v938 = vadd.f32 %v937, %v208
    %v939 = vadd.f32 %v938, %v240
    %v940 = vadd.f32 %v939, %v272
    %v941 = vadd.f32 %v940, %v304
    %v942 = vadd.f32 %v941, %v336
    %v943 = vrot.slane %v942, 4
    %v944 = vadd.f32 %v942, %v943
    %v945 = vrot.slane %v944, 2
    %v946 = vadd.f32 %v944, %v945
    %v947 = vrot.slane %v946, 1
    %v948 = vadd.f32 %v946, %v947
    %v949 = vadd.f32 %v113, %v145
    %v950 = vadd.f32 %v949, %v177
    %v951 = vadd.f32 %v950, %v209
    %v952 = vadd.f32 %v951, %v241
    %v953 = vadd.f32 %v952, %v273
    %v954 = vadd.f32 %v953, %v305
    %v955 = vadd.f32 %v954, %v337
    %v956 = vrot.slane %v955, 4
    %v957 = vadd.f32 %v955, %v956
    %v958 = vrot.slane %v957, 2
    %v959 = vadd.f32 %v957, %v958
    %v960 = vrot.slane %v959, 1
    %v961 = vadd.f32 %v959, %v960
    %v962 = vadd.f32 %v114, %v146
    %v963 = vadd.f32 %v962, %v178
    %v964 = vadd.f32 %v963, %v210
    %v965 = vadd.f32 %v964, %v242
    %v966 = vadd.f32 %v965, %v274
    %v967 = vadd.f32 %v966, %v306
    %v968 = vadd.f32 %v967, %v338
    %v969 = vrot.slane %v968, 4
    %v970 = vadd.f32 %v968, %v969
    %v971 = vrot.slane %v970, 2
    %v972 = vadd.f32 %v970, %v971
    %v973 = vrot.slane %v972, 1
    %v974 = vadd.f32 %v972, %v973
    %v975 = vadd.f32 %v115, %v147
    %v976 = vadd.f32 %v975, %v179
    %v977 = vadd.f32 %v976, %v211
    %v978 = vadd.f32 %v977, %v243
    %v979 = vadd.f32 %v978, %v275
    %v980 = vadd.f32 %v979, %v307
    %v981 = vadd.f32 %v980, %v339
    %v982 = vrot.slane %v981, 4
    %v983 = vadd.f32 %v981, %v982
    %v984 = vrot.slane %v983, 2
    %v985 = vadd.f32 %v983, %v984
    %v986 = vrot.slane %v985, 1
    %v987 = vadd.f32 %v985, %v986
    %v988 = vadd.f32 %v116, %v148
    %v989 = vadd.f32 %v988, %v180
    %v990 = vadd.f32 %v989, %v212
    %v991 = vadd.f32 %v990, %v244
    %v992 = vadd.f32 %v991, %v276
    %v993 = vadd.f32 %v992, %v308
    %v994 = vadd.f32 %v993, %v340
    %v995 = vrot.slane %v994, 4
    %v996 = vadd.f32 %v994, %v995
    %v997 = vrot.slane %v996, 2
    %v998 = vadd.f32 %v996, %v997
    %v999 = vrot.slane %v998, 1
    %v1000 = vadd.f32 %v998, %v999
    %vm1001 = vcmask 523264
    %v1002 = vsel %vm1001, %v117, 0.0
    %v1003 = vsel %vm1001, %v149, 0.0
    %v1004 = vadd.f32 %v1002, %v1003
    %v1005 = vsel %vm1001, %v181, 0.0
    %v1006 = vadd.f32 %v1004, %v1005
    %v1007 = vsel %vm1001, %v213, 0.0
    %v1008 = vadd.f32 %v1006, %v1007
    %v1009 = vsel %vm1001, %v245, 0.0
    %v1010 = vadd.f32 %v1008, %v1009
    %v1011 = vsel %vm1001, %v277, 0.0
    %v1012 = vadd.f32 %v1010, %v1011
    %v1013 = vsel %vm1001, %v309, 0.0
    %v1014 = vadd.f32 %v1012, %v1013
    %v1015 = vsel %vm1001, %v341, 0.0
    %v1016 = vadd.f32 %v1014, %v1015
    %v1017 = vrot.slane %v1016, 4
    %v1018 = vadd.f32 %v1016, %v1017
    %v1019 = vrot.slane %v1018, 2
    %v1020 = vadd.f32 %v1018, %v1019
    %v1021 = vrot.slane %v1020, 1
    %v1022 = vadd.f32 %v1020, %v1021
    %v1023 = vadd.f32 %v342, %v374
    %v1024 = vadd.f32 %v1023, %v406
    %v1025 = vadd.f32 %v1024, %v438
    %v1026 = vadd.f32 %v1025, %v470
    %v1027 = vadd.f32 %v1026, %v502
    %v1028 = vadd.f32 %v1027, %v534
    %v1029 = vadd.f32 %v1028, %v566
    %v1030 = vrot.slane %v1029, 4
    %v1031 = vadd.f32 %v1029, %v1030
    %v1032 = vrot.slane %v1031, 2
    %v1033 = vadd.f32 %v1031, %v1032
    %v1034 = vrot.slane %v1033, 1
    %v1035 = vadd.f32 %v1033, %v1034
    %v1036 = vadd.f32 %v343, %v375
    %v1037 = vadd.f32 %v1036, %v407
    %v1038 = vadd.f32 %v1037, %v439
    %v1039 = vadd.f32 %v1038, %v471
    %v1040 = vadd.f32 %v1039, %v503
    %v1041 = vadd.f32 %v1040, %v535
    %v1042 = vadd.f32 %v1041, %v567
    %v1043 = vrot.slane %v1042, 4
    %v1044 = vadd.f32 %v1042, %v1043
    %v1045 = vrot.slane %v1044, 2
    %v1046 = vadd.f32 %v1044, %v1045
    %v1047 = vrot.slane %v1046, 1
    %v1048 = vadd.f32 %v1046, %v1047
    %v1049 = vadd.f32 %v344, %v376
    %v1050 = vadd.f32 %v1049, %v408
    %v1051 = vadd.f32 %v1050, %v440
    %v1052 = vadd.f32 %v1051, %v472
    %v1053 = vadd.f32 %v1052, %v504
    %v1054 = vadd.f32 %v1053, %v536
    %v1055 = vadd.f32 %v1054, %v568
    %v1056 = vrot.slane %v1055, 4
    %v1057 = vadd.f32 %v1055, %v1056
    %v1058 = vrot.slane %v1057, 2
    %v1059 = vadd.f32 %v1057, %v1058
    %v1060 = vrot.slane %v1059, 1
    %v1061 = vadd.f32 %v1059, %v1060
    %v1062 = vadd.f32 %v345, %v377
    %v1063 = vadd.f32 %v1062, %v409
    %v1064 = vadd.f32 %v1063, %v441
    %v1065 = vadd.f32 %v1064, %v473
    %v1066 = vadd.f32 %v1065, %v505
    %v1067 = vadd.f32 %v1066, %v537
    %v1068 = vadd.f32 %v1067, %v569
    %v1069 = vrot.slane %v1068, 4
    %v1070 = vadd.f32 %v1068, %v1069
    %v1071 = vrot.slane %v1070, 2
    %v1072 = vadd.f32 %v1070, %v1071
    %v1073 = vrot.slane %v1072, 1
    %v1074 = vadd.f32 %v1072, %v1073
    %v1075 = vadd.f32 %v346, %v378
    %v1076 = vadd.f32 %v1075, %v410
    %v1077 = vadd.f32 %v1076, %v442
    %v1078 = vadd.f32 %v1077, %v474
    %v1079 = vadd.f32 %v1078, %v506
    %v1080 = vadd.f32 %v1079, %v538
    %v1081 = vadd.f32 %v1080, %v570
    %v1082 = vrot.slane %v1081, 4
    %v1083 = vadd.f32 %v1081, %v1082
    %v1084 = vrot.slane %v1083, 2
    %v1085 = vadd.f32 %v1083, %v1084
    %v1086 = vrot.slane %v1085, 1
    %v1087 = vadd.f32 %v1085, %v1086
    %v1088 = vadd.f32 %v347, %v379
    %v1089 = vadd.f32 %v1088, %v411
    %v1090 = vadd.f32 %v1089, %v443
    %v1091 = vadd.f32 %v1090, %v475
    %v1092 = vadd.f32 %v1091, %v507
    %v1093 = vadd.f32 %v1092, %v539
    %v1094 = vadd.f32 %v1093, %v571
    %v1095 = vrot.slane %v1094, 4
    %v1096 = vadd.f32 %v1094, %v1095
    %v1097 = vrot.slane %v1096, 2
    %v1098 = vadd.f32 %v1096, %v1097
    %v1099 = vrot.slane %v1098, 1
    %v1100 = vadd.f32 %v1098, %v1099
    %v1101 = vadd.f32 %v348, %v380
    %v1102 = vadd.f32 %v1101, %v412
    %v1103 = vadd.f32 %v1102, %v444
    %v1104 = vadd.f32 %v1103, %v476
    %v1105 = vadd.f32 %v1104, %v508
    %v1106 = vadd.f32 %v1105, %v540
    %v1107 = vadd.f32 %v1106, %v572
    %v1108 = vrot.slane %v1107, 4
    %v1109 = vadd.f32 %v1107, %v1108
    %v1110 = vrot.slane %v1109, 2
    %v1111 = vadd.f32 %v1109, %v1110
    %v1112 = vrot.slane %v1111, 1
    %v1113 = vadd.f32 %v1111, %v1112
    %v1114 = vadd.f32 %v349, %v381
    %v1115 = vadd.f32 %v1114, %v413
    %v1116 = vadd.f32 %v1115, %v445
    %v1117 = vadd.f32 %v1116, %v477
    %v1118 = vadd.f32 %v1117, %v509
    %v1119 = vadd.f32 %v1118, %v541
    %v1120 = vadd.f32 %v1119, %v573
    %v1121 = vrot.slane %v1120, 4
    %v1122 = vadd.f32 %v1120, %v1121
    %v1123 = vrot.slane %v1122, 2
    %v1124 = vadd.f32 %v1122, %v1123
    %v1125 = vrot.slane %v1124, 1
    %v1126 = vadd.f32 %v1124, %v1125
    %v1127 = vadd.f32 %v350, %v382
    %v1128 = vadd.f32 %v1127, %v414
    %v1129 = vadd.f32 %v1128, %v446
    %v1130 = vadd.f32 %v1129, %v478
    %v1131 = vadd.f32 %v1130, %v510
    %v1132 = vadd.f32 %v1131, %v542
    %v1133 = vadd.f32 %v1132, %v574
    %v1134 = vrot.slane %v1133, 4
    %v1135 = vadd.f32 %v1133, %v1134
    %v1136 = vrot.slane %v1135, 2
    %v1137 = vadd.f32 %v1135, %v1136
    %v1138 = vrot.slane %v1137, 1
    %v1139 = vadd.f32 %v1137, %v1138
    %v1140 = vadd.f32 %v351, %v383
    %v1141 = vadd.f32 %v1140, %v415
    %v1142 = vadd.f32 %v1141, %v447
    %v1143 = vadd.f32 %v1142, %v479
    %v1144 = vadd.f32 %v1143, %v511
    %v1145 = vadd.f32 %v1144, %v543
    %v1146 = vadd.f32 %v1145, %v575
    %v1147 = vrot.slane %v1146, 4
    %v1148 = vadd.f32 %v1146, %v1147
    %v1149 = vrot.slane %v1148, 2
    %v1150 = vadd.f32 %v1148, %v1149
    %v1151 = vrot.slane %v1150, 1
    %v1152 = vadd.f32 %v1150, %v1151
    %v1153 = vadd.f32 %v352, %v384
    %v1154 = vadd.f32 %v1153, %v416
    %v1155 = vadd.f32 %v1154, %v448
    %v1156 = vadd.f32 %v1155, %v480
    %v1157 = vadd.f32 %v1156, %v512
    %v1158 = vadd.f32 %v1157, %v544
    %v1159 = vadd.f32 %v1158, %v576
    %v1160 = vrot.slane %v1159, 4
    %v1161 = vadd.f32 %v1159, %v1160
    %v1162 = vrot.slane %v1161, 2
    %v1163 = vadd.f32 %v1161, %v1162
    %v1164 = vrot.slane %v1163, 1
    %v1165 = vadd.f32 %v1163, %v1164
    %v1166 = vadd.f32 %v353, %v385
    %v1167 = vadd.f32 %v1166, %v417
    %v1168 = vadd.f32 %v1167, %v449
    %v1169 = vadd.f32 %v1168, %v481
    %v1170 = vadd.f32 %v1169, %v513
    %v1171 = vadd.f32 %v1170, %v545
    %v1172 = vadd.f32 %v1171, %v577
    %v1173 = vrot.slane %v1172, 4
    %v1174 = vadd.f32 %v1172, %v1173
    %v1175 = vrot.slane %v1174, 2
    %v1176 = vadd.f32 %v1174, %v1175
    %v1177 = vrot.slane %v1176, 1
    %v1178 = vadd.f32 %v1176, %v1177
    %v1179 = vadd.f32 %v354, %v386
    %v1180 = vadd.f32 %v1179, %v418
    %v1181 = vadd.f32 %v1180, %v450
    %v1182 = vadd.f32 %v1181, %v482
    %v1183 = vadd.f32 %v1182, %v514
    %v1184 = vadd.f32 %v1183, %v546
    %v1185 = vadd.f32 %v1184, %v578
    %v1186 = vrot.slane %v1185, 4
    %v1187 = vadd.f32 %v1185, %v1186
    %v1188 = vrot.slane %v1187, 2
    %v1189 = vadd.f32 %v1187, %v1188
    %v1190 = vrot.slane %v1189, 1
    %v1191 = vadd.f32 %v1189, %v1190
    %v1192 = vadd.f32 %v355, %v387
    %v1193 = vadd.f32 %v1192, %v419
    %v1194 = vadd.f32 %v1193, %v451
    %v1195 = vadd.f32 %v1194, %v483
    %v1196 = vadd.f32 %v1195, %v515
    %v1197 = vadd.f32 %v1196, %v547
    %v1198 = vadd.f32 %v1197, %v579
    %v1199 = vrot.slane %v1198, 4
    %v1200 = vadd.f32 %v1198, %v1199
    %v1201 = vrot.slane %v1200, 2
    %v1202 = vadd.f32 %v1200, %v1201
    %v1203 = vrot.slane %v1202, 1
    %v1204 = vadd.f32 %v1202, %v1203
    %v1205 = vadd.f32 %v356, %v388
    %v1206 = vadd.f32 %v1205, %v420
    %v1207 = vadd.f32 %v1206, %v452
    %v1208 = vadd.f32 %v1207, %v484
    %v1209 = vadd.f32 %v1208, %v516
    %v1210 = vadd.f32 %v1209, %v548
    %v1211 = vadd.f32 %v1210, %v580
    %v1212 = vrot.slane %v1211, 4
    %v1213 = vadd.f32 %v1211, %v1212
    %v1214 = vrot.slane %v1213, 2
    %v1215 = vadd.f32 %v1213, %v1214
    %v1216 = vrot.slane %v1215, 1
    %v1217 = vadd.f32 %v1215, %v1216
    %v1218 = vadd.f32 %v357, %v389
    %v1219 = vadd.f32 %v1218, %v421
    %v1220 = vadd.f32 %v1219, %v453
    %v1221 = vadd.f32 %v1220, %v485
    %v1222 = vadd.f32 %v1221, %v517
    %v1223 = vadd.f32 %v1222, %v549
    %v1224 = vadd.f32 %v1223, %v581
    %v1225 = vrot.slane %v1224, 4
    %v1226 = vadd.f32 %v1224, %v1225
    %v1227 = vrot.slane %v1226, 2
    %v1228 = vadd.f32 %v1226, %v1227
    %v1229 = vrot.slane %v1228, 1
    %v1230 = vadd.f32 %v1228, %v1229
    %v1231 = vadd.f32 %v358, %v390
    %v1232 = vadd.f32 %v1231, %v422
    %v1233 = vadd.f32 %v1232, %v454
    %v1234 = vadd.f32 %v1233, %v486
    %v1235 = vadd.f32 %v1234, %v518
    %v1236 = vadd.f32 %v1235, %v550
    %v1237 = vadd.f32 %v1236, %v582
    %v1238 = vrot.slane %v1237, 4
    %v1239 = vadd.f32 %v1237, %v1238
    %v1240 = vrot.slane %v1239, 2
    %v1241 = vadd.f32 %v1239, %v1240
    %v1242 = vrot.slane %v1241, 1
    %v1243 = vadd.f32 %v1241, %v1242
    %v1244 = vadd.f32 %v359, %v391
    %v1245 = vadd.f32 %v1244, %v423
    %v1246 = vadd.f32 %v1245, %v455
    %v1247 = vadd.f32 %v1246, %v487
    %v1248 = vadd.f32 %v1247, %v519
    %v1249 = vadd.f32 %v1248, %v551
    %v1250 = vadd.f32 %v1249, %v583
    %v1251 = vrot.slane %v1250, 4
    %v1252 = vadd.f32 %v1250, %v1251
    %v1253 = vrot.slane %v1252, 2
    %v1254 = vadd.f32 %v1252, %v1253
    %v1255 = vrot.slane %v1254, 1
    %v1256 = vadd.f32 %v1254, %v1255
    %v1257 = vadd.f32 %v360, %v392
    %v1258 = vadd.f32 %v1257, %v424
    %v1259 = vadd.f32 %v1258, %v456
    %v1260 = vadd.f32 %v1259, %v488
    %v1261 = vadd.f32 %v1260, %v520
    %v1262 = vadd.f32 %v1261, %v552
    %v1263 = vadd.f32 %v1262, %v584
    %v1264 = vrot.slane %v1263, 4
    %v1265 = vadd.f32 %v1263, %v1264
    %v1266 = vrot.slane %v1265, 2
    %v1267 = vadd.f32 %v1265, %v1266
    %v1268 = vrot.slane %v1267, 1
    %v1269 = vadd.f32 %v1267, %v1268
    %v1270 = vadd.f32 %v361, %v393
    %v1271 = vadd.f32 %v1270, %v425
    %v1272 = vadd.f32 %v1271, %v457
    %v1273 = vadd.f32 %v1272, %v489
    %v1274 = vadd.f32 %v1273, %v521
    %v1275 = vadd.f32 %v1274, %v553
    %v1276 = vadd.f32 %v1275, %v585
    %v1277 = vrot.slane %v1276, 4
    %v1278 = vadd.f32 %v1276, %v1277
    %v1279 = vrot.slane %v1278, 2
    %v1280 = vadd.f32 %v1278, %v1279
    %v1281 = vrot.slane %v1280, 1
    %v1282 = vadd.f32 %v1280, %v1281
    %v1283 = vadd.f32 %v362, %v394
    %v1284 = vadd.f32 %v1283, %v426
    %v1285 = vadd.f32 %v1284, %v458
    %v1286 = vadd.f32 %v1285, %v490
    %v1287 = vadd.f32 %v1286, %v522
    %v1288 = vadd.f32 %v1287, %v554
    %v1289 = vadd.f32 %v1288, %v586
    %v1290 = vrot.slane %v1289, 4
    %v1291 = vadd.f32 %v1289, %v1290
    %v1292 = vrot.slane %v1291, 2
    %v1293 = vadd.f32 %v1291, %v1292
    %v1294 = vrot.slane %v1293, 1
    %v1295 = vadd.f32 %v1293, %v1294
    %v1296 = vadd.f32 %v363, %v395
    %v1297 = vadd.f32 %v1296, %v427
    %v1298 = vadd.f32 %v1297, %v459
    %v1299 = vadd.f32 %v1298, %v491
    %v1300 = vadd.f32 %v1299, %v523
    %v1301 = vadd.f32 %v1300, %v555
    %v1302 = vadd.f32 %v1301, %v587
    %v1303 = vrot.slane %v1302, 4
    %v1304 = vadd.f32 %v1302, %v1303
    %v1305 = vrot.slane %v1304, 2
    %v1306 = vadd.f32 %v1304, %v1305
    %v1307 = vrot.slane %v1306, 1
    %v1308 = vadd.f32 %v1306, %v1307
    %v1309 = vadd.f32 %v364, %v396
    %v1310 = vadd.f32 %v1309, %v428
    %v1311 = vadd.f32 %v1310, %v460
    %v1312 = vadd.f32 %v1311, %v492
    %v1313 = vadd.f32 %v1312, %v524
    %v1314 = vadd.f32 %v1313, %v556
    %v1315 = vadd.f32 %v1314, %v588
    %v1316 = vrot.slane %v1315, 4
    %v1317 = vadd.f32 %v1315, %v1316
    %v1318 = vrot.slane %v1317, 2
    %v1319 = vadd.f32 %v1317, %v1318
    %v1320 = vrot.slane %v1319, 1
    %v1321 = vadd.f32 %v1319, %v1320
    %v1322 = vadd.f32 %v365, %v397
    %v1323 = vadd.f32 %v1322, %v429
    %v1324 = vadd.f32 %v1323, %v461
    %v1325 = vadd.f32 %v1324, %v493
    %v1326 = vadd.f32 %v1325, %v525
    %v1327 = vadd.f32 %v1326, %v557
    %v1328 = vadd.f32 %v1327, %v589
    %v1329 = vrot.slane %v1328, 4
    %v1330 = vadd.f32 %v1328, %v1329
    %v1331 = vrot.slane %v1330, 2
    %v1332 = vadd.f32 %v1330, %v1331
    %v1333 = vrot.slane %v1332, 1
    %v1334 = vadd.f32 %v1332, %v1333
    %v1335 = vadd.f32 %v366, %v398
    %v1336 = vadd.f32 %v1335, %v430
    %v1337 = vadd.f32 %v1336, %v462
    %v1338 = vadd.f32 %v1337, %v494
    %v1339 = vadd.f32 %v1338, %v526
    %v1340 = vadd.f32 %v1339, %v558
    %v1341 = vadd.f32 %v1340, %v590
    %v1342 = vrot.slane %v1341, 4
    %v1343 = vadd.f32 %v1341, %v1342
    %v1344 = vrot.slane %v1343, 2
    %v1345 = vadd.f32 %v1343, %v1344
    %v1346 = vrot.slane %v1345, 1
    %v1347 = vadd.f32 %v1345, %v1346
    %v1348 = vadd.f32 %v367, %v399
    %v1349 = vadd.f32 %v1348, %v431
    %v1350 = vadd.f32 %v1349, %v463
    %v1351 = vadd.f32 %v1350, %v495
    %v1352 = vadd.f32 %v1351, %v527
    %v1353 = vadd.f32 %v1352, %v559
    %v1354 = vadd.f32 %v1353, %v591
    %v1355 = vrot.slane %v1354, 4
    %v1356 = vadd.f32 %v1354, %v1355
    %v1357 = vrot.slane %v1356, 2
    %v1358 = vadd.f32 %v1356, %v1357
    %v1359 = vrot.slane %v1358, 1
    %v1360 = vadd.f32 %v1358, %v1359
    %v1361 = vadd.f32 %v368, %v400
    %v1362 = vadd.f32 %v1361, %v432
    %v1363 = vadd.f32 %v1362, %v464
    %v1364 = vadd.f32 %v1363, %v496
    %v1365 = vadd.f32 %v1364, %v528
    %v1366 = vadd.f32 %v1365, %v560
    %v1367 = vadd.f32 %v1366, %v592
    %v1368 = vrot.slane %v1367, 4
    %v1369 = vadd.f32 %v1367, %v1368
    %v1370 = vrot.slane %v1369, 2
    %v1371 = vadd.f32 %v1369, %v1370
    %v1372 = vrot.slane %v1371, 1
    %v1373 = vadd.f32 %v1371, %v1372
    %v1374 = vadd.f32 %v369, %v401
    %v1375 = vadd.f32 %v1374, %v433
    %v1376 = vadd.f32 %v1375, %v465
    %v1377 = vadd.f32 %v1376, %v497
    %v1378 = vadd.f32 %v1377, %v529
    %v1379 = vadd.f32 %v1378, %v561
    %v1380 = vadd.f32 %v1379, %v593
    %v1381 = vrot.slane %v1380, 4
    %v1382 = vadd.f32 %v1380, %v1381
    %v1383 = vrot.slane %v1382, 2
    %v1384 = vadd.f32 %v1382, %v1383
    %v1385 = vrot.slane %v1384, 1
    %v1386 = vadd.f32 %v1384, %v1385
    %v1387 = vadd.f32 %v370, %v402
    %v1388 = vadd.f32 %v1387, %v434
    %v1389 = vadd.f32 %v1388, %v466
    %v1390 = vadd.f32 %v1389, %v498
    %v1391 = vadd.f32 %v1390, %v530
    %v1392 = vadd.f32 %v1391, %v562
    %v1393 = vadd.f32 %v1392, %v594
    %v1394 = vrot.slane %v1393, 4
    %v1395 = vadd.f32 %v1393, %v1394
    %v1396 = vrot.slane %v1395, 2
    %v1397 = vadd.f32 %v1395, %v1396
    %v1398 = vrot.slane %v1397, 1
    %v1399 = vadd.f32 %v1397, %v1398
    %v1400 = vadd.f32 %v371, %v403
    %v1401 = vadd.f32 %v1400, %v435
    %v1402 = vadd.f32 %v1401, %v467
    %v1403 = vadd.f32 %v1402, %v499
    %v1404 = vadd.f32 %v1403, %v531
    %v1405 = vadd.f32 %v1404, %v563
    %v1406 = vadd.f32 %v1405, %v595
    %v1407 = vrot.slane %v1406, 4
    %v1408 = vadd.f32 %v1406, %v1407
    %v1409 = vrot.slane %v1408, 2
    %v1410 = vadd.f32 %v1408, %v1409
    %v1411 = vrot.slane %v1410, 1
    %v1412 = vadd.f32 %v1410, %v1411
    %v1413 = vadd.f32 %v372, %v404
    %v1414 = vadd.f32 %v1413, %v436
    %v1415 = vadd.f32 %v1414, %v468
    %v1416 = vadd.f32 %v1415, %v500
    %v1417 = vadd.f32 %v1416, %v532
    %v1418 = vadd.f32 %v1417, %v564
    %v1419 = vadd.f32 %v1418, %v596
    %v1420 = vrot.slane %v1419, 4
    %v1421 = vadd.f32 %v1419, %v1420
    %v1422 = vrot.slane %v1421, 2
    %v1423 = vadd.f32 %v1421, %v1422
    %v1424 = vrot.slane %v1423, 1
    %v1425 = vadd.f32 %v1423, %v1424
    %v1426 = vsel %vm1001, %v373, 0.0
    %v1427 = vsel %vm1001, %v405, 0.0
    %v1428 = vadd.f32 %v1426, %v1427
    %v1429 = vsel %vm1001, %v437, 0.0
    %v1430 = vadd.f32 %v1428, %v1429
    %v1431 = vsel %vm1001, %v469, 0.0
    %v1432 = vadd.f32 %v1430, %v1431
    %v1433 = vsel %vm1001, %v501, 0.0
    %v1434 = vadd.f32 %v1432, %v1433
    %v1435 = vsel %vm1001, %v533, 0.0
    %v1436 = vadd.f32 %v1434, %v1435
    %v1437 = vsel %vm1001, %v565, 0.0
    %v1438 = vadd.f32 %v1436, %v1437
    %v1439 = vsel %vm1001, %v597, 0.0
    %v1440 = vadd.f32 %v1438, %v1439
    %v1441 = vrot.slane %v1440, 4
    %v1442 = vadd.f32 %v1440, %v1441
    %v1443 = vrot.slane %v1442, 2
    %v1444 = vadd.f32 %v1442, %v1443
    %v1445 = vrot.slane %v1444, 1
    %v1446 = vadd.f32 %v1444, %v1445
    %v1447 = vpack.c.bf16 %v610, %v610
    %v1448 = vpack.c.bf16 %v623, %v623
    %v1449 = vpack.c.bf16 %v636, %v636
    %v1450 = vpack.c.bf16 %v649, %v649
    %v1451 = vpack.c.bf16 %v662, %v662
    %v1452 = vpack.c.bf16 %v675, %v675
    %v1453 = vpack.c.bf16 %v688, %v688
    %v1454 = vpack.c.bf16 %v701, %v701
    %v1455 = vpack.c.bf16 %v714, %v714
    %v1456 = vpack.c.bf16 %v727, %v727
    %v1457 = vpack.c.bf16 %v740, %v740
    %v1458 = vpack.c.bf16 %v753, %v753
    %v1459 = vpack.c.bf16 %v766, %v766
    %v1460 = vpack.c.bf16 %v779, %v779
    %v1461 = vpack.c.bf16 %v792, %v792
    %v1462 = vpack.c.bf16 %v805, %v805
    %v1463 = vpack.c.bf16 %v818, %v818
    %v1464 = vpack.c.bf16 %v831, %v831
    %v1465 = vpack.c.bf16 %v844, %v844
    %v1466 = vpack.c.bf16 %v857, %v857
    %v1467 = vpack.c.bf16 %v870, %v870
    %v1468 = vpack.c.bf16 %v883, %v883
    %v1469 = vpack.c.bf16 %v896, %v896
    %v1470 = vpack.c.bf16 %v909, %v909
    %v1471 = vpack.c.bf16 %v922, %v922
    %v1472 = vpack.c.bf16 %v935, %v935
    %v1473 = vpack.c.bf16 %v948, %v948
    %v1474 = vpack.c.bf16 %v961, %v961
    %v1475 = vpack.c.bf16 %v974, %v974
    %v1476 = vpack.c.bf16 %v987, %v987
    %v1477 = vpack.c.bf16 %v1000, %v1000
    %v1478 = vpack.c.bf16 %v1022, %v1022
    %v1479 = vpack.c.bf16 %v1035, %v1035
    %v1480 = vpack.c.bf16 %v1048, %v1048
    %v1481 = vpack.c.bf16 %v1061, %v1061
    %v1482 = vpack.c.bf16 %v1074, %v1074
    %v1483 = vpack.c.bf16 %v1087, %v1087
    %v1484 = vpack.c.bf16 %v1100, %v1100
    %v1485 = vpack.c.bf16 %v1113, %v1113
    %v1486 = vpack.c.bf16 %v1126, %v1126
    %v1487 = vpack.c.bf16 %v1139, %v1139
    %v1488 = vpack.c.bf16 %v1152, %v1152
    %v1489 = vpack.c.bf16 %v1165, %v1165
    %v1490 = vpack.c.bf16 %v1178, %v1178
    %v1491 = vpack.c.bf16 %v1191, %v1191
    %v1492 = vpack.c.bf16 %v1204, %v1204
    %v1493 = vpack.c.bf16 %v1217, %v1217
    %v1494 = vpack.c.bf16 %v1230, %v1230
    %v1495 = vpack.c.bf16 %v1243, %v1243
    %v1496 = vpack.c.bf16 %v1256, %v1256
    %v1497 = vpack.c.bf16 %v1269, %v1269
    %v1498 = vpack.c.bf16 %v1282, %v1282
    %v1499 = vpack.c.bf16 %v1295, %v1295
    %v1500 = vpack.c.bf16 %v1308, %v1308
    %v1501 = vpack.c.bf16 %v1321, %v1321
    %v1502 = vpack.c.bf16 %v1334, %v1334
    %v1503 = vpack.c.bf16 %v1347, %v1347
    %v1504 = vpack.c.bf16 %v1360, %v1360
    %v1505 = vpack.c.bf16 %v1373, %v1373
    %v1506 = vpack.c.bf16 %v1386, %v1386
    %v1507 = vpack.c.bf16 %v1399, %v1399
    %v1508 = vpack.c.bf16 %v1412, %v1412
    %v1509 = vpack.c.bf16 %v1425, %v1425
    %v1510 = vpack.c.bf16 %v1446, %v1446
    %v1511 = vld [vmem:[#allocation5] sm:$0xff]
    %v1512 = vld [vmem:[#allocation5 + $0x8] sm:$0xff]
    %v1513 = vld [vmem:[#allocation5 + $0x10] sm:$0xff]
    %v1514 = vld [vmem:[#allocation5 + $0x18] sm:$0xff]
    %v1515 = vld [vmem:[#allocation5 + $0x20] sm:$0xff]
    %v1516 = vld [vmem:[#allocation5 + $0x28] sm:$0xff]
    %v1517 = vld [vmem:[#allocation5 + $0x30] sm:$0xff]
    %v1518 = vld [vmem:[#allocation5 + $0x38] sm:$0xff]
    %v1519 = vld [vmem:[#allocation5 + $0x40] sm:$0xff]
    %v1520 = vld [vmem:[#allocation5 + $0x48] sm:$0xff]
    %v1521 = vld [vmem:[#allocation5 + $0x50] sm:$0xff]
    %v1522 = vld [vmem:[#allocation5 + $0x58] sm:$0xff]
    %v1523 = vld [vmem:[#allocation5 + $0x60] sm:$0xff]
    %v1524 = vld [vmem:[#allocation5 + $0x68] sm:$0xff]
    %v1525 = vld [vmem:[#allocation5 + $0x70] sm:$0xff]
    %v1526 = vld [vmem:[#allocation5 + $0x78] sm:$0xff]
    %v1527 = vld [vmem:[#allocation5 + $0x80] sm:$0xff]
    %v1528 = vld [vmem:[#allocation5 + $0x88] sm:$0xff]
    %v1529 = vld [vmem:[#allocation5 + $0x90] sm:$0xff]
    %v1530 = vld [vmem:[#allocation5 + $0x98] sm:$0xff]
    %v1531 = vld [vmem:[#allocation5 + $0xa0] sm:$0xff]
    %v1532 = vld [vmem:[#allocation5 + $0xa8] sm:$0xff]
    %v1533 = vld [vmem:[#allocation5 + $0xb0] sm:$0xff]
    %v1534 = vld [vmem:[#allocation5 + $0xb8] sm:$0xff]
    %v1535 = vld [vmem:[#allocation5 + $0xc0] sm:$0xff]
    %v1536 = vld [vmem:[#allocation5 + $0xc8] sm:$0xff]
    %v1537 = vld [vmem:[#allocation5 + $0xd0] sm:$0xff]
    %v1538 = vld [vmem:[#allocation5 + $0xd8] sm:$0xff]
    %v1539 = vld [vmem:[#allocation5 + $0xe0] sm:$0xff]
    %v1540 = vld [vmem:[#allocation5 + $0xe8] sm:$0xff]
    %v1541 = vld [vmem:[#allocation5 + $0xf0] sm:$0xff]
    %v1542 = vld [vmem:[#allocation5 + $0xf8] sm:$0xff]
    %v1543 = vld [vmem:[#allocation5 + $0x100] sm:$0xff]
    %v1544 = vld [vmem:[#allocation5 + $0x108] sm:$0xff]
    %v1545 = vld [vmem:[#allocation5 + $0x110] sm:$0xff]
    %v1546 = vld [vmem:[#allocation5 + $0x118] sm:$0xff]
    %v1547 = vld [vmem:[#allocation5 + $0x120] sm:$0xff]
    %v1548 = vld [vmem:[#allocation5 + $0x128] sm:$0xff]
    %v1549 = vld [vmem:[#allocation5 + $0x130] sm:$0xff]
    %v1550 = vld [vmem:[#allocation5 + $0x138] sm:$0xff]
    %v1551 = vld [vmem:[#allocation5 + $0x140] sm:$0xff]
    %v1552 = vld [vmem:[#allocation5 + $0x148] sm:$0xff]
    %v1553 = vld [vmem:[#allocation5 + $0x150] sm:$0xff]
    %v1554 = vld [vmem:[#allocation5 + $0x158] sm:$0xff]
    %v1555 = vld [vmem:[#allocation5 + $0x160] sm:$0xff]
    %v1556 = vld [vmem:[#allocation5 + $0x168] sm:$0xff]
    %v1557 = vld [vmem:[#allocation5 + $0x170] sm:$0xff]
    %v1558 = vld [vmem:[#allocation5 + $0x178] sm:$0xff]
    %v1559 = vld [vmem:[#allocation5 + $0x180] sm:$0xff]
    %v1560 = vld [vmem:[#allocation5 + $0x188] sm:$0xff]
    %v1561 = vld [vmem:[#allocation5 + $0x190] sm:$0xff]
    %v1562 = vld [vmem:[#allocation5 + $0x198] sm:$0xff]
    %v1563 = vld [vmem:[#allocation5 + $0x1a0] sm:$0xff]
    %v1564 = vld [vmem:[#allocation5 + $0x1a8] sm:$0xff]
    %v1565 = vld [vmem:[#allocation5 + $0x1b0] sm:$0xff]
    %v1566 = vld [vmem:[#allocation5 + $0x1b8] sm:$0xff]
    %v1567 = vld [vmem:[#allocation5 + $0x1c0] sm:$0xff]
    %v1568 = vld [vmem:[#allocation5 + $0x1c8] sm:$0xff]
    %v1569 = vld [vmem:[#allocation5 + $0x1d0] sm:$0xff]
    %v1570 = vld [vmem:[#allocation5 + $0x1d8] sm:$0xff]
    %v1571 = vld [vmem:[#allocation5 + $0x1e0] sm:$0xff]
    %v1572 = vld [vmem:[#allocation5 + $0x1e8] sm:$0xff]
    %v1573 = vld [vmem:[#allocation5 + $0x1f0] sm:$0xff]
    %v1574 = vld [vmem:[#allocation5 + $0x1f8] sm:$0xff]
    %v1575 = vld [vmem:[#allocation5 + $0x200] sm:$0xff]
    %v1576 = vld [vmem:[#allocation5 + $0x208] sm:$0xff]
    %v1577 = vld [vmem:[#allocation5 + $0x210] sm:$0xff]
    %v1578 = vld [vmem:[#allocation5 + $0x218] sm:$0xff]
    %v1579 = vld [vmem:[#allocation5 + $0x220] sm:$0xff]
    %v1580 = vld [vmem:[#allocation5 + $0x228] sm:$0xff]
    %v1581 = vld [vmem:[#allocation5 + $0x230] sm:$0xff]
    %v1582 = vld [vmem:[#allocation5 + $0x238] sm:$0xff]
    %v1583 = vld [vmem:[#allocation5 + $0x240] sm:$0xff]
    %v1584 = vld [vmem:[#allocation5 + $0x248] sm:$0xff]
    %v1585 = vld [vmem:[#allocation5 + $0x250] sm:$0xff]
    %v1586 = vld [vmem:[#allocation5 + $0x258] sm:$0xff]
    %v1587 = vld [vmem:[#allocation5 + $0x260] sm:$0xff]
    %v1588 = vld [vmem:[#allocation5 + $0x268] sm:$0xff]
    %v1589 = vld [vmem:[#allocation5 + $0x270] sm:$0xff]
    %v1590 = vld [vmem:[#allocation5 + $0x278] sm:$0xff]
    %v1591 = vld [vmem:[#allocation5 + $0x280] sm:$0xff]
    %v1592 = vld [vmem:[#allocation5 + $0x288] sm:$0xff]
    %v1593 = vld [vmem:[#allocation5 + $0x290] sm:$0xff]
    %v1594 = vld [vmem:[#allocation5 + $0x298] sm:$0xff]
    %v1595 = vld [vmem:[#allocation5 + $0x2a0] sm:$0xff]
    %v1596 = vld [vmem:[#allocation5 + $0x2a8] sm:$0xff]
    %v1597 = vld [vmem:[#allocation5 + $0x2b0] sm:$0xff]
    %v1598 = vld [vmem:[#allocation5 + $0x2b8] sm:$0xff]
    %v1599 = vld [vmem:[#allocation5 + $0x2c0] sm:$0xff]
    %v1600 = vld [vmem:[#allocation5 + $0x2c8] sm:$0xff]
    %v1601 = vld [vmem:[#allocation5 + $0x2d0] sm:$0xff]
    %v1602 = vld [vmem:[#allocation5 + $0x2d8] sm:$0xff]
    %v1603 = vld [vmem:[#allocation5 + $0x2e0] sm:$0xff]
    %v1604 = vld [vmem:[#allocation5 + $0x2e8] sm:$0xff]
    %v1605 = vld [vmem:[#allocation5 + $0x2f0] sm:$0xff]
    %v1606 = vld [vmem:[#allocation5 + $0x2f8] sm:$0xff]
    %v1607 = vld [vmem:[#allocation5 + $0x300] sm:$0xff]
    %v1608 = vld [vmem:[#allocation5 + $0x308] sm:$0xff]
    %v1609 = vld [vmem:[#allocation5 + $0x310] sm:$0xff]
    %v1610 = vld [vmem:[#allocation5 + $0x318] sm:$0xff]
    %v1611 = vld [vmem:[#allocation5 + $0x320] sm:$0xff]
    %v1612 = vld [vmem:[#allocation5 + $0x328] sm:$0xff]
    %v1613 = vld [vmem:[#allocation5 + $0x330] sm:$0xff]
    %v1614 = vld [vmem:[#allocation5 + $0x338] sm:$0xff]
    %v1615 = vld [vmem:[#allocation5 + $0x340] sm:$0xff]
    %v1616 = vld [vmem:[#allocation5 + $0x348] sm:$0xff]
    %v1617 = vld [vmem:[#allocation5 + $0x350] sm:$0xff]
    %v1618 = vld [vmem:[#allocation5 + $0x358] sm:$0xff]
    %v1619 = vld [vmem:[#allocation5 + $0x360] sm:$0xff]
    %v1620 = vld [vmem:[#allocation5 + $0x368] sm:$0xff]
    %v1621 = vld [vmem:[#allocation5 + $0x370] sm:$0xff]
    %v1622 = vld [vmem:[#allocation5 + $0x378] sm:$0xff]
    %v1623 = vld [vmem:[#allocation5 + $0x380] sm:$0xff]
    %v1624 = vld [vmem:[#allocation5 + $0x388] sm:$0xff]
    %v1625 = vld [vmem:[#allocation5 + $0x390] sm:$0xff]
    %v1626 = vld [vmem:[#allocation5 + $0x398] sm:$0xff]
    %v1627 = vld [vmem:[#allocation5 + $0x3a0] sm:$0xff]
    %v1628 = vld [vmem:[#allocation5 + $0x3a8] sm:$0xff]
    %v1629 = vld [vmem:[#allocation5 + $0x3b0] sm:$0xff]
    %v1630 = vld [vmem:[#allocation5 + $0x3b8] sm:$0xff]
    %v1631 = vld [vmem:[#allocation5 + $0x3c0] sm:$0xff]
    %v1632 = vld [vmem:[#allocation5 + $0x3c8] sm:$0xff]
    %v1633 = vld [vmem:[#allocation5 + $0x3d0] sm:$0xff]
    %v1634 = vld [vmem:[#allocation5 + $0x3d8] sm:$0xff]
    %v1635 = vld [vmem:[#allocation5 + $0x3e0] sm:$0xff]
    %v1636 = vld [vmem:[#allocation5 + $0x3e8] sm:$0xff]
    %v1637 = vld [vmem:[#allocation5 + $0x3f0] sm:$0xff]
    %v1638 = vld [vmem:[#allocation5 + $0x3f8] sm:$0xff]
    %v1639 = vld [vmem:[#allocation5 + $0x400] sm:$0xff]
    %v1640 = vld [vmem:[#allocation5 + $0x408] sm:$0xff]
    %v1641 = vld [vmem:[#allocation5 + $0x410] sm:$0xff]
    %v1642 = vld [vmem:[#allocation5 + $0x418] sm:$0xff]
    %v1643 = vld [vmem:[#allocation5 + $0x420] sm:$0xff]
    %v1644 = vld [vmem:[#allocation5 + $0x428] sm:$0xff]
    %v1645 = vld [vmem:[#allocation5 + $0x430] sm:$0xff]
    %v1646 = vld [vmem:[#allocation5 + $0x438] sm:$0xff]
    %v1647 = vld [vmem:[#allocation5 + $0x440] sm:$0xff]
    %v1648 = vld [vmem:[#allocation5 + $0x448] sm:$0xff]
    %v1649 = vld [vmem:[#allocation5 + $0x450] sm:$0xff]
    %v1650 = vld [vmem:[#allocation5 + $0x458] sm:$0xff]
    %v1651 = vld [vmem:[#allocation5 + $0x460] sm:$0xff]
    %v1652 = vld [vmem:[#allocation5 + $0x468] sm:$0xff]
    %v1653 = vld [vmem:[#allocation5 + $0x470] sm:$0xff]
    %v1654 = vld [vmem:[#allocation5 + $0x478] sm:$0xff]
    %v1655 = vld [vmem:[#allocation5 + $0x480] sm:$0xff]
    %v1656 = vld [vmem:[#allocation5 + $0x488] sm:$0xff]
    %v1657 = vld [vmem:[#allocation5 + $0x490] sm:$0xff]
    %v1658 = vld [vmem:[#allocation5 + $0x498] sm:$0xff]
    %v1659 = vld [vmem:[#allocation5 + $0x4a0] sm:$0xff]
    %v1660 = vld [vmem:[#allocation5 + $0x4a8] sm:$0xff]
    %v1661 = vld [vmem:[#allocation5 + $0x4b0] sm:$0xff]
    %v1662 = vld [vmem:[#allocation5 + $0x4b8] sm:$0xff]
    %v1663 = vld [vmem:[#allocation5 + $0x4c0] sm:$0xff]
    %v1664 = vld [vmem:[#allocation5 + $0x4c8] sm:$0xff]
    %v1665 = vld [vmem:[#allocation5 + $0x4d0] sm:$0xff]
    %v1666 = vld [vmem:[#allocation5 + $0x4d8] sm:$0xff]
    %v1667 = vld [vmem:[#allocation5 + $0x4e0] sm:$0xff]
    %v1668 = vld [vmem:[#allocation5 + $0x4e8] sm:$0xff]
    %v1669 = vld [vmem:[#allocation5 + $0x4f0] sm:$0xff]
    %v1670 = vld [vmem:[#allocation5 + $0x4f8] sm:$0xff]
    %v1671 = vld [vmem:[#allocation5 + $0x500] sm:$0xff]
    %v1672 = vld [vmem:[#allocation5 + $0x508] sm:$0xff]
    %v1673 = vld [vmem:[#allocation5 + $0x510] sm:$0xff]
    %v1674 = vld [vmem:[#allocation5 + $0x518] sm:$0xff]
    %v1675 = vld [vmem:[#allocation5 + $0x520] sm:$0xff]
    %v1676 = vld [vmem:[#allocation5 + $0x528] sm:$0xff]
    %v1677 = vld [vmem:[#allocation5 + $0x530] sm:$0xff]
    %v1678 = vld [vmem:[#allocation5 + $0x538] sm:$0xff]
    %v1679 = vld [vmem:[#allocation5 + $0x540] sm:$0xff]
    %v1680 = vld [vmem:[#allocation5 + $0x548] sm:$0xff]
    %v1681 = vld [vmem:[#allocation5 + $0x550] sm:$0xff]
    %v1682 = vld [vmem:[#allocation5 + $0x558] sm:$0xff]
    %v1683 = vld [vmem:[#allocation5 + $0x560] sm:$0xff]
    %v1684 = vld [vmem:[#allocation5 + $0x568] sm:$0xff]
    %v1685 = vld [vmem:[#allocation5 + $0x570] sm:$0xff]
    %v1686 = vld [vmem:[#allocation5 + $0x578] sm:$0xff]
    %v1687 = vld [vmem:[#allocation5 + $0x580] sm:$0xff]
    %v1688 = vld [vmem:[#allocation5 + $0x588] sm:$0xff]
    %v1689 = vld [vmem:[#allocation5 + $0x590] sm:$0xff]
    %v1690 = vld [vmem:[#allocation5 + $0x598] sm:$0xff]
    %v1691 = vld [vmem:[#allocation5 + $0x5a0] sm:$0xff]
    %v1692 = vld [vmem:[#allocation5 + $0x5a8] sm:$0xff]
    %v1693 = vld [vmem:[#allocation5 + $0x5b0] sm:$0xff]
    %v1694 = vld [vmem:[#allocation5 + $0x5b8] sm:$0xff]
    %v1695 = vld [vmem:[#allocation5 + $0x5c0] sm:$0xff]
    %v1696 = vld [vmem:[#allocation5 + $0x5c8] sm:$0xff]
    %v1697 = vld [vmem:[#allocation5 + $0x5d0] sm:$0xff]
    %v1698 = vld [vmem:[#allocation5 + $0x5d8] sm:$0xff]
    %v1699 = vld [vmem:[#allocation5 + $0x5e0] sm:$0xff]
    %v1700 = vld [vmem:[#allocation5 + $0x5e8] sm:$0xff]
    %v1701 = vld [vmem:[#allocation5 + $0x5f0] sm:$0xff]
    %v1702 = vld [vmem:[#allocation5 + $0x5f8] sm:$0xff]
    %v1703 = vld [vmem:[#allocation5 + $0x600] sm:$0xff]
    %v1704 = vld [vmem:[#allocation5 + $0x608] sm:$0xff]
    %v1705 = vld [vmem:[#allocation5 + $0x610] sm:$0xff]
    %v1706 = vld [vmem:[#allocation5 + $0x618] sm:$0xff]
    %v1707 = vld [vmem:[#allocation5 + $0x620] sm:$0xff]
    %v1708 = vld [vmem:[#allocation5 + $0x628] sm:$0xff]
    %v1709 = vld [vmem:[#allocation5 + $0x630] sm:$0xff]
    %v1710 = vld [vmem:[#allocation5 + $0x638] sm:$0xff]
    %v1711 = vld [vmem:[#allocation5 + $0x640] sm:$0xff]
    %v1712 = vld [vmem:[#allocation5 + $0x648] sm:$0xff]
    %v1713 = vld [vmem:[#allocation5 + $0x650] sm:$0xff]
    %v1714 = vld [vmem:[#allocation5 + $0x658] sm:$0xff]
    %v1715 = vld [vmem:[#allocation5 + $0x660] sm:$0xff]
    %v1716 = vld [vmem:[#allocation5 + $0x668] sm:$0xff]
    %v1717 = vld [vmem:[#allocation5 + $0x670] sm:$0xff]
    %v1718 = vld [vmem:[#allocation5 + $0x678] sm:$0xff]
    %v1719 = vld [vmem:[#allocation5 + $0x680] sm:$0xff]
    %v1720 = vld [vmem:[#allocation5 + $0x688] sm:$0xff]
    %v1721 = vld [vmem:[#allocation5 + $0x690] sm:$0xff]
    %v1722 = vld [vmem:[#allocation5 + $0x698] sm:$0xff]
    %v1723 = vld [vmem:[#allocation5 + $0x6a0] sm:$0xff]
    %v1724 = vld [vmem:[#allocation5 + $0x6a8] sm:$0xff]
    %v1725 = vld [vmem:[#allocation5 + $0x6b0] sm:$0xff]
    %v1726 = vld [vmem:[#allocation5 + $0x6b8] sm:$0xff]
    %v1727 = vld [vmem:[#allocation5 + $0x6c0] sm:$0xff]
    %v1728 = vld [vmem:[#allocation5 + $0x6c8] sm:$0xff]
    %v1729 = vld [vmem:[#allocation5 + $0x6d0] sm:$0xff]
    %v1730 = vld [vmem:[#allocation5 + $0x6d8] sm:$0xff]
    %v1731 = vld [vmem:[#allocation5 + $0x6e0] sm:$0xff]
    %v1732 = vld [vmem:[#allocation5 + $0x6e8] sm:$0xff]
    %v1733 = vld [vmem:[#allocation5 + $0x6f0] sm:$0xff]
    %v1734 = vld [vmem:[#allocation5 + $0x6f8] sm:$0xff]
    %v1735 = vld [vmem:[#allocation5 + $0x700] sm:$0xff]
    %v1736 = vld [vmem:[#allocation5 + $0x708] sm:$0xff]
    %v1737 = vld [vmem:[#allocation5 + $0x710] sm:$0xff]
    %v1738 = vld [vmem:[#allocation5 + $0x718] sm:$0xff]
    %v1739 = vld [vmem:[#allocation5 + $0x720] sm:$0xff]
    %v1740 = vld [vmem:[#allocation5 + $0x728] sm:$0xff]
    %v1741 = vld [vmem:[#allocation5 + $0x730] sm:$0xff]
    %v1742 = vld [vmem:[#allocation5 + $0x738] sm:$0xff]
    %v1743 = vld [vmem:[#allocation5 + $0x740] sm:$0xff]
    %v1744 = vld [vmem:[#allocation5 + $0x748] sm:$0xff]
    %v1745 = vld [vmem:[#allocation5 + $0x750] sm:$0xff]
    %v1746 = vld [vmem:[#allocation5 + $0x758] sm:$0xff]
    %v1747 = vld [vmem:[#allocation5 + $0x760] sm:$0xff]
    %v1748 = vld [vmem:[#allocation5 + $0x768] sm:$0xff]
    %v1749 = vld [vmem:[#allocation5 + $0x770] sm:$0xff]
    %v1750 = vld [vmem:[#allocation5 + $0x778] sm:$0xff]
    %v1751 = vld [vmem:[#allocation5 + $0x780] sm:$0xff]
    %v1752 = vld [vmem:[#allocation5 + $0x788] sm:$0xff]
    %v1753 = vld [vmem:[#allocation5 + $0x790] sm:$0xff]
    %v1754 = vld [vmem:[#allocation5 + $0x798] sm:$0xff]
    %v1755 = vld [vmem:[#allocation5 + $0x7a0] sm:$0xff]
    %v1756 = vld [vmem:[#allocation5 + $0x7a8] sm:$0xff]
    %v1757 = vld [vmem:[#allocation5 + $0x7b0] sm:$0xff]
    %v1758 = vld [vmem:[#allocation5 + $0x7b8] sm:$0xff]
    %v1759 = vld [vmem:[#allocation5 + $0x7c0] sm:$0xff]
    %v1760 = vld [vmem:[#allocation5 + $0x7c8] sm:$0xff]
    %v1761 = vld [vmem:[#allocation5 + $0x7d0] sm:$0xff]
    %v1762 = vld [vmem:[#allocation5 + $0x7d8] sm:$0xff]
    %v1763 = vld [vmem:[#allocation5 + $0x7e0] sm:$0xff]
    %v1764 = vld [vmem:[#allocation5 + $0x7e8] sm:$0xff]
    %v1765 = vld [vmem:[#allocation5 + $0x7f0] sm:$0xff]
    %v1766 = vld [vmem:[#allocation5 + $0x7f8] sm:$0xff]
    %v1767 = vld [vmem:[#allocation5 + $0x800] sm:$0xff]
    %v1768 = vld [vmem:[#allocation5 + $0x808] sm:$0xff]
    %v1769 = vld [vmem:[#allocation5 + $0x810] sm:$0xff]
    %v1770 = vld [vmem:[#allocation5 + $0x818] sm:$0xff]
    %v1771 = vld [vmem:[#allocation5 + $0x820] sm:$0xff]
    %v1772 = vld [vmem:[#allocation5 + $0x828] sm:$0xff]
    %v1773 = vld [vmem:[#allocation5 + $0x830] sm:$0xff]
    %v1774 = vld [vmem:[#allocation5 + $0x838] sm:$0xff]
    %v1775 = vld [vmem:[#allocation5 + $0x840] sm:$0xff]
    %v1776 = vld [vmem:[#allocation5 + $0x848] sm:$0xff]
    %v1777 = vld [vmem:[#allocation5 + $0x850] sm:$0xff]
    %v1778 = vld [vmem:[#allocation5 + $0x858] sm:$0xff]
    %v1779 = vld [vmem:[#allocation5 + $0x860] sm:$0xff]
    %v1780 = vld [vmem:[#allocation5 + $0x868] sm:$0xff]
    %v1781 = vld [vmem:[#allocation5 + $0x870] sm:$0xff]
    %v1782 = vld [vmem:[#allocation5 + $0x878] sm:$0xff]
    %v1783 = vld [vmem:[#allocation5 + $0x880] sm:$0xff]
    %v1784 = vld [vmem:[#allocation5 + $0x888] sm:$0xff]
    %v1785 = vld [vmem:[#allocation5 + $0x890] sm:$0xff]
    %v1786 = vld [vmem:[#allocation5 + $0x898] sm:$0xff]
    %v1787 = vld [vmem:[#allocation5 + $0x8a0] sm:$0xff]
    %v1788 = vld [vmem:[#allocation5 + $0x8a8] sm:$0xff]
    %v1789 = vld [vmem:[#allocation5 + $0x8b0] sm:$0xff]
    %v1790 = vld [vmem:[#allocation5 + $0x8b8] sm:$0xff]
    %v1791 = vld [vmem:[#allocation5 + $0x8c0] sm:$0xff]
    %v1792 = vld [vmem:[#allocation5 + $0x8c8] sm:$0xff]
    %v1793 = vld [vmem:[#allocation5 + $0x8d0] sm:$0xff]
    %v1794 = vld [vmem:[#allocation5 + $0x8d8] sm:$0xff]
    %v1795 = vld [vmem:[#allocation5 + $0x8e0] sm:$0xff]
    %v1796 = vld [vmem:[#allocation5 + $0x8e8] sm:$0xff]
    %v1797 = vld [vmem:[#allocation5 + $0x8f0] sm:$0xff]
    %v1798 = vld [vmem:[#allocation5 + $0x8f8] sm:$0xff]
    %v1799 = vld [vmem:[#allocation5 + $0x900] sm:$0xff]
    %v1800 = vld [vmem:[#allocation5 + $0x908] sm:$0xff]
    %v1801 = vld [vmem:[#allocation5 + $0x910] sm:$0xff]
    %v1802 = vld [vmem:[#allocation5 + $0x918] sm:$0xff]
    %v1803 = vld [vmem:[#allocation5 + $0x920] sm:$0xff]
    %v1804 = vld [vmem:[#allocation5 + $0x928] sm:$0xff]
    %v1805 = vld [vmem:[#allocation5 + $0x930] sm:$0xff]
    %v1806 = vld [vmem:[#allocation5 + $0x938] sm:$0xff]
    %v1807 = vld [vmem:[#allocation5 + $0x940] sm:$0xff]
    %v1808 = vld [vmem:[#allocation5 + $0x948] sm:$0xff]
    %v1809 = vld [vmem:[#allocation5 + $0x950] sm:$0xff]
    %v1810 = vld [vmem:[#allocation5 + $0x958] sm:$0xff]
    %v1811 = vld [vmem:[#allocation5 + $0x960] sm:$0xff]
    %v1812 = vld [vmem:[#allocation5 + $0x968] sm:$0xff]
    %v1813 = vld [vmem:[#allocation5 + $0x970] sm:$0xff]
    %v1814 = vld [vmem:[#allocation5 + $0x978] sm:$0xff]
    %v1815 = vld [vmem:[#allocation5 + $0x980] sm:$0xff]
    %v1816 = vld [vmem:[#allocation5 + $0x988] sm:$0xff]
    %v1817 = vld [vmem:[#allocation5 + $0x990] sm:$0xff]
    %v1818 = vld [vmem:[#allocation5 + $0x998] sm:$0xff]
    %v1819 = vld [vmem:[#allocation5 + $0x9a0] sm:$0xff]
    %v1820 = vld [vmem:[#allocation5 + $0x9a8] sm:$0xff]
    %v1821 = vld [vmem:[#allocation5 + $0x9b0] sm:$0xff]
    %v1822 = vld [vmem:[#allocation5 + $0x9b8] sm:$0xff]
    %v1823 = vld [vmem:[#allocation5 + $0x9c0] sm:$0xff]
    %v1824 = vld [vmem:[#allocation5 + $0x9c8] sm:$0xff]
    %v1825 = vld [vmem:[#allocation5 + $0x9d0] sm:$0xff]
    %v1826 = vld [vmem:[#allocation5 + $0x9d8] sm:$0xff]
    %v1827 = vld [vmem:[#allocation5 + $0x9e0] sm:$0xff]
    %v1828 = vld [vmem:[#allocation5 + $0x9e8] sm:$0xff]
    %v1829 = vld [vmem:[#allocation5 + $0x9f0] sm:$0xff]
    %v1830 = vld [vmem:[#allocation5 + $0x9f8] sm:$0xff]
    %v1831 = vld [vmem:[#allocation5 + $0xa00] sm:$0xff]
    %v1832 = vld [vmem:[#allocation5 + $0xa08] sm:$0xff]
    %v1833 = vld [vmem:[#allocation5 + $0xa10] sm:$0xff]
    %v1834 = vld [vmem:[#allocation5 + $0xa18] sm:$0xff]
    %v1835 = vld [vmem:[#allocation5 + $0xa20] sm:$0xff]
    %v1836 = vld [vmem:[#allocation5 + $0xa28] sm:$0xff]
    %v1837 = vld [vmem:[#allocation5 + $0xa30] sm:$0xff]
    %v1838 = vld [vmem:[#allocation5 + $0xa38] sm:$0xff]
    %v1839 = vld [vmem:[#allocation5 + $0xa40] sm:$0xff]
    %v1840 = vld [vmem:[#allocation5 + $0xa48] sm:$0xff]
    %v1841 = vld [vmem:[#allocation5 + $0xa50] sm:$0xff]
    %v1842 = vld [vmem:[#allocation5 + $0xa58] sm:$0xff]
    %v1843 = vld [vmem:[#allocation5 + $0xa60] sm:$0xff]
    %v1844 = vld [vmem:[#allocation5 + $0xa68] sm:$0xff]
    %v1845 = vld [vmem:[#allocation5 + $0xa70] sm:$0xff]
    %v1846 = vld [vmem:[#allocation5 + $0xa78] sm:$0xff]
    %v1847 = vld [vmem:[#allocation5 + $0xa80] sm:$0xff]
    %v1848 = vld [vmem:[#allocation5 + $0xa88] sm:$0xff]
    %v1849 = vld [vmem:[#allocation5 + $0xa90] sm:$0xff]
    %v1850 = vld [vmem:[#allocation5 + $0xa98] sm:$0xff]
    %v1851 = vld [vmem:[#allocation5 + $0xaa0] sm:$0xff]
    %v1852 = vld [vmem:[#allocation5 + $0xaa8] sm:$0xff]
    %v1853 = vld [vmem:[#allocation5 + $0xab0] sm:$0xff]
    %v1854 = vld [vmem:[#allocation5 + $0xab8] sm:$0xff]
    %v1855 = vld [vmem:[#allocation5 + $0xac0] sm:$0xff]
    %v1856 = vld [vmem:[#allocation5 + $0xac8] sm:$0xff]
    %v1857 = vld [vmem:[#allocation5 + $0xad0] sm:$0xff]
    %v1858 = vld [vmem:[#allocation5 + $0xad8] sm:$0xff]
    %v1859 = vld [vmem:[#allocation5 + $0xae0] sm:$0xff]
    %v1860 = vld [vmem:[#allocation5 + $0xae8] sm:$0xff]
    %v1861 = vld [vmem:[#allocation5 + $0xaf0] sm:$0xff]
    %v1862 = vld [vmem:[#allocation5 + $0xaf8] sm:$0xff]
    %v1863 = vld [vmem:[#allocation5 + $0xb00] sm:$0xff]
    %v1864 = vld [vmem:[#allocation5 + $0xb08] sm:$0xff]
    %v1865 = vld [vmem:[#allocation5 + $0xb10] sm:$0xff]
    %v1866 = vld [vmem:[#allocation5 + $0xb18] sm:$0xff]
    %v1867 = vld [vmem:[#allocation5 + $0xb20] sm:$0xff]
    %v1868 = vld [vmem:[#allocation5 + $0xb28] sm:$0xff]
    %v1869 = vld [vmem:[#allocation5 + $0xb30] sm:$0xff]
    %v1870 = vld [vmem:[#allocation5 + $0xb38] sm:$0xff]
    %v1871 = vld [vmem:[#allocation5 + $0xb40] sm:$0xff]
    %v1872 = vld [vmem:[#allocation5 + $0xb48] sm:$0xff]
    %v1873 = vld [vmem:[#allocation5 + $0xb50] sm:$0xff]
    %v1874 = vld [vmem:[#allocation5 + $0xb58] sm:$0xff]
    %v1875 = vld [vmem:[#allocation5 + $0xb60] sm:$0xff]
    %v1876 = vld [vmem:[#allocation5 + $0xb68] sm:$0xff]
    %v1877 = vld [vmem:[#allocation5 + $0xb70] sm:$0xff]
    %v1878 = vld [vmem:[#allocation5 + $0xb78] sm:$0xff]
    %v1879 = vld [vmem:[#allocation5 + $0xb80] sm:$0xff]
    %v1880 = vld [vmem:[#allocation5 + $0xb88] sm:$0xff]
    %v1881 = vld [vmem:[#allocation5 + $0xb90] sm:$0xff]
    %v1882 = vld [vmem:[#allocation5 + $0xb98] sm:$0xff]
    %v1883 = vld [vmem:[#allocation5 + $0xba0] sm:$0xff]
    %v1884 = vld [vmem:[#allocation5 + $0xba8] sm:$0xff]
    %v1885 = vld [vmem:[#allocation5 + $0xbb0] sm:$0xff]
    %v1886 = vld [vmem:[#allocation5 + $0xbb8] sm:$0xff]
    %v1887 = vld [vmem:[#allocation5 + $0xbc0] sm:$0xff]
    %v1888 = vld [vmem:[#allocation5 + $0xbc8] sm:$0xff]
    %v1889 = vld [vmem:[#allocation5 + $0xbd0] sm:$0xff]
    %v1890 = vld [vmem:[#allocation5 + $0xbd8] sm:$0xff]
    %v1891 = vld [vmem:[#allocation5 + $0xbe0] sm:$0xff]
    %v1892 = vld [vmem:[#allocation5 + $0xbe8] sm:$0xff]
    %v1893 = vld [vmem:[#allocation5 + $0xbf0] sm:$0xff]
    %v1894 = vld [vmem:[#allocation5 + $0xbf8] sm:$0xff]
    %v1895 = vld [vmem:[#allocation5 + $0xc00] sm:$0xff]
    %v1896 = vld [vmem:[#allocation5 + $0xc08] sm:$0xff]
    %v1897 = vld [vmem:[#allocation5 + $0xc10] sm:$0xff]
    %v1898 = vld [vmem:[#allocation5 + $0xc18] sm:$0xff]
    %v1899 = vld [vmem:[#allocation5 + $0xc20] sm:$0xff]
    %v1900 = vld [vmem:[#allocation5 + $0xc28] sm:$0xff]
    %v1901 = vld [vmem:[#allocation5 + $0xc30] sm:$0xff]
    %v1902 = vld [vmem:[#allocation5 + $0xc38] sm:$0xff]
    %v1903 = vld [vmem:[#allocation5 + $0xc40] sm:$0xff]
    %v1904 = vld [vmem:[#allocation5 + $0xc48] sm:$0xff]
    %v1905 = vld [vmem:[#allocation5 + $0xc50] sm:$0xff]
    %v1906 = vld [vmem:[#allocation5 + $0xc58] sm:$0xff]
    %v1907 = vld [vmem:[#allocation5 + $0xc60] sm:$0xff]
    %v1908 = vld [vmem:[#allocation5 + $0xc68] sm:$0xff]
    %v1909 = vld [vmem:[#allocation5 + $0xc70] sm:$0xff]
    %v1910 = vld [vmem:[#allocation5 + $0xc78] sm:$0xff]
    %v1911 = vld [vmem:[#allocation5 + $0xc80] sm:$0xff]
    %v1912 = vld [vmem:[#allocation5 + $0xc88] sm:$0xff]
    %v1913 = vld [vmem:[#allocation5 + $0xc90] sm:$0xff]
    %v1914 = vld [vmem:[#allocation5 + $0xc98] sm:$0xff]
    %v1915 = vld [vmem:[#allocation5 + $0xca0] sm:$0xff]
    %v1916 = vld [vmem:[#allocation5 + $0xca8] sm:$0xff]
    %v1917 = vld [vmem:[#allocation5 + $0xcb0] sm:$0xff]
    %v1918 = vld [vmem:[#allocation5 + $0xcb8] sm:$0xff]
    %v1919 = vld [vmem:[#allocation5 + $0xcc0] sm:$0xff]
    %v1920 = vld [vmem:[#allocation5 + $0xcc8] sm:$0xff]
    %v1921 = vld [vmem:[#allocation5 + $0xcd0] sm:$0xff]
    %v1922 = vld [vmem:[#allocation5 + $0xcd8] sm:$0xff]
    %v1923 = vld [vmem:[#allocation5 + $0xce0] sm:$0xff]
    %v1924 = vld [vmem:[#allocation5 + $0xce8] sm:$0xff]
    %v1925 = vld [vmem:[#allocation5 + $0xcf0] sm:$0xff]
    %v1926 = vld [vmem:[#allocation5 + $0xcf8] sm:$0xff]
    %v1927 = vld [vmem:[#allocation5 + $0xd00] sm:$0xff]
    %v1928 = vld [vmem:[#allocation5 + $0xd08] sm:$0xff]
    %v1929 = vld [vmem:[#allocation5 + $0xd10] sm:$0xff]
    %v1930 = vld [vmem:[#allocation5 + $0xd18] sm:$0xff]
    %v1931 = vld [vmem:[#allocation5 + $0xd20] sm:$0xff]
    %v1932 = vld [vmem:[#allocation5 + $0xd28] sm:$0xff]
    %v1933 = vld [vmem:[#allocation5 + $0xd30] sm:$0xff]
    %v1934 = vld [vmem:[#allocation5 + $0xd38] sm:$0xff]
    %v1935 = vld [vmem:[#allocation5 + $0xd40] sm:$0xff]
    %v1936 = vld [vmem:[#allocation5 + $0xd48] sm:$0xff]
    %v1937 = vld [vmem:[#allocation5 + $0xd50] sm:$0xff]
    %v1938 = vld [vmem:[#allocation5 + $0xd58] sm:$0xff]
    %v1939 = vld [vmem:[#allocation5 + $0xd60] sm:$0xff]
    %v1940 = vld [vmem:[#allocation5 + $0xd68] sm:$0xff]
    %v1941 = vld [vmem:[#allocation5 + $0xd70] sm:$0xff]
    %v1942 = vld [vmem:[#allocation5 + $0xd78] sm:$0xff]
    %v1943 = vld [vmem:[#allocation5 + $0xd80] sm:$0xff]
    %v1944 = vld [vmem:[#allocation5 + $0xd88] sm:$0xff]
    %v1945 = vld [vmem:[#allocation5 + $0xd90] sm:$0xff]
    %v1946 = vld [vmem:[#allocation5 + $0xd98] sm:$0xff]
    %v1947 = vld [vmem:[#allocation5 + $0xda0] sm:$0xff]
    %v1948 = vld [vmem:[#allocation5 + $0xda8] sm:$0xff]
    %v1949 = vld [vmem:[#allocation5 + $0xdb0] sm:$0xff]
    %v1950 = vld [vmem:[#allocation5 + $0xdb8] sm:$0xff]
    %v1951 = vld [vmem:[#allocation5 + $0xdc0] sm:$0xff]
    %v1952 = vld [vmem:[#allocation5 + $0xdc8] sm:$0xff]
    %v1953 = vld [vmem:[#allocation5 + $0xdd0] sm:$0xff]
    %v1954 = vld [vmem:[#allocation5 + $0xdd8] sm:$0xff]
    %v1955 = vld [vmem:[#allocation5 + $0xde0] sm:$0xff]
    %v1956 = vld [vmem:[#allocation5 + $0xde8] sm:$0xff]
    %v1957 = vld [vmem:[#allocation5 + $0xdf0] sm:$0xff]
    %v1958 = vld [vmem:[#allocation5 + $0xdf8] sm:$0xff]
    %v1959 = vld [vmem:[#allocation5 + $0xe00] sm:$0xff]
    %v1960 = vld [vmem:[#allocation5 + $0xe08] sm:$0xff]
    %v1961 = vld [vmem:[#allocation5 + $0xe10] sm:$0xff]
    %v1962 = vld [vmem:[#allocation5 + $0xe18] sm:$0xff]
    %v1963 = vld [vmem:[#allocation5 + $0xe20] sm:$0xff]
    %v1964 = vld [vmem:[#allocation5 + $0xe28] sm:$0xff]
    %v1965 = vld [vmem:[#allocation5 + $0xe30] sm:$0xff]
    %v1966 = vld [vmem:[#allocation5 + $0xe38] sm:$0xff]
    %v1967 = vld [vmem:[#allocation5 + $0xe40] sm:$0xff]
    %v1968 = vld [vmem:[#allocation5 + $0xe48] sm:$0xff]
    %v1969 = vld [vmem:[#allocation5 + $0xe50] sm:$0xff]
    %v1970 = vld [vmem:[#allocation5 + $0xe58] sm:$0xff]
    %v1971 = vld [vmem:[#allocation5 + $0xe60] sm:$0xff]
    %v1972 = vld [vmem:[#allocation5 + $0xe68] sm:$0xff]
    %v1973 = vld [vmem:[#allocation5 + $0xe70] sm:$0xff]
    %v1974 = vld [vmem:[#allocation5 + $0xe78] sm:$0xff]
    %v1975 = vld [vmem:[#allocation5 + $0xe80] sm:$0xff]
    %v1976 = vld [vmem:[#allocation5 + $0xe88] sm:$0xff]
    %v1977 = vld [vmem:[#allocation5 + $0xe90] sm:$0xff]
    %v1978 = vld [vmem:[#allocation5 + $0xe98] sm:$0xff]
    %v1979 = vld [vmem:[#allocation5 + $0xea0] sm:$0xff]
    %v1980 = vld [vmem:[#allocation5 + $0xea8] sm:$0xff]
    %v1981 = vld [vmem:[#allocation5 + $0xeb0] sm:$0xff]
    %v1982 = vld [vmem:[#allocation5 + $0xeb8] sm:$0xff]
    %v1983 = vld [vmem:[#allocation5 + $0xec0] sm:$0xff]
    %v1984 = vld [vmem:[#allocation5 + $0xec8] sm:$0xff]
    %v1985 = vld [vmem:[#allocation5 + $0xed0] sm:$0xff]
    %v1986 = vld [vmem:[#allocation5 + $0xed8] sm:$0xff]
    %v1987 = vld [vmem:[#allocation5 + $0xee0] sm:$0xff]
    %v1988 = vld [vmem:[#allocation5 + $0xee8] sm:$0xff]
    %v1989 = vld [vmem:[#allocation5 + $0xef0] sm:$0xff]
    %v1990 = vld [vmem:[#allocation5 + $0xef8] sm:$0xff]
    %v1991 = vld [vmem:[#allocation5 + $0xf00] sm:$0xff]
    %v1992 = vld [vmem:[#allocation5 + $0xf08] sm:$0xff]
    %v1993 = vld [vmem:[#allocation5 + $0xf10] sm:$0xff]
    %v1994 = vld [vmem:[#allocation5 + $0xf18] sm:$0xff]
    %v1995 = vld [vmem:[#allocation5 + $0xf20] sm:$0xff]
    %v1996 = vld [vmem:[#allocation5 + $0xf28] sm:$0xff]
    %v1997 = vld [vmem:[#allocation5 + $0xf30] sm:$0xff]
    %v1998 = vld [vmem:[#allocation5 + $0xf38] sm:$0xff]
    %v1999 = vld [vmem:[#allocation5 + $0xf40] sm:$0xff]
    %v2000 = vld [vmem:[#allocation5 + $0xf48] sm:$0xff]
    %v2001 = vld [vmem:[#allocation5 + $0xf50] sm:$0xff]
    %v2002 = vld [vmem:[#allocation5 + $0xf58] sm:$0xff]
    %v2003 = vld [vmem:[#allocation5 + $0xf60] sm:$0xff]
    %v2004 = vld [vmem:[#allocation5 + $0xf68] sm:$0xff]
    %v2005 = vld [vmem:[#allocation5 + $0xf70] sm:$0xff]
    %v2006 = vld [vmem:[#allocation5 + $0xf78] sm:$0xff]
    %v2007 = vld [vmem:[#allocation5 + $0xf80] sm:$0xff]
    %v2008 = vld [vmem:[#allocation5 + $0xf88] sm:$0xff]
    %v2009 = vld [vmem:[#allocation5 + $0xf90] sm:$0xff]
    %v2010 = vld [vmem:[#allocation5 + $0xf98] sm:$0xff]
    %v2011 = vld [vmem:[#allocation5 + $0xfa0] sm:$0xff]
    %v2012 = vld [vmem:[#allocation5 + $0xfa8] sm:$0xff]
    %v2013 = vld [vmem:[#allocation5 + $0xfb0] sm:$0xff]
    %v2014 = vld [vmem:[#allocation5 + $0xfb8] sm:$0xff]
    %v2015 = vld [vmem:[#allocation5 + $0xfc0] sm:$0xff]
    %v2016 = vld [vmem:[#allocation5 + $0xfc8] sm:$0xff]
    %v2017 = vld [vmem:[#allocation5 + $0xfd0] sm:$0xff]
    %v2018 = vld [vmem:[#allocation5 + $0xfd8] sm:$0xff]
    %v2019 = vld [vmem:[#allocation5 + $0xfe0] sm:$0xff]
    %v2020 = vld [vmem:[#allocation5 + $0xfe8] sm:$0xff]
    %v2021 = vld [vmem:[#allocation5 + $0xff0] sm:$0xff]
    %v2022 = vld [vmem:[#allocation5 + $0xff8] sm:$0xff]
    %v2023 = vld [vmem:[#allocation5 + $0x1000] sm:$0xff]
    %v2024 = vld [vmem:[#allocation5 + $0x1008] sm:$0xff]
    %v2025 = vld [vmem:[#allocation5 + $0x1010] sm:$0xff]
    %v2026 = vld [vmem:[#allocation5 + $0x1018] sm:$0xff]
    %v2027 = vld [vmem:[#allocation5 + $0x1020] sm:$0xff]
    %v2028 = vld [vmem:[#allocation5 + $0x1028] sm:$0xff]
    %v2029 = vld [vmem:[#allocation5 + $0x1030] sm:$0xff]
    %v2030 = vld [vmem:[#allocation5 + $0x1038] sm:$0xff]
    %v2031 = vld [vmem:[#allocation5 + $0x1040] sm:$0xff]
    %v2032 = vld [vmem:[#allocation5 + $0x1048] sm:$0xff]
    %v2033 = vld [vmem:[#allocation5 + $0x1050] sm:$0xff]
    %v2034 = vld [vmem:[#allocation5 + $0x1058] sm:$0xff]
    %v2035 = vld [vmem:[#allocation5 + $0x1060] sm:$0xff]
    %v2036 = vld [vmem:[#allocation5 + $0x1068] sm:$0xff]
    %v2037 = vld [vmem:[#allocation5 + $0x1070] sm:$0xff]
    %v2038 = vld [vmem:[#allocation5 + $0x1078] sm:$0xff]
    %v2039 = vld [vmem:[#allocation5 + $0x1080] sm:$0xff]
    %v2040 = vld [vmem:[#allocation5 + $0x1088] sm:$0xff]
    %v2041 = vld [vmem:[#allocation5 + $0x1090] sm:$0xff]
    %v2042 = vld [vmem:[#allocation5 + $0x1098] sm:$0xff]
    %v2043 = vld [vmem:[#allocation5 + $0x10a0] sm:$0xff]
    %v2044 = vld [vmem:[#allocation5 + $0x10a8] sm:$0xff]
    %v2045 = vld [vmem:[#allocation5 + $0x10b0] sm:$0xff]
    %v2046 = vld [vmem:[#allocation5 + $0x10b8] sm:$0xff]
    %v2047 = vld [vmem:[#allocation5 + $0x10c0] sm:$0xff]
    %v2048 = vld [vmem:[#allocation5 + $0x10c8] sm:$0xff]
    %v2049 = vld [vmem:[#allocation5 + $0x10d0] sm:$0xff]
    %v2050 = vld [vmem:[#allocation5 + $0x10d8] sm:$0xff]
    %v2051 = vld [vmem:[#allocation5 + $0x10e0] sm:$0xff]
    %v2052 = vld [vmem:[#allocation5 + $0x10e8] sm:$0xff]
    %v2053 = vld [vmem:[#allocation5 + $0x10f0] sm:$0xff]
    %v2054 = vld [vmem:[#allocation5 + $0x10f8] sm:$0xff]
    %v2055 = vld [vmem:[#allocation5 + $0x1100] sm:$0xff]
    %v2056 = vld [vmem:[#allocation5 + $0x1108] sm:$0xff]
    %v2057 = vld [vmem:[#allocation5 + $0x1110] sm:$0xff]
    %v2058 = vld [vmem:[#allocation5 + $0x1118] sm:$0xff]
    %v2059 = vld [vmem:[#allocation5 + $0x1120] sm:$0xff]
    %v2060 = vld [vmem:[#allocation5 + $0x1128] sm:$0xff]
    %v2061 = vld [vmem:[#allocation5 + $0x1130] sm:$0xff]
    %v2062 = vld [vmem:[#allocation5 + $0x1138] sm:$0xff]
    %v2063 = vld [vmem:[#allocation5 + $0x1140] sm:$0xff]
    %v2064 = vld [vmem:[#allocation5 + $0x1148] sm:$0xff]
    %v2065 = vld [vmem:[#allocation5 + $0x1150] sm:$0xff]
    %v2066 = vld [vmem:[#allocation5 + $0x1158] sm:$0xff]
    %v2067 = vld [vmem:[#allocation5 + $0x1160] sm:$0xff]
    %v2068 = vld [vmem:[#allocation5 + $0x1168] sm:$0xff]
    %v2069 = vld [vmem:[#allocation5 + $0x1170] sm:$0xff]
    %v2070 = vld [vmem:[#allocation5 + $0x1178] sm:$0xff]
    %v2071 = vld [vmem:[#allocation5 + $0x1180] sm:$0xff]
    %v2072 = vld [vmem:[#allocation5 + $0x1188] sm:$0xff]
    %v2073 = vld [vmem:[#allocation5 + $0x1190] sm:$0xff]
    %v2074 = vld [vmem:[#allocation5 + $0x1198] sm:$0xff]
    %v2075 = vld [vmem:[#allocation5 + $0x11a0] sm:$0xff]
    %v2076 = vld [vmem:[#allocation5 + $0x11a8] sm:$0xff]
    %v2077 = vld [vmem:[#allocation5 + $0x11b0] sm:$0xff]
    %v2078 = vld [vmem:[#allocation5 + $0x11b8] sm:$0xff]
    %v2079 = vld [vmem:[#allocation5 + $0x11c0] sm:$0xff]
    %v2080 = vld [vmem:[#allocation5 + $0x11c8] sm:$0xff]
    %v2081 = vld [vmem:[#allocation5 + $0x11d0] sm:$0xff]
    %v2082 = vld [vmem:[#allocation5 + $0x11d8] sm:$0xff]
    %v2083 = vld [vmem:[#allocation5 + $0x11e0] sm:$0xff]
    %v2084 = vld [vmem:[#allocation5 + $0x11e8] sm:$0xff]
    %v2085 = vld [vmem:[#allocation5 + $0x11f0] sm:$0xff]
    %v2086 = vld [vmem:[#allocation5 + $0x11f8] sm:$0xff]
    %v2087 = vld [vmem:[#allocation5 + $0x1200] sm:$0xff]
    %v2088 = vld [vmem:[#allocation5 + $0x1208] sm:$0xff]
    %v2089 = vld [vmem:[#allocation5 + $0x1210] sm:$0xff]
    %v2090 = vld [vmem:[#allocation5 + $0x1218] sm:$0xff]
    %v2091 = vld [vmem:[#allocation5 + $0x1220] sm:$0xff]
    %v2092 = vld [vmem:[#allocation5 + $0x1228] sm:$0xff]
    %v2093 = vld [vmem:[#allocation5 + $0x1230] sm:$0xff]
    %v2094 = vld [vmem:[#allocation5 + $0x1238] sm:$0xff]
    %v2095 = vld [vmem:[#allocation5 + $0x1240] sm:$0xff]
    %v2096 = vld [vmem:[#allocation5 + $0x1248] sm:$0xff]
    %v2097 = vld [vmem:[#allocation5 + $0x1250] sm:$0xff]
    %v2098 = vld [vmem:[#allocation5 + $0x1258] sm:$0xff]
    %v2099 = vld [vmem:[#allocation5 + $0x1260] sm:$0xff]
    %v2100 = vld [vmem:[#allocation5 + $0x1268] sm:$0xff]
    %v2101 = vld [vmem:[#allocation5 + $0x1270] sm:$0xff]
    %v2102 = vld [vmem:[#allocation5 + $0x1278] sm:$0xff]
    %v2103 = vld [vmem:[#allocation5 + $0x1280] sm:$0xff]
    %v2104 = vld [vmem:[#allocation5 + $0x1288] sm:$0xff]
    %v2105 = vld [vmem:[#allocation5 + $0x1290] sm:$0xff]
    %v2106 = vld [vmem:[#allocation5 + $0x1298] sm:$0xff]
    %v2107 = vld [vmem:[#allocation5 + $0x12a0] sm:$0xff]
    %v2108 = vld [vmem:[#allocation5 + $0x12a8] sm:$0xff]
    %v2109 = vld [vmem:[#allocation5 + $0x12b0] sm:$0xff]
    %v2110 = vld [vmem:[#allocation5 + $0x12b8] sm:$0xff]
    %v2111 = vld [vmem:[#allocation5 + $0x12c0] sm:$0xff]
    %v2112 = vld [vmem:[#allocation5 + $0x12c8] sm:$0xff]
    %v2113 = vld [vmem:[#allocation5 + $0x12d0] sm:$0xff]
    %v2114 = vld [vmem:[#allocation5 + $0x12d8] sm:$0xff]
    %v2115 = vld [vmem:[#allocation5 + $0x12e0] sm:$0xff]
    %v2116 = vld [vmem:[#allocation5 + $0x12e8] sm:$0xff]
    %v2117 = vld [vmem:[#allocation5 + $0x12f0] sm:$0xff]
    %v2118 = vld [vmem:[#allocation5 + $0x12f8] sm:$0xff]
    %v2119 = vld [vmem:[#allocation5 + $0x1300] sm:$0xff]
    %v2120 = vld [vmem:[#allocation5 + $0x1308] sm:$0xff]
    %v2121 = vld [vmem:[#allocation5 + $0x1310] sm:$0xff]
    %v2122 = vld [vmem:[#allocation5 + $0x1318] sm:$0xff]
    %v2123 = vld [vmem:[#allocation5 + $0x1320] sm:$0xff]
    %v2124 = vld [vmem:[#allocation5 + $0x1328] sm:$0xff]
    %v2125 = vld [vmem:[#allocation5 + $0x1330] sm:$0xff]
    %v2126 = vld [vmem:[#allocation5 + $0x1338] sm:$0xff]
    %v2127 = vld [vmem:[#allocation5 + $0x1340] sm:$0xff]
    %v2128 = vld [vmem:[#allocation5 + $0x1348] sm:$0xff]
    %v2129 = vld [vmem:[#allocation5 + $0x1350] sm:$0xff]
    %v2130 = vld [vmem:[#allocation5 + $0x1358] sm:$0xff]
    %v2131 = vld [vmem:[#allocation5 + $0x1360] sm:$0xff]
    %v2132 = vld [vmem:[#allocation5 + $0x1368] sm:$0xff]
    %v2133 = vld [vmem:[#allocation5 + $0x1370] sm:$0xff]
    %v2134 = vld [vmem:[#allocation5 + $0x1378] sm:$0xff]
    %v2135 = vld [vmem:[#allocation5 + $0x1380] sm:$0xff]
    %v2136 = vld [vmem:[#allocation5 + $0x1388] sm:$0xff]
    %v2137 = vld [vmem:[#allocation5 + $0x1390] sm:$0xff]
    %v2138 = vld [vmem:[#allocation5 + $0x1398] sm:$0xff]
    %v2139 = vld [vmem:[#allocation5 + $0x13a0] sm:$0xff]
    %v2140 = vld [vmem:[#allocation5 + $0x13a8] sm:$0xff]
    %v2141 = vld [vmem:[#allocation5 + $0x13b0] sm:$0xff]
    %v2142 = vld [vmem:[#allocation5 + $0x13b8] sm:$0xff]
    %v2143 = vld [vmem:[#allocation5 + $0x13c0] sm:$0xff]
    %v2144 = vld [vmem:[#allocation5 + $0x13c8] sm:$0xff]
    %v2145 = vld [vmem:[#allocation5 + $0x13d0] sm:$0xff]
    %v2146 = vld [vmem:[#allocation5 + $0x13d8] sm:$0xff]
    %v2147 = vld [vmem:[#allocation5 + $0x13e0] sm:$0xff]
    %v2148 = vld [vmem:[#allocation5 + $0x13e8] sm:$0xff]
    %v2149 = vld [vmem:[#allocation5 + $0x13f0] sm:$0xff]
    %v2150 = vld [vmem:[#allocation5 + $0x13f8] sm:$0xff]
    %v2151 = vld [vmem:[#allocation5 + $0x1400] sm:$0xff]
    %v2152 = vld [vmem:[#allocation5 + $0x1408] sm:$0xff]
    %v2153 = vld [vmem:[#allocation5 + $0x1410] sm:$0xff]
    %v2154 = vld [vmem:[#allocation5 + $0x1418] sm:$0xff]
    %v2155 = vld [vmem:[#allocation5 + $0x1420] sm:$0xff]
    %v2156 = vld [vmem:[#allocation5 + $0x1428] sm:$0xff]
    %v2157 = vld [vmem:[#allocation5 + $0x1430] sm:$0xff]
    %v2158 = vld [vmem:[#allocation5 + $0x1438] sm:$0xff]
    %v2159 = vld [vmem:[#allocation5 + $0x1440] sm:$0xff]
    %v2160 = vld [vmem:[#allocation5 + $0x1448] sm:$0xff]
    %v2161 = vld [vmem:[#allocation5 + $0x1450] sm:$0xff]
    %v2162 = vld [vmem:[#allocation5 + $0x1458] sm:$0xff]
    %v2163 = vld [vmem:[#allocation5 + $0x1460] sm:$0xff]
    %v2164 = vld [vmem:[#allocation5 + $0x1468] sm:$0xff]
    %v2165 = vld [vmem:[#allocation5 + $0x1470] sm:$0xff]
    %v2166 = vld [vmem:[#allocation5 + $0x1478] sm:$0xff]
    %v2167 = vld [vmem:[#allocation5 + $0x1480] sm:$0xff]
    %v2168 = vld [vmem:[#allocation5 + $0x1488] sm:$0xff]
    %v2169 = vld [vmem:[#allocation5 + $0x1490] sm:$0xff]
    %v2170 = vld [vmem:[#allocation5 + $0x1498] sm:$0xff]
    %v2171 = vld [vmem:[#allocation5 + $0x14a0] sm:$0xff]
    %v2172 = vld [vmem:[#allocation5 + $0x14a8] sm:$0xff]
    %v2173 = vld [vmem:[#allocation5 + $0x14b0] sm:$0xff]
    %v2174 = vld [vmem:[#allocation5 + $0x14b8] sm:$0xff]
    %v2175 = vld [vmem:[#allocation5 + $0x14c0] sm:$0xff]
    %v2176 = vld [vmem:[#allocation5 + $0x14c8] sm:$0xff]
    %v2177 = vld [vmem:[#allocation5 + $0x14d0] sm:$0xff]
    %v2178 = vld [vmem:[#allocation5 + $0x14d8] sm:$0xff]
    %v2179 = vld [vmem:[#allocation5 + $0x14e0] sm:$0xff]
    %v2180 = vld [vmem:[#allocation5 + $0x14e8] sm:$0xff]
    %v2181 = vld [vmem:[#allocation5 + $0x14f0] sm:$0xff]
    %v2182 = vld [vmem:[#allocation5 + $0x14f8] sm:$0xff]
    %v2183 = vld [vmem:[#allocation5 + $0x1500] sm:$0xff]
    %v2184 = vld [vmem:[#allocation5 + $0x1508] sm:$0xff]
    %v2185 = vld [vmem:[#allocation5 + $0x1510] sm:$0xff]
    %v2186 = vld [vmem:[#allocation5 + $0x1518] sm:$0xff]
    %v2187 = vld [vmem:[#allocation5 + $0x1520] sm:$0xff]
    %v2188 = vld [vmem:[#allocation5 + $0x1528] sm:$0xff]
    %v2189 = vld [vmem:[#allocation5 + $0x1530] sm:$0xff]
    %v2190 = vld [vmem:[#allocation5 + $0x1538] sm:$0xff]
    %v2191 = vld [vmem:[#allocation5 + $0x1540] sm:$0xff]
    %v2192 = vld [vmem:[#allocation5 + $0x1548] sm:$0xff]
    %v2193 = vld [vmem:[#allocation5 + $0x1550] sm:$0xff]
    %v2194 = vld [vmem:[#allocation5 + $0x1558] sm:$0xff]
    %v2195 = vld [vmem:[#allocation5 + $0x1560] sm:$0xff]
    %v2196 = vld [vmem:[#allocation5 + $0x1568] sm:$0xff]
    %v2197 = vld [vmem:[#allocation5 + $0x1570] sm:$0xff]
    %v2198 = vld [vmem:[#allocation5 + $0x1578] sm:$0xff]
    %v2199 = vld [vmem:[#allocation5 + $0x1580] sm:$0xff]
    %v2200 = vld [vmem:[#allocation5 + $0x1588] sm:$0xff]
    %v2201 = vld [vmem:[#allocation5 + $0x1590] sm:$0xff]
    %v2202 = vld [vmem:[#allocation5 + $0x1598] sm:$0xff]
    %v2203 = vld [vmem:[#allocation5 + $0x15a0] sm:$0xff]
    %v2204 = vld [vmem:[#allocation5 + $0x15a8] sm:$0xff]
    %v2205 = vld [vmem:[#allocation5 + $0x15b0] sm:$0xff]
    %v2206 = vld [vmem:[#allocation5 + $0x15b8] sm:$0xff]
    %v2207 = vld [vmem:[#allocation5 + $0x15c0] sm:$0xff]
    %v2208 = vld [vmem:[#allocation5 + $0x15c8] sm:$0xff]
    %v2209 = vld [vmem:[#allocation5 + $0x15d0] sm:$0xff]
    %v2210 = vld [vmem:[#allocation5 + $0x15d8] sm:$0xff]
    %v2211 = vld [vmem:[#allocation5 + $0x15e0] sm:$0xff]
    %v2212 = vld [vmem:[#allocation5 + $0x15e8] sm:$0xff]
    %v2213 = vld [vmem:[#allocation5 + $0x15f0] sm:$0xff]
    %v2214 = vld [vmem:[#allocation5 + $0x15f8] sm:$0xff]
    %v2215 = vld [vmem:[#allocation5 + $0x1600] sm:$0xff]
    %v2216 = vld [vmem:[#allocation5 + $0x1608] sm:$0xff]
    %v2217 = vld [vmem:[#allocation5 + $0x1610] sm:$0xff]
    %v2218 = vld [vmem:[#allocation5 + $0x1618] sm:$0xff]
    %v2219 = vld [vmem:[#allocation5 + $0x1620] sm:$0xff]
    %v2220 = vld [vmem:[#allocation5 + $0x1628] sm:$0xff]
    %v2221 = vld [vmem:[#allocation5 + $0x1630] sm:$0xff]
    %v2222 = vld [vmem:[#allocation5 + $0x1638] sm:$0xff]
    %v2223 = vld [vmem:[#allocation5 + $0x1640] sm:$0xff]
    %v2224 = vld [vmem:[#allocation5 + $0x1648] sm:$0xff]
    %v2225 = vld [vmem:[#allocation5 + $0x1650] sm:$0xff]
    %v2226 = vld [vmem:[#allocation5 + $0x1658] sm:$0xff]
    %v2227 = vld [vmem:[#allocation5 + $0x1660] sm:$0xff]
    %v2228 = vld [vmem:[#allocation5 + $0x1668] sm:$0xff]
    %v2229 = vld [vmem:[#allocation5 + $0x1670] sm:$0xff]
    %v2230 = vld [vmem:[#allocation5 + $0x1678] sm:$0xff]
    %v2231 = vld [vmem:[#allocation5 + $0x1680] sm:$0xff]
    %v2232 = vld [vmem:[#allocation5 + $0x1688] sm:$0xff]
    %v2233 = vld [vmem:[#allocation5 + $0x1690] sm:$0xff]
    %v2234 = vld [vmem:[#allocation5 + $0x1698] sm:$0xff]
    %v2235 = vld [vmem:[#allocation5 + $0x16a0] sm:$0xff]
    %v2236 = vld [vmem:[#allocation5 + $0x16a8] sm:$0xff]
    %v2237 = vld [vmem:[#allocation5 + $0x16b0] sm:$0xff]
    %v2238 = vld [vmem:[#allocation5 + $0x16b8] sm:$0xff]
    %v2239 = vld [vmem:[#allocation5 + $0x16c0] sm:$0xff]
    %v2240 = vld [vmem:[#allocation5 + $0x16c8] sm:$0xff]
    %v2241 = vld [vmem:[#allocation5 + $0x16d0] sm:$0xff]
    %v2242 = vld [vmem:[#allocation5 + $0x16d8] sm:$0xff]
    %v2243 = vld [vmem:[#allocation5 + $0x16e0] sm:$0xff]
    %v2244 = vld [vmem:[#allocation5 + $0x16e8] sm:$0xff]
    %v2245 = vld [vmem:[#allocation5 + $0x16f0] sm:$0xff]
    %v2246 = vld [vmem:[#allocation5 + $0x16f8] sm:$0xff]
    %v2247 = vld [vmem:[#allocation5 + $0x1700] sm:$0xff]
    %v2248 = vld [vmem:[#allocation5 + $0x1708] sm:$0xff]
    %v2249 = vld [vmem:[#allocation5 + $0x1710] sm:$0xff]
    %v2250 = vld [vmem:[#allocation5 + $0x1718] sm:$0xff]
    %v2251 = vld [vmem:[#allocation5 + $0x1720] sm:$0xff]
    %v2252 = vld [vmem:[#allocation5 + $0x1728] sm:$0xff]
    %v2253 = vld [vmem:[#allocation5 + $0x1730] sm:$0xff]
    %v2254 = vld [vmem:[#allocation5 + $0x1738] sm:$0xff]
    %v2255 = vld [vmem:[#allocation5 + $0x1740] sm:$0xff]
    %v2256 = vld [vmem:[#allocation5 + $0x1748] sm:$0xff]
    %v2257 = vld [vmem:[#allocation5 + $0x1750] sm:$0xff]
    %v2258 = vld [vmem:[#allocation5 + $0x1758] sm:$0xff]
    %v2259 = vld [vmem:[#allocation5 + $0x1760] sm:$0xff]
    %v2260 = vld [vmem:[#allocation5 + $0x1768] sm:$0xff]
    %v2261 = vld [vmem:[#allocation5 + $0x1770] sm:$0xff]
    %v2262 = vld [vmem:[#allocation5 + $0x1778] sm:$0xff]
    %v2263 = vld [vmem:[#allocation5 + $0x1780] sm:$0xff]
    %v2264 = vld [vmem:[#allocation5 + $0x1788] sm:$0xff]
    %v2265 = vld [vmem:[#allocation5 + $0x1790] sm:$0xff]
    %v2266 = vld [vmem:[#allocation5 + $0x1798] sm:$0xff]
    %v2267 = vld [vmem:[#allocation5 + $0x17a0] sm:$0xff]
    %v2268 = vld [vmem:[#allocation5 + $0x17a8] sm:$0xff]
    %v2269 = vld [vmem:[#allocation5 + $0x17b0] sm:$0xff]
    %v2270 = vld [vmem:[#allocation5 + $0x17b8] sm:$0xff]
    %v2271 = vld [vmem:[#allocation5 + $0x17c0] sm:$0xff]
    %v2272 = vld [vmem:[#allocation5 + $0x17c8] sm:$0xff]
    %v2273 = vld [vmem:[#allocation5 + $0x17d0] sm:$0xff]
    %v2274 = vld [vmem:[#allocation5 + $0x17d8] sm:$0xff]
    %v2275 = vld [vmem:[#allocation5 + $0x17e0] sm:$0xff]
    %v2276 = vld [vmem:[#allocation5 + $0x17e8] sm:$0xff]
    %v2277 = vld [vmem:[#allocation5 + $0x17f0] sm:$0xff]
    %v2278 = vld [vmem:[#allocation5 + $0x17f8] sm:$0xff]
    %v2279 = vld [vmem:[#allocation5 + $0x1800] sm:$0xff]
    %v2280 = vld [vmem:[#allocation5 + $0x1808] sm:$0xff]
    %v2281 = vld [vmem:[#allocation5 + $0x1810] sm:$0xff]
    %v2282 = vld [vmem:[#allocation5 + $0x1818] sm:$0xff]
    %v2283 = vld [vmem:[#allocation5 + $0x1820] sm:$0xff]
    %v2284 = vld [vmem:[#allocation5 + $0x1828] sm:$0xff]
    %v2285 = vld [vmem:[#allocation5 + $0x1830] sm:$0xff]
    %v2286 = vld [vmem:[#allocation5 + $0x1838] sm:$0xff]
    %v2287 = vld [vmem:[#allocation5 + $0x1840] sm:$0xff]
    %v2288 = vld [vmem:[#allocation5 + $0x1848] sm:$0xff]
    %v2289 = vld [vmem:[#allocation5 + $0x1850] sm:$0xff]
    %v2290 = vld [vmem:[#allocation5 + $0x1858] sm:$0xff]
    %v2291 = vld [vmem:[#allocation5 + $0x1860] sm:$0xff]
    %v2292 = vld [vmem:[#allocation5 + $0x1868] sm:$0xff]
    %v2293 = vld [vmem:[#allocation5 + $0x1870] sm:$0xff]
    %v2294 = vld [vmem:[#allocation5 + $0x1878] sm:$0xff]
    %v2295 = vld [vmem:[#allocation5 + $0x1880] sm:$0xff]
    %v2296 = vld [vmem:[#allocation5 + $0x1888] sm:$0xff]
    %v2297 = vld [vmem:[#allocation5 + $0x1890] sm:$0xff]
    %v2298 = vld [vmem:[#allocation5 + $0x1898] sm:$0xff]
    %v2299 = vld [vmem:[#allocation5 + $0x18a0] sm:$0xff]
    %v2300 = vld [vmem:[#allocation5 + $0x18a8] sm:$0xff]
    %v2301 = vld [vmem:[#allocation5 + $0x18b0] sm:$0xff]
    %v2302 = vld [vmem:[#allocation5 + $0x18b8] sm:$0xff]
    %v2303 = vld [vmem:[#allocation5 + $0x18c0] sm:$0xff]
    %v2304 = vld [vmem:[#allocation5 + $0x18c8] sm:$0xff]
    %v2305 = vld [vmem:[#allocation5 + $0x18d0] sm:$0xff]
    %v2306 = vld [vmem:[#allocation5 + $0x18d8] sm:$0xff]
    %v2307 = vld [vmem:[#allocation5 + $0x18e0] sm:$0xff]
    %v2308 = vld [vmem:[#allocation5 + $0x18e8] sm:$0xff]
    %v2309 = vld [vmem:[#allocation5 + $0x18f0] sm:$0xff]
    %v2310 = vld [vmem:[#allocation5 + $0x18f8] sm:$0xff]
    %v2311 = vld [vmem:[#allocation5 + $0x1900] sm:$0xff]
    %v2312 = vld [vmem:[#allocation5 + $0x1908] sm:$0xff]
    %v2313 = vld [vmem:[#allocation5 + $0x1910] sm:$0xff]
    %v2314 = vld [vmem:[#allocation5 + $0x1918] sm:$0xff]
    %v2315 = vld [vmem:[#allocation5 + $0x1920] sm:$0xff]
    %v2316 = vld [vmem:[#allocation5 + $0x1928] sm:$0xff]
    %v2317 = vld [vmem:[#allocation5 + $0x1930] sm:$0xff]
    %v2318 = vld [vmem:[#allocation5 + $0x1938] sm:$0xff]
    %v2319 = vld [vmem:[#allocation5 + $0x1940] sm:$0xff]
    %v2320 = vld [vmem:[#allocation5 + $0x1948] sm:$0xff]
    %v2321 = vld [vmem:[#allocation5 + $0x1950] sm:$0xff]
    %v2322 = vld [vmem:[#allocation5 + $0x1958] sm:$0xff]
    %v2323 = vld [vmem:[#allocation5 + $0x1960] sm:$0xff]
    %v2324 = vld [vmem:[#allocation5 + $0x1968] sm:$0xff]
    %v2325 = vld [vmem:[#allocation5 + $0x1970] sm:$0xff]
    %v2326 = vld [vmem:[#allocation5 + $0x1978] sm:$0xff]
    %v2327 = vld [vmem:[#allocation5 + $0x1980] sm:$0xff]
    %v2328 = vld [vmem:[#allocation5 + $0x1988] sm:$0xff]
    %v2329 = vld [vmem:[#allocation5 + $0x1990] sm:$0xff]
    %v2330 = vld [vmem:[#allocation5 + $0x1998] sm:$0xff]
    %v2331 = vld [vmem:[#allocation5 + $0x19a0] sm:$0xff]
    %v2332 = vld [vmem:[#allocation5 + $0x19a8] sm:$0xff]
    %v2333 = vld [vmem:[#allocation5 + $0x19b0] sm:$0xff]
    %v2334 = vld [vmem:[#allocation5 + $0x19b8] sm:$0xff]
    %v2335 = vld [vmem:[#allocation5 + $0x19c0] sm:$0xff]
    %v2336 = vld [vmem:[#allocation5 + $0x19c8] sm:$0xff]
    %v2337 = vld [vmem:[#allocation5 + $0x19d0] sm:$0xff]
    %v2338 = vld [vmem:[#allocation5 + $0x19d8] sm:$0xff]
    %v2339 = vld [vmem:[#allocation5 + $0x19e0] sm:$0xff]
    %v2340 = vld [vmem:[#allocation5 + $0x19e8] sm:$0xff]
    %v2341 = vld [vmem:[#allocation5 + $0x19f0] sm:$0xff]
    %v2342 = vld [vmem:[#allocation5 + $0x19f8] sm:$0xff]
    %v2343 = vld [vmem:[#allocation5 + $0x1a00] sm:$0xff]
    %v2344 = vld [vmem:[#allocation5 + $0x1a08] sm:$0xff]
    %v2345 = vld [vmem:[#allocation5 + $0x1a10] sm:$0xff]
    %v2346 = vld [vmem:[#allocation5 + $0x1a18] sm:$0xff]
    %v2347 = vld [vmem:[#allocation5 + $0x1a20] sm:$0xff]
    %v2348 = vld [vmem:[#allocation5 + $0x1a28] sm:$0xff]
    %v2349 = vld [vmem:[#allocation5 + $0x1a30] sm:$0xff]
    %v2350 = vld [vmem:[#allocation5 + $0x1a38] sm:$0xff]
    %v2351 = vld [vmem:[#allocation5 + $0x1a40] sm:$0xff]
    %v2352 = vld [vmem:[#allocation5 + $0x1a48] sm:$0xff]
    %v2353 = vld [vmem:[#allocation5 + $0x1a50] sm:$0xff]
    %v2354 = vld [vmem:[#allocation5 + $0x1a58] sm:$0xff]
    %v2355 = vld [vmem:[#allocation5 + $0x1a60] sm:$0xff]
    %v2356 = vld [vmem:[#allocation5 + $0x1a68] sm:$0xff]
    %v2357 = vld [vmem:[#allocation5 + $0x1a70] sm:$0xff]
    %v2358 = vld [vmem:[#allocation5 + $0x1a78] sm:$0xff]
    %v2359 = vld [vmem:[#allocation5 + $0x1a80] sm:$0xff]
    %v2360 = vld [vmem:[#allocation5 + $0x1a88] sm:$0xff]
    %v2361 = vld [vmem:[#allocation5 + $0x1a90] sm:$0xff]
    %v2362 = vld [vmem:[#allocation5 + $0x1a98] sm:$0xff]
    %v2363 = vld [vmem:[#allocation5 + $0x1aa0] sm:$0xff]
    %v2364 = vld [vmem:[#allocation5 + $0x1aa8] sm:$0xff]
    %v2365 = vld [vmem:[#allocation5 + $0x1ab0] sm:$0xff]
    %v2366 = vld [vmem:[#allocation5 + $0x1ab8] sm:$0xff]
    %v2367 = vld [vmem:[#allocation5 + $0x1ac0] sm:$0xff]
    %v2368 = vld [vmem:[#allocation5 + $0x1ac8] sm:$0xff]
    %v2369 = vld [vmem:[#allocation5 + $0x1ad0] sm:$0xff]
    %v2370 = vld [vmem:[#allocation5 + $0x1ad8] sm:$0xff]
    %v2371 = vld [vmem:[#allocation5 + $0x1ae0] sm:$0xff]
    %v2372 = vld [vmem:[#allocation5 + $0x1ae8] sm:$0xff]
    %v2373 = vld [vmem:[#allocation5 + $0x1af0] sm:$0xff]
    %v2374 = vld [vmem:[#allocation5 + $0x1af8] sm:$0xff]
    %v2375 = vld [vmem:[#allocation5 + $0x1b00] sm:$0xff]
    %v2376 = vld [vmem:[#allocation5 + $0x1b08] sm:$0xff]
    %v2377 = vld [vmem:[#allocation5 + $0x1b10] sm:$0xff]
    %v2378 = vld [vmem:[#allocation5 + $0x1b18] sm:$0xff]
    %v2379 = vld [vmem:[#allocation5 + $0x1b20] sm:$0xff]
    %v2380 = vld [vmem:[#allocation5 + $0x1b28] sm:$0xff]
    %v2381 = vld [vmem:[#allocation5 + $0x1b30] sm:$0xff]
    %v2382 = vld [vmem:[#allocation5 + $0x1b38] sm:$0xff]
    %v2383 = vld [vmem:[#allocation5 + $0x1b40] sm:$0xff]
    %v2384 = vld [vmem:[#allocation5 + $0x1b48] sm:$0xff]
    %v2385 = vld [vmem:[#allocation5 + $0x1b50] sm:$0xff]
    %v2386 = vld [vmem:[#allocation5 + $0x1b58] sm:$0xff]
    %v2387 = vld [vmem:[#allocation5 + $0x1b60] sm:$0xff]
    %v2388 = vld [vmem:[#allocation5 + $0x1b68] sm:$0xff]
    %v2389 = vld [vmem:[#allocation5 + $0x1b70] sm:$0xff]
    %v2390 = vld [vmem:[#allocation5 + $0x1b78] sm:$0xff]
    %v2391 = vld [vmem:[#allocation5 + $0x1b80] sm:$0xff]
    %v2392 = vld [vmem:[#allocation5 + $0x1b88] sm:$0xff]
    %v2393 = vld [vmem:[#allocation5 + $0x1b90] sm:$0xff]
    %v2394 = vld [vmem:[#allocation5 + $0x1b98] sm:$0xff]
    %v2395 = vld [vmem:[#allocation5 + $0x1ba0] sm:$0xff]
    %v2396 = vld [vmem:[#allocation5 + $0x1ba8] sm:$0xff]
    %v2397 = vld [vmem:[#allocation5 + $0x1bb0] sm:$0xff]
    %v2398 = vld [vmem:[#allocation5 + $0x1bb8] sm:$0xff]
    %v2399 = vld [vmem:[#allocation5 + $0x1bc0] sm:$0xff]
    %v2400 = vld [vmem:[#allocation5 + $0x1bc8] sm:$0xff]
    %v2401 = vld [vmem:[#allocation5 + $0x1bd0] sm:$0xff]
    %v2402 = vld [vmem:[#allocation5 + $0x1bd8] sm:$0xff]
    %v2403 = vld [vmem:[#allocation5 + $0x1be0] sm:$0xff]
    %v2404 = vld [vmem:[#allocation5 + $0x1be8] sm:$0xff]
    %v2405 = vld [vmem:[#allocation5 + $0x1bf0] sm:$0xff]
    %v2406 = vld [vmem:[#allocation5 + $0x1bf8] sm:$0xff]
    %v2407 = vld [vmem:[#allocation5 + $0x1c00] sm:$0xff]
    %v2408 = vld [vmem:[#allocation5 + $0x1c08] sm:$0xff]
    %v2409 = vld [vmem:[#allocation5 + $0x1c10] sm:$0xff]
    %v2410 = vld [vmem:[#allocation5 + $0x1c18] sm:$0xff]
    %v2411 = vld [vmem:[#allocation5 + $0x1c20] sm:$0xff]
    %v2412 = vld [vmem:[#allocation5 + $0x1c28] sm:$0xff]
    %v2413 = vld [vmem:[#allocation5 + $0x1c30] sm:$0xff]
    %v2414 = vld [vmem:[#allocation5 + $0x1c38] sm:$0xff]
    %v2415 = vld [vmem:[#allocation5 + $0x1c40] sm:$0xff]
    %v2416 = vld [vmem:[#allocation5 + $0x1c48] sm:$0xff]
    %v2417 = vld [vmem:[#allocation5 + $0x1c50] sm:$0xff]
    %v2418 = vld [vmem:[#allocation5 + $0x1c58] sm:$0xff]
    %v2419 = vld [vmem:[#allocation5 + $0x1c60] sm:$0xff]
    %v2420 = vld [vmem:[#allocation5 + $0x1c68] sm:$0xff]
    %v2421 = vld [vmem:[#allocation5 + $0x1c70] sm:$0xff]
    %v2422 = vld [vmem:[#allocation5 + $0x1c78] sm:$0xff]
    %v2423 = vld [vmem:[#allocation5 + $0x1c80] sm:$0xff]
    %v2424 = vld [vmem:[#allocation5 + $0x1c88] sm:$0xff]
    %v2425 = vld [vmem:[#allocation5 + $0x1c90] sm:$0xff]
    %v2426 = vld [vmem:[#allocation5 + $0x1c98] sm:$0xff]
    %v2427 = vld [vmem:[#allocation5 + $0x1ca0] sm:$0xff]
    %v2428 = vld [vmem:[#allocation5 + $0x1ca8] sm:$0xff]
    %v2429 = vld [vmem:[#allocation5 + $0x1cb0] sm:$0xff]
    %v2430 = vld [vmem:[#allocation5 + $0x1cb8] sm:$0xff]
    %v2431 = vld [vmem:[#allocation5 + $0x1cc0] sm:$0xff]
    %v2432 = vld [vmem:[#allocation5 + $0x1cc8] sm:$0xff]
    %v2433 = vld [vmem:[#allocation5 + $0x1cd0] sm:$0xff]
    %v2434 = vld [vmem:[#allocation5 + $0x1cd8] sm:$0xff]
    %v2435 = vld [vmem:[#allocation5 + $0x1ce0] sm:$0xff]
    %v2436 = vld [vmem:[#allocation5 + $0x1ce8] sm:$0xff]
    %v2437 = vld [vmem:[#allocation5 + $0x1cf0] sm:$0xff]
    %v2438 = vld [vmem:[#allocation5 + $0x1cf8] sm:$0xff]
    %v2439 = vld [vmem:[#allocation5 + $0x1d00] sm:$0xff]
    %v2440 = vld [vmem:[#allocation5 + $0x1d08] sm:$0xff]
    %v2441 = vld [vmem:[#allocation5 + $0x1d10] sm:$0xff]
    %v2442 = vld [vmem:[#allocation5 + $0x1d18] sm:$0xff]
    %v2443 = vld [vmem:[#allocation5 + $0x1d20] sm:$0xff]
    %v2444 = vld [vmem:[#allocation5 + $0x1d28] sm:$0xff]
    %v2445 = vld [vmem:[#allocation5 + $0x1d30] sm:$0xff]
    %v2446 = vld [vmem:[#allocation5 + $0x1d38] sm:$0xff]
    %v2447 = vld [vmem:[#allocation5 + $0x1d40] sm:$0xff]
    %v2448 = vld [vmem:[#allocation5 + $0x1d48] sm:$0xff]
    %v2449 = vld [vmem:[#allocation5 + $0x1d50] sm:$0xff]
    %v2450 = vld [vmem:[#allocation5 + $0x1d58] sm:$0xff]
    %v2451 = vld [vmem:[#allocation5 + $0x1d60] sm:$0xff]
    %v2452 = vld [vmem:[#allocation5 + $0x1d68] sm:$0xff]
    %v2453 = vld [vmem:[#allocation5 + $0x1d70] sm:$0xff]
    %v2454 = vld [vmem:[#allocation5 + $0x1d78] sm:$0xff]
    %v2455 = vld [vmem:[#allocation5 + $0x1d80] sm:$0xff]
    %v2456 = vld [vmem:[#allocation5 + $0x1d88] sm:$0xff]
    %v2457 = vld [vmem:[#allocation5 + $0x1d90] sm:$0xff]
    %v2458 = vld [vmem:[#allocation5 + $0x1d98] sm:$0xff]
    %v2459 = vld [vmem:[#allocation5 + $0x1da0] sm:$0xff]
    %v2460 = vld [vmem:[#allocation5 + $0x1da8] sm:$0xff]
    %v2461 = vld [vmem:[#allocation5 + $0x1db0] sm:$0xff]
    %v2462 = vld [vmem:[#allocation5 + $0x1db8] sm:$0xff]
    %v2463 = vld [vmem:[#allocation5 + $0x1dc0] sm:$0xff]
    %v2464 = vld [vmem:[#allocation5 + $0x1dc8] sm:$0xff]
    %v2465 = vld [vmem:[#allocation5 + $0x1dd0] sm:$0xff]
    %v2466 = vld [vmem:[#allocation5 + $0x1dd8] sm:$0xff]
    %v2467 = vld [vmem:[#allocation5 + $0x1de0] sm:$0xff]
    %v2468 = vld [vmem:[#allocation5 + $0x1de8] sm:$0xff]
    %v2469 = vld [vmem:[#allocation5 + $0x1df0] sm:$0xff]
    %v2470 = vld [vmem:[#allocation5 + $0x1df8] sm:$0xff]
    %v2471 = vld [vmem:[#allocation5 + $0x1e00] sm:$0xff]
    %v2472 = vld [vmem:[#allocation5 + $0x1e08] sm:$0xff]
    %v2473 = vld [vmem:[#allocation5 + $0x1e10] sm:$0xff]
    %v2474 = vld [vmem:[#allocation5 + $0x1e18] sm:$0xff]
    %v2475 = vld [vmem:[#allocation5 + $0x1e20] sm:$0xff]
    %v2476 = vld [vmem:[#allocation5 + $0x1e28] sm:$0xff]
    %v2477 = vld [vmem:[#allocation5 + $0x1e30] sm:$0xff]
    %v2478 = vld [vmem:[#allocation5 + $0x1e38] sm:$0xff]
    %v2479 = vld [vmem:[#allocation5 + $0x1e40] sm:$0xff]
    %v2480 = vld [vmem:[#allocation5 + $0x1e48] sm:$0xff]
    %v2481 = vld [vmem:[#allocation5 + $0x1e50] sm:$0xff]
    %v2482 = vld [vmem:[#allocation5 + $0x1e58] sm:$0xff]
    %v2483 = vld [vmem:[#allocation5 + $0x1e60] sm:$0xff]
    %v2484 = vld [vmem:[#allocation5 + $0x1e68] sm:$0xff]
    %v2485 = vld [vmem:[#allocation5 + $0x1e70] sm:$0xff]
    %v2486 = vld [vmem:[#allocation5 + $0x1e78] sm:$0xff]
    %v2487 = vld [vmem:[#allocation5 + $0x1e80] sm:$0xff]
    %v2488 = vld [vmem:[#allocation5 + $0x1e88] sm:$0xff]
    %v2489 = vld [vmem:[#allocation5 + $0x1e90] sm:$0xff]
    %v2490 = vld [vmem:[#allocation5 + $0x1e98] sm:$0xff]
    %v2491 = vld [vmem:[#allocation5 + $0x1ea0] sm:$0xff]
    %v2492 = vld [vmem:[#allocation5 + $0x1ea8] sm:$0xff]
    %v2493 = vld [vmem:[#allocation5 + $0x1eb0] sm:$0xff]
    %v2494 = vld [vmem:[#allocation5 + $0x1eb8] sm:$0xff]
    %v2495 = vld [vmem:[#allocation5 + $0x1ec0] sm:$0xff]
    %v2496 = vld [vmem:[#allocation5 + $0x1ec8] sm:$0xff]
    %v2497 = vld [vmem:[#allocation5 + $0x1ed0] sm:$0xff]
    %v2498 = vld [vmem:[#allocation5 + $0x1ed8] sm:$0xff]
    %v2499 = vld [vmem:[#allocation5 + $0x1ee0] sm:$0xff]
    %v2500 = vld [vmem:[#allocation5 + $0x1ee8] sm:$0xff]
    %v2501 = vld [vmem:[#allocation5 + $0x1ef0] sm:$0xff]
    %v2502 = vld [vmem:[#allocation5 + $0x1ef8] sm:$0xff]
    %v2503 = vld [vmem:[#allocation5 + $0x1f00] sm:$0xff]
    %v2504 = vld [vmem:[#allocation5 + $0x1f08] sm:$0xff]
    %v2505 = vld [vmem:[#allocation5 + $0x1f10] sm:$0xff]
    %v2506 = vld [vmem:[#allocation5 + $0x1f18] sm:$0xff]
    %v2507 = vld [vmem:[#allocation5 + $0x1f20] sm:$0xff]
    %v2508 = vld [vmem:[#allocation5 + $0x1f28] sm:$0xff]
    %v2509 = vld [vmem:[#allocation5 + $0x1f30] sm:$0xff]
    %v2510 = vld [vmem:[#allocation5 + $0x1f38] sm:$0xff]
    %v2511 = vld [vmem:[#allocation5 + $0x1f40] sm:$0xff]
    %v2512 = vld [vmem:[#allocation5 + $0x1f48] sm:$0xff]
    %v2513 = vld [vmem:[#allocation5 + $0x1f50] sm:$0xff]
    %v2514 = vld [vmem:[#allocation5 + $0x1f58] sm:$0xff]
    %v2515 = vld [vmem:[#allocation5 + $0x1f60] sm:$0xff]
    %v2516 = vld [vmem:[#allocation5 + $0x1f68] sm:$0xff]
    %v2517 = vld [vmem:[#allocation5 + $0x1f70] sm:$0xff]
    %v2518 = vld [vmem:[#allocation5 + $0x1f78] sm:$0xff]
    %v2519 = vld [vmem:[#allocation7] sm:$0xf]
    %v2521 = vlaneseq
    %v2522 = vshrl.u32 %v2521, 7
    %v2523 = vsub.s32 0, %v2522
    %v2524 = vrot.slane %v2519, %v2523
    %v2525 = vlaneseq
    %v2526 = vshrl.u32 %v2525, 7
    %v2527 = vsub.s32 1, %v2526
    %v2528 = vrot.slane %v2519, %v2527
    %v2529 = vlaneseq
    %v2530 = vshrl.u32 %v2529, 7
    %v2531 = vsub.s32 2, %v2530
    %v2532 = vrot.slane %v2519, %v2531
    %v2533 = vlaneseq
    %v2534 = vshrl.u32 %v2533, 7
    %v2535 = vsub.s32 3, %v2534
    %v2536 = vrot.slane %v2519, %v2535
    %v2605 = vunpack.c.l.b16 %v1447
    %v2606 = vunpack.c.l.b16 %v1448
    %v2607 = vunpack.c.l.b16 %v1449
    %v2608 = vunpack.c.l.b16 %v1450
    %v2609 = vunpack.c.l.b16 %v1451
    %v2610 = vunpack.c.l.b16 %v1452
    %v2611 = vunpack.c.l.b16 %v1453
    %v2612 = vunpack.c.l.b16 %v1454
    %v2613 = vunpack.c.l.b16 %v1455
    %v2614 = vunpack.c.l.b16 %v1456
    %v2615 = vunpack.c.l.b16 %v1457
    %v2616 = vunpack.c.l.b16 %v1458
    %v2617 = vunpack.c.l.b16 %v1459
    %v2618 = vunpack.c.l.b16 %v1460
    %v2619 = vunpack.c.l.b16 %v1461
    %v2620 = vunpack.c.l.b16 %v1462
    %v2621 = vunpack.c.l.b16 %v1463
    %v2622 = vunpack.c.l.b16 %v1464
    %v2623 = vunpack.c.l.b16 %v1465
    %v2624 = vunpack.c.l.b16 %v1466
    %v2625 = vunpack.c.l.b16 %v1467
    %v2626 = vunpack.c.l.b16 %v1468
    %v2627 = vunpack.c.l.b16 %v1469
    %v2628 = vunpack.c.l.b16 %v1470
    %v2629 = vunpack.c.l.b16 %v1471
    %v2630 = vunpack.c.l.b16 %v1472
    %v2631 = vunpack.c.l.b16 %v1473
    %v2632 = vunpack.c.l.b16 %v1474
    %v2633 = vunpack.c.l.b16 %v1475
    %v2634 = vunpack.c.l.b16 %v1476
    %v2635 = vunpack.c.l.b16 %v1477
    %v2636 = vunpack.c.l.b16 %v1478
    %v2637 = vunpack.c.l.b16 %v1479
    %v2638 = vunpack.c.l.b16 %v1480
    %v2639 = vunpack.c.l.b16 %v1481
    %v2640 = vunpack.c.l.b16 %v1482
    %v2641 = vunpack.c.l.b16 %v1483
    %v2642 = vunpack.c.l.b16 %v1484
    %v2643 = vunpack.c.l.b16 %v1485
    %v2644 = vunpack.c.l.b16 %v1486
    %v2645 = vunpack.c.l.b16 %v1487
    %v2646 = vunpack.c.l.b16 %v1488
    %v2647 = vunpack.c.l.b16 %v1489
    %v2648 = vunpack.c.l.b16 %v1490
    %v2649 = vunpack.c.l.b16 %v1491
    %v2650 = vunpack.c.l.b16 %v1492
    %v2651 = vunpack.c.l.b16 %v1493
    %v2652 = vunpack.c.l.b16 %v1494
    %v2653 = vunpack.c.l.b16 %v1495
    %v2654 = vunpack.c.l.b16 %v1496
    %v2655 = vunpack.c.l.b16 %v1497
    %v2656 = vunpack.c.l.b16 %v1498
    %v2657 = vunpack.c.l.b16 %v1499
    %v2658 = vunpack.c.l.b16 %v1500
    %v2659 = vunpack.c.l.b16 %v1501
    %v2660 = vunpack.c.l.b16 %v1502
    %v2661 = vunpack.c.l.b16 %v1503
    %v2662 = vunpack.c.l.b16 %v1504
    %v2663 = vunpack.c.l.b16 %v1505
    %v2664 = vunpack.c.l.b16 %v1506
    %v2665 = vunpack.c.l.b16 %v1507
    %v2666 = vunpack.c.l.b16 %v1508
    %v2667 = vunpack.c.l.b16 %v1509
    %v2668 = vunpack.c.l.b16 %v1510
    %vm2669 = vcmask 1041409
    %v2670 = vsel %vm2669, %v2637, %v2605
    %v2671 = vsel %vm2669, %v2638, %v2606
    %v2672 = vsel %vm2669, %v2639, %v2607
    %v2673 = vsel %vm2669, %v2640, %v2608
    %v2674 = vsel %vm2669, %v2641, %v2609
    %v2675 = vsel %vm2669, %v2642, %v2610
    %v2676 = vsel %vm2669, %v2643, %v2611
    %v2677 = vsel %vm2669, %v2644, %v2612
    %v2678 = vsel %vm2669, %v2645, %v2613
    %v2679 = vsel %vm2669, %v2646, %v2614
    %v2680 = vsel %vm2669, %v2647, %v2615
    %v2681 = vsel %vm2669, %v2648, %v2616
    %v2682 = vsel %vm2669, %v2649, %v2617
    %v2683 = vsel %vm2669, %v2650, %v2618
    %v2684 = vsel %vm2669, %v2651, %v2619
    %v2685 = vsel %vm2669, %v2652, %v2620
    %v2686 = vsel %vm2669, %v2653, %v2621
    %v2687 = vsel %vm2669, %v2654, %v2622
    %v2688 = vsel %vm2669, %v2655, %v2623
    %v2689 = vsel %vm2669, %v2656, %v2624
    %v2690 = vsel %vm2669, %v2657, %v2625
    %v2691 = vsel %vm2669, %v2658, %v2626
    %v2692 = vsel %vm2669, %v2659, %v2627
    %v2693 = vsel %vm2669, %v2660, %v2628
    %v2694 = vsel %vm2669, %v2661, %v2629
    %v2695 = vsel %vm2669, %v2662, %v2630
    %v2696 = vsel %vm2669, %v2663, %v2631
    %v2697 = vsel %vm2669, %v2664, %v2632
    %v2698 = vsel %vm2669, %v2665, %v2633
    %v2699 = vsel %vm2669, %v2666, %v2634
    %v2700 = vsel %vm2669, %v2667, %v2635
    %v2701 = vsel %vm2669, %v2668, %v2636
    %v2702 = vpack.c.b16 %v2670, %v2670
    %v2703 = vpack.c.b16 %v2671, %v2671
    %v2704 = vpack.c.b16 %v2672, %v2672
    %v2705 = vpack.c.b16 %v2673, %v2673
    %v2706 = vpack.c.b16 %v2674, %v2674
    %v2707 = vpack.c.b16 %v2675, %v2675
    %v2708 = vpack.c.b16 %v2676, %v2676
    %v2709 = vpack.c.b16 %v2677, %v2677
    %v2710 = vpack.c.b16 %v2678, %v2678
    %v2711 = vpack.c.b16 %v2679, %v2679
    %v2712 = vpack.c.b16 %v2680, %v2680
    %v2713 = vpack.c.b16 %v2681, %v2681
    %v2714 = vpack.c.b16 %v2682, %v2682
    %v2715 = vpack.c.b16 %v2683, %v2683
    %v2716 = vpack.c.b16 %v2684, %v2684
    %v2717 = vpack.c.b16 %v2685, %v2685
    %v2718 = vpack.c.b16 %v2686, %v2686
    %v2719 = vpack.c.b16 %v2687, %v2687
    %v2720 = vpack.c.b16 %v2688, %v2688
    %v2721 = vpack.c.b16 %v2689, %v2689
    %v2722 = vpack.c.b16 %v2690, %v2690
    %v2723 = vpack.c.b16 %v2691, %v2691
    %v2724 = vpack.c.b16 %v2692, %v2692
    %v2725 = vpack.c.b16 %v2693, %v2693
    %v2726 = vpack.c.b16 %v2694, %v2694
    %v2727 = vpack.c.b16 %v2695, %v2695
    %v2728 = vpack.c.b16 %v2696, %v2696
    %v2729 = vpack.c.b16 %v2697, %v2697
    %v2730 = vpack.c.b16 %v2698, %v2698
    %v2731 = vpack.c.b16 %v2699, %v2699
    %v2732 = vpack.c.b16 %v2700, %v2700
    %v2733 = vpack.c.b16 %v2701, %v2701
    %v3773 = vunpack.c.l.b16 %v1511
    %v3774 = vunpack.c.h.b16 %v1511
    %v3775 = vunpack.c.l.b16 %v1512
    %v3776 = vunpack.c.h.b16 %v1512
    %v3777 = vunpack.c.l.b16 %v1513
    %v3778 = vunpack.c.h.b16 %v1513
    %v3779 = vunpack.c.l.b16 %v1514
    %v3780 = vunpack.c.h.b16 %v1514
    %v3781 = vunpack.c.l.b16 %v1515
    %v3782 = vunpack.c.h.b16 %v1515
    %v3783 = vunpack.c.l.b16 %v1516
    %v3784 = vunpack.c.h.b16 %v1516
    %v3785 = vunpack.c.l.b16 %v1517
    %v3786 = vunpack.c.h.b16 %v1517
    %v3787 = vunpack.c.l.b16 %v1518
    %v3788 = vunpack.c.h.b16 %v1518
    %v3789 = vunpack.c.l.b16 %v1519
    %v3790 = vunpack.c.h.b16 %v1519
    %v3791 = vunpack.c.l.b16 %v1520
    %v3792 = vunpack.c.h.b16 %v1520
    %v3793 = vunpack.c.l.b16 %v1521
    %v3794 = vunpack.c.h.b16 %v1521
    %v3795 = vunpack.c.l.b16 %v1522
    %v3796 = vunpack.c.h.b16 %v1522
    %v3797 = vunpack.c.l.b16 %v1523
    %v3798 = vunpack.c.h.b16 %v1523
    %v3799 = vunpack.c.l.b16 %v1524
    %v3800 = vunpack.c.h.b16 %v1524
    %v3801 = vunpack.c.l.b16 %v1525
    %v3802 = vunpack.c.h.b16 %v1525
    %v3803 = vunpack.c.l.b16 %v1526
    %v3804 = vunpack.c.h.b16 %v1526
    %v3805 = vunpack.c.l.b16 %v1527
    %v3806 = vunpack.c.h.b16 %v1527
    %v3807 = vunpack.c.l.b16 %v1528
    %v3808 = vunpack.c.h.b16 %v1528
    %v3809 = vunpack.c.l.b16 %v1529
    %v3810 = vunpack.c.h.b16 %v1529
    %v3811 = vunpack.c.l.b16 %v1530
    %v3812 = vunpack.c.h.b16 %v1530
    %v3813 = vunpack.c.l.b16 %v1531
    %v3814 = vunpack.c.h.b16 %v1531
    %v3815 = vunpack.c.l.b16 %v1532
    %v3816 = vunpack.c.h.b16 %v1532
    %v3817 = vunpack.c.l.b16 %v1533
    %v3818 = vunpack.c.h.b16 %v1533
    %v3819 = vunpack.c.l.b16 %v1534
    %v3820 = vunpack.c.h.b16 %v1534
    %v3821 = vunpack.c.l.b16 %v1535
    %v3822 = vunpack.c.h.b16 %v1535
    %v3823 = vunpack.c.l.b16 %v1536
    %v3824 = vunpack.c.h.b16 %v1536
    %v3825 = vunpack.c.l.b16 %v1537
    %v3826 = vunpack.c.h.b16 %v1537
    %v3827 = vunpack.c.l.b16 %v1538
    %v3828 = vunpack.c.h.b16 %v1538
    %v3829 = vunpack.c.l.b16 %v1539
    %v3830 = vunpack.c.h.b16 %v1539
    %v3831 = vunpack.c.l.b16 %v1540
    %v3832 = vunpack.c.h.b16 %v1540
    %v3833 = vunpack.c.l.b16 %v1541
    %v3834 = vunpack.c.h.b16 %v1541
    %v3835 = vunpack.c.l.b16 %v1542
    %v3836 = vunpack.c.h.b16 %v1542
    %v3837 = vunpack.c.l.b16 %v1543
    %v3838 = vunpack.c.h.b16 %v1543
    %v3839 = vunpack.c.l.b16 %v1544
    %v3840 = vunpack.c.h.b16 %v1544
    %v3841 = vunpack.c.l.b16 %v1545
    %v3842 = vunpack.c.h.b16 %v1545
    %v3843 = vunpack.c.l.b16 %v1546
    %v3844 = vunpack.c.h.b16 %v1546
    %v3845 = vunpack.c.l.b16 %v1547
    %v3846 = vunpack.c.h.b16 %v1547
    %v3847 = vunpack.c.l.b16 %v1548
    %v3848 = vunpack.c.h.b16 %v1548
    %v3849 = vunpack.c.l.b16 %v1549
    %v3850 = vunpack.c.h.b16 %v1549
    %v3851 = vunpack.c.l.b16 %v1550
    %v3852 = vunpack.c.h.b16 %v1550
    %v3853 = vunpack.c.l.b16 %v1551
    %v3854 = vunpack.c.h.b16 %v1551
    %v3855 = vunpack.c.l.b16 %v1552
    %v3856 = vunpack.c.h.b16 %v1552
    %v3857 = vunpack.c.l.b16 %v1553
    %v3858 = vunpack.c.h.b16 %v1553
    %v3859 = vunpack.c.l.b16 %v1554
    %v3860 = vunpack.c.h.b16 %v1554
    %v3861 = vunpack.c.l.b16 %v1555
    %v3862 = vunpack.c.h.b16 %v1555
    %v3863 = vunpack.c.l.b16 %v1556
    %v3864 = vunpack.c.h.b16 %v1556
    %v3865 = vunpack.c.l.b16 %v1557
    %v3866 = vunpack.c.h.b16 %v1557
    %v3867 = vunpack.c.l.b16 %v1558
    %v3868 = vunpack.c.h.b16 %v1558
    %v3869 = vunpack.c.l.b16 %v1559
    %v3870 = vunpack.c.h.b16 %v1559
    %v3871 = vunpack.c.l.b16 %v1560
    %v3872 = vunpack.c.h.b16 %v1560
    %v3873 = vunpack.c.l.b16 %v1561
    %v3874 = vunpack.c.h.b16 %v1561
    %v3875 = vunpack.c.l.b16 %v1562
    %v3876 = vunpack.c.h.b16 %v1562
    %v3877 = vunpack.c.l.b16 %v1563
    %v3878 = vunpack.c.h.b16 %v1563
    %v3879 = vunpack.c.l.b16 %v1564
    %v3880 = vunpack.c.h.b16 %v1564
    %v3881 = vunpack.c.l.b16 %v1565
    %v3882 = vunpack.c.h.b16 %v1565
    %v3883 = vunpack.c.l.b16 %v1566
    %v3884 = vunpack.c.h.b16 %v1566
    %v3885 = vunpack.c.l.b16 %v1567
    %v3886 = vunpack.c.h.b16 %v1567
    %v3887 = vunpack.c.l.b16 %v1568
    %v3888 = vunpack.c.h.b16 %v1568
    %v3889 = vunpack.c.l.b16 %v1569
    %v3890 = vunpack.c.h.b16 %v1569
    %v3891 = vunpack.c.l.b16 %v1570
    %v3892 = vunpack.c.h.b16 %v1570
    %v3893 = vunpack.c.l.b16 %v1571
    %v3894 = vunpack.c.h.b16 %v1571
    %v3895 = vunpack.c.l.b16 %v1572
    %v3896 = vunpack.c.h.b16 %v1572
    %v3897 = vunpack.c.l.b16 %v1573
    %v3898 = vunpack.c.h.b16 %v1573
    %v3899 = vunpack.c.l.b16 %v1574
    %v3900 = vunpack.c.h.b16 %v1574
    %v3901 = vunpack.c.l.b16 %v1575
    %v3902 = vunpack.c.h.b16 %v1575
    %v3903 = vunpack.c.l.b16 %v1576
    %v3904 = vunpack.c.h.b16 %v1576
    %v3905 = vunpack.c.l.b16 %v1577
    %v3906 = vunpack.c.h.b16 %v1577
    %v3907 = vunpack.c.l.b16 %v1578
    %v3908 = vunpack.c.h.b16 %v1578
    %v3909 = vunpack.c.l.b16 %v1579
    %v3910 = vunpack.c.h.b16 %v1579
    %v3911 = vunpack.c.l.b16 %v1580
    %v3912 = vunpack.c.h.b16 %v1580
    %v3913 = vunpack.c.l.b16 %v1581
    %v3914 = vunpack.c.h.b16 %v1581
    %v3915 = vunpack.c.l.b16 %v1582
    %v3916 = vunpack.c.h.b16 %v1582
    %v3917 = vunpack.c.l.b16 %v1583
    %v3918 = vunpack.c.h.b16 %v1583
    %v3919 = vunpack.c.l.b16 %v1584
    %v3920 = vunpack.c.h.b16 %v1584
    %v3921 = vunpack.c.l.b16 %v1585
    %v3922 = vunpack.c.h.b16 %v1585
    %v3923 = vunpack.c.l.b16 %v1586
    %v3924 = vunpack.c.h.b16 %v1586
    %v3925 = vunpack.c.l.b16 %v1587
    %v3926 = vunpack.c.h.b16 %v1587
    %v3927 = vunpack.c.l.b16 %v1588
    %v3928 = vunpack.c.h.b16 %v1588
    %v3929 = vunpack.c.l.b16 %v1589
    %v3930 = vunpack.c.h.b16 %v1589
    %v3931 = vunpack.c.l.b16 %v1590
    %v3932 = vunpack.c.h.b16 %v1590
    %v3933 = vunpack.c.l.b16 %v1591
    %v3934 = vunpack.c.h.b16 %v1591
    %v3935 = vunpack.c.l.b16 %v1592
    %v3936 = vunpack.c.h.b16 %v1592
    %v3937 = vunpack.c.l.b16 %v1593
    %v3938 = vunpack.c.h.b16 %v1593
    %v3939 = vunpack.c.l.b16 %v1594
    %v3940 = vunpack.c.h.b16 %v1594
    %v3941 = vunpack.c.l.b16 %v1595
    %v3942 = vunpack.c.h.b16 %v1595
    %v3943 = vunpack.c.l.b16 %v1596
    %v3944 = vunpack.c.h.b16 %v1596
    %v3945 = vunpack.c.l.b16 %v1597
    %v3946 = vunpack.c.h.b16 %v1597
    %v3947 = vunpack.c.l.b16 %v1598
    %v3948 = vunpack.c.h.b16 %v1598
    %v3949 = vunpack.c.l.b16 %v1599
    %v3950 = vunpack.c.h.b16 %v1599
    %v3951 = vunpack.c.l.b16 %v1600
    %v3952 = vunpack.c.h.b16 %v1600
    %v3953 = vunpack.c.l.b16 %v1601
    %v3954 = vunpack.c.h.b16 %v1601
    %v3955 = vunpack.c.l.b16 %v1602
    %v3956 = vunpack.c.h.b16 %v1602
    %v3957 = vunpack.c.l.b16 %v1603
    %v3958 = vunpack.c.h.b16 %v1603
    %v3959 = vunpack.c.l.b16 %v1604
    %v3960 = vunpack.c.h.b16 %v1604
    %v3961 = vunpack.c.l.b16 %v1605
    %v3962 = vunpack.c.h.b16 %v1605
    %v3963 = vunpack.c.l.b16 %v1606
    %v3964 = vunpack.c.h.b16 %v1606
    %v3965 = vunpack.c.l.b16 %v1607
    %v3966 = vunpack.c.h.b16 %v1607
    %v3967 = vunpack.c.l.b16 %v1608
    %v3968 = vunpack.c.h.b16 %v1608
    %v3969 = vunpack.c.l.b16 %v1609
    %v3970 = vunpack.c.h.b16 %v1609
    %v3971 = vunpack.c.l.b16 %v1610
    %v3972 = vunpack.c.h.b16 %v1610
    %v3973 = vunpack.c.l.b16 %v1611
    %v3974 = vunpack.c.h.b16 %v1611
    %v3975 = vunpack.c.l.b16 %v1612
    %v3976 = vunpack.c.h.b16 %v1612
    %v3977 = vunpack.c.l.b16 %v1613
    %v3978 = vunpack.c.h.b16 %v1613
    %v3979 = vunpack.c.l.b16 %v1614
    %v3980 = vunpack.c.h.b16 %v1614
    %v3981 = vunpack.c.l.b16 %v1615
    %v3982 = vunpack.c.h.b16 %v1615
    %v3983 = vunpack.c.l.b16 %v1616
    %v3984 = vunpack.c.h.b16 %v1616
    %v3985 = vunpack.c.l.b16 %v1617
    %v3986 = vunpack.c.h.b16 %v1617
    %v3987 = vunpack.c.l.b16 %v1618
    %v3988 = vunpack.c.h.b16 %v1618
    %v3989 = vunpack.c.l.b16 %v1619
    %v3990 = vunpack.c.h.b16 %v1619
    %v3991 = vunpack.c.l.b16 %v1620
    %v3992 = vunpack.c.h.b16 %v1620
    %v3993 = vunpack.c.l.b16 %v1621
    %v3994 = vunpack.c.h.b16 %v1621
    %v3995 = vunpack.c.l.b16 %v1622
    %v3996 = vunpack.c.h.b16 %v1622
    %v3997 = vunpack.c.l.b16 %v1623
    %v3998 = vunpack.c.h.b16 %v1623
    %v3999 = vunpack.c.l.b16 %v1624
    %v4000 = vunpack.c.h.b16 %v1624
    %v4001 = vunpack.c.l.b16 %v1625
    %v4002 = vunpack.c.h.b16 %v1625
    %v4003 = vunpack.c.l.b16 %v1626
    %v4004 = vunpack.c.h.b16 %v1626
    %v4005 = vunpack.c.l.b16 %v1627
    %v4006 = vunpack.c.h.b16 %v1627
    %v4007 = vunpack.c.l.b16 %v1628
    %v4008 = vunpack.c.h.b16 %v1628
    %v4009 = vunpack.c.l.b16 %v1629
    %v4010 = vunpack.c.h.b16 %v1629
    %v4011 = vunpack.c.l.b16 %v1630
    %v4012 = vunpack.c.h.b16 %v1630
    %v4013 = vunpack.c.l.b16 %v1631
    %v4014 = vunpack.c.h.b16 %v1631
    %v4015 = vunpack.c.l.b16 %v1632
    %v4016 = vunpack.c.h.b16 %v1632
    %v4017 = vunpack.c.l.b16 %v1633
    %v4018 = vunpack.c.h.b16 %v1633
    %v4019 = vunpack.c.l.b16 %v1634
    %v4020 = vunpack.c.h.b16 %v1634
    %v4021 = vunpack.c.l.b16 %v1635
    %v4022 = vunpack.c.h.b16 %v1635
    %v4023 = vunpack.c.l.b16 %v1636
    %v4024 = vunpack.c.h.b16 %v1636
    %v4025 = vunpack.c.l.b16 %v1637
    %v4026 = vunpack.c.h.b16 %v1637
    %v4027 = vunpack.c.l.b16 %v1638
    %v4028 = vunpack.c.h.b16 %v1638
    %v4029 = vunpack.c.l.b16 %v1639
    %v4030 = vunpack.c.h.b16 %v1639
    %v4031 = vunpack.c.l.b16 %v1640
    %v4032 = vunpack.c.h.b16 %v1640
    %v4033 = vunpack.c.l.b16 %v1641
    %v4034 = vunpack.c.h.b16 %v1641
    %v4035 = vunpack.c.l.b16 %v1642
    %v4036 = vunpack.c.h.b16 %v1642
    %v4037 = vunpack.c.l.b16 %v1643
    %v4038 = vunpack.c.h.b16 %v1643
    %v4039 = vunpack.c.l.b16 %v1644
    %v4040 = vunpack.c.h.b16 %v1644
    %v4041 = vunpack.c.l.b16 %v1645
    %v4042 = vunpack.c.h.b16 %v1645
    %v4043 = vunpack.c.l.b16 %v1646
    %v4044 = vunpack.c.h.b16 %v1646
    %v4045 = vunpack.c.l.b16 %v1647
    %v4046 = vunpack.c.h.b16 %v1647
    %v4047 = vunpack.c.l.b16 %v1648
    %v4048 = vunpack.c.h.b16 %v1648
    %v4049 = vunpack.c.l.b16 %v1649
    %v4050 = vunpack.c.h.b16 %v1649
    %v4051 = vunpack.c.l.b16 %v1650
    %v4052 = vunpack.c.h.b16 %v1650
    %v4053 = vunpack.c.l.b16 %v1651
    %v4054 = vunpack.c.h.b16 %v1651
    %v4055 = vunpack.c.l.b16 %v1652
    %v4056 = vunpack.c.h.b16 %v1652
    %v4057 = vunpack.c.l.b16 %v1653
    %v4058 = vunpack.c.h.b16 %v1653
    %v4059 = vunpack.c.l.b16 %v1654
    %v4060 = vunpack.c.h.b16 %v1654
    %v4061 = vunpack.c.l.b16 %v1655
    %v4062 = vunpack.c.h.b16 %v1655
    %v4063 = vunpack.c.l.b16 %v1656
    %v4064 = vunpack.c.h.b16 %v1656
    %v4065 = vunpack.c.l.b16 %v1657
    %v4066 = vunpack.c.h.b16 %v1657
    %v4067 = vunpack.c.l.b16 %v1658
    %v4068 = vunpack.c.h.b16 %v1658
    %v4069 = vunpack.c.l.b16 %v1659
    %v4070 = vunpack.c.h.b16 %v1659
    %v4071 = vunpack.c.l.b16 %v1660
    %v4072 = vunpack.c.h.b16 %v1660
    %v4073 = vunpack.c.l.b16 %v1661
    %v4074 = vunpack.c.h.b16 %v1661
    %v4075 = vunpack.c.l.b16 %v1662
    %v4076 = vunpack.c.h.b16 %v1662
    %v4077 = vunpack.c.l.b16 %v1663
    %v4078 = vunpack.c.h.b16 %v1663
    %v4079 = vunpack.c.l.b16 %v1664
    %v4080 = vunpack.c.h.b16 %v1664
    %v4081 = vunpack.c.l.b16 %v1665
    %v4082 = vunpack.c.h.b16 %v1665
    %v4083 = vunpack.c.l.b16 %v1666
    %v4084 = vunpack.c.h.b16 %v1666
    %v4085 = vunpack.c.l.b16 %v1667
    %v4086 = vunpack.c.h.b16 %v1667
    %v4087 = vunpack.c.l.b16 %v1668
    %v4088 = vunpack.c.h.b16 %v1668
    %v4089 = vunpack.c.l.b16 %v1669
    %v4090 = vunpack.c.h.b16 %v1669
    %v4091 = vunpack.c.l.b16 %v1670
    %v4092 = vunpack.c.h.b16 %v1670
    %v4093 = vunpack.c.l.b16 %v1671
    %v4094 = vunpack.c.h.b16 %v1671
    %v4095 = vunpack.c.l.b16 %v1672
    %v4096 = vunpack.c.h.b16 %v1672
    %v4097 = vunpack.c.l.b16 %v1673
    %v4098 = vunpack.c.h.b16 %v1673
    %v4099 = vunpack.c.l.b16 %v1674
    %v4100 = vunpack.c.h.b16 %v1674
    %v4101 = vunpack.c.l.b16 %v1675
    %v4102 = vunpack.c.h.b16 %v1675
    %v4103 = vunpack.c.l.b16 %v1676
    %v4104 = vunpack.c.h.b16 %v1676
    %v4105 = vunpack.c.l.b16 %v1677
    %v4106 = vunpack.c.h.b16 %v1677
    %v4107 = vunpack.c.l.b16 %v1678
    %v4108 = vunpack.c.h.b16 %v1678
    %v4109 = vunpack.c.l.b16 %v1679
    %v4110 = vunpack.c.h.b16 %v1679
    %v4111 = vunpack.c.l.b16 %v1680
    %v4112 = vunpack.c.h.b16 %v1680
    %v4113 = vunpack.c.l.b16 %v1681
    %v4114 = vunpack.c.h.b16 %v1681
    %v4115 = vunpack.c.l.b16 %v1682
    %v4116 = vunpack.c.h.b16 %v1682
    %v4117 = vunpack.c.l.b16 %v1683
    %v4118 = vunpack.c.h.b16 %v1683
    %v4119 = vunpack.c.l.b16 %v1684
    %v4120 = vunpack.c.h.b16 %v1684
    %v4121 = vunpack.c.l.b16 %v1685
    %v4122 = vunpack.c.h.b16 %v1685
    %v4123 = vunpack.c.l.b16 %v1686
    %v4124 = vunpack.c.h.b16 %v1686
    %v4125 = vunpack.c.l.b16 %v1687
    %v4126 = vunpack.c.h.b16 %v1687
    %v4127 = vunpack.c.l.b16 %v1688
    %v4128 = vunpack.c.h.b16 %v1688
    %v4129 = vunpack.c.l.b16 %v1689
    %v4130 = vunpack.c.h.b16 %v1689
    %v4131 = vunpack.c.l.b16 %v1690
    %v4132 = vunpack.c.h.b16 %v1690
    %v4133 = vunpack.c.l.b16 %v1691
    %v4134 = vunpack.c.h.b16 %v1691
    %v4135 = vunpack.c.l.b16 %v1692
    %v4136 = vunpack.c.h.b16 %v1692
    %v4137 = vunpack.c.l.b16 %v1693
    %v4138 = vunpack.c.h.b16 %v1693
    %v4139 = vunpack.c.l.b16 %v1694
    %v4140 = vunpack.c.h.b16 %v1694
    %v4141 = vunpack.c.l.b16 %v1695
    %v4142 = vunpack.c.h.b16 %v1695
    %v4143 = vunpack.c.l.b16 %v1696
    %v4144 = vunpack.c.h.b16 %v1696
    %v4145 = vunpack.c.l.b16 %v1697
    %v4146 = vunpack.c.h.b16 %v1697
    %v4147 = vunpack.c.l.b16 %v1698
    %v4148 = vunpack.c.h.b16 %v1698
    %v4149 = vunpack.c.l.b16 %v1699
    %v4150 = vunpack.c.h.b16 %v1699
    %v4151 = vunpack.c.l.b16 %v1700
    %v4152 = vunpack.c.h.b16 %v1700
    %v4153 = vunpack.c.l.b16 %v1701
    %v4154 = vunpack.c.h.b16 %v1701
    %v4155 = vunpack.c.l.b16 %v1702
    %v4156 = vunpack.c.h.b16 %v1702
    %v4157 = vunpack.c.l.b16 %v1703
    %v4158 = vunpack.c.h.b16 %v1703
    %v4159 = vunpack.c.l.b16 %v1704
    %v4160 = vunpack.c.h.b16 %v1704
    %v4161 = vunpack.c.l.b16 %v1705
    %v4162 = vunpack.c.h.b16 %v1705
    %v4163 = vunpack.c.l.b16 %v1706
    %v4164 = vunpack.c.h.b16 %v1706
    %v4165 = vunpack.c.l.b16 %v1707
    %v4166 = vunpack.c.h.b16 %v1707
    %v4167 = vunpack.c.l.b16 %v1708
    %v4168 = vunpack.c.h.b16 %v1708
    %v4169 = vunpack.c.l.b16 %v1709
    %v4170 = vunpack.c.h.b16 %v1709
    %v4171 = vunpack.c.l.b16 %v1710
    %v4172 = vunpack.c.h.b16 %v1710
    %v4173 = vunpack.c.l.b16 %v1711
    %v4174 = vunpack.c.h.b16 %v1711
    %v4175 = vunpack.c.l.b16 %v1712
    %v4176 = vunpack.c.h.b16 %v1712
    %v4177 = vunpack.c.l.b16 %v1713
    %v4178 = vunpack.c.h.b16 %v1713
    %v4179 = vunpack.c.l.b16 %v1714
    %v4180 = vunpack.c.h.b16 %v1714
    %v4181 = vunpack.c.l.b16 %v1715
    %v4182 = vunpack.c.h.b16 %v1715
    %v4183 = vunpack.c.l.b16 %v1716
    %v4184 = vunpack.c.h.b16 %v1716
    %v4185 = vunpack.c.l.b16 %v1717
    %v4186 = vunpack.c.h.b16 %v1717
    %v4187 = vunpack.c.l.b16 %v1718
    %v4188 = vunpack.c.h.b16 %v1718
    %v4189 = vunpack.c.l.b16 %v1719
    %v4190 = vunpack.c.h.b16 %v1719
    %v4191 = vunpack.c.l.b16 %v1720
    %v4192 = vunpack.c.h.b16 %v1720
    %v4193 = vunpack.c.l.b16 %v1721
    %v4194 = vunpack.c.h.b16 %v1721
    %v4195 = vunpack.c.l.b16 %v1722
    %v4196 = vunpack.c.h.b16 %v1722
    %v4197 = vunpack.c.l.b16 %v1723
    %v4198 = vunpack.c.h.b16 %v1723
    %v4199 = vunpack.c.l.b16 %v1724
    %v4200 = vunpack.c.h.b16 %v1724
    %v4201 = vunpack.c.l.b16 %v1725
    %v4202 = vunpack.c.h.b16 %v1725
    %v4203 = vunpack.c.l.b16 %v1726
    %v4204 = vunpack.c.h.b16 %v1726
    %v4205 = vunpack.c.l.b16 %v1727
    %v4206 = vunpack.c.h.b16 %v1727
    %v4207 = vunpack.c.l.b16 %v1728
    %v4208 = vunpack.c.h.b16 %v1728
    %v4209 = vunpack.c.l.b16 %v1729
    %v4210 = vunpack.c.h.b16 %v1729
    %v4211 = vunpack.c.l.b16 %v1730
    %v4212 = vunpack.c.h.b16 %v1730
    %v4213 = vunpack.c.l.b16 %v1731
    %v4214 = vunpack.c.h.b16 %v1731
    %v4215 = vunpack.c.l.b16 %v1732
    %v4216 = vunpack.c.h.b16 %v1732
    %v4217 = vunpack.c.l.b16 %v1733
    %v4218 = vunpack.c.h.b16 %v1733
    %v4219 = vunpack.c.l.b16 %v1734
    %v4220 = vunpack.c.h.b16 %v1734
    %v4221 = vunpack.c.l.b16 %v1735
    %v4222 = vunpack.c.h.b16 %v1735
    %v4223 = vunpack.c.l.b16 %v1736
    %v4224 = vunpack.c.h.b16 %v1736
    %v4225 = vunpack.c.l.b16 %v1737
    %v4226 = vunpack.c.h.b16 %v1737
    %v4227 = vunpack.c.l.b16 %v1738
    %v4228 = vunpack.c.h.b16 %v1738
    %v4229 = vunpack.c.l.b16 %v1739
    %v4230 = vunpack.c.h.b16 %v1739
    %v4231 = vunpack.c.l.b16 %v1740
    %v4232 = vunpack.c.h.b16 %v1740
    %v4233 = vunpack.c.l.b16 %v1741
    %v4234 = vunpack.c.h.b16 %v1741
    %v4235 = vunpack.c.l.b16 %v1742
    %v4236 = vunpack.c.h.b16 %v1742
    %v4237 = vunpack.c.l.b16 %v1743
    %v4238 = vunpack.c.h.b16 %v1743
    %v4239 = vunpack.c.l.b16 %v1744
    %v4240 = vunpack.c.h.b16 %v1744
    %v4241 = vunpack.c.l.b16 %v1745
    %v4242 = vunpack.c.h.b16 %v1745
    %v4243 = vunpack.c.l.b16 %v1746
    %v4244 = vunpack.c.h.b16 %v1746
    %v4245 = vunpack.c.l.b16 %v1747
    %v4246 = vunpack.c.h.b16 %v1747
    %v4247 = vunpack.c.l.b16 %v1748
    %v4248 = vunpack.c.h.b16 %v1748
    %v4249 = vunpack.c.l.b16 %v1749
    %v4250 = vunpack.c.h.b16 %v1749
    %v4251 = vunpack.c.l.b16 %v1750
    %v4252 = vunpack.c.h.b16 %v1750
    %v4253 = vunpack.c.l.b16 %v1751
    %v4254 = vunpack.c.h.b16 %v1751
    %v4255 = vunpack.c.l.b16 %v1752
    %v4256 = vunpack.c.h.b16 %v1752
    %v4257 = vunpack.c.l.b16 %v1753
    %v4258 = vunpack.c.h.b16 %v1753
    %v4259 = vunpack.c.l.b16 %v1754
    %v4260 = vunpack.c.h.b16 %v1754
    %v4261 = vunpack.c.l.b16 %v1755
    %v4262 = vunpack.c.h.b16 %v1755
    %v4263 = vunpack.c.l.b16 %v1756
    %v4264 = vunpack.c.h.b16 %v1756
    %v4265 = vunpack.c.l.b16 %v1757
    %v4266 = vunpack.c.h.b16 %v1757
    %v4267 = vunpack.c.l.b16 %v1758
    %v4268 = vunpack.c.h.b16 %v1758
    %v4269 = vunpack.c.l.b16 %v1759
    %v4270 = vunpack.c.h.b16 %v1759
    %v4271 = vunpack.c.l.b16 %v1760
    %v4272 = vunpack.c.h.b16 %v1760
    %v4273 = vunpack.c.l.b16 %v1761
    %v4274 = vunpack.c.h.b16 %v1761
    %v4275 = vunpack.c.l.b16 %v1762
    %v4276 = vunpack.c.h.b16 %v1762
    %v4277 = vunpack.c.l.b16 %v1763
    %v4278 = vunpack.c.h.b16 %v1763
    %v4279 = vunpack.c.l.b16 %v1764
    %v4280 = vunpack.c.h.b16 %v1764
    %v4281 = vunpack.c.l.b16 %v1765
    %v4282 = vunpack.c.h.b16 %v1765
    %v4283 = vunpack.c.l.b16 %v1766
    %v4284 = vunpack.c.h.b16 %v1766
    %v4285 = vunpack.c.l.b16 %v1767
    %v4286 = vunpack.c.h.b16 %v1767
    %v4287 = vunpack.c.l.b16 %v1768
    %v4288 = vunpack.c.h.b16 %v1768
    %v4289 = vunpack.c.l.b16 %v1769
    %v4290 = vunpack.c.h.b16 %v1769
    %v4291 = vunpack.c.l.b16 %v1770
    %v4292 = vunpack.c.h.b16 %v1770
    %v4293 = vunpack.c.l.b16 %v1771
    %v4294 = vunpack.c.h.b16 %v1771
    %v4295 = vunpack.c.l.b16 %v1772
    %v4296 = vunpack.c.h.b16 %v1772
    %v4297 = vunpack.c.l.b16 %v1773
    %v4298 = vunpack.c.h.b16 %v1773
    %v4299 = vunpack.c.l.b16 %v1774
    %v4300 = vunpack.c.h.b16 %v1774
    %v4301 = vunpack.c.l.b16 %v1775
    %v4302 = vunpack.c.h.b16 %v1775
    %v4303 = vunpack.c.l.b16 %v1776
    %v4304 = vunpack.c.h.b16 %v1776
    %v4305 = vunpack.c.l.b16 %v1777
    %v4306 = vunpack.c.h.b16 %v1777
    %v4307 = vunpack.c.l.b16 %v1778
    %v4308 = vunpack.c.h.b16 %v1778
    %v4309 = vunpack.c.l.b16 %v1779
    %v4310 = vunpack.c.h.b16 %v1779
    %v4311 = vunpack.c.l.b16 %v1780
    %v4312 = vunpack.c.h.b16 %v1780
    %v4313 = vunpack.c.l.b16 %v1781
    %v4314 = vunpack.c.h.b16 %v1781
    %v4315 = vunpack.c.l.b16 %v1782
    %v4316 = vunpack.c.h.b16 %v1782
    %v4317 = vunpack.c.l.b16 %v1783
    %v4318 = vunpack.c.h.b16 %v1783
    %v4319 = vunpack.c.l.b16 %v1784
    %v4320 = vunpack.c.h.b16 %v1784
    %v4321 = vunpack.c.l.b16 %v1785
    %v4322 = vunpack.c.h.b16 %v1785
    %v4323 = vunpack.c.l.b16 %v1786
    %v4324 = vunpack.c.h.b16 %v1786
    %v4325 = vunpack.c.l.b16 %v1787
    %v4326 = vunpack.c.h.b16 %v1787
    %v4327 = vunpack.c.l.b16 %v1788
    %v4328 = vunpack.c.h.b16 %v1788
    %v4329 = vunpack.c.l.b16 %v1789
    %v4330 = vunpack.c.h.b16 %v1789
    %v4331 = vunpack.c.l.b16 %v1790
    %v4332 = vunpack.c.h.b16 %v1790
    %v4333 = vunpack.c.l.b16 %v1791
    %v4334 = vunpack.c.h.b16 %v1791
    %v4335 = vunpack.c.l.b16 %v1792
    %v4336 = vunpack.c.h.b16 %v1792
    %v4337 = vunpack.c.l.b16 %v1793
    %v4338 = vunpack.c.h.b16 %v1793
    %v4339 = vunpack.c.l.b16 %v1794
    %v4340 = vunpack.c.h.b16 %v1794
    %v4341 = vunpack.c.l.b16 %v1795
    %v4342 = vunpack.c.h.b16 %v1795
    %v4343 = vunpack.c.l.b16 %v1796
    %v4344 = vunpack.c.h.b16 %v1796
    %v4345 = vunpack.c.l.b16 %v1797
    %v4346 = vunpack.c.h.b16 %v1797
    %v4347 = vunpack.c.l.b16 %v1798
    %v4348 = vunpack.c.h.b16 %v1798
    %v4349 = vunpack.c.l.b16 %v1799
    %v4350 = vunpack.c.h.b16 %v1799
    %v4351 = vunpack.c.l.b16 %v1800
    %v4352 = vunpack.c.h.b16 %v1800
    %v4353 = vunpack.c.l.b16 %v1801
    %v4354 = vunpack.c.h.b16 %v1801
    %v4355 = vunpack.c.l.b16 %v1802
    %v4356 = vunpack.c.h.b16 %v1802
    %v4357 = vunpack.c.l.b16 %v1803
    %v4358 = vunpack.c.h.b16 %v1803
    %v4359 = vunpack.c.l.b16 %v1804
    %v4360 = vunpack.c.h.b16 %v1804
    %v4361 = vunpack.c.l.b16 %v1805
    %v4362 = vunpack.c.h.b16 %v1805
    %v4363 = vunpack.c.l.b16 %v1806
    %v4364 = vunpack.c.h.b16 %v1806
    %v4365 = vunpack.c.l.b16 %v1807
    %v4366 = vunpack.c.h.b16 %v1807
    %v4367 = vunpack.c.l.b16 %v1808
    %v4368 = vunpack.c.h.b16 %v1808
    %v4369 = vunpack.c.l.b16 %v1809
    %v4370 = vunpack.c.h.b16 %v1809
    %v4371 = vunpack.c.l.b16 %v1810
    %v4372 = vunpack.c.h.b16 %v1810
    %v4373 = vunpack.c.l.b16 %v1811
    %v4374 = vunpack.c.h.b16 %v1811
    %v4375 = vunpack.c.l.b16 %v1812
    %v4376 = vunpack.c.h.b16 %v1812
    %v4377 = vunpack.c.l.b16 %v1813
    %v4378 = vunpack.c.h.b16 %v1813
    %v4379 = vunpack.c.l.b16 %v1814
    %v4380 = vunpack.c.h.b16 %v1814
    %v4381 = vunpack.c.l.b16 %v1815
    %v4382 = vunpack.c.h.b16 %v1815
    %v4383 = vunpack.c.l.b16 %v1816
    %v4384 = vunpack.c.h.b16 %v1816
    %v4385 = vunpack.c.l.b16 %v1817
    %v4386 = vunpack.c.h.b16 %v1817
    %v4387 = vunpack.c.l.b16 %v1818
    %v4388 = vunpack.c.h.b16 %v1818
    %v4389 = vunpack.c.l.b16 %v1819
    %v4390 = vunpack.c.h.b16 %v1819
    %v4391 = vunpack.c.l.b16 %v1820
    %v4392 = vunpack.c.h.b16 %v1820
    %v4393 = vunpack.c.l.b16 %v1821
    %v4394 = vunpack.c.h.b16 %v1821
    %v4395 = vunpack.c.l.b16 %v1822
    %v4396 = vunpack.c.h.b16 %v1822
    %v4397 = vunpack.c.l.b16 %v1823
    %v4398 = vunpack.c.h.b16 %v1823
    %v4399 = vunpack.c.l.b16 %v1824
    %v4400 = vunpack.c.h.b16 %v1824
    %v4401 = vunpack.c.l.b16 %v1825
    %v4402 = vunpack.c.h.b16 %v1825
    %v4403 = vunpack.c.l.b16 %v1826
    %v4404 = vunpack.c.h.b16 %v1826
    %v4405 = vunpack.c.l.b16 %v1827
    %v4406 = vunpack.c.h.b16 %v1827
    %v4407 = vunpack.c.l.b16 %v1828
    %v4408 = vunpack.c.h.b16 %v1828
    %v4409 = vunpack.c.l.b16 %v1829
    %v4410 = vunpack.c.h.b16 %v1829
    %v4411 = vunpack.c.l.b16 %v1830
    %v4412 = vunpack.c.h.b16 %v1830
    %v4413 = vunpack.c.l.b16 %v1831
    %v4414 = vunpack.c.h.b16 %v1831
    %v4415 = vunpack.c.l.b16 %v1832
    %v4416 = vunpack.c.h.b16 %v1832
    %v4417 = vunpack.c.l.b16 %v1833
    %v4418 = vunpack.c.h.b16 %v1833
    %v4419 = vunpack.c.l.b16 %v1834
    %v4420 = vunpack.c.h.b16 %v1834
    %v4421 = vunpack.c.l.b16 %v1835
    %v4422 = vunpack.c.h.b16 %v1835
    %v4423 = vunpack.c.l.b16 %v1836
    %v4424 = vunpack.c.h.b16 %v1836
    %v4425 = vunpack.c.l.b16 %v1837
    %v4426 = vunpack.c.h.b16 %v1837
    %v4427 = vunpack.c.l.b16 %v1838
    %v4428 = vunpack.c.h.b16 %v1838
    %v4429 = vunpack.c.l.b16 %v1839
    %v4430 = vunpack.c.h.b16 %v1839
    %v4431 = vunpack.c.l.b16 %v1840
    %v4432 = vunpack.c.h.b16 %v1840
    %v4433 = vunpack.c.l.b16 %v1841
    %v4434 = vunpack.c.h.b16 %v1841
    %v4435 = vunpack.c.l.b16 %v1842
    %v4436 = vunpack.c.h.b16 %v1842
    %v4437 = vunpack.c.l.b16 %v1843
    %v4438 = vunpack.c.h.b16 %v1843
    %v4439 = vunpack.c.l.b16 %v1844
    %v4440 = vunpack.c.h.b16 %v1844
    %v4441 = vunpack.c.l.b16 %v1845
    %v4442 = vunpack.c.h.b16 %v1845
    %v4443 = vunpack.c.l.b16 %v1846
    %v4444 = vunpack.c.h.b16 %v1846
    %v4445 = vunpack.c.l.b16 %v1847
    %v4446 = vunpack.c.h.b16 %v1847
    %v4447 = vunpack.c.l.b16 %v1848
    %v4448 = vunpack.c.h.b16 %v1848
    %v4449 = vunpack.c.l.b16 %v1849
    %v4450 = vunpack.c.h.b16 %v1849
    %v4451 = vunpack.c.l.b16 %v1850
    %v4452 = vunpack.c.h.b16 %v1850
    %v4453 = vunpack.c.l.b16 %v1851
    %v4454 = vunpack.c.h.b16 %v1851
    %v4455 = vunpack.c.l.b16 %v1852
    %v4456 = vunpack.c.h.b16 %v1852
    %v4457 = vunpack.c.l.b16 %v1853
    %v4458 = vunpack.c.h.b16 %v1853
    %v4459 = vunpack.c.l.b16 %v1854
    %v4460 = vunpack.c.h.b16 %v1854
    %v4461 = vunpack.c.l.b16 %v1855
    %v4462 = vunpack.c.h.b16 %v1855
    %v4463 = vunpack.c.l.b16 %v1856
    %v4464 = vunpack.c.h.b16 %v1856
    %v4465 = vunpack.c.l.b16 %v1857
    %v4466 = vunpack.c.h.b16 %v1857
    %v4467 = vunpack.c.l.b16 %v1858
    %v4468 = vunpack.c.h.b16 %v1858
    %v4469 = vunpack.c.l.b16 %v1859
    %v4470 = vunpack.c.h.b16 %v1859
    %v4471 = vunpack.c.l.b16 %v1860
    %v4472 = vunpack.c.h.b16 %v1860
    %v4473 = vunpack.c.l.b16 %v1861
    %v4474 = vunpack.c.h.b16 %v1861
    %v4475 = vunpack.c.l.b16 %v1862
    %v4476 = vunpack.c.h.b16 %v1862
    %v4477 = vunpack.c.l.b16 %v1863
    %v4478 = vunpack.c.h.b16 %v1863
    %v4479 = vunpack.c.l.b16 %v1864
    %v4480 = vunpack.c.h.b16 %v1864
    %v4481 = vunpack.c.l.b16 %v1865
    %v4482 = vunpack.c.h.b16 %v1865
    %v4483 = vunpack.c.l.b16 %v1866
    %v4484 = vunpack.c.h.b16 %v1866
    %v4485 = vunpack.c.l.b16 %v1867
    %v4486 = vunpack.c.h.b16 %v1867
    %v4487 = vunpack.c.l.b16 %v1868
    %v4488 = vunpack.c.h.b16 %v1868
    %v4489 = vunpack.c.l.b16 %v1869
    %v4490 = vunpack.c.h.b16 %v1869
    %v4491 = vunpack.c.l.b16 %v1870
    %v4492 = vunpack.c.h.b16 %v1870
    %v4493 = vunpack.c.l.b16 %v1871
    %v4494 = vunpack.c.h.b16 %v1871
    %v4495 = vunpack.c.l.b16 %v1872
    %v4496 = vunpack.c.h.b16 %v1872
    %v4497 = vunpack.c.l.b16 %v1873
    %v4498 = vunpack.c.h.b16 %v1873
    %v4499 = vunpack.c.l.b16 %v1874
    %v4500 = vunpack.c.h.b16 %v1874
    %v4501 = vunpack.c.l.b16 %v1875
    %v4502 = vunpack.c.h.b16 %v1875
    %v4503 = vunpack.c.l.b16 %v1876
    %v4504 = vunpack.c.h.b16 %v1876
    %v4505 = vunpack.c.l.b16 %v1877
    %v4506 = vunpack.c.h.b16 %v1877
    %v4507 = vunpack.c.l.b16 %v1878
    %v4508 = vunpack.c.h.b16 %v1878
    %v4509 = vunpack.c.l.b16 %v1879
    %v4510 = vunpack.c.h.b16 %v1879
    %v4511 = vunpack.c.l.b16 %v1880
    %v4512 = vunpack.c.h.b16 %v1880
    %v4513 = vunpack.c.l.b16 %v1881
    %v4514 = vunpack.c.h.b16 %v1881
    %v4515 = vunpack.c.l.b16 %v1882
    %v4516 = vunpack.c.h.b16 %v1882
    %v4517 = vunpack.c.l.b16 %v1883
    %v4518 = vunpack.c.h.b16 %v1883
    %v4519 = vunpack.c.l.b16 %v1884
    %v4520 = vunpack.c.h.b16 %v1884
    %v4521 = vunpack.c.l.b16 %v1885
    %v4522 = vunpack.c.h.b16 %v1885
    %v4523 = vunpack.c.l.b16 %v1886
    %v4524 = vunpack.c.h.b16 %v1886
    %v4525 = vunpack.c.l.b16 %v1887
    %v4526 = vunpack.c.h.b16 %v1887
    %v4527 = vunpack.c.l.b16 %v1888
    %v4528 = vunpack.c.h.b16 %v1888
    %v4529 = vunpack.c.l.b16 %v1889
    %v4530 = vunpack.c.h.b16 %v1889
    %v4531 = vunpack.c.l.b16 %v1890
    %v4532 = vunpack.c.h.b16 %v1890
    %v4533 = vunpack.c.l.b16 %v1891
    %v4534 = vunpack.c.h.b16 %v1891
    %v4535 = vunpack.c.l.b16 %v1892
    %v4536 = vunpack.c.h.b16 %v1892
    %v4537 = vunpack.c.l.b16 %v1893
    %v4538 = vunpack.c.h.b16 %v1893
    %v4539 = vunpack.c.l.b16 %v1894
    %v4540 = vunpack.c.h.b16 %v1894
    %v4541 = vunpack.c.l.b16 %v1895
    %v4542 = vunpack.c.h.b16 %v1895
    %v4543 = vunpack.c.l.b16 %v1896
    %v4544 = vunpack.c.h.b16 %v1896
    %v4545 = vunpack.c.l.b16 %v1897
    %v4546 = vunpack.c.h.b16 %v1897
    %v4547 = vunpack.c.l.b16 %v1898
    %v4548 = vunpack.c.h.b16 %v1898
    %v4549 = vunpack.c.l.b16 %v1899
    %v4550 = vunpack.c.h.b16 %v1899
    %v4551 = vunpack.c.l.b16 %v1900
    %v4552 = vunpack.c.h.b16 %v1900
    %v4553 = vunpack.c.l.b16 %v1901
    %v4554 = vunpack.c.h.b16 %v1901
    %v4555 = vunpack.c.l.b16 %v1902
    %v4556 = vunpack.c.h.b16 %v1902
    %v4557 = vunpack.c.l.b16 %v1903
    %v4558 = vunpack.c.h.b16 %v1903
    %v4559 = vunpack.c.l.b16 %v1904
    %v4560 = vunpack.c.h.b16 %v1904
    %v4561 = vunpack.c.l.b16 %v1905
    %v4562 = vunpack.c.h.b16 %v1905
    %v4563 = vunpack.c.l.b16 %v1906
    %v4564 = vunpack.c.h.b16 %v1906
    %v4565 = vunpack.c.l.b16 %v1907
    %v4566 = vunpack.c.h.b16 %v1907
    %v4567 = vunpack.c.l.b16 %v1908
    %v4568 = vunpack.c.h.b16 %v1908
    %v4569 = vunpack.c.l.b16 %v1909
    %v4570 = vunpack.c.h.b16 %v1909
    %v4571 = vunpack.c.l.b16 %v1910
    %v4572 = vunpack.c.h.b16 %v1910
    %v4573 = vunpack.c.l.b16 %v1911
    %v4574 = vunpack.c.h.b16 %v1911
    %v4575 = vunpack.c.l.b16 %v1912
    %v4576 = vunpack.c.h.b16 %v1912
    %v4577 = vunpack.c.l.b16 %v1913
    %v4578 = vunpack.c.h.b16 %v1913
    %v4579 = vunpack.c.l.b16 %v1914
    %v4580 = vunpack.c.h.b16 %v1914
    %v4581 = vunpack.c.l.b16 %v1915
    %v4582 = vunpack.c.h.b16 %v1915
    %v4583 = vunpack.c.l.b16 %v1916
    %v4584 = vunpack.c.h.b16 %v1916
    %v4585 = vunpack.c.l.b16 %v1917
    %v4586 = vunpack.c.h.b16 %v1917
    %v4587 = vunpack.c.l.b16 %v1918
    %v4588 = vunpack.c.h.b16 %v1918
    %v4589 = vunpack.c.l.b16 %v1919
    %v4590 = vunpack.c.h.b16 %v1919
    %v4591 = vunpack.c.l.b16 %v1920
    %v4592 = vunpack.c.h.b16 %v1920
    %v4593 = vunpack.c.l.b16 %v1921
    %v4594 = vunpack.c.h.b16 %v1921
    %v4595 = vunpack.c.l.b16 %v1922
    %v4596 = vunpack.c.h.b16 %v1922
    %v4597 = vunpack.c.l.b16 %v1923
    %v4598 = vunpack.c.h.b16 %v1923
    %v4599 = vunpack.c.l.b16 %v1924
    %v4600 = vunpack.c.h.b16 %v1924
    %v4601 = vunpack.c.l.b16 %v1925
    %v4602 = vunpack.c.h.b16 %v1925
    %v4603 = vunpack.c.l.b16 %v1926
    %v4604 = vunpack.c.h.b16 %v1926
    %v4605 = vunpack.c.l.b16 %v1927
    %v4606 = vunpack.c.h.b16 %v1927
    %v4607 = vunpack.c.l.b16 %v1928
    %v4608 = vunpack.c.h.b16 %v1928
    %v4609 = vunpack.c.l.b16 %v1929
    %v4610 = vunpack.c.h.b16 %v1929
    %v4611 = vunpack.c.l.b16 %v1930
    %v4612 = vunpack.c.h.b16 %v1930
    %v4613 = vunpack.c.l.b16 %v1931
    %v4614 = vunpack.c.h.b16 %v1931
    %v4615 = vunpack.c.l.b16 %v1932
    %v4616 = vunpack.c.h.b16 %v1932
    %v4617 = vunpack.c.l.b16 %v1933
    %v4618 = vunpack.c.h.b16 %v1933
    %v4619 = vunpack.c.l.b16 %v1934
    %v4620 = vunpack.c.h.b16 %v1934
    %v4621 = vunpack.c.l.b16 %v1935
    %v4622 = vunpack.c.h.b16 %v1935
    %v4623 = vunpack.c.l.b16 %v1936
    %v4624 = vunpack.c.h.b16 %v1936
    %v4625 = vunpack.c.l.b16 %v1937
    %v4626 = vunpack.c.h.b16 %v1937
    %v4627 = vunpack.c.l.b16 %v1938
    %v4628 = vunpack.c.h.b16 %v1938
    %v4629 = vunpack.c.l.b16 %v1939
    %v4630 = vunpack.c.h.b16 %v1939
    %v4631 = vunpack.c.l.b16 %v1940
    %v4632 = vunpack.c.h.b16 %v1940
    %v4633 = vunpack.c.l.b16 %v1941
    %v4634 = vunpack.c.h.b16 %v1941
    %v4635 = vunpack.c.l.b16 %v1942
    %v4636 = vunpack.c.h.b16 %v1942
    %v4637 = vunpack.c.l.b16 %v1943
    %v4638 = vunpack.c.h.b16 %v1943
    %v4639 = vunpack.c.l.b16 %v1944
    %v4640 = vunpack.c.h.b16 %v1944
    %v4641 = vunpack.c.l.b16 %v1945
    %v4642 = vunpack.c.h.b16 %v1945
    %v4643 = vunpack.c.l.b16 %v1946
    %v4644 = vunpack.c.h.b16 %v1946
    %v4645 = vunpack.c.l.b16 %v1947
    %v4646 = vunpack.c.h.b16 %v1947
    %v4647 = vunpack.c.l.b16 %v1948
    %v4648 = vunpack.c.h.b16 %v1948
    %v4649 = vunpack.c.l.b16 %v1949
    %v4650 = vunpack.c.h.b16 %v1949
    %v4651 = vunpack.c.l.b16 %v1950
    %v4652 = vunpack.c.h.b16 %v1950
    %v4653 = vunpack.c.l.b16 %v1951
    %v4654 = vunpack.c.h.b16 %v1951
    %v4655 = vunpack.c.l.b16 %v1952
    %v4656 = vunpack.c.h.b16 %v1952
    %v4657 = vunpack.c.l.b16 %v1953
    %v4658 = vunpack.c.h.b16 %v1953
    %v4659 = vunpack.c.l.b16 %v1954
    %v4660 = vunpack.c.h.b16 %v1954
    %v4661 = vunpack.c.l.b16 %v1955
    %v4662 = vunpack.c.h.b16 %v1955
    %v4663 = vunpack.c.l.b16 %v1956
    %v4664 = vunpack.c.h.b16 %v1956
    %v4665 = vunpack.c.l.b16 %v1957
    %v4666 = vunpack.c.h.b16 %v1957
    %v4667 = vunpack.c.l.b16 %v1958
    %v4668 = vunpack.c.h.b16 %v1958
    %v4669 = vunpack.c.l.b16 %v1959
    %v4670 = vunpack.c.h.b16 %v1959
    %v4671 = vunpack.c.l.b16 %v1960
    %v4672 = vunpack.c.h.b16 %v1960
    %v4673 = vunpack.c.l.b16 %v1961
    %v4674 = vunpack.c.h.b16 %v1961
    %v4675 = vunpack.c.l.b16 %v1962
    %v4676 = vunpack.c.h.b16 %v1962
    %v4677 = vunpack.c.l.b16 %v1963
    %v4678 = vunpack.c.h.b16 %v1963
    %v4679 = vunpack.c.l.b16 %v1964
    %v4680 = vunpack.c.h.b16 %v1964
    %v4681 = vunpack.c.l.b16 %v1965
    %v4682 = vunpack.c.h.b16 %v1965
    %v4683 = vunpack.c.l.b16 %v1966
    %v4684 = vunpack.c.h.b16 %v1966
    %v4685 = vunpack.c.l.b16 %v1967
    %v4686 = vunpack.c.h.b16 %v1967
    %v4687 = vunpack.c.l.b16 %v1968
    %v4688 = vunpack.c.h.b16 %v1968
    %v4689 = vunpack.c.l.b16 %v1969
    %v4690 = vunpack.c.h.b16 %v1969
    %v4691 = vunpack.c.l.b16 %v1970
    %v4692 = vunpack.c.h.b16 %v1970
    %v4693 = vunpack.c.l.b16 %v1971
    %v4694 = vunpack.c.h.b16 %v1971
    %v4695 = vunpack.c.l.b16 %v1972
    %v4696 = vunpack.c.h.b16 %v1972
    %v4697 = vunpack.c.l.b16 %v1973
    %v4698 = vunpack.c.h.b16 %v1973
    %v4699 = vunpack.c.l.b16 %v1974
    %v4700 = vunpack.c.h.b16 %v1974
    %v4701 = vunpack.c.l.b16 %v1975
    %v4702 = vunpack.c.h.b16 %v1975
    %v4703 = vunpack.c.l.b16 %v1976
    %v4704 = vunpack.c.h.b16 %v1976
    %v4705 = vunpack.c.l.b16 %v1977
    %v4706 = vunpack.c.h.b16 %v1977
    %v4707 = vunpack.c.l.b16 %v1978
    %v4708 = vunpack.c.h.b16 %v1978
    %v4709 = vunpack.c.l.b16 %v1979
    %v4710 = vunpack.c.h.b16 %v1979
    %v4711 = vunpack.c.l.b16 %v1980
    %v4712 = vunpack.c.h.b16 %v1980
    %v4713 = vunpack.c.l.b16 %v1981
    %v4714 = vunpack.c.h.b16 %v1981
    %v4715 = vunpack.c.l.b16 %v1982
    %v4716 = vunpack.c.h.b16 %v1982
    %v4717 = vunpack.c.l.b16 %v1983
    %v4718 = vunpack.c.h.b16 %v1983
    %v4719 = vunpack.c.l.b16 %v1984
    %v4720 = vunpack.c.h.b16 %v1984
    %v4721 = vunpack.c.l.b16 %v1985
    %v4722 = vunpack.c.h.b16 %v1985
    %v4723 = vunpack.c.l.b16 %v1986
    %v4724 = vunpack.c.h.b16 %v1986
    %v4725 = vunpack.c.l.b16 %v1987
    %v4726 = vunpack.c.h.b16 %v1987
    %v4727 = vunpack.c.l.b16 %v1988
    %v4728 = vunpack.c.h.b16 %v1988
    %v4729 = vunpack.c.l.b16 %v1989
    %v4730 = vunpack.c.h.b16 %v1989
    %v4731 = vunpack.c.l.b16 %v1990
    %v4732 = vunpack.c.h.b16 %v1990
    %v4733 = vunpack.c.l.b16 %v1991
    %v4734 = vunpack.c.h.b16 %v1991
    %v4735 = vunpack.c.l.b16 %v1992
    %v4736 = vunpack.c.h.b16 %v1992
    %v4737 = vunpack.c.l.b16 %v1993
    %v4738 = vunpack.c.h.b16 %v1993
    %v4739 = vunpack.c.l.b16 %v1994
    %v4740 = vunpack.c.h.b16 %v1994
    %v4741 = vunpack.c.l.b16 %v1995
    %v4742 = vunpack.c.h.b16 %v1995
    %v4743 = vunpack.c.l.b16 %v1996
    %v4744 = vunpack.c.h.b16 %v1996
    %v4745 = vunpack.c.l.b16 %v1997
    %v4746 = vunpack.c.h.b16 %v1997
    %v4747 = vunpack.c.l.b16 %v1998
    %v4748 = vunpack.c.h.b16 %v1998
    %v4749 = vunpack.c.l.b16 %v1999
    %v4750 = vunpack.c.h.b16 %v1999
    %v4751 = vunpack.c.l.b16 %v2000
    %v4752 = vunpack.c.h.b16 %v2000
    %v4753 = vunpack.c.l.b16 %v2001
    %v4754 = vunpack.c.h.b16 %v2001
    %v4755 = vunpack.c.l.b16 %v2002
    %v4756 = vunpack.c.h.b16 %v2002
    %v4757 = vunpack.c.l.b16 %v2003
    %v4758 = vunpack.c.h.b16 %v2003
    %v4759 = vunpack.c.l.b16 %v2004
    %v4760 = vunpack.c.h.b16 %v2004
    %v4761 = vunpack.c.l.b16 %v2005
    %v4762 = vunpack.c.h.b16 %v2005
    %v4763 = vunpack.c.l.b16 %v2006
    %v4764 = vunpack.c.h.b16 %v2006
    %v4765 = vunpack.c.l.b16 %v2007
    %v4766 = vunpack.c.h.b16 %v2007
    %v4767 = vunpack.c.l.b16 %v2008
    %v4768 = vunpack.c.h.b16 %v2008
    %v4769 = vunpack.c.l.b16 %v2009
    %v4770 = vunpack.c.h.b16 %v2009
    %v4771 = vunpack.c.l.b16 %v2010
    %v4772 = vunpack.c.h.b16 %v2010
    %v4773 = vunpack.c.l.b16 %v2011
    %v4774 = vunpack.c.h.b16 %v2011
    %v4775 = vunpack.c.l.b16 %v2012
    %v4776 = vunpack.c.h.b16 %v2012
    %v4777 = vunpack.c.l.b16 %v2013
    %v4778 = vunpack.c.h.b16 %v2013
    %v4779 = vunpack.c.l.b16 %v2014
    %v4780 = vunpack.c.h.b16 %v2014
    %v4781 = vunpack.c.l.b16 %v2015
    %v4782 = vunpack.c.h.b16 %v2015
    %v4783 = vunpack.c.l.b16 %v2016
    %v4784 = vunpack.c.h.b16 %v2016
    %v4785 = vunpack.c.l.b16 %v2017
    %v4786 = vunpack.c.h.b16 %v2017
    %v4787 = vunpack.c.l.b16 %v2018
    %v4788 = vunpack.c.h.b16 %v2018
    %v4789 = vunpack.c.l.b16 %v2019
    %v4790 = vunpack.c.h.b16 %v2019
    %v4791 = vunpack.c.l.b16 %v2020
    %v4792 = vunpack.c.h.b16 %v2020
    %v4793 = vunpack.c.l.b16 %v2021
    %v4794 = vunpack.c.h.b16 %v2021
    %v4795 = vunpack.c.l.b16 %v2022
    %v4796 = vunpack.c.h.b16 %v2022
    %v4797 = vunpack.c.l.b16 %v2023
    %v4798 = vunpack.c.h.b16 %v2023
    %v4799 = vunpack.c.l.b16 %v2024
    %v4800 = vunpack.c.h.b16 %v2024
    %v4801 = vunpack.c.l.b16 %v2025
    %v4802 = vunpack.c.h.b16 %v2025
    %v4803 = vunpack.c.l.b16 %v2026
    %v4804 = vunpack.c.h.b16 %v2026
    %v4805 = vunpack.c.l.b16 %v2027
    %v4806 = vunpack.c.h.b16 %v2027
    %v4807 = vunpack.c.l.b16 %v2028
    %v4808 = vunpack.c.h.b16 %v2028
    %v4809 = vunpack.c.l.b16 %v2029
    %v4810 = vunpack.c.h.b16 %v2029
    %v4811 = vunpack.c.l.b16 %v2030
    %v4812 = vunpack.c.h.b16 %v2030
    %v4813 = vunpack.c.l.b16 %v2031
    %v4814 = vunpack.c.h.b16 %v2031
    %v4815 = vunpack.c.l.b16 %v2032
    %v4816 = vunpack.c.h.b16 %v2032
    %v4817 = vunpack.c.l.b16 %v2033
    %v4818 = vunpack.c.h.b16 %v2033
    %v4819 = vunpack.c.l.b16 %v2034
    %v4820 = vunpack.c.h.b16 %v2034
    %v4821 = vunpack.c.l.b16 %v2035
    %v4822 = vunpack.c.h.b16 %v2035
    %v4823 = vunpack.c.l.b16 %v2036
    %v4824 = vunpack.c.h.b16 %v2036
    %v4825 = vunpack.c.l.b16 %v2037
    %v4826 = vunpack.c.h.b16 %v2037
    %v4827 = vunpack.c.l.b16 %v2038
    %v4828 = vunpack.c.h.b16 %v2038
    %v4829 = vunpack.c.l.b16 %v2039
    %v4830 = vunpack.c.h.b16 %v2039
    %v4831 = vunpack.c.l.b16 %v2040
    %v4832 = vunpack.c.h.b16 %v2040
    %v4833 = vunpack.c.l.b16 %v2041
    %v4834 = vunpack.c.h.b16 %v2041
    %v4835 = vunpack.c.l.b16 %v2042
    %v4836 = vunpack.c.h.b16 %v2042
    %v4837 = vunpack.c.l.b16 %v2043
    %v4838 = vunpack.c.h.b16 %v2043
    %v4839 = vunpack.c.l.b16 %v2044
    %v4840 = vunpack.c.h.b16 %v2044
    %v4841 = vunpack.c.l.b16 %v2045
    %v4842 = vunpack.c.h.b16 %v2045
    %v4843 = vunpack.c.l.b16 %v2046
    %v4844 = vunpack.c.h.b16 %v2046
    %v4845 = vunpack.c.l.b16 %v2047
    %v4846 = vunpack.c.h.b16 %v2047
    %v4847 = vunpack.c.l.b16 %v2048
    %v4848 = vunpack.c.h.b16 %v2048
    %v4849 = vunpack.c.l.b16 %v2049
    %v4850 = vunpack.c.h.b16 %v2049
    %v4851 = vunpack.c.l.b16 %v2050
    %v4852 = vunpack.c.h.b16 %v2050
    %v4853 = vunpack.c.l.b16 %v2051
    %v4854 = vunpack.c.h.b16 %v2051
    %v4855 = vunpack.c.l.b16 %v2052
    %v4856 = vunpack.c.h.b16 %v2052
    %v4857 = vunpack.c.l.b16 %v2053
    %v4858 = vunpack.c.h.b16 %v2053
    %v4859 = vunpack.c.l.b16 %v2054
    %v4860 = vunpack.c.h.b16 %v2054
    %v4861 = vunpack.c.l.b16 %v2055
    %v4862 = vunpack.c.h.b16 %v2055
    %v4863 = vunpack.c.l.b16 %v2056
    %v4864 = vunpack.c.h.b16 %v2056
    %v4865 = vunpack.c.l.b16 %v2057
    %v4866 = vunpack.c.h.b16 %v2057
    %v4867 = vunpack.c.l.b16 %v2058
    %v4868 = vunpack.c.h.b16 %v2058
    %v4869 = vunpack.c.l.b16 %v2059
    %v4870 = vunpack.c.h.b16 %v2059
    %v4871 = vunpack.c.l.b16 %v2060
    %v4872 = vunpack.c.h.b16 %v2060
    %v4873 = vunpack.c.l.b16 %v2061
    %v4874 = vunpack.c.h.b16 %v2061
    %v4875 = vunpack.c.l.b16 %v2062
    %v4876 = vunpack.c.h.b16 %v2062
    %v4877 = vunpack.c.l.b16 %v2063
    %v4878 = vunpack.c.h.b16 %v2063
    %v4879 = vunpack.c.l.b16 %v2064
    %v4880 = vunpack.c.h.b16 %v2064
    %v4881 = vunpack.c.l.b16 %v2065
    %v4882 = vunpack.c.h.b16 %v2065
    %v4883 = vunpack.c.l.b16 %v2066
    %v4884 = vunpack.c.h.b16 %v2066
    %v4885 = vunpack.c.l.b16 %v2067
    %v4886 = vunpack.c.h.b16 %v2067
    %v4887 = vunpack.c.l.b16 %v2068
    %v4888 = vunpack.c.h.b16 %v2068
    %v4889 = vunpack.c.l.b16 %v2069
    %v4890 = vunpack.c.h.b16 %v2069
    %v4891 = vunpack.c.l.b16 %v2070
    %v4892 = vunpack.c.h.b16 %v2070
    %v4893 = vunpack.c.l.b16 %v2071
    %v4894 = vunpack.c.h.b16 %v2071
    %v4895 = vunpack.c.l.b16 %v2072
    %v4896 = vunpack.c.h.b16 %v2072
    %v4897 = vunpack.c.l.b16 %v2073
    %v4898 = vunpack.c.h.b16 %v2073
    %v4899 = vunpack.c.l.b16 %v2074
    %v4900 = vunpack.c.h.b16 %v2074
    %v4901 = vunpack.c.l.b16 %v2075
    %v4902 = vunpack.c.h.b16 %v2075
    %v4903 = vunpack.c.l.b16 %v2076
    %v4904 = vunpack.c.h.b16 %v2076
    %v4905 = vunpack.c.l.b16 %v2077
    %v4906 = vunpack.c.h.b16 %v2077
    %v4907 = vunpack.c.l.b16 %v2078
    %v4908 = vunpack.c.h.b16 %v2078
    %v4909 = vunpack.c.l.b16 %v2079
    %v4910 = vunpack.c.h.b16 %v2079
    %v4911 = vunpack.c.l.b16 %v2080
    %v4912 = vunpack.c.h.b16 %v2080
    %v4913 = vunpack.c.l.b16 %v2081
    %v4914 = vunpack.c.h.b16 %v2081
    %v4915 = vunpack.c.l.b16 %v2082
    %v4916 = vunpack.c.h.b16 %v2082
    %v4917 = vunpack.c.l.b16 %v2083
    %v4918 = vunpack.c.h.b16 %v2083
    %v4919 = vunpack.c.l.b16 %v2084
    %v4920 = vunpack.c.h.b16 %v2084
    %v4921 = vunpack.c.l.b16 %v2085
    %v4922 = vunpack.c.h.b16 %v2085
    %v4923 = vunpack.c.l.b16 %v2086
    %v4924 = vunpack.c.h.b16 %v2086
    %v4925 = vunpack.c.l.b16 %v2087
    %v4926 = vunpack.c.h.b16 %v2087
    %v4927 = vunpack.c.l.b16 %v2088
    %v4928 = vunpack.c.h.b16 %v2088
    %v4929 = vunpack.c.l.b16 %v2089
    %v4930 = vunpack.c.h.b16 %v2089
    %v4931 = vunpack.c.l.b16 %v2090
    %v4932 = vunpack.c.h.b16 %v2090
    %v4933 = vunpack.c.l.b16 %v2091
    %v4934 = vunpack.c.h.b16 %v2091
    %v4935 = vunpack.c.l.b16 %v2092
    %v4936 = vunpack.c.h.b16 %v2092
    %v4937 = vunpack.c.l.b16 %v2093
    %v4938 = vunpack.c.h.b16 %v2093
    %v4939 = vunpack.c.l.b16 %v2094
    %v4940 = vunpack.c.h.b16 %v2094
    %v4941 = vunpack.c.l.b16 %v2095
    %v4942 = vunpack.c.h.b16 %v2095
    %v4943 = vunpack.c.l.b16 %v2096
    %v4944 = vunpack.c.h.b16 %v2096
    %v4945 = vunpack.c.l.b16 %v2097
    %v4946 = vunpack.c.h.b16 %v2097
    %v4947 = vunpack.c.l.b16 %v2098
    %v4948 = vunpack.c.h.b16 %v2098
    %v4949 = vunpack.c.l.b16 %v2099
    %v4950 = vunpack.c.h.b16 %v2099
    %v4951 = vunpack.c.l.b16 %v2100
    %v4952 = vunpack.c.h.b16 %v2100
    %v4953 = vunpack.c.l.b16 %v2101
    %v4954 = vunpack.c.h.b16 %v2101
    %v4955 = vunpack.c.l.b16 %v2102
    %v4956 = vunpack.c.h.b16 %v2102
    %v4957 = vunpack.c.l.b16 %v2103
    %v4958 = vunpack.c.h.b16 %v2103
    %v4959 = vunpack.c.l.b16 %v2104
    %v4960 = vunpack.c.h.b16 %v2104
    %v4961 = vunpack.c.l.b16 %v2105
    %v4962 = vunpack.c.h.b16 %v2105
    %v4963 = vunpack.c.l.b16 %v2106
    %v4964 = vunpack.c.h.b16 %v2106
    %v4965 = vunpack.c.l.b16 %v2107
    %v4966 = vunpack.c.h.b16 %v2107
    %v4967 = vunpack.c.l.b16 %v2108
    %v4968 = vunpack.c.h.b16 %v2108
    %v4969 = vunpack.c.l.b16 %v2109
    %v4970 = vunpack.c.h.b16 %v2109
    %v4971 = vunpack.c.l.b16 %v2110
    %v4972 = vunpack.c.h.b16 %v2110
    %v4973 = vunpack.c.l.b16 %v2111
    %v4974 = vunpack.c.h.b16 %v2111
    %v4975 = vunpack.c.l.b16 %v2112
    %v4976 = vunpack.c.h.b16 %v2112
    %v4977 = vunpack.c.l.b16 %v2113
    %v4978 = vunpack.c.h.b16 %v2113
    %v4979 = vunpack.c.l.b16 %v2114
    %v4980 = vunpack.c.h.b16 %v2114
    %v4981 = vunpack.c.l.b16 %v2115
    %v4982 = vunpack.c.h.b16 %v2115
    %v4983 = vunpack.c.l.b16 %v2116
    %v4984 = vunpack.c.h.b16 %v2116
    %v4985 = vunpack.c.l.b16 %v2117
    %v4986 = vunpack.c.h.b16 %v2117
    %v4987 = vunpack.c.l.b16 %v2118
    %v4988 = vunpack.c.h.b16 %v2118
    %v4989 = vunpack.c.l.b16 %v2119
    %v4990 = vunpack.c.h.b16 %v2119
    %v4991 = vunpack.c.l.b16 %v2120
    %v4992 = vunpack.c.h.b16 %v2120
    %v4993 = vunpack.c.l.b16 %v2121
    %v4994 = vunpack.c.h.b16 %v2121
    %v4995 = vunpack.c.l.b16 %v2122
    %v4996 = vunpack.c.h.b16 %v2122
    %v4997 = vunpack.c.l.b16 %v2123
    %v4998 = vunpack.c.h.b16 %v2123
    %v4999 = vunpack.c.l.b16 %v2124
    %v5000 = vunpack.c.h.b16 %v2124
    %v5001 = vunpack.c.l.b16 %v2125
    %v5002 = vunpack.c.h.b16 %v2125
    %v5003 = vunpack.c.l.b16 %v2126
    %v5004 = vunpack.c.h.b16 %v2126
    %v5005 = vunpack.c.l.b16 %v2127
    %v5006 = vunpack.c.h.b16 %v2127
    %v5007 = vunpack.c.l.b16 %v2128
    %v5008 = vunpack.c.h.b16 %v2128
    %v5009 = vunpack.c.l.b16 %v2129
    %v5010 = vunpack.c.h.b16 %v2129
    %v5011 = vunpack.c.l.b16 %v2130
    %v5012 = vunpack.c.h.b16 %v2130
    %v5013 = vunpack.c.l.b16 %v2131
    %v5014 = vunpack.c.h.b16 %v2131
    %v5015 = vunpack.c.l.b16 %v2132
    %v5016 = vunpack.c.h.b16 %v2132
    %v5017 = vunpack.c.l.b16 %v2133
    %v5018 = vunpack.c.h.b16 %v2133
    %v5019 = vunpack.c.l.b16 %v2134
    %v5020 = vunpack.c.h.b16 %v2134
    %v5021 = vunpack.c.l.b16 %v2135
    %v5022 = vunpack.c.h.b16 %v2135
    %v5023 = vunpack.c.l.b16 %v2136
    %v5024 = vunpack.c.h.b16 %v2136
    %v5025 = vunpack.c.l.b16 %v2137
    %v5026 = vunpack.c.h.b16 %v2137
    %v5027 = vunpack.c.l.b16 %v2138
    %v5028 = vunpack.c.h.b16 %v2138
    %v5029 = vunpack.c.l.b16 %v2139
    %v5030 = vunpack.c.h.b16 %v2139
    %v5031 = vunpack.c.l.b16 %v2140
    %v5032 = vunpack.c.h.b16 %v2140
    %v5033 = vunpack.c.l.b16 %v2141
    %v5034 = vunpack.c.h.b16 %v2141
    %v5035 = vunpack.c.l.b16 %v2142
    %v5036 = vunpack.c.h.b16 %v2142
    %v5037 = vunpack.c.l.b16 %v2143
    %v5038 = vunpack.c.h.b16 %v2143
    %v5039 = vunpack.c.l.b16 %v2144
    %v5040 = vunpack.c.h.b16 %v2144
    %v5041 = vunpack.c.l.b16 %v2145
    %v5042 = vunpack.c.h.b16 %v2145
    %v5043 = vunpack.c.l.b16 %v2146
    %v5044 = vunpack.c.h.b16 %v2146
    %v5045 = vunpack.c.l.b16 %v2147
    %v5046 = vunpack.c.h.b16 %v2147
    %v5047 = vunpack.c.l.b16 %v2148
    %v5048 = vunpack.c.h.b16 %v2148
    %v5049 = vunpack.c.l.b16 %v2149
    %v5050 = vunpack.c.h.b16 %v2149
    %v5051 = vunpack.c.l.b16 %v2150
    %v5052 = vunpack.c.h.b16 %v2150
    %v5053 = vunpack.c.l.b16 %v2151
    %v5054 = vunpack.c.h.b16 %v2151
    %v5055 = vunpack.c.l.b16 %v2152
    %v5056 = vunpack.c.h.b16 %v2152
    %v5057 = vunpack.c.l.b16 %v2153
    %v5058 = vunpack.c.h.b16 %v2153
    %v5059 = vunpack.c.l.b16 %v2154
    %v5060 = vunpack.c.h.b16 %v2154
    %v5061 = vunpack.c.l.b16 %v2155
    %v5062 = vunpack.c.h.b16 %v2155
    %v5063 = vunpack.c.l.b16 %v2156
    %v5064 = vunpack.c.h.b16 %v2156
    %v5065 = vunpack.c.l.b16 %v2157
    %v5066 = vunpack.c.h.b16 %v2157
    %v5067 = vunpack.c.l.b16 %v2158
    %v5068 = vunpack.c.h.b16 %v2158
    %v5069 = vunpack.c.l.b16 %v2159
    %v5070 = vunpack.c.h.b16 %v2159
    %v5071 = vunpack.c.l.b16 %v2160
    %v5072 = vunpack.c.h.b16 %v2160
    %v5073 = vunpack.c.l.b16 %v2161
    %v5074 = vunpack.c.h.b16 %v2161
    %v5075 = vunpack.c.l.b16 %v2162
    %v5076 = vunpack.c.h.b16 %v2162
    %v5077 = vunpack.c.l.b16 %v2163
    %v5078 = vunpack.c.h.b16 %v2163
    %v5079 = vunpack.c.l.b16 %v2164
    %v5080 = vunpack.c.h.b16 %v2164
    %v5081 = vunpack.c.l.b16 %v2165
    %v5082 = vunpack.c.h.b16 %v2165
    %v5083 = vunpack.c.l.b16 %v2166
    %v5084 = vunpack.c.h.b16 %v2166
    %v5085 = vunpack.c.l.b16 %v2167
    %v5086 = vunpack.c.h.b16 %v2167
    %v5087 = vunpack.c.l.b16 %v2168
    %v5088 = vunpack.c.h.b16 %v2168
    %v5089 = vunpack.c.l.b16 %v2169
    %v5090 = vunpack.c.h.b16 %v2169
    %v5091 = vunpack.c.l.b16 %v2170
    %v5092 = vunpack.c.h.b16 %v2170
    %v5093 = vunpack.c.l.b16 %v2171
    %v5094 = vunpack.c.h.b16 %v2171
    %v5095 = vunpack.c.l.b16 %v2172
    %v5096 = vunpack.c.h.b16 %v2172
    %v5097 = vunpack.c.l.b16 %v2173
    %v5098 = vunpack.c.h.b16 %v2173
    %v5099 = vunpack.c.l.b16 %v2174
    %v5100 = vunpack.c.h.b16 %v2174
    %v5101 = vunpack.c.l.b16 %v2175
    %v5102 = vunpack.c.h.b16 %v2175
    %v5103 = vunpack.c.l.b16 %v2176
    %v5104 = vunpack.c.h.b16 %v2176
    %v5105 = vunpack.c.l.b16 %v2177
    %v5106 = vunpack.c.h.b16 %v2177
    %v5107 = vunpack.c.l.b16 %v2178
    %v5108 = vunpack.c.h.b16 %v2178
    %v5109 = vunpack.c.l.b16 %v2179
    %v5110 = vunpack.c.h.b16 %v2179
    %v5111 = vunpack.c.l.b16 %v2180
    %v5112 = vunpack.c.h.b16 %v2180
    %v5113 = vunpack.c.l.b16 %v2181
    %v5114 = vunpack.c.h.b16 %v2181
    %v5115 = vunpack.c.l.b16 %v2182
    %v5116 = vunpack.c.h.b16 %v2182
    %v5117 = vunpack.c.l.b16 %v2183
    %v5118 = vunpack.c.h.b16 %v2183
    %v5119 = vunpack.c.l.b16 %v2184
    %v5120 = vunpack.c.h.b16 %v2184
    %v5121 = vunpack.c.l.b16 %v2185
    %v5122 = vunpack.c.h.b16 %v2185
    %v5123 = vunpack.c.l.b16 %v2186
    %v5124 = vunpack.c.h.b16 %v2186
    %v5125 = vunpack.c.l.b16 %v2187
    %v5126 = vunpack.c.h.b16 %v2187
    %v5127 = vunpack.c.l.b16 %v2188
    %v5128 = vunpack.c.h.b16 %v2188
    %v5129 = vunpack.c.l.b16 %v2189
    %v5130 = vunpack.c.h.b16 %v2189
    %v5131 = vunpack.c.l.b16 %v2190
    %v5132 = vunpack.c.h.b16 %v2190
    %v5133 = vunpack.c.l.b16 %v2191
    %v5134 = vunpack.c.h.b16 %v2191
    %v5135 = vunpack.c.l.b16 %v2192
    %v5136 = vunpack.c.h.b16 %v2192
    %v5137 = vunpack.c.l.b16 %v2193
    %v5138 = vunpack.c.h.b16 %v2193
    %v5139 = vunpack.c.l.b16 %v2194
    %v5140 = vunpack.c.h.b16 %v2194
    %v5141 = vunpack.c.l.b16 %v2195
    %v5142 = vunpack.c.h.b16 %v2195
    %v5143 = vunpack.c.l.b16 %v2196
    %v5144 = vunpack.c.h.b16 %v2196
    %v5145 = vunpack.c.l.b16 %v2197
    %v5146 = vunpack.c.h.b16 %v2197
    %v5147 = vunpack.c.l.b16 %v2198
    %v5148 = vunpack.c.h.b16 %v2198
    %v5149 = vunpack.c.l.b16 %v2199
    %v5150 = vunpack.c.h.b16 %v2199
    %v5151 = vunpack.c.l.b16 %v2200
    %v5152 = vunpack.c.h.b16 %v2200
    %v5153 = vunpack.c.l.b16 %v2201
    %v5154 = vunpack.c.h.b16 %v2201
    %v5155 = vunpack.c.l.b16 %v2202
    %v5156 = vunpack.c.h.b16 %v2202
    %v5157 = vunpack.c.l.b16 %v2203
    %v5158 = vunpack.c.h.b16 %v2203
    %v5159 = vunpack.c.l.b16 %v2204
    %v5160 = vunpack.c.h.b16 %v2204
    %v5161 = vunpack.c.l.b16 %v2205
    %v5162 = vunpack.c.h.b16 %v2205
    %v5163 = vunpack.c.l.b16 %v2206
    %v5164 = vunpack.c.h.b16 %v2206
    %v5165 = vunpack.c.l.b16 %v2207
    %v5166 = vunpack.c.h.b16 %v2207
    %v5167 = vunpack.c.l.b16 %v2208
    %v5168 = vunpack.c.h.b16 %v2208
    %v5169 = vunpack.c.l.b16 %v2209
    %v5170 = vunpack.c.h.b16 %v2209
    %v5171 = vunpack.c.l.b16 %v2210
    %v5172 = vunpack.c.h.b16 %v2210
    %v5173 = vunpack.c.l.b16 %v2211
    %v5174 = vunpack.c.h.b16 %v2211
    %v5175 = vunpack.c.l.b16 %v2212
    %v5176 = vunpack.c.h.b16 %v2212
    %v5177 = vunpack.c.l.b16 %v2213
    %v5178 = vunpack.c.h.b16 %v2213
    %v5179 = vunpack.c.l.b16 %v2214
    %v5180 = vunpack.c.h.b16 %v2214
    %v5181 = vunpack.c.l.b16 %v2215
    %v5182 = vunpack.c.h.b16 %v2215
    %v5183 = vunpack.c.l.b16 %v2216
    %v5184 = vunpack.c.h.b16 %v2216
    %v5185 = vunpack.c.l.b16 %v2217
    %v5186 = vunpack.c.h.b16 %v2217
    %v5187 = vunpack.c.l.b16 %v2218
    %v5188 = vunpack.c.h.b16 %v2218
    %v5189 = vunpack.c.l.b16 %v2219
    %v5190 = vunpack.c.h.b16 %v2219
    %v5191 = vunpack.c.l.b16 %v2220
    %v5192 = vunpack.c.h.b16 %v2220
    %v5193 = vunpack.c.l.b16 %v2221
    %v5194 = vunpack.c.h.b16 %v2221
    %v5195 = vunpack.c.l.b16 %v2222
    %v5196 = vunpack.c.h.b16 %v2222
    %v5197 = vunpack.c.l.b16 %v2223
    %v5198 = vunpack.c.h.b16 %v2223
    %v5199 = vunpack.c.l.b16 %v2224
    %v5200 = vunpack.c.h.b16 %v2224
    %v5201 = vunpack.c.l.b16 %v2225
    %v5202 = vunpack.c.h.b16 %v2225
    %v5203 = vunpack.c.l.b16 %v2226
    %v5204 = vunpack.c.h.b16 %v2226
    %v5205 = vunpack.c.l.b16 %v2227
    %v5206 = vunpack.c.h.b16 %v2227
    %v5207 = vunpack.c.l.b16 %v2228
    %v5208 = vunpack.c.h.b16 %v2228
    %v5209 = vunpack.c.l.b16 %v2229
    %v5210 = vunpack.c.h.b16 %v2229
    %v5211 = vunpack.c.l.b16 %v2230
    %v5212 = vunpack.c.h.b16 %v2230
    %v5213 = vunpack.c.l.b16 %v2231
    %v5214 = vunpack.c.h.b16 %v2231
    %v5215 = vunpack.c.l.b16 %v2232
    %v5216 = vunpack.c.h.b16 %v2232
    %v5217 = vunpack.c.l.b16 %v2233
    %v5218 = vunpack.c.h.b16 %v2233
    %v5219 = vunpack.c.l.b16 %v2234
    %v5220 = vunpack.c.h.b16 %v2234
    %v5221 = vunpack.c.l.b16 %v2235
    %v5222 = vunpack.c.h.b16 %v2235
    %v5223 = vunpack.c.l.b16 %v2236
    %v5224 = vunpack.c.h.b16 %v2236
    %v5225 = vunpack.c.l.b16 %v2237
    %v5226 = vunpack.c.h.b16 %v2237
    %v5227 = vunpack.c.l.b16 %v2238
    %v5228 = vunpack.c.h.b16 %v2238
    %v5229 = vunpack.c.l.b16 %v2239
    %v5230 = vunpack.c.h.b16 %v2239
    %v5231 = vunpack.c.l.b16 %v2240
    %v5232 = vunpack.c.h.b16 %v2240
    %v5233 = vunpack.c.l.b16 %v2241
    %v5234 = vunpack.c.h.b16 %v2241
    %v5235 = vunpack.c.l.b16 %v2242
    %v5236 = vunpack.c.h.b16 %v2242
    %v5237 = vunpack.c.l.b16 %v2243
    %v5238 = vunpack.c.h.b16 %v2243
    %v5239 = vunpack.c.l.b16 %v2244
    %v5240 = vunpack.c.h.b16 %v2244
    %v5241 = vunpack.c.l.b16 %v2245
    %v5242 = vunpack.c.h.b16 %v2245
    %v5243 = vunpack.c.l.b16 %v2246
    %v5244 = vunpack.c.h.b16 %v2246
    %v5245 = vunpack.c.l.b16 %v2247
    %v5246 = vunpack.c.h.b16 %v2247
    %v5247 = vunpack.c.l.b16 %v2248
    %v5248 = vunpack.c.h.b16 %v2248
    %v5249 = vunpack.c.l.b16 %v2249
    %v5250 = vunpack.c.h.b16 %v2249
    %v5251 = vunpack.c.l.b16 %v2250
    %v5252 = vunpack.c.h.b16 %v2250
    %v5253 = vunpack.c.l.b16 %v2251
    %v5254 = vunpack.c.h.b16 %v2251
    %v5255 = vunpack.c.l.b16 %v2252
    %v5256 = vunpack.c.h.b16 %v2252
    %v5257 = vunpack.c.l.b16 %v2253
    %v5258 = vunpack.c.h.b16 %v2253
    %v5259 = vunpack.c.l.b16 %v2254
    %v5260 = vunpack.c.h.b16 %v2254
    %v5261 = vunpack.c.l.b16 %v2255
    %v5262 = vunpack.c.h.b16 %v2255
    %v5263 = vunpack.c.l.b16 %v2256
    %v5264 = vunpack.c.h.b16 %v2256
    %v5265 = vunpack.c.l.b16 %v2257
    %v5266 = vunpack.c.h.b16 %v2257
    %v5267 = vunpack.c.l.b16 %v2258
    %v5268 = vunpack.c.h.b16 %v2258
    %v5269 = vunpack.c.l.b16 %v2259
    %v5270 = vunpack.c.h.b16 %v2259
    %v5271 = vunpack.c.l.b16 %v2260
    %v5272 = vunpack.c.h.b16 %v2260
    %v5273 = vunpack.c.l.b16 %v2261
    %v5274 = vunpack.c.h.b16 %v2261
    %v5275 = vunpack.c.l.b16 %v2262
    %v5276 = vunpack.c.h.b16 %v2262
    %v5277 = vunpack.c.l.b16 %v2263
    %v5278 = vunpack.c.h.b16 %v2263
    %v5279 = vunpack.c.l.b16 %v2264
    %v5280 = vunpack.c.h.b16 %v2264
    %v5281 = vunpack.c.l.b16 %v2265
    %v5282 = vunpack.c.h.b16 %v2265
    %v5283 = vunpack.c.l.b16 %v2266
    %v5284 = vunpack.c.h.b16 %v2266
    %v5285 = vunpack.c.l.b16 %v2267
    %v5286 = vunpack.c.h.b16 %v2267
    %v5287 = vunpack.c.l.b16 %v2268
    %v5288 = vunpack.c.h.b16 %v2268
    %v5289 = vunpack.c.l.b16 %v2269
    %v5290 = vunpack.c.h.b16 %v2269
    %v5291 = vunpack.c.l.b16 %v2270
    %v5292 = vunpack.c.h.b16 %v2270
    %v5293 = vunpack.c.l.b16 %v2271
    %v5294 = vunpack.c.h.b16 %v2271
    %v5295 = vunpack.c.l.b16 %v2272
    %v5296 = vunpack.c.h.b16 %v2272
    %v5297 = vunpack.c.l.b16 %v2273
    %v5298 = vunpack.c.h.b16 %v2273
    %v5299 = vunpack.c.l.b16 %v2274
    %v5300 = vunpack.c.h.b16 %v2274
    %v5301 = vunpack.c.l.b16 %v2275
    %v5302 = vunpack.c.h.b16 %v2275
    %v5303 = vunpack.c.l.b16 %v2276
    %v5304 = vunpack.c.h.b16 %v2276
    %v5305 = vunpack.c.l.b16 %v2277
    %v5306 = vunpack.c.h.b16 %v2277
    %v5307 = vunpack.c.l.b16 %v2278
    %v5308 = vunpack.c.h.b16 %v2278
    %v5309 = vunpack.c.l.b16 %v2279
    %v5310 = vunpack.c.h.b16 %v2279
    %v5311 = vunpack.c.l.b16 %v2280
    %v5312 = vunpack.c.h.b16 %v2280
    %v5313 = vunpack.c.l.b16 %v2281
    %v5314 = vunpack.c.h.b16 %v2281
    %v5315 = vunpack.c.l.b16 %v2282
    %v5316 = vunpack.c.h.b16 %v2282
    %v5317 = vunpack.c.l.b16 %v2283
    %v5318 = vunpack.c.h.b16 %v2283
    %v5319 = vunpack.c.l.b16 %v2284
    %v5320 = vunpack.c.h.b16 %v2284
    %v5321 = vunpack.c.l.b16 %v2285
    %v5322 = vunpack.c.h.b16 %v2285
    %v5323 = vunpack.c.l.b16 %v2286
    %v5324 = vunpack.c.h.b16 %v2286
    %v5325 = vunpack.c.l.b16 %v2287
    %v5326 = vunpack.c.h.b16 %v2287
    %v5327 = vunpack.c.l.b16 %v2288
    %v5328 = vunpack.c.h.b16 %v2288
    %v5329 = vunpack.c.l.b16 %v2289
    %v5330 = vunpack.c.h.b16 %v2289
    %v5331 = vunpack.c.l.b16 %v2290
    %v5332 = vunpack.c.h.b16 %v2290
    %v5333 = vunpack.c.l.b16 %v2291
    %v5334 = vunpack.c.h.b16 %v2291
    %v5335 = vunpack.c.l.b16 %v2292
    %v5336 = vunpack.c.h.b16 %v2292
    %v5337 = vunpack.c.l.b16 %v2293
    %v5338 = vunpack.c.h.b16 %v2293
    %v5339 = vunpack.c.l.b16 %v2294
    %v5340 = vunpack.c.h.b16 %v2294
    %v5341 = vunpack.c.l.b16 %v2295
    %v5342 = vunpack.c.h.b16 %v2295
    %v5343 = vunpack.c.l.b16 %v2296
    %v5344 = vunpack.c.h.b16 %v2296
    %v5345 = vunpack.c.l.b16 %v2297
    %v5346 = vunpack.c.h.b16 %v2297
    %v5347 = vunpack.c.l.b16 %v2298
    %v5348 = vunpack.c.h.b16 %v2298
    %v5349 = vunpack.c.l.b16 %v2299
    %v5350 = vunpack.c.h.b16 %v2299
    %v5351 = vunpack.c.l.b16 %v2300
    %v5352 = vunpack.c.h.b16 %v2300
    %v5353 = vunpack.c.l.b16 %v2301
    %v5354 = vunpack.c.h.b16 %v2301
    %v5355 = vunpack.c.l.b16 %v2302
    %v5356 = vunpack.c.h.b16 %v2302
    %v5357 = vunpack.c.l.b16 %v2303
    %v5358 = vunpack.c.h.b16 %v2303
    %v5359 = vunpack.c.l.b16 %v2304
    %v5360 = vunpack.c.h.b16 %v2304
    %v5361 = vunpack.c.l.b16 %v2305
    %v5362 = vunpack.c.h.b16 %v2305
    %v5363 = vunpack.c.l.b16 %v2306
    %v5364 = vunpack.c.h.b16 %v2306
    %v5365 = vunpack.c.l.b16 %v2307
    %v5366 = vunpack.c.h.b16 %v2307
    %v5367 = vunpack.c.l.b16 %v2308
    %v5368 = vunpack.c.h.b16 %v2308
    %v5369 = vunpack.c.l.b16 %v2309
    %v5370 = vunpack.c.h.b16 %v2309
    %v5371 = vunpack.c.l.b16 %v2310
    %v5372 = vunpack.c.h.b16 %v2310
    %v5373 = vunpack.c.l.b16 %v2311
    %v5374 = vunpack.c.h.b16 %v2311
    %v5375 = vunpack.c.l.b16 %v2312
    %v5376 = vunpack.c.h.b16 %v2312
    %v5377 = vunpack.c.l.b16 %v2313
    %v5378 = vunpack.c.h.b16 %v2313
    %v5379 = vunpack.c.l.b16 %v2314
    %v5380 = vunpack.c.h.b16 %v2314
    %v5381 = vunpack.c.l.b16 %v2315
    %v5382 = vunpack.c.h.b16 %v2315
    %v5383 = vunpack.c.l.b16 %v2316
    %v5384 = vunpack.c.h.b16 %v2316
    %v5385 = vunpack.c.l.b16 %v2317
    %v5386 = vunpack.c.h.b16 %v2317
    %v5387 = vunpack.c.l.b16 %v2318
    %v5388 = vunpack.c.h.b16 %v2318
    %v5389 = vunpack.c.l.b16 %v2319
    %v5390 = vunpack.c.h.b16 %v2319
    %v5391 = vunpack.c.l.b16 %v2320
    %v5392 = vunpack.c.h.b16 %v2320
    %v5393 = vunpack.c.l.b16 %v2321
    %v5394 = vunpack.c.h.b16 %v2321
    %v5395 = vunpack.c.l.b16 %v2322
    %v5396 = vunpack.c.h.b16 %v2322
    %v5397 = vunpack.c.l.b16 %v2323
    %v5398 = vunpack.c.h.b16 %v2323
    %v5399 = vunpack.c.l.b16 %v2324
    %v5400 = vunpack.c.h.b16 %v2324
    %v5401 = vunpack.c.l.b16 %v2325
    %v5402 = vunpack.c.h.b16 %v2325
    %v5403 = vunpack.c.l.b16 %v2326
    %v5404 = vunpack.c.h.b16 %v2326
    %v5405 = vunpack.c.l.b16 %v2327
    %v5406 = vunpack.c.h.b16 %v2327
    %v5407 = vunpack.c.l.b16 %v2328
    %v5408 = vunpack.c.h.b16 %v2328
    %v5409 = vunpack.c.l.b16 %v2329
    %v5410 = vunpack.c.h.b16 %v2329
    %v5411 = vunpack.c.l.b16 %v2330
    %v5412 = vunpack.c.h.b16 %v2330
    %v5413 = vunpack.c.l.b16 %v2331
    %v5414 = vunpack.c.h.b16 %v2331
    %v5415 = vunpack.c.l.b16 %v2332
    %v5416 = vunpack.c.h.b16 %v2332
    %v5417 = vunpack.c.l.b16 %v2333
    %v5418 = vunpack.c.h.b16 %v2333
    %v5419 = vunpack.c.l.b16 %v2334
    %v5420 = vunpack.c.h.b16 %v2334
    %v5421 = vunpack.c.l.b16 %v2335
    %v5422 = vunpack.c.h.b16 %v2335
    %v5423 = vunpack.c.l.b16 %v2336
    %v5424 = vunpack.c.h.b16 %v2336
    %v5425 = vunpack.c.l.b16 %v2337
    %v5426 = vunpack.c.h.b16 %v2337
    %v5427 = vunpack.c.l.b16 %v2338
    %v5428 = vunpack.c.h.b16 %v2338
    %v5429 = vunpack.c.l.b16 %v2339
    %v5430 = vunpack.c.h.b16 %v2339
    %v5431 = vunpack.c.l.b16 %v2340
    %v5432 = vunpack.c.h.b16 %v2340
    %v5433 = vunpack.c.l.b16 %v2341
    %v5434 = vunpack.c.h.b16 %v2341
    %v5435 = vunpack.c.l.b16 %v2342
    %v5436 = vunpack.c.h.b16 %v2342
    %v5437 = vunpack.c.l.b16 %v2343
    %v5438 = vunpack.c.h.b16 %v2343
    %v5439 = vunpack.c.l.b16 %v2344
    %v5440 = vunpack.c.h.b16 %v2344
    %v5441 = vunpack.c.l.b16 %v2345
    %v5442 = vunpack.c.h.b16 %v2345
    %v5443 = vunpack.c.l.b16 %v2346
    %v5444 = vunpack.c.h.b16 %v2346
    %v5445 = vunpack.c.l.b16 %v2347
    %v5446 = vunpack.c.h.b16 %v2347
    %v5447 = vunpack.c.l.b16 %v2348
    %v5448 = vunpack.c.h.b16 %v2348
    %v5449 = vunpack.c.l.b16 %v2349
    %v5450 = vunpack.c.h.b16 %v2349
    %v5451 = vunpack.c.l.b16 %v2350
    %v5452 = vunpack.c.h.b16 %v2350
    %v5453 = vunpack.c.l.b16 %v2351
    %v5454 = vunpack.c.h.b16 %v2351
    %v5455 = vunpack.c.l.b16 %v2352
    %v5456 = vunpack.c.h.b16 %v2352
    %v5457 = vunpack.c.l.b16 %v2353
    %v5458 = vunpack.c.h.b16 %v2353
    %v5459 = vunpack.c.l.b16 %v2354
    %v5460 = vunpack.c.h.b16 %v2354
    %v5461 = vunpack.c.l.b16 %v2355
    %v5462 = vunpack.c.h.b16 %v2355
    %v5463 = vunpack.c.l.b16 %v2356
    %v5464 = vunpack.c.h.b16 %v2356
    %v5465 = vunpack.c.l.b16 %v2357
    %v5466 = vunpack.c.h.b16 %v2357
    %v5467 = vunpack.c.l.b16 %v2358
    %v5468 = vunpack.c.h.b16 %v2358
    %v5469 = vunpack.c.l.b16 %v2359
    %v5470 = vunpack.c.h.b16 %v2359
    %v5471 = vunpack.c.l.b16 %v2360
    %v5472 = vunpack.c.h.b16 %v2360
    %v5473 = vunpack.c.l.b16 %v2361
    %v5474 = vunpack.c.h.b16 %v2361
    %v5475 = vunpack.c.l.b16 %v2362
    %v5476 = vunpack.c.h.b16 %v2362
    %v5477 = vunpack.c.l.b16 %v2363
    %v5478 = vunpack.c.h.b16 %v2363
    %v5479 = vunpack.c.l.b16 %v2364
    %v5480 = vunpack.c.h.b16 %v2364
    %v5481 = vunpack.c.l.b16 %v2365
    %v5482 = vunpack.c.h.b16 %v2365
    %v5483 = vunpack.c.l.b16 %v2366
    %v5484 = vunpack.c.h.b16 %v2366
    %v5485 = vunpack.c.l.b16 %v2367
    %v5486 = vunpack.c.h.b16 %v2367
    %v5487 = vunpack.c.l.b16 %v2368
    %v5488 = vunpack.c.h.b16 %v2368
    %v5489 = vunpack.c.l.b16 %v2369
    %v5490 = vunpack.c.h.b16 %v2369
    %v5491 = vunpack.c.l.b16 %v2370
    %v5492 = vunpack.c.h.b16 %v2370
    %v5493 = vunpack.c.l.b16 %v2371
    %v5494 = vunpack.c.h.b16 %v2371
    %v5495 = vunpack.c.l.b16 %v2372
    %v5496 = vunpack.c.h.b16 %v2372
    %v5497 = vunpack.c.l.b16 %v2373
    %v5498 = vunpack.c.h.b16 %v2373
    %v5499 = vunpack.c.l.b16 %v2374
    %v5500 = vunpack.c.h.b16 %v2374
    %v5501 = vunpack.c.l.b16 %v2375
    %v5502 = vunpack.c.h.b16 %v2375
    %v5503 = vunpack.c.l.b16 %v2376
    %v5504 = vunpack.c.h.b16 %v2376
    %v5505 = vunpack.c.l.b16 %v2377
    %v5506 = vunpack.c.h.b16 %v2377
    %v5507 = vunpack.c.l.b16 %v2378
    %v5508 = vunpack.c.h.b16 %v2378
    %v5509 = vunpack.c.l.b16 %v2379
    %v5510 = vunpack.c.h.b16 %v2379
    %v5511 = vunpack.c.l.b16 %v2380
    %v5512 = vunpack.c.h.b16 %v2380
    %v5513 = vunpack.c.l.b16 %v2381
    %v5514 = vunpack.c.h.b16 %v2381
    %v5515 = vunpack.c.l.b16 %v2382
    %v5516 = vunpack.c.h.b16 %v2382
    %v5517 = vunpack.c.l.b16 %v2383
    %v5518 = vunpack.c.h.b16 %v2383
    %v5519 = vunpack.c.l.b16 %v2384
    %v5520 = vunpack.c.h.b16 %v2384
    %v5521 = vunpack.c.l.b16 %v2385
    %v5522 = vunpack.c.h.b16 %v2385
    %v5523 = vunpack.c.l.b16 %v2386
    %v5524 = vunpack.c.h.b16 %v2386
    %v5525 = vunpack.c.l.b16 %v2387
    %v5526 = vunpack.c.h.b16 %v2387
    %v5527 = vunpack.c.l.b16 %v2388
    %v5528 = vunpack.c.h.b16 %v2388
    %v5529 = vunpack.c.l.b16 %v2389
    %v5530 = vunpack.c.h.b16 %v2389
    %v5531 = vunpack.c.l.b16 %v2390
    %v5532 = vunpack.c.h.b16 %v2390
    %v5533 = vunpack.c.l.b16 %v2391
    %v5534 = vunpack.c.h.b16 %v2391
    %v5535 = vunpack.c.l.b16 %v2392
    %v5536 = vunpack.c.h.b16 %v2392
    %v5537 = vunpack.c.l.b16 %v2393
    %v5538 = vunpack.c.h.b16 %v2393
    %v5539 = vunpack.c.l.b16 %v2394
    %v5540 = vunpack.c.h.b16 %v2394
    %v5541 = vunpack.c.l.b16 %v2395
    %v5542 = vunpack.c.h.b16 %v2395
    %v5543 = vunpack.c.l.b16 %v2396
    %v5544 = vunpack.c.h.b16 %v2396
    %v5545 = vunpack.c.l.b16 %v2397
    %v5546 = vunpack.c.h.b16 %v2397
    %v5547 = vunpack.c.l.b16 %v2398
    %v5548 = vunpack.c.h.b16 %v2398
    %v5549 = vunpack.c.l.b16 %v2399
    %v5550 = vunpack.c.h.b16 %v2399
    %v5551 = vunpack.c.l.b16 %v2400
    %v5552 = vunpack.c.h.b16 %v2400
    %v5553 = vunpack.c.l.b16 %v2401
    %v5554 = vunpack.c.h.b16 %v2401
    %v5555 = vunpack.c.l.b16 %v2402
    %v5556 = vunpack.c.h.b16 %v2402
    %v5557 = vunpack.c.l.b16 %v2403
    %v5558 = vunpack.c.h.b16 %v2403
    %v5559 = vunpack.c.l.b16 %v2404
    %v5560 = vunpack.c.h.b16 %v2404
    %v5561 = vunpack.c.l.b16 %v2405
    %v5562 = vunpack.c.h.b16 %v2405
    %v5563 = vunpack.c.l.b16 %v2406
    %v5564 = vunpack.c.h.b16 %v2406
    %v5565 = vunpack.c.l.b16 %v2407
    %v5566 = vunpack.c.h.b16 %v2407
    %v5567 = vunpack.c.l.b16 %v2408
    %v5568 = vunpack.c.h.b16 %v2408
    %v5569 = vunpack.c.l.b16 %v2409
    %v5570 = vunpack.c.h.b16 %v2409
    %v5571 = vunpack.c.l.b16 %v2410
    %v5572 = vunpack.c.h.b16 %v2410
    %v5573 = vunpack.c.l.b16 %v2411
    %v5574 = vunpack.c.h.b16 %v2411
    %v5575 = vunpack.c.l.b16 %v2412
    %v5576 = vunpack.c.h.b16 %v2412
    %v5577 = vunpack.c.l.b16 %v2413
    %v5578 = vunpack.c.h.b16 %v2413
    %v5579 = vunpack.c.l.b16 %v2414
    %v5580 = vunpack.c.h.b16 %v2414
    %v5581 = vunpack.c.l.b16 %v2415
    %v5582 = vunpack.c.h.b16 %v2415
    %v5583 = vunpack.c.l.b16 %v2416
    %v5584 = vunpack.c.h.b16 %v2416
    %v5585 = vunpack.c.l.b16 %v2417
    %v5586 = vunpack.c.h.b16 %v2417
    %v5587 = vunpack.c.l.b16 %v2418
    %v5588 = vunpack.c.h.b16 %v2418
    %v5589 = vunpack.c.l.b16 %v2419
    %v5590 = vunpack.c.h.b16 %v2419
    %v5591 = vunpack.c.l.b16 %v2420
    %v5592 = vunpack.c.h.b16 %v2420
    %v5593 = vunpack.c.l.b16 %v2421
    %v5594 = vunpack.c.h.b16 %v2421
    %v5595 = vunpack.c.l.b16 %v2422
    %v5596 = vunpack.c.h.b16 %v2422
    %v5597 = vunpack.c.l.b16 %v2423
    %v5598 = vunpack.c.h.b16 %v2423
    %v5599 = vunpack.c.l.b16 %v2424
    %v5600 = vunpack.c.h.b16 %v2424
    %v5601 = vunpack.c.l.b16 %v2425
    %v5602 = vunpack.c.h.b16 %v2425
    %v5603 = vunpack.c.l.b16 %v2426
    %v5604 = vunpack.c.h.b16 %v2426
    %v5605 = vunpack.c.l.b16 %v2427
    %v5606 = vunpack.c.h.b16 %v2427
    %v5607 = vunpack.c.l.b16 %v2428
    %v5608 = vunpack.c.h.b16 %v2428
    %v5609 = vunpack.c.l.b16 %v2429
    %v5610 = vunpack.c.h.b16 %v2429
    %v5611 = vunpack.c.l.b16 %v2430
    %v5612 = vunpack.c.h.b16 %v2430
    %v5613 = vunpack.c.l.b16 %v2431
    %v5614 = vunpack.c.h.b16 %v2431
    %v5615 = vunpack.c.l.b16 %v2432
    %v5616 = vunpack.c.h.b16 %v2432
    %v5617 = vunpack.c.l.b16 %v2433
    %v5618 = vunpack.c.h.b16 %v2433
    %v5619 = vunpack.c.l.b16 %v2434
    %v5620 = vunpack.c.h.b16 %v2434
    %v5621 = vunpack.c.l.b16 %v2435
    %v5622 = vunpack.c.h.b16 %v2435
    %v5623 = vunpack.c.l.b16 %v2436
    %v5624 = vunpack.c.h.b16 %v2436
    %v5625 = vunpack.c.l.b16 %v2437
    %v5626 = vunpack.c.h.b16 %v2437
    %v5627 = vunpack.c.l.b16 %v2438
    %v5628 = vunpack.c.h.b16 %v2438
    %v5629 = vunpack.c.l.b16 %v2439
    %v5630 = vunpack.c.h.b16 %v2439
    %v5631 = vunpack.c.l.b16 %v2440
    %v5632 = vunpack.c.h.b16 %v2440
    %v5633 = vunpack.c.l.b16 %v2441
    %v5634 = vunpack.c.h.b16 %v2441
    %v5635 = vunpack.c.l.b16 %v2442
    %v5636 = vunpack.c.h.b16 %v2442
    %v5637 = vunpack.c.l.b16 %v2443
    %v5638 = vunpack.c.h.b16 %v2443
    %v5639 = vunpack.c.l.b16 %v2444
    %v5640 = vunpack.c.h.b16 %v2444
    %v5641 = vunpack.c.l.b16 %v2445
    %v5642 = vunpack.c.h.b16 %v2445
    %v5643 = vunpack.c.l.b16 %v2446
    %v5644 = vunpack.c.h.b16 %v2446
    %v5645 = vunpack.c.l.b16 %v2447
    %v5646 = vunpack.c.h.b16 %v2447
    %v5647 = vunpack.c.l.b16 %v2448
    %v5648 = vunpack.c.h.b16 %v2448
    %v5649 = vunpack.c.l.b16 %v2449
    %v5650 = vunpack.c.h.b16 %v2449
    %v5651 = vunpack.c.l.b16 %v2450
    %v5652 = vunpack.c.h.b16 %v2450
    %v5653 = vunpack.c.l.b16 %v2451
    %v5654 = vunpack.c.h.b16 %v2451
    %v5655 = vunpack.c.l.b16 %v2452
    %v5656 = vunpack.c.h.b16 %v2452
    %v5657 = vunpack.c.l.b16 %v2453
    %v5658 = vunpack.c.h.b16 %v2453
    %v5659 = vunpack.c.l.b16 %v2454
    %v5660 = vunpack.c.h.b16 %v2454
    %v5661 = vunpack.c.l.b16 %v2455
    %v5662 = vunpack.c.h.b16 %v2455
    %v5663 = vunpack.c.l.b16 %v2456
    %v5664 = vunpack.c.h.b16 %v2456
    %v5665 = vunpack.c.l.b16 %v2457
    %v5666 = vunpack.c.h.b16 %v2457
    %v5667 = vunpack.c.l.b16 %v2458
    %v5668 = vunpack.c.h.b16 %v2458
    %v5669 = vunpack.c.l.b16 %v2459
    %v5670 = vunpack.c.h.b16 %v2459
    %v5671 = vunpack.c.l.b16 %v2460
    %v5672 = vunpack.c.h.b16 %v2460
    %v5673 = vunpack.c.l.b16 %v2461
    %v5674 = vunpack.c.h.b16 %v2461
    %v5675 = vunpack.c.l.b16 %v2462
    %v5676 = vunpack.c.h.b16 %v2462
    %v5677 = vunpack.c.l.b16 %v2463
    %v5678 = vunpack.c.h.b16 %v2463
    %v5679 = vunpack.c.l.b16 %v2464
    %v5680 = vunpack.c.h.b16 %v2464
    %v5681 = vunpack.c.l.b16 %v2465
    %v5682 = vunpack.c.h.b16 %v2465
    %v5683 = vunpack.c.l.b16 %v2466
    %v5684 = vunpack.c.h.b16 %v2466
    %v5685 = vunpack.c.l.b16 %v2467
    %v5686 = vunpack.c.h.b16 %v2467
    %v5687 = vunpack.c.l.b16 %v2468
    %v5688 = vunpack.c.h.b16 %v2468
    %v5689 = vunpack.c.l.b16 %v2469
    %v5690 = vunpack.c.h.b16 %v2469
    %v5691 = vunpack.c.l.b16 %v2470
    %v5692 = vunpack.c.h.b16 %v2470
    %v5693 = vunpack.c.l.b16 %v2471
    %v5694 = vunpack.c.h.b16 %v2471
    %v5695 = vunpack.c.l.b16 %v2472
    %v5696 = vunpack.c.h.b16 %v2472
    %v5697 = vunpack.c.l.b16 %v2473
    %v5698 = vunpack.c.h.b16 %v2473
    %v5699 = vunpack.c.l.b16 %v2474
    %v5700 = vunpack.c.h.b16 %v2474
    %v5701 = vunpack.c.l.b16 %v2475
    %v5702 = vunpack.c.h.b16 %v2475
    %v5703 = vunpack.c.l.b16 %v2476
    %v5704 = vunpack.c.h.b16 %v2476
    %v5705 = vunpack.c.l.b16 %v2477
    %v5706 = vunpack.c.h.b16 %v2477
    %v5707 = vunpack.c.l.b16 %v2478
    %v5708 = vunpack.c.h.b16 %v2478
    %v5709 = vunpack.c.l.b16 %v2479
    %v5710 = vunpack.c.h.b16 %v2479
    %v5711 = vunpack.c.l.b16 %v2480
    %v5712 = vunpack.c.h.b16 %v2480
    %v5713 = vunpack.c.l.b16 %v2481
    %v5714 = vunpack.c.h.b16 %v2481
    %v5715 = vunpack.c.l.b16 %v2482
    %v5716 = vunpack.c.h.b16 %v2482
    %v5717 = vunpack.c.l.b16 %v2483
    %v5718 = vunpack.c.h.b16 %v2483
    %v5719 = vunpack.c.l.b16 %v2484
    %v5720 = vunpack.c.h.b16 %v2484
    %v5721 = vunpack.c.l.b16 %v2485
    %v5722 = vunpack.c.h.b16 %v2485
    %v5723 = vunpack.c.l.b16 %v2486
    %v5724 = vunpack.c.h.b16 %v2486
    %v5725 = vunpack.c.l.b16 %v2487
    %v5726 = vunpack.c.h.b16 %v2487
    %v5727 = vunpack.c.l.b16 %v2488
    %v5728 = vunpack.c.h.b16 %v2488
    %v5729 = vunpack.c.l.b16 %v2489
    %v5730 = vunpack.c.h.b16 %v2489
    %v5731 = vunpack.c.l.b16 %v2490
    %v5732 = vunpack.c.h.b16 %v2490
    %v5733 = vunpack.c.l.b16 %v2491
    %v5734 = vunpack.c.h.b16 %v2491
    %v5735 = vunpack.c.l.b16 %v2492
    %v5736 = vunpack.c.h.b16 %v2492
    %v5737 = vunpack.c.l.b16 %v2493
    %v5738 = vunpack.c.h.b16 %v2493
    %v5739 = vunpack.c.l.b16 %v2494
    %v5740 = vunpack.c.h.b16 %v2494
    %v5741 = vunpack.c.l.b16 %v2495
    %v5742 = vunpack.c.h.b16 %v2495
    %v5743 = vunpack.c.l.b16 %v2496
    %v5744 = vunpack.c.h.b16 %v2496
    %v5745 = vunpack.c.l.b16 %v2497
    %v5746 = vunpack.c.h.b16 %v2497
    %v5747 = vunpack.c.l.b16 %v2498
    %v5748 = vunpack.c.h.b16 %v2498
    %v5749 = vunpack.c.l.b16 %v2499
    %v5750 = vunpack.c.h.b16 %v2499
    %v5751 = vunpack.c.l.b16 %v2500
    %v5752 = vunpack.c.h.b16 %v2500
    %v5753 = vunpack.c.l.b16 %v2501
    %v5754 = vunpack.c.h.b16 %v2501
    %v5755 = vunpack.c.l.b16 %v2502
    %v5756 = vunpack.c.h.b16 %v2502
    %v5757 = vunpack.c.l.b16 %v2503
    %v5758 = vunpack.c.h.b16 %v2503
    %v5759 = vunpack.c.l.b16 %v2504
    %v5760 = vunpack.c.h.b16 %v2504
    %v5761 = vunpack.c.l.b16 %v2505
    %v5762 = vunpack.c.h.b16 %v2505
    %v5763 = vunpack.c.l.b16 %v2506
    %v5764 = vunpack.c.h.b16 %v2506
    %v5765 = vunpack.c.l.b16 %v2507
    %v5766 = vunpack.c.h.b16 %v2507
    %v5767 = vunpack.c.l.b16 %v2508
    %v5768 = vunpack.c.h.b16 %v2508
    %v5769 = vunpack.c.l.b16 %v2509
    %v5770 = vunpack.c.h.b16 %v2509
    %v5771 = vunpack.c.l.b16 %v2510
    %v5772 = vunpack.c.h.b16 %v2510
    %v5773 = vunpack.c.l.b16 %v2511
    %v5774 = vunpack.c.h.b16 %v2511
    %v5775 = vunpack.c.l.b16 %v2512
    %v5776 = vunpack.c.h.b16 %v2512
    %v5777 = vunpack.c.l.b16 %v2513
    %v5778 = vunpack.c.h.b16 %v2513
    %v5779 = vunpack.c.l.b16 %v2514
    %v5780 = vunpack.c.h.b16 %v2514
    %v5781 = vunpack.c.l.b16 %v2515
    %v5782 = vunpack.c.h.b16 %v2515
    %v5783 = vunpack.c.l.b16 %v2516
    %v5784 = vunpack.c.h.b16 %v2516
    %v5785 = vunpack.c.l.b16 %v2517
    %v5786 = vunpack.c.h.b16 %v2517
    %v5787 = vunpack.c.l.b16 %v2518
    %v5788 = vunpack.c.h.b16 %v2518
    %v5789 = vpack.c.b16 %v3777, %v3773
    %v5790 = vpack.c.b16 %v3778, %v3774
    %v5791 = vpack.c.b16 %v3779, %v3775
    %v5792 = vpack.c.b16 %v3780, %v3776
    %v5793 = vpack.c.b16 %v3785, %v3781
    %v5794 = vpack.c.b16 %v3786, %v3782
    %v5795 = vpack.c.b16 %v3787, %v3783
    %v5796 = vpack.c.b16 %v3788, %v3784
    %v5797 = vpack.c.b16 %v3793, %v3789
    %v5798 = vpack.c.b16 %v3794, %v3790
    %v5799 = vpack.c.b16 %v3795, %v3791
    %v5800 = vpack.c.b16 %v3796, %v3792
    %v5801 = vpack.c.b16 %v3801, %v3797
    %v5802 = vpack.c.b16 %v3802, %v3798
    %v5803 = vpack.c.b16 %v3803, %v3799
    %v5804 = vpack.c.b16 %v3804, %v3800
    %v5805 = vpack.c.b16 %v3809, %v3805
    %v5806 = vpack.c.b16 %v3810, %v3806
    %v5807 = vpack.c.b16 %v3811, %v3807
    %v5808 = vpack.c.b16 %v3812, %v3808
    %v5809 = vpack.c.b16 %v3817, %v3813
    %v5810 = vpack.c.b16 %v3818, %v3814
    %v5811 = vpack.c.b16 %v3819, %v3815
    %v5812 = vpack.c.b16 %v3820, %v3816
    %v5813 = vpack.c.b16 %v3825, %v3821
    %v5814 = vpack.c.b16 %v3826, %v3822
    %v5815 = vpack.c.b16 %v3827, %v3823
    %v5816 = vpack.c.b16 %v3828, %v3824
    %v5817 = vpack.c.b16 %v3833, %v3829
    %v5818 = vpack.c.b16 %v3834, %v3830
    %v5819 = vpack.c.b16 %v3835, %v3831
    %v5820 = vpack.c.b16 %v3836, %v3832
    %v5821 = vpack.c.b16 %v3841, %v3837
    %v5822 = vpack.c.b16 %v3842, %v3838
    %v5823 = vpack.c.b16 %v3843, %v3839
    %v5824 = vpack.c.b16 %v3844, %v3840
    %v5825 = vpack.c.b16 %v3849, %v3845
    %v5826 = vpack.c.b16 %v3850, %v3846
    %v5827 = vpack.c.b16 %v3851, %v3847
    %v5828 = vpack.c.b16 %v3852, %v3848
    %v5829 = vpack.c.b16 %v3857, %v3853
    %v5830 = vpack.c.b16 %v3858, %v3854
    %v5831 = vpack.c.b16 %v3859, %v3855
    %v5832 = vpack.c.b16 %v3860, %v3856
    %v5833 = vpack.c.b16 %v3865, %v3861
    %v5834 = vpack.c.b16 %v3866, %v3862
    %v5835 = vpack.c.b16 %v3867, %v3863
    %v5836 = vpack.c.b16 %v3868, %v3864
    %v5837 = vpack.c.b16 %v3873, %v3869
    %v5838 = vpack.c.b16 %v3874, %v3870
    %v5839 = vpack.c.b16 %v3875, %v3871
    %v5840 = vpack.c.b16 %v3876, %v3872
    %v5841 = vpack.c.b16 %v3881, %v3877
    %v5842 = vpack.c.b16 %v3882, %v3878
    %v5843 = vpack.c.b16 %v3883, %v3879
    %v5844 = vpack.c.b16 %v3884, %v3880
    %v5845 = vpack.c.b16 %v3889, %v3885
    %v5846 = vpack.c.b16 %v3890, %v3886
    %v5847 = vpack.c.b16 %v3891, %v3887
    %v5848 = vpack.c.b16 %v3892, %v3888
    %v5849 = vpack.c.b16 %v3897, %v3893
    %v5850 = vpack.c.b16 %v3898, %v3894
    %v5851 = vpack.c.b16 %v3899, %v3895
    %v5852 = vpack.c.b16 %v3900, %v3896
    %v5853 = vpack.c.b16 %v3905, %v3901
    %v5854 = vpack.c.b16 %v3906, %v3902
    %v5855 = vpack.c.b16 %v3907, %v3903
    %v5856 = vpack.c.b16 %v3908, %v3904
    %v5857 = vpack.c.b16 %v3913, %v3909
    %v5858 = vpack.c.b16 %v3914, %v3910
    %v5859 = vpack.c.b16 %v3915, %v3911
    %v5860 = vpack.c.b16 %v3916, %v3912
    %v5861 = vpack.c.b16 %v3921, %v3917
    %v5862 = vpack.c.b16 %v3922, %v3918
    %v5863 = vpack.c.b16 %v3923, %v3919
    %v5864 = vpack.c.b16 %v3924, %v3920
    %v5865 = vpack.c.b16 %v3929, %v3925
    %v5866 = vpack.c.b16 %v3930, %v3926
    %v5867 = vpack.c.b16 %v3931, %v3927
    %v5868 = vpack.c.b16 %v3932, %v3928
    %v5869 = vpack.c.b16 %v3937, %v3933
    %v5870 = vpack.c.b16 %v3938, %v3934
    %v5871 = vpack.c.b16 %v3939, %v3935
    %v5872 = vpack.c.b16 %v3940, %v3936
    %v5873 = vpack.c.b16 %v3945, %v3941
    %v5874 = vpack.c.b16 %v3946, %v3942
    %v5875 = vpack.c.b16 %v3947, %v3943
    %v5876 = vpack.c.b16 %v3948, %v3944
    %v5877 = vpack.c.b16 %v3953, %v3949
    %v5878 = vpack.c.b16 %v3954, %v3950
    %v5879 = vpack.c.b16 %v3955, %v3951
    %v5880 = vpack.c.b16 %v3956, %v3952
    %v5881 = vpack.c.b16 %v3961, %v3957
    %v5882 = vpack.c.b16 %v3962, %v3958
    %v5883 = vpack.c.b16 %v3963, %v3959
    %v5884 = vpack.c.b16 %v3964, %v3960
    %v5885 = vpack.c.b16 %v3969, %v3965
    %v5886 = vpack.c.b16 %v3970, %v3966
    %v5887 = vpack.c.b16 %v3971, %v3967
    %v5888 = vpack.c.b16 %v3972, %v3968
    %v5889 = vpack.c.b16 %v3977, %v3973
    %v5890 = vpack.c.b16 %v3978, %v3974
    %v5891 = vpack.c.b16 %v3979, %v3975
    %v5892 = vpack.c.b16 %v3980, %v3976
    %v5893 = vpack.c.b16 %v3985, %v3981
    %v5894 = vpack.c.b16 %v3986, %v3982
    %v5895 = vpack.c.b16 %v3987, %v3983
    %v5896 = vpack.c.b16 %v3988, %v3984
    %v5897 = vpack.c.b16 %v3993, %v3989
    %v5898 = vpack.c.b16 %v3994, %v3990
    %v5899 = vpack.c.b16 %v3995, %v3991
    %v5900 = vpack.c.b16 %v3996, %v3992
    %v5901 = vpack.c.b16 %v4001, %v3997
    %v5902 = vpack.c.b16 %v4002, %v3998
    %v5903 = vpack.c.b16 %v4003, %v3999
    %v5904 = vpack.c.b16 %v4004, %v4000
    %v5905 = vpack.c.b16 %v4009, %v4005
    %v5906 = vpack.c.b16 %v4010, %v4006
    %v5907 = vpack.c.b16 %v4011, %v4007
    %v5908 = vpack.c.b16 %v4012, %v4008
    %v5909 = vpack.c.b16 %v4017, %v4013
    %v5910 = vpack.c.b16 %v4018, %v4014
    %v5911 = vpack.c.b16 %v4019, %v4015
    %v5912 = vpack.c.b16 %v4020, %v4016
    %v5913 = vpack.c.b16 %v4025, %v4021
    %v5914 = vpack.c.b16 %v4026, %v4022
    %v5915 = vpack.c.b16 %v4027, %v4023
    %v5916 = vpack.c.b16 %v4028, %v4024
    %v5917 = vpack.c.b16 %v4033, %v4029
    %v5918 = vpack.c.b16 %v4034, %v4030
    %v5919 = vpack.c.b16 %v4035, %v4031
    %v5920 = vpack.c.b16 %v4036, %v4032
    %v5921 = vpack.c.b16 %v4041, %v4037
    %v5922 = vpack.c.b16 %v4042, %v4038
    %v5923 = vpack.c.b16 %v4043, %v4039
    %v5924 = vpack.c.b16 %v4044, %v4040
    %v5925 = vpack.c.b16 %v4049, %v4045
    %v5926 = vpack.c.b16 %v4050, %v4046
    %v5927 = vpack.c.b16 %v4051, %v4047
    %v5928 = vpack.c.b16 %v4052, %v4048
    %v5929 = vpack.c.b16 %v4057, %v4053
    %v5930 = vpack.c.b16 %v4058, %v4054
    %v5931 = vpack.c.b16 %v4059, %v4055
    %v5932 = vpack.c.b16 %v4060, %v4056
    %v5933 = vpack.c.b16 %v4065, %v4061
    %v5934 = vpack.c.b16 %v4066, %v4062
    %v5935 = vpack.c.b16 %v4067, %v4063
    %v5936 = vpack.c.b16 %v4068, %v4064
    %v5937 = vpack.c.b16 %v4073, %v4069
    %v5938 = vpack.c.b16 %v4074, %v4070
    %v5939 = vpack.c.b16 %v4075, %v4071
    %v5940 = vpack.c.b16 %v4076, %v4072
    %v5941 = vpack.c.b16 %v4081, %v4077
    %v5942 = vpack.c.b16 %v4082, %v4078
    %v5943 = vpack.c.b16 %v4083, %v4079
    %v5944 = vpack.c.b16 %v4084, %v4080
    %v5945 = vpack.c.b16 %v4089, %v4085
    %v5946 = vpack.c.b16 %v4090, %v4086
    %v5947 = vpack.c.b16 %v4091, %v4087
    %v5948 = vpack.c.b16 %v4092, %v4088
    %v5949 = vpack.c.b16 %v4097, %v4093
    %v5950 = vpack.c.b16 %v4098, %v4094
    %v5951 = vpack.c.b16 %v4099, %v4095
    %v5952 = vpack.c.b16 %v4100, %v4096
    %v5953 = vpack.c.b16 %v4105, %v4101
    %v5954 = vpack.c.b16 %v4106, %v4102
    %v5955 = vpack.c.b16 %v4107, %v4103
    %v5956 = vpack.c.b16 %v4108, %v4104
    %v5957 = vpack.c.b16 %v4113, %v4109
    %v5958 = vpack.c.b16 %v4114, %v4110
    %v5959 = vpack.c.b16 %v4115, %v4111
    %v5960 = vpack.c.b16 %v4116, %v4112
    %v5961 = vpack.c.b16 %v4121, %v4117
    %v5962 = vpack.c.b16 %v4122, %v4118
    %v5963 = vpack.c.b16 %v4123, %v4119
    %v5964 = vpack.c.b16 %v4124, %v4120
    %v5965 = vpack.c.b16 %v4129, %v4125
    %v5966 = vpack.c.b16 %v4130, %v4126
    %v5967 = vpack.c.b16 %v4131, %v4127
    %v5968 = vpack.c.b16 %v4132, %v4128
    %v5969 = vpack.c.b16 %v4137, %v4133
    %v5970 = vpack.c.b16 %v4138, %v4134
    %v5971 = vpack.c.b16 %v4139, %v4135
    %v5972 = vpack.c.b16 %v4140, %v4136
    %v5973 = vpack.c.b16 %v4145, %v4141
    %v5974 = vpack.c.b16 %v4146, %v4142
    %v5975 = vpack.c.b16 %v4147, %v4143
    %v5976 = vpack.c.b16 %v4148, %v4144
    %v5977 = vpack.c.b16 %v4153, %v4149
    %v5978 = vpack.c.b16 %v4154, %v4150
    %v5979 = vpack.c.b16 %v4155, %v4151
    %v5980 = vpack.c.b16 %v4156, %v4152
    %v5981 = vpack.c.b16 %v4161, %v4157
    %v5982 = vpack.c.b16 %v4162, %v4158
    %v5983 = vpack.c.b16 %v4163, %v4159
    %v5984 = vpack.c.b16 %v4164, %v4160
    %v5985 = vpack.c.b16 %v4169, %v4165
    %v5986 = vpack.c.b16 %v4170, %v4166
    %v5987 = vpack.c.b16 %v4171, %v4167
    %v5988 = vpack.c.b16 %v4172, %v4168
    %v5989 = vpack.c.b16 %v4177, %v4173
    %v5990 = vpack.c.b16 %v4178, %v4174
    %v5991 = vpack.c.b16 %v4179, %v4175
    %v5992 = vpack.c.b16 %v4180, %v4176
    %v5993 = vpack.c.b16 %v4185, %v4181
    %v5994 = vpack.c.b16 %v4186, %v4182
    %v5995 = vpack.c.b16 %v4187, %v4183
    %v5996 = vpack.c.b16 %v4188, %v4184
    %v5997 = vpack.c.b16 %v4193, %v4189
    %v5998 = vpack.c.b16 %v4194, %v4190
    %v5999 = vpack.c.b16 %v4195, %v4191
    %v6000 = vpack.c.b16 %v4196, %v4192
    %v6001 = vpack.c.b16 %v4201, %v4197
    %v6002 = vpack.c.b16 %v4202, %v4198
    %v6003 = vpack.c.b16 %v4203, %v4199
    %v6004 = vpack.c.b16 %v4204, %v4200
    %v6005 = vpack.c.b16 %v4209, %v4205
    %v6006 = vpack.c.b16 %v4210, %v4206
    %v6007 = vpack.c.b16 %v4211, %v4207
    %v6008 = vpack.c.b16 %v4212, %v4208
    %v6009 = vpack.c.b16 %v4217, %v4213
    %v6010 = vpack.c.b16 %v4218, %v4214
    %v6011 = vpack.c.b16 %v4219, %v4215
    %v6012 = vpack.c.b16 %v4220, %v4216
    %v6013 = vpack.c.b16 %v4225, %v4221
    %v6014 = vpack.c.b16 %v4226, %v4222
    %v6015 = vpack.c.b16 %v4227, %v4223
    %v6016 = vpack.c.b16 %v4228, %v4224
    %v6017 = vpack.c.b16 %v4233, %v4229
    %v6018 = vpack.c.b16 %v4234, %v4230
    %v6019 = vpack.c.b16 %v4235, %v4231
    %v6020 = vpack.c.b16 %v4236, %v4232
    %v6021 = vpack.c.b16 %v4241, %v4237
    %v6022 = vpack.c.b16 %v4242, %v4238
    %v6023 = vpack.c.b16 %v4243, %v4239
    %v6024 = vpack.c.b16 %v4244, %v4240
    %v6025 = vpack.c.b16 %v4249, %v4245
    %v6026 = vpack.c.b16 %v4250, %v4246
    %v6027 = vpack.c.b16 %v4251, %v4247
    %v6028 = vpack.c.b16 %v4252, %v4248
    %v6029 = vpack.c.b16 %v4257, %v4253
    %v6030 = vpack.c.b16 %v4258, %v4254
    %v6031 = vpack.c.b16 %v4259, %v4255
    %v6032 = vpack.c.b16 %v4260, %v4256
    %v6033 = vpack.c.b16 %v4265, %v4261
    %v6034 = vpack.c.b16 %v4266, %v4262
    %v6035 = vpack.c.b16 %v4267, %v4263
    %v6036 = vpack.c.b16 %v4268, %v4264
    %v6037 = vpack.c.b16 %v4273, %v4269
    %v6038 = vpack.c.b16 %v4274, %v4270
    %v6039 = vpack.c.b16 %v4275, %v4271
    %v6040 = vpack.c.b16 %v4276, %v4272
    %v6041 = vpack.c.b16 %v4281, %v4277
    %v6042 = vpack.c.b16 %v4282, %v4278
    %v6043 = vpack.c.b16 %v4283, %v4279
    %v6044 = vpack.c.b16 %v4284, %v4280
    %v6045 = vpack.c.b16 %v4289, %v4285
    %v6046 = vpack.c.b16 %v4290, %v4286
    %v6047 = vpack.c.b16 %v4291, %v4287
    %v6048 = vpack.c.b16 %v4292, %v4288
    %v6049 = vpack.c.b16 %v4297, %v4293
    %v6050 = vpack.c.b16 %v4298, %v4294
    %v6051 = vpack.c.b16 %v4299, %v4295
    %v6052 = vpack.c.b16 %v4300, %v4296
    %v6053 = vpack.c.b16 %v4305, %v4301
    %v6054 = vpack.c.b16 %v4306, %v4302
    %v6055 = vpack.c.b16 %v4307, %v4303
    %v6056 = vpack.c.b16 %v4308, %v4304
    %v6057 = vpack.c.b16 %v4313, %v4309
    %v6058 = vpack.c.b16 %v4314, %v4310
    %v6059 = vpack.c.b16 %v4315, %v4311
    %v6060 = vpack.c.b16 %v4316, %v4312
    %v6061 = vpack.c.b16 %v4321, %v4317
    %v6062 = vpack.c.b16 %v4322, %v4318
    %v6063 = vpack.c.b16 %v4323, %v4319
    %v6064 = vpack.c.b16 %v4324, %v4320
    %v6065 = vpack.c.b16 %v4329, %v4325
    %v6066 = vpack.c.b16 %v4330, %v4326
    %v6067 = vpack.c.b16 %v4331, %v4327
    %v6068 = vpack.c.b16 %v4332, %v4328
    %v6069 = vpack.c.b16 %v4337, %v4333
    %v6070 = vpack.c.b16 %v4338, %v4334
    %v6071 = vpack.c.b16 %v4339, %v4335
    %v6072 = vpack.c.b16 %v4340, %v4336
    %v6073 = vpack.c.b16 %v4345, %v4341
    %v6074 = vpack.c.b16 %v4346, %v4342
    %v6075 = vpack.c.b16 %v4347, %v4343
    %v6076 = vpack.c.b16 %v4348, %v4344
    %v6077 = vpack.c.b16 %v4353, %v4349
    %v6078 = vpack.c.b16 %v4354, %v4350
    %v6079 = vpack.c.b16 %v4355, %v4351
    %v6080 = vpack.c.b16 %v4356, %v4352
    %v6081 = vpack.c.b16 %v4361, %v4357
    %v6082 = vpack.c.b16 %v4362, %v4358
    %v6083 = vpack.c.b16 %v4363, %v4359
    %v6084 = vpack.c.b16 %v4364, %v4360
    %v6085 = vpack.c.b16 %v4369, %v4365
    %v6086 = vpack.c.b16 %v4370, %v4366
    %v6087 = vpack.c.b16 %v4371, %v4367
    %v6088 = vpack.c.b16 %v4372, %v4368
    %v6089 = vpack.c.b16 %v4377, %v4373
    %v6090 = vpack.c.b16 %v4378, %v4374
    %v6091 = vpack.c.b16 %v4379, %v4375
    %v6092 = vpack.c.b16 %v4380, %v4376
    %v6093 = vpack.c.b16 %v4385, %v4381
    %v6094 = vpack.c.b16 %v4386, %v4382
    %v6095 = vpack.c.b16 %v4387, %v4383
    %v6096 = vpack.c.b16 %v4388, %v4384
    %v6097 = vpack.c.b16 %v4393, %v4389
    %v6098 = vpack.c.b16 %v4394, %v4390
    %v6099 = vpack.c.b16 %v4395, %v4391
    %v6100 = vpack.c.b16 %v4396, %v4392
    %v6101 = vpack.c.b16 %v4401, %v4397
    %v6102 = vpack.c.b16 %v4402, %v4398
    %v6103 = vpack.c.b16 %v4403, %v4399
    %v6104 = vpack.c.b16 %v4404, %v4400
    %v6105 = vpack.c.b16 %v4409, %v4405
    %v6106 = vpack.c.b16 %v4410, %v4406
    %v6107 = vpack.c.b16 %v4411, %v4407
    %v6108 = vpack.c.b16 %v4412, %v4408
    %v6109 = vpack.c.b16 %v4417, %v4413
    %v6110 = vpack.c.b16 %v4418, %v4414
    %v6111 = vpack.c.b16 %v4419, %v4415
    %v6112 = vpack.c.b16 %v4420, %v4416
    %v6113 = vpack.c.b16 %v4425, %v4421
    %v6114 = vpack.c.b16 %v4426, %v4422
    %v6115 = vpack.c.b16 %v4427, %v4423
    %v6116 = vpack.c.b16 %v4428, %v4424
    %v6117 = vpack.c.b16 %v4433, %v4429
    %v6118 = vpack.c.b16 %v4434, %v4430
    %v6119 = vpack.c.b16 %v4435, %v4431
    %v6120 = vpack.c.b16 %v4436, %v4432
    %v6121 = vpack.c.b16 %v4441, %v4437
    %v6122 = vpack.c.b16 %v4442, %v4438
    %v6123 = vpack.c.b16 %v4443, %v4439
    %v6124 = vpack.c.b16 %v4444, %v4440
    %v6125 = vpack.c.b16 %v4449, %v4445
    %v6126 = vpack.c.b16 %v4450, %v4446
    %v6127 = vpack.c.b16 %v4451, %v4447
    %v6128 = vpack.c.b16 %v4452, %v4448
    %v6129 = vpack.c.b16 %v4457, %v4453
    %v6130 = vpack.c.b16 %v4458, %v4454
    %v6131 = vpack.c.b16 %v4459, %v4455
    %v6132 = vpack.c.b16 %v4460, %v4456
    %v6133 = vpack.c.b16 %v4465, %v4461
    %v6134 = vpack.c.b16 %v4466, %v4462
    %v6135 = vpack.c.b16 %v4467, %v4463
    %v6136 = vpack.c.b16 %v4468, %v4464
    %v6137 = vpack.c.b16 %v4473, %v4469
    %v6138 = vpack.c.b16 %v4474, %v4470
    %v6139 = vpack.c.b16 %v4475, %v4471
    %v6140 = vpack.c.b16 %v4476, %v4472
    %v6141 = vpack.c.b16 %v4481, %v4477
    %v6142 = vpack.c.b16 %v4482, %v4478
    %v6143 = vpack.c.b16 %v4483, %v4479
    %v6144 = vpack.c.b16 %v4484, %v4480
    %v6145 = vpack.c.b16 %v4489, %v4485
    %v6146 = vpack.c.b16 %v4490, %v4486
    %v6147 = vpack.c.b16 %v4491, %v4487
    %v6148 = vpack.c.b16 %v4492, %v4488
    %v6149 = vpack.c.b16 %v4497, %v4493
    %v6150 = vpack.c.b16 %v4498, %v4494
    %v6151 = vpack.c.b16 %v4499, %v4495
    %v6152 = vpack.c.b16 %v4500, %v4496
    %v6153 = vpack.c.b16 %v4505, %v4501
    %v6154 = vpack.c.b16 %v4506, %v4502
    %v6155 = vpack.c.b16 %v4507, %v4503
    %v6156 = vpack.c.b16 %v4508, %v4504
    %v6157 = vpack.c.b16 %v4513, %v4509
    %v6158 = vpack.c.b16 %v4514, %v4510
    %v6159 = vpack.c.b16 %v4515, %v4511
    %v6160 = vpack.c.b16 %v4516, %v4512
    %v6161 = vpack.c.b16 %v4521, %v4517
    %v6162 = vpack.c.b16 %v4522, %v4518
    %v6163 = vpack.c.b16 %v4523, %v4519
    %v6164 = vpack.c.b16 %v4524, %v4520
    %v6165 = vpack.c.b16 %v4529, %v4525
    %v6166 = vpack.c.b16 %v4530, %v4526
    %v6167 = vpack.c.b16 %v4531, %v4527
    %v6168 = vpack.c.b16 %v4532, %v4528
    %v6169 = vpack.c.b16 %v4537, %v4533
    %v6170 = vpack.c.b16 %v4538, %v4534
    %v6171 = vpack.c.b16 %v4539, %v4535
    %v6172 = vpack.c.b16 %v4540, %v4536
    %v6173 = vpack.c.b16 %v4545, %v4541
    %v6174 = vpack.c.b16 %v4546, %v4542
    %v6175 = vpack.c.b16 %v4547, %v4543
    %v6176 = vpack.c.b16 %v4548, %v4544
    %v6177 = vpack.c.b16 %v4553, %v4549
    %v6178 = vpack.c.b16 %v4554, %v4550
    %v6179 = vpack.c.b16 %v4555, %v4551
    %v6180 = vpack.c.b16 %v4556, %v4552
    %v6181 = vpack.c.b16 %v4561, %v4557
    %v6182 = vpack.c.b16 %v4562, %v4558
    %v6183 = vpack.c.b16 %v4563, %v4559
    %v6184 = vpack.c.b16 %v4564, %v4560
    %v6185 = vpack.c.b16 %v4569, %v4565
    %v6186 = vpack.c.b16 %v4570, %v4566
    %v6187 = vpack.c.b16 %v4571, %v4567
    %v6188 = vpack.c.b16 %v4572, %v4568
    %v6189 = vpack.c.b16 %v4577, %v4573
    %v6190 = vpack.c.b16 %v4578, %v4574
    %v6191 = vpack.c.b16 %v4579, %v4575
    %v6192 = vpack.c.b16 %v4580, %v4576
    %v6193 = vpack.c.b16 %v4585, %v4581
    %v6194 = vpack.c.b16 %v4586, %v4582
    %v6195 = vpack.c.b16 %v4587, %v4583
    %v6196 = vpack.c.b16 %v4588, %v4584
    %v6197 = vpack.c.b16 %v4593, %v4589
    %v6198 = vpack.c.b16 %v4594, %v4590
    %v6199 = vpack.c.b16 %v4595, %v4591
    %v6200 = vpack.c.b16 %v4596, %v4592
    %v6201 = vpack.c.b16 %v4601, %v4597
    %v6202 = vpack.c.b16 %v4602, %v4598
    %v6203 = vpack.c.b16 %v4603, %v4599
    %v6204 = vpack.c.b16 %v4604, %v4600
    %v6205 = vpack.c.b16 %v4609, %v4605
    %v6206 = vpack.c.b16 %v4610, %v4606
    %v6207 = vpack.c.b16 %v4611, %v4607
    %v6208 = vpack.c.b16 %v4612, %v4608
    %v6209 = vpack.c.b16 %v4617, %v4613
    %v6210 = vpack.c.b16 %v4618, %v4614
    %v6211 = vpack.c.b16 %v4619, %v4615
    %v6212 = vpack.c.b16 %v4620, %v4616
    %v6213 = vpack.c.b16 %v4625, %v4621
    %v6214 = vpack.c.b16 %v4626, %v4622
    %v6215 = vpack.c.b16 %v4627, %v4623
    %v6216 = vpack.c.b16 %v4628, %v4624
    %v6217 = vpack.c.b16 %v4633, %v4629
    %v6218 = vpack.c.b16 %v4634, %v4630
    %v6219 = vpack.c.b16 %v4635, %v4631
    %v6220 = vpack.c.b16 %v4636, %v4632
    %v6221 = vpack.c.b16 %v4641, %v4637
    %v6222 = vpack.c.b16 %v4642, %v4638
    %v6223 = vpack.c.b16 %v4643, %v4639
    %v6224 = vpack.c.b16 %v4644, %v4640
    %v6225 = vpack.c.b16 %v4649, %v4645
    %v6226 = vpack.c.b16 %v4650, %v4646
    %v6227 = vpack.c.b16 %v4651, %v4647
    %v6228 = vpack.c.b16 %v4652, %v4648
    %v6229 = vpack.c.b16 %v4657, %v4653
    %v6230 = vpack.c.b16 %v4658, %v4654
    %v6231 = vpack.c.b16 %v4659, %v4655
    %v6232 = vpack.c.b16 %v4660, %v4656
    %v6233 = vpack.c.b16 %v4665, %v4661
    %v6234 = vpack.c.b16 %v4666, %v4662
    %v6235 = vpack.c.b16 %v4667, %v4663
    %v6236 = vpack.c.b16 %v4668, %v4664
    %v6237 = vpack.c.b16 %v4673, %v4669
    %v6238 = vpack.c.b16 %v4674, %v4670
    %v6239 = vpack.c.b16 %v4675, %v4671
    %v6240 = vpack.c.b16 %v4676, %v4672
    %v6241 = vpack.c.b16 %v4681, %v4677
    %v6242 = vpack.c.b16 %v4682, %v4678
    %v6243 = vpack.c.b16 %v4683, %v4679
    %v6244 = vpack.c.b16 %v4684, %v4680
    %v6245 = vpack.c.b16 %v4689, %v4685
    %v6246 = vpack.c.b16 %v4690, %v4686
    %v6247 = vpack.c.b16 %v4691, %v4687
    %v6248 = vpack.c.b16 %v4692, %v4688
    %v6249 = vpack.c.b16 %v4697, %v4693
    %v6250 = vpack.c.b16 %v4698, %v4694
    %v6251 = vpack.c.b16 %v4699, %v4695
    %v6252 = vpack.c.b16 %v4700, %v4696
    %v6253 = vpack.c.b16 %v4705, %v4701
    %v6254 = vpack.c.b16 %v4706, %v4702
    %v6255 = vpack.c.b16 %v4707, %v4703
    %v6256 = vpack.c.b16 %v4708, %v4704
    %v6257 = vpack.c.b16 %v4713, %v4709
    %v6258 = vpack.c.b16 %v4714, %v4710
    %v6259 = vpack.c.b16 %v4715, %v4711
    %v6260 = vpack.c.b16 %v4716, %v4712
    %v6261 = vpack.c.b16 %v4721, %v4717
    %v6262 = vpack.c.b16 %v4722, %v4718
    %v6263 = vpack.c.b16 %v4723, %v4719
    %v6264 = vpack.c.b16 %v4724, %v4720
    %v6265 = vpack.c.b16 %v4729, %v4725
    %v6266 = vpack.c.b16 %v4730, %v4726
    %v6267 = vpack.c.b16 %v4731, %v4727
    %v6268 = vpack.c.b16 %v4732, %v4728
    %v6269 = vpack.c.b16 %v4737, %v4733
    %v6270 = vpack.c.b16 %v4738, %v4734
    %v6271 = vpack.c.b16 %v4739, %v4735
    %v6272 = vpack.c.b16 %v4740, %v4736
    %v6273 = vpack.c.b16 %v4745, %v4741
    %v6274 = vpack.c.b16 %v4746, %v4742
    %v6275 = vpack.c.b16 %v4747, %v4743
    %v6276 = vpack.c.b16 %v4748, %v4744
    %v6277 = vpack.c.b16 %v4753, %v4749
    %v6278 = vpack.c.b16 %v4754, %v4750
    %v6279 = vpack.c.b16 %v4755, %v4751
    %v6280 = vpack.c.b16 %v4756, %v4752
    %v6281 = vpack.c.b16 %v4761, %v4757
    %v6282 = vpack.c.b16 %v4762, %v4758
    %v6283 = vpack.c.b16 %v4763, %v4759
    %v6284 = vpack.c.b16 %v4764, %v4760
    %v6285 = vpack.c.b16 %v4769, %v4765
    %v6286 = vpack.c.b16 %v4770, %v4766
    %v6287 = vpack.c.b16 %v4771, %v4767
    %v6288 = vpack.c.b16 %v4772, %v4768
    %v6289 = vpack.c.b16 %v4777, %v4773
    %v6290 = vpack.c.b16 %v4778, %v4774
    %v6291 = vpack.c.b16 %v4779, %v4775
    %v6292 = vpack.c.b16 %v4780, %v4776
    %v6293 = vpack.c.b16 %v4785, %v4781
    %v6294 = vpack.c.b16 %v4786, %v4782
    %v6295 = vpack.c.b16 %v4787, %v4783
    %v6296 = vpack.c.b16 %v4788, %v4784
    %v6297 = vpack.c.b16 %v4793, %v4789
    %v6298 = vpack.c.b16 %v4794, %v4790
    %v6299 = vpack.c.b16 %v4795, %v4791
    %v6300 = vpack.c.b16 %v4796, %v4792
    %v6301 = vpack.c.b16 %v4801, %v4797
    %v6302 = vpack.c.b16 %v4802, %v4798
    %v6303 = vpack.c.b16 %v4803, %v4799
    %v6304 = vpack.c.b16 %v4804, %v4800
    %v6305 = vpack.c.b16 %v4809, %v4805
    %v6306 = vpack.c.b16 %v4810, %v4806
    %v6307 = vpack.c.b16 %v4811, %v4807
    %v6308 = vpack.c.b16 %v4812, %v4808
    %v6309 = vpack.c.b16 %v4817, %v4813
    %v6310 = vpack.c.b16 %v4818, %v4814
    %v6311 = vpack.c.b16 %v4819, %v4815
    %v6312 = vpack.c.b16 %v4820, %v4816
    %v6313 = vpack.c.b16 %v4825, %v4821
    %v6314 = vpack.c.b16 %v4826, %v4822
    %v6315 = vpack.c.b16 %v4827, %v4823
    %v6316 = vpack.c.b16 %v4828, %v4824
    %v6317 = vpack.c.b16 %v4833, %v4829
    %v6318 = vpack.c.b16 %v4834, %v4830
    %v6319 = vpack.c.b16 %v4835, %v4831
    %v6320 = vpack.c.b16 %v4836, %v4832
    %v6321 = vpack.c.b16 %v4841, %v4837
    %v6322 = vpack.c.b16 %v4842, %v4838
    %v6323 = vpack.c.b16 %v4843, %v4839
    %v6324 = vpack.c.b16 %v4844, %v4840
    %v6325 = vpack.c.b16 %v4849, %v4845
    %v6326 = vpack.c.b16 %v4850, %v4846
    %v6327 = vpack.c.b16 %v4851, %v4847
    %v6328 = vpack.c.b16 %v4852, %v4848
    %v6329 = vpack.c.b16 %v4857, %v4853
    %v6330 = vpack.c.b16 %v4858, %v4854
    %v6331 = vpack.c.b16 %v4859, %v4855
    %v6332 = vpack.c.b16 %v4860, %v4856
    %v6333 = vpack.c.b16 %v4865, %v4861
    %v6334 = vpack.c.b16 %v4866, %v4862
    %v6335 = vpack.c.b16 %v4867, %v4863
    %v6336 = vpack.c.b16 %v4868, %v4864
    %v6337 = vpack.c.b16 %v4873, %v4869
    %v6338 = vpack.c.b16 %v4874, %v4870
    %v6339 = vpack.c.b16 %v4875, %v4871
    %v6340 = vpack.c.b16 %v4876, %v4872
    %v6341 = vpack.c.b16 %v4881, %v4877
    %v6342 = vpack.c.b16 %v4882, %v4878
    %v6343 = vpack.c.b16 %v4883, %v4879
    %v6344 = vpack.c.b16 %v4884, %v4880
    %v6345 = vpack.c.b16 %v4889, %v4885
    %v6346 = vpack.c.b16 %v4890, %v4886
    %v6347 = vpack.c.b16 %v4891, %v4887
    %v6348 = vpack.c.b16 %v4892, %v4888
    %v6349 = vpack.c.b16 %v4897, %v4893
    %v6350 = vpack.c.b16 %v4898, %v4894
    %v6351 = vpack.c.b16 %v4899, %v4895
    %v6352 = vpack.c.b16 %v4900, %v4896
    %v6353 = vpack.c.b16 %v4905, %v4901
    %v6354 = vpack.c.b16 %v4906, %v4902
    %v6355 = vpack.c.b16 %v4907, %v4903
    %v6356 = vpack.c.b16 %v4908, %v4904
    %v6357 = vpack.c.b16 %v4913, %v4909
    %v6358 = vpack.c.b16 %v4914, %v4910
    %v6359 = vpack.c.b16 %v4915, %v4911
    %v6360 = vpack.c.b16 %v4916, %v4912
    %v6361 = vpack.c.b16 %v4921, %v4917
    %v6362 = vpack.c.b16 %v4922, %v4918
    %v6363 = vpack.c.b16 %v4923, %v4919
    %v6364 = vpack.c.b16 %v4924, %v4920
    %v6365 = vpack.c.b16 %v4929, %v4925
    %v6366 = vpack.c.b16 %v4930, %v4926
    %v6367 = vpack.c.b16 %v4931, %v4927
    %v6368 = vpack.c.b16 %v4932, %v4928
    %v6369 = vpack.c.b16 %v4937, %v4933
    %v6370 = vpack.c.b16 %v4938, %v4934
    %v6371 = vpack.c.b16 %v4939, %v4935
    %v6372 = vpack.c.b16 %v4940, %v4936
    %v6373 = vpack.c.b16 %v4945, %v4941
    %v6374 = vpack.c.b16 %v4946, %v4942
    %v6375 = vpack.c.b16 %v4947, %v4943
    %v6376 = vpack.c.b16 %v4948, %v4944
    %v6377 = vpack.c.b16 %v4953, %v4949
    %v6378 = vpack.c.b16 %v4954, %v4950
    %v6379 = vpack.c.b16 %v4955, %v4951
    %v6380 = vpack.c.b16 %v4956, %v4952
    %v6381 = vpack.c.b16 %v4961, %v4957
    %v6382 = vpack.c.b16 %v4962, %v4958
    %v6383 = vpack.c.b16 %v4963, %v4959
    %v6384 = vpack.c.b16 %v4964, %v4960
    %v6385 = vpack.c.b16 %v4969, %v4965
    %v6386 = vpack.c.b16 %v4970, %v4966
    %v6387 = vpack.c.b16 %v4971, %v4967
    %v6388 = vpack.c.b16 %v4972, %v4968
    %v6389 = vpack.c.b16 %v4977, %v4973
    %v6390 = vpack.c.b16 %v4978, %v4974
    %v6391 = vpack.c.b16 %v4979, %v4975
    %v6392 = vpack.c.b16 %v4980, %v4976
    %v6393 = vpack.c.b16 %v4985, %v4981
    %v6394 = vpack.c.b16 %v4986, %v4982
    %v6395 = vpack.c.b16 %v4987, %v4983
    %v6396 = vpack.c.b16 %v4988, %v4984
    %v6397 = vpack.c.b16 %v4993, %v4989
    %v6398 = vpack.c.b16 %v4994, %v4990
    %v6399 = vpack.c.b16 %v4995, %v4991
    %v6400 = vpack.c.b16 %v4996, %v4992
    %v6401 = vpack.c.b16 %v5001, %v4997
    %v6402 = vpack.c.b16 %v5002, %v4998
    %v6403 = vpack.c.b16 %v5003, %v4999
    %v6404 = vpack.c.b16 %v5004, %v5000
    %v6405 = vpack.c.b16 %v5009, %v5005
    %v6406 = vpack.c.b16 %v5010, %v5006
    %v6407 = vpack.c.b16 %v5011, %v5007
    %v6408 = vpack.c.b16 %v5012, %v5008
    %v6409 = vpack.c.b16 %v5017, %v5013
    %v6410 = vpack.c.b16 %v5018, %v5014
    %v6411 = vpack.c.b16 %v5019, %v5015
    %v6412 = vpack.c.b16 %v5020, %v5016
    %v6413 = vpack.c.b16 %v5025, %v5021
    %v6414 = vpack.c.b16 %v5026, %v5022
    %v6415 = vpack.c.b16 %v5027, %v5023
    %v6416 = vpack.c.b16 %v5028, %v5024
    %v6417 = vpack.c.b16 %v5033, %v5029
    %v6418 = vpack.c.b16 %v5034, %v5030
    %v6419 = vpack.c.b16 %v5035, %v5031
    %v6420 = vpack.c.b16 %v5036, %v5032
    %v6421 = vpack.c.b16 %v5041, %v5037
    %v6422 = vpack.c.b16 %v5042, %v5038
    %v6423 = vpack.c.b16 %v5043, %v5039
    %v6424 = vpack.c.b16 %v5044, %v5040
    %v6425 = vpack.c.b16 %v5049, %v5045
    %v6426 = vpack.c.b16 %v5050, %v5046
    %v6427 = vpack.c.b16 %v5051, %v5047
    %v6428 = vpack.c.b16 %v5052, %v5048
    %v6429 = vpack.c.b16 %v5057, %v5053
    %v6430 = vpack.c.b16 %v5058, %v5054
    %v6431 = vpack.c.b16 %v5059, %v5055
    %v6432 = vpack.c.b16 %v5060, %v5056
    %v6433 = vpack.c.b16 %v5065, %v5061
    %v6434 = vpack.c.b16 %v5066, %v5062
    %v6435 = vpack.c.b16 %v5067, %v5063
    %v6436 = vpack.c.b16 %v5068, %v5064
    %v6437 = vpack.c.b16 %v5073, %v5069
    %v6438 = vpack.c.b16 %v5074, %v5070
    %v6439 = vpack.c.b16 %v5075, %v5071
    %v6440 = vpack.c.b16 %v5076, %v5072
    %v6441 = vpack.c.b16 %v5081, %v5077
    %v6442 = vpack.c.b16 %v5082, %v5078
    %v6443 = vpack.c.b16 %v5083, %v5079
    %v6444 = vpack.c.b16 %v5084, %v5080
    %v6445 = vpack.c.b16 %v5089, %v5085
    %v6446 = vpack.c.b16 %v5090, %v5086
    %v6447 = vpack.c.b16 %v5091, %v5087
    %v6448 = vpack.c.b16 %v5092, %v5088
    %v6449 = vpack.c.b16 %v5097, %v5093
    %v6450 = vpack.c.b16 %v5098, %v5094
    %v6451 = vpack.c.b16 %v5099, %v5095
    %v6452 = vpack.c.b16 %v5100, %v5096
    %v6453 = vpack.c.b16 %v5105, %v5101
    %v6454 = vpack.c.b16 %v5106, %v5102
    %v6455 = vpack.c.b16 %v5107, %v5103
    %v6456 = vpack.c.b16 %v5108, %v5104
    %v6457 = vpack.c.b16 %v5113, %v5109
    %v6458 = vpack.c.b16 %v5114, %v5110
    %v6459 = vpack.c.b16 %v5115, %v5111
    %v6460 = vpack.c.b16 %v5116, %v5112
    %v6461 = vpack.c.b16 %v5121, %v5117
    %v6462 = vpack.c.b16 %v5122, %v5118
    %v6463 = vpack.c.b16 %v5123, %v5119
    %v6464 = vpack.c.b16 %v5124, %v5120
    %v6465 = vpack.c.b16 %v5129, %v5125
    %v6466 = vpack.c.b16 %v5130, %v5126
    %v6467 = vpack.c.b16 %v5131, %v5127
    %v6468 = vpack.c.b16 %v5132, %v5128
    %v6469 = vpack.c.b16 %v5137, %v5133
    %v6470 = vpack.c.b16 %v5138, %v5134
    %v6471 = vpack.c.b16 %v5139, %v5135
    %v6472 = vpack.c.b16 %v5140, %v5136
    %v6473 = vpack.c.b16 %v5145, %v5141
    %v6474 = vpack.c.b16 %v5146, %v5142
    %v6475 = vpack.c.b16 %v5147, %v5143
    %v6476 = vpack.c.b16 %v5148, %v5144
    %v6477 = vpack.c.b16 %v5153, %v5149
    %v6478 = vpack.c.b16 %v5154, %v5150
    %v6479 = vpack.c.b16 %v5155, %v5151
    %v6480 = vpack.c.b16 %v5156, %v5152
    %v6481 = vpack.c.b16 %v5161, %v5157
    %v6482 = vpack.c.b16 %v5162, %v5158
    %v6483 = vpack.c.b16 %v5163, %v5159
    %v6484 = vpack.c.b16 %v5164, %v5160
    %v6485 = vpack.c.b16 %v5169, %v5165
    %v6486 = vpack.c.b16 %v5170, %v5166
    %v6487 = vpack.c.b16 %v5171, %v5167
    %v6488 = vpack.c.b16 %v5172, %v5168
    %v6489 = vpack.c.b16 %v5177, %v5173
    %v6490 = vpack.c.b16 %v5178, %v5174
    %v6491 = vpack.c.b16 %v5179, %v5175
    %v6492 = vpack.c.b16 %v5180, %v5176
    %v6493 = vpack.c.b16 %v5185, %v5181
    %v6494 = vpack.c.b16 %v5186, %v5182
    %v6495 = vpack.c.b16 %v5187, %v5183
    %v6496 = vpack.c.b16 %v5188, %v5184
    %v6497 = vpack.c.b16 %v5193, %v5189
    %v6498 = vpack.c.b16 %v5194, %v5190
    %v6499 = vpack.c.b16 %v5195, %v5191
    %v6500 = vpack.c.b16 %v5196, %v5192
    %v6501 = vpack.c.b16 %v5201, %v5197
    %v6502 = vpack.c.b16 %v5202, %v5198
    %v6503 = vpack.c.b16 %v5203, %v5199
    %v6504 = vpack.c.b16 %v5204, %v5200
    %v6505 = vpack.c.b16 %v5209, %v5205
    %v6506 = vpack.c.b16 %v5210, %v5206
    %v6507 = vpack.c.b16 %v5211, %v5207
    %v6508 = vpack.c.b16 %v5212, %v5208
    %v6509 = vpack.c.b16 %v5217, %v5213
    %v6510 = vpack.c.b16 %v5218, %v5214
    %v6511 = vpack.c.b16 %v5219, %v5215
    %v6512 = vpack.c.b16 %v5220, %v5216
    %v6513 = vpack.c.b16 %v5225, %v5221
    %v6514 = vpack.c.b16 %v5226, %v5222
    %v6515 = vpack.c.b16 %v5227, %v5223
    %v6516 = vpack.c.b16 %v5228, %v5224
    %v6517 = vpack.c.b16 %v5233, %v5229
    %v6518 = vpack.c.b16 %v5234, %v5230
    %v6519 = vpack.c.b16 %v5235, %v5231
    %v6520 = vpack.c.b16 %v5236, %v5232
    %v6521 = vpack.c.b16 %v5241, %v5237
    %v6522 = vpack.c.b16 %v5242, %v5238
    %v6523 = vpack.c.b16 %v5243, %v5239
    %v6524 = vpack.c.b16 %v5244, %v5240
    %v6525 = vpack.c.b16 %v5249, %v5245
    %v6526 = vpack.c.b16 %v5250, %v5246
    %v6527 = vpack.c.b16 %v5251, %v5247
    %v6528 = vpack.c.b16 %v5252, %v5248
    %v6529 = vpack.c.b16 %v5257, %v5253
    %v6530 = vpack.c.b16 %v5258, %v5254
    %v6531 = vpack.c.b16 %v5259, %v5255
    %v6532 = vpack.c.b16 %v5260, %v5256
    %v6533 = vpack.c.b16 %v5265, %v5261
    %v6534 = vpack.c.b16 %v5266, %v5262
    %v6535 = vpack.c.b16 %v5267, %v5263
    %v6536 = vpack.c.b16 %v5268, %v5264
    %v6537 = vpack.c.b16 %v5273, %v5269
    %v6538 = vpack.c.b16 %v5274, %v5270
    %v6539 = vpack.c.b16 %v5275, %v5271
    %v6540 = vpack.c.b16 %v5276, %v5272
    %v6541 = vpack.c.b16 %v5281, %v5277
    %v6542 = vpack.c.b16 %v5282, %v5278
    %v6543 = vpack.c.b16 %v5283, %v5279
    %v6544 = vpack.c.b16 %v5284, %v5280
    %v6545 = vpack.c.b16 %v5289, %v5285
    %v6546 = vpack.c.b16 %v5290, %v5286
    %v6547 = vpack.c.b16 %v5291, %v5287
    %v6548 = vpack.c.b16 %v5292, %v5288
    %v6549 = vpack.c.b16 %v5297, %v5293
    %v6550 = vpack.c.b16 %v5298, %v5294
    %v6551 = vpack.c.b16 %v5299, %v5295
    %v6552 = vpack.c.b16 %v5300, %v5296
    %v6553 = vpack.c.b16 %v5305, %v5301
    %v6554 = vpack.c.b16 %v5306, %v5302
    %v6555 = vpack.c.b16 %v5307, %v5303
    %v6556 = vpack.c.b16 %v5308, %v5304
    %v6557 = vpack.c.b16 %v5313, %v5309
    %v6558 = vpack.c.b16 %v5314, %v5310
    %v6559 = vpack.c.b16 %v5315, %v5311
    %v6560 = vpack.c.b16 %v5316, %v5312
    %v6561 = vpack.c.b16 %v5321, %v5317
    %v6562 = vpack.c.b16 %v5322, %v5318
    %v6563 = vpack.c.b16 %v5323, %v5319
    %v6564 = vpack.c.b16 %v5324, %v5320
    %v6565 = vpack.c.b16 %v5329, %v5325
    %v6566 = vpack.c.b16 %v5330, %v5326
    %v6567 = vpack.c.b16 %v5331, %v5327
    %v6568 = vpack.c.b16 %v5332, %v5328
    %v6569 = vpack.c.b16 %v5337, %v5333
    %v6570 = vpack.c.b16 %v5338, %v5334
    %v6571 = vpack.c.b16 %v5339, %v5335
    %v6572 = vpack.c.b16 %v5340, %v5336
    %v6573 = vpack.c.b16 %v5345, %v5341
    %v6574 = vpack.c.b16 %v5346, %v5342
    %v6575 = vpack.c.b16 %v5347, %v5343
    %v6576 = vpack.c.b16 %v5348, %v5344
    %v6577 = vpack.c.b16 %v5353, %v5349
    %v6578 = vpack.c.b16 %v5354, %v5350
    %v6579 = vpack.c.b16 %v5355, %v5351
    %v6580 = vpack.c.b16 %v5356, %v5352
    %v6581 = vpack.c.b16 %v5361, %v5357
    %v6582 = vpack.c.b16 %v5362, %v5358
    %v6583 = vpack.c.b16 %v5363, %v5359
    %v6584 = vpack.c.b16 %v5364, %v5360
    %v6585 = vpack.c.b16 %v5369, %v5365
    %v6586 = vpack.c.b16 %v5370, %v5366
    %v6587 = vpack.c.b16 %v5371, %v5367
    %v6588 = vpack.c.b16 %v5372, %v5368
    %v6589 = vpack.c.b16 %v5377, %v5373
    %v6590 = vpack.c.b16 %v5378, %v5374
    %v6591 = vpack.c.b16 %v5379, %v5375
    %v6592 = vpack.c.b16 %v5380, %v5376
    %v6593 = vpack.c.b16 %v5385, %v5381
    %v6594 = vpack.c.b16 %v5386, %v5382
    %v6595 = vpack.c.b16 %v5387, %v5383
    %v6596 = vpack.c.b16 %v5388, %v5384
    %v6597 = vpack.c.b16 %v5393, %v5389
    %v6598 = vpack.c.b16 %v5394, %v5390
    %v6599 = vpack.c.b16 %v5395, %v5391
    %v6600 = vpack.c.b16 %v5396, %v5392
    %v6601 = vpack.c.b16 %v5401, %v5397
    %v6602 = vpack.c.b16 %v5402, %v5398
    %v6603 = vpack.c.b16 %v5403, %v5399
    %v6604 = vpack.c.b16 %v5404, %v5400
    %v6605 = vpack.c.b16 %v5409, %v5405
    %v6606 = vpack.c.b16 %v5410, %v5406
    %v6607 = vpack.c.b16 %v5411, %v5407
    %v6608 = vpack.c.b16 %v5412, %v5408
    %v6609 = vpack.c.b16 %v5417, %v5413
    %v6610 = vpack.c.b16 %v5418, %v5414
    %v6611 = vpack.c.b16 %v5419, %v5415
    %v6612 = vpack.c.b16 %v5420, %v5416
    %v6613 = vpack.c.b16 %v5425, %v5421
    %v6614 = vpack.c.b16 %v5426, %v5422
    %v6615 = vpack.c.b16 %v5427, %v5423
    %v6616 = vpack.c.b16 %v5428, %v5424
    %v6617 = vpack.c.b16 %v5433, %v5429
    %v6618 = vpack.c.b16 %v5434, %v5430
    %v6619 = vpack.c.b16 %v5435, %v5431
    %v6620 = vpack.c.b16 %v5436, %v5432
    %v6621 = vpack.c.b16 %v5441, %v5437
    %v6622 = vpack.c.b16 %v5442, %v5438
    %v6623 = vpack.c.b16 %v5443, %v5439
    %v6624 = vpack.c.b16 %v5444, %v5440
    %v6625 = vpack.c.b16 %v5449, %v5445
    %v6626 = vpack.c.b16 %v5450, %v5446
    %v6627 = vpack.c.b16 %v5451, %v5447
    %v6628 = vpack.c.b16 %v5452, %v5448
    %v6629 = vpack.c.b16 %v5457, %v5453
    %v6630 = vpack.c.b16 %v5458, %v5454
    %v6631 = vpack.c.b16 %v5459, %v5455
    %v6632 = vpack.c.b16 %v5460, %v5456
    %v6633 = vpack.c.b16 %v5465, %v5461
    %v6634 = vpack.c.b16 %v5466, %v5462
    %v6635 = vpack.c.b16 %v5467, %v5463
    %v6636 = vpack.c.b16 %v5468, %v5464
    %v6637 = vpack.c.b16 %v5473, %v5469
    %v6638 = vpack.c.b16 %v5474, %v5470
    %v6639 = vpack.c.b16 %v5475, %v5471
    %v6640 = vpack.c.b16 %v5476, %v5472
    %v6641 = vpack.c.b16 %v5481, %v5477
    %v6642 = vpack.c.b16 %v5482, %v5478
    %v6643 = vpack.c.b16 %v5483, %v5479
    %v6644 = vpack.c.b16 %v5484, %v5480
    %v6645 = vpack.c.b16 %v5489, %v5485
    %v6646 = vpack.c.b16 %v5490, %v5486
    %v6647 = vpack.c.b16 %v5491, %v5487
    %v6648 = vpack.c.b16 %v5492, %v5488
    %v6649 = vpack.c.b16 %v5497, %v5493
    %v6650 = vpack.c.b16 %v5498, %v5494
    %v6651 = vpack.c.b16 %v5499, %v5495
    %v6652 = vpack.c.b16 %v5500, %v5496
    %v6653 = vpack.c.b16 %v5505, %v5501
    %v6654 = vpack.c.b16 %v5506, %v5502
    %v6655 = vpack.c.b16 %v5507, %v5503
    %v6656 = vpack.c.b16 %v5508, %v5504
    %v6657 = vpack.c.b16 %v5513, %v5509
    %v6658 = vpack.c.b16 %v5514, %v5510
    %v6659 = vpack.c.b16 %v5515, %v5511
    %v6660 = vpack.c.b16 %v5516, %v5512
    %v6661 = vpack.c.b16 %v5521, %v5517
    %v6662 = vpack.c.b16 %v5522, %v5518
    %v6663 = vpack.c.b16 %v5523, %v5519
    %v6664 = vpack.c.b16 %v5524, %v5520
    %v6665 = vpack.c.b16 %v5529, %v5525
    %v6666 = vpack.c.b16 %v5530, %v5526
    %v6667 = vpack.c.b16 %v5531, %v5527
    %v6668 = vpack.c.b16 %v5532, %v5528
    %v6669 = vpack.c.b16 %v5537, %v5533
    %v6670 = vpack.c.b16 %v5538, %v5534
    %v6671 = vpack.c.b16 %v5539, %v5535
    %v6672 = vpack.c.b16 %v5540, %v5536
    %v6673 = vpack.c.b16 %v5545, %v5541
    %v6674 = vpack.c.b16 %v5546, %v5542
    %v6675 = vpack.c.b16 %v5547, %v5543
    %v6676 = vpack.c.b16 %v5548, %v5544
    %v6677 = vpack.c.b16 %v5553, %v5549
    %v6678 = vpack.c.b16 %v5554, %v5550
    %v6679 = vpack.c.b16 %v5555, %v5551
    %v6680 = vpack.c.b16 %v5556, %v5552
    %v6681 = vpack.c.b16 %v5561, %v5557
    %v6682 = vpack.c.b16 %v5562, %v5558
    %v6683 = vpack.c.b16 %v5563, %v5559
    %v6684 = vpack.c.b16 %v5564, %v5560
    %v6685 = vpack.c.b16 %v5569, %v5565
    %v6686 = vpack.c.b16 %v5570, %v5566
    %v6687 = vpack.c.b16 %v5571, %v5567
    %v6688 = vpack.c.b16 %v5572, %v5568
    %v6689 = vpack.c.b16 %v5577, %v5573
    %v6690 = vpack.c.b16 %v5578, %v5574
    %v6691 = vpack.c.b16 %v5579, %v5575
    %v6692 = vpack.c.b16 %v5580, %v5576
    %v6693 = vpack.c.b16 %v5585, %v5581
    %v6694 = vpack.c.b16 %v5586, %v5582
    %v6695 = vpack.c.b16 %v5587, %v5583
    %v6696 = vpack.c.b16 %v5588, %v5584
    %v6697 = vpack.c.b16 %v5593, %v5589
    %v6698 = vpack.c.b16 %v5594, %v5590
    %v6699 = vpack.c.b16 %v5595, %v5591
    %v6700 = vpack.c.b16 %v5596, %v5592
    %v6701 = vpack.c.b16 %v5601, %v5597
    %v6702 = vpack.c.b16 %v5602, %v5598
    %v6703 = vpack.c.b16 %v5603, %v5599
    %v6704 = vpack.c.b16 %v5604, %v5600
    %v6705 = vpack.c.b16 %v5609, %v5605
    %v6706 = vpack.c.b16 %v5610, %v5606
    %v6707 = vpack.c.b16 %v5611, %v5607
    %v6708 = vpack.c.b16 %v5612, %v5608
    %v6709 = vpack.c.b16 %v5617, %v5613
    %v6710 = vpack.c.b16 %v5618, %v5614
    %v6711 = vpack.c.b16 %v5619, %v5615
    %v6712 = vpack.c.b16 %v5620, %v5616
    %v6713 = vpack.c.b16 %v5625, %v5621
    %v6714 = vpack.c.b16 %v5626, %v5622
    %v6715 = vpack.c.b16 %v5627, %v5623
    %v6716 = vpack.c.b16 %v5628, %v5624
    %v6717 = vpack.c.b16 %v5633, %v5629
    %v6718 = vpack.c.b16 %v5634, %v5630
    %v6719 = vpack.c.b16 %v5635, %v5631
    %v6720 = vpack.c.b16 %v5636, %v5632
    %v6721 = vpack.c.b16 %v5641, %v5637
    %v6722 = vpack.c.b16 %v5642, %v5638
    %v6723 = vpack.c.b16 %v5643, %v5639
    %v6724 = vpack.c.b16 %v5644, %v5640
    %v6725 = vpack.c.b16 %v5649, %v5645
    %v6726 = vpack.c.b16 %v5650, %v5646
    %v6727 = vpack.c.b16 %v5651, %v5647
    %v6728 = vpack.c.b16 %v5652, %v5648
    %v6729 = vpack.c.b16 %v5657, %v5653
    %v6730 = vpack.c.b16 %v5658, %v5654
    %v6731 = vpack.c.b16 %v5659, %v5655
    %v6732 = vpack.c.b16 %v5660, %v5656
    %v6733 = vpack.c.b16 %v5665, %v5661
    %v6734 = vpack.c.b16 %v5666, %v5662
    %v6735 = vpack.c.b16 %v5667, %v5663
    %v6736 = vpack.c.b16 %v5668, %v5664
    %v6737 = vpack.c.b16 %v5673, %v5669
    %v6738 = vpack.c.b16 %v5674, %v5670
    %v6739 = vpack.c.b16 %v5675, %v5671
    %v6740 = vpack.c.b16 %v5676, %v5672
    %v6741 = vpack.c.b16 %v5681, %v5677
    %v6742 = vpack.c.b16 %v5682, %v5678
    %v6743 = vpack.c.b16 %v5683, %v5679
    %v6744 = vpack.c.b16 %v5684, %v5680
    %v6745 = vpack.c.b16 %v5689, %v5685
    %v6746 = vpack.c.b16 %v5690, %v5686
    %v6747 = vpack.c.b16 %v5691, %v5687
    %v6748 = vpack.c.b16 %v5692, %v5688
    %v6749 = vpack.c.b16 %v5697, %v5693
    %v6750 = vpack.c.b16 %v5698, %v5694
    %v6751 = vpack.c.b16 %v5699, %v5695
    %v6752 = vpack.c.b16 %v5700, %v5696
    %v6753 = vpack.c.b16 %v5705, %v5701
    %v6754 = vpack.c.b16 %v5706, %v5702
    %v6755 = vpack.c.b16 %v5707, %v5703
    %v6756 = vpack.c.b16 %v5708, %v5704
    %v6757 = vpack.c.b16 %v5713, %v5709
    %v6758 = vpack.c.b16 %v5714, %v5710
    %v6759 = vpack.c.b16 %v5715, %v5711
    %v6760 = vpack.c.b16 %v5716, %v5712
    %v6761 = vpack.c.b16 %v5721, %v5717
    %v6762 = vpack.c.b16 %v5722, %v5718
    %v6763 = vpack.c.b16 %v5723, %v5719
    %v6764 = vpack.c.b16 %v5724, %v5720
    %v6765 = vpack.c.b16 %v5729, %v5725
    %v6766 = vpack.c.b16 %v5730, %v5726
    %v6767 = vpack.c.b16 %v5731, %v5727
    %v6768 = vpack.c.b16 %v5732, %v5728
    %v6769 = vpack.c.b16 %v5737, %v5733
    %v6770 = vpack.c.b16 %v5738, %v5734
    %v6771 = vpack.c.b16 %v5739, %v5735
    %v6772 = vpack.c.b16 %v5740, %v5736
    %v6773 = vpack.c.b16 %v5745, %v5741
    %v6774 = vpack.c.b16 %v5746, %v5742
    %v6775 = vpack.c.b16 %v5747, %v5743
    %v6776 = vpack.c.b16 %v5748, %v5744
    %v6777 = vpack.c.b16 %v5753, %v5749
    %v6778 = vpack.c.b16 %v5754, %v5750
    %v6779 = vpack.c.b16 %v5755, %v5751
    %v6780 = vpack.c.b16 %v5756, %v5752
    %v6781 = vpack.c.b16 %v5761, %v5757
    %v6782 = vpack.c.b16 %v5762, %v5758
    %v6783 = vpack.c.b16 %v5763, %v5759
    %v6784 = vpack.c.b16 %v5764, %v5760
    %v6785 = vpack.c.b16 %v5769, %v5765
    %v6786 = vpack.c.b16 %v5770, %v5766
    %v6787 = vpack.c.b16 %v5771, %v5767
    %v6788 = vpack.c.b16 %v5772, %v5768
    %v6789 = vpack.c.b16 %v5777, %v5773
    %v6790 = vpack.c.b16 %v5778, %v5774
    %v6791 = vpack.c.b16 %v5779, %v5775
    %v6792 = vpack.c.b16 %v5780, %v5776
    %v6793 = vpack.c.b16 %v5785, %v5781
    %v6794 = vpack.c.b16 %v5786, %v5782
    %v6795 = vpack.c.b16 %v5787, %v5783
    %v6796 = vpack.c.b16 %v5788, %v5784
    %v7806 = vsel %vm1001, %v2733, 0
    %7808 = vmatprep.subr.bf16.mxu0 %v5790
    %7809 = vmatpush1.bf16.msra.mxu0 %v5789
    %7810 = vmatprep.subr.bf16.mxu0 %v5794
    %7811 = vmatpush1.bf16.msra.mxu0 %v5793
    %7812 = vmatprep.subr.bf16.mxu0 %v5798
    %7813 = vmatpush1.bf16.msra.mxu0 %v5797
    %7814 = vmatprep.subr.bf16.mxu0 %v5802
    %7815 = vmatpush1.bf16.msra.mxu0 %v5801
    %7816 = vmatprep.subr.bf16.mxu0 %v5806
    %7817 = vmatpush1.bf16.msra.mxu0 %v5805
    %7818 = vmatprep.subr.bf16.mxu0 %v5810
    %7819 = vmatpush1.bf16.msra.mxu0 %v5809
    %7820 = vmatprep.subr.bf16.mxu0 %v5814
    %7821 = vmatpush1.bf16.msra.mxu0 %v5813
    %7822 = vmatprep.subr.bf16.mxu0 %v5818
    %7823 = vmatpush1.bf16.msra.mxu0 %v5817
    %7824 = vmatprep.subr.bf16.mxu0 %v5822
    %7825 = vmatpush1.bf16.msra.mxu0 %v5821
    %7826 = vmatprep.subr.bf16.mxu0 %v5826
    %7827 = vmatpush1.bf16.msra.mxu0 %v5825
    %7828 = vmatprep.subr.bf16.mxu0 %v5830
    %7829 = vmatpush1.bf16.msra.mxu0 %v5829
    %7830 = vmatprep.subr.bf16.mxu0 %v5834
    %7831 = vmatpush1.bf16.msra.mxu0 %v5833
    %7832 = vmatprep.subr.bf16.mxu0 %v5838
    %7833 = vmatpush1.bf16.msra.mxu0 %v5837
    %7834 = vmatprep.subr.bf16.mxu0 %v5842
    %7835 = vmatpush1.bf16.msra.mxu0 %v5841
    %7836 = vmatprep.subr.bf16.mxu0 %v5846
    %7837 = vmatpush1.bf16.msra.mxu0 %v5845
    %7838 = vmatprep.subr.bf16.mxu0 %v5850
    %7839 = vmatpush1.bf16.msra.mxu0 %v5849
    %7840 = vmatprep.mubr.bf16.mxu0 %v2703
    %7841 = vmatmul.mubr.bf16.gmra.mrb[0].mxu0 %v2702
    %v7842 = vpop.f32.mrb[0].mxu0
    %v7843 = vadd.f32 %v2524, %v7842
    %v7844 = vpop.f32.mrb[0].mxu0
    %v7845 = vadd.f32 %v2528, %v7844
    %v7846 = vpop.f32.mrb[0].mxu0
    %v7847 = vpop.f32.mrb[0].mxu0
    %7848 = vdwg.mxu0
    %7849 = vmatprep.subr.bf16.mxu0 %v5854
    %7850 = vmatpush1.bf16.msra.mxu0 %v5853
    %7851 = vmatprep.subr.bf16.mxu0 %v5858
    %7852 = vmatpush1.bf16.msra.mxu0 %v5857
    %7853 = vmatprep.subr.bf16.mxu0 %v5862
    %7854 = vmatpush1.bf16.msra.mxu0 %v5861
    %7855 = vmatprep.subr.bf16.mxu0 %v5866
    %7856 = vmatpush1.bf16.msra.mxu0 %v5865
    %7857 = vmatprep.subr.bf16.mxu0 %v5870
    %7858 = vmatpush1.bf16.msra.mxu0 %v5869
    %7859 = vmatprep.subr.bf16.mxu0 %v5874
    %7860 = vmatpush1.bf16.msra.mxu0 %v5873
    %7861 = vmatprep.subr.bf16.mxu0 %v5878
    %7862 = vmatpush1.bf16.msra.mxu0 %v5877
    %7863 = vmatprep.subr.bf16.mxu0 %v5882
    %7864 = vmatpush1.bf16.msra.mxu0 %v5881
    %7865 = vmatprep.subr.bf16.mxu0 %v5886
    %7866 = vmatpush1.bf16.msra.mxu0 %v5885
    %7867 = vmatprep.subr.bf16.mxu0 %v5890
    %7868 = vmatpush1.bf16.msra.mxu0 %v5889
    %7869 = vmatprep.subr.bf16.mxu0 %v5894
    %7870 = vmatpush1.bf16.msra.mxu0 %v5893
    %7871 = vmatprep.subr.bf16.mxu0 %v5898
    %7872 = vmatpush1.bf16.msra.mxu0 %v5897
    %7873 = vmatprep.subr.bf16.mxu0 %v5902
    %7874 = vmatpush1.bf16.msra.mxu0 %v5901
    %7875 = vmatprep.subr.bf16.mxu0 %v5906
    %7876 = vmatpush1.bf16.msra.mxu0 %v5905
    %7877 = vmatprep.subr.bf16.mxu0 %v5910
    %7878 = vmatpush1.bf16.msra.mxu0 %v5909
    %7879 = vmatprep.subr.bf16.mxu0 %v5914
    %7880 = vmatpush1.bf16.msra.mxu0 %v5913
    %7881 = vmatprep.mubr.bf16.mxu0 %v2705
    %7882 = vmatmul.mubr.bf16.gmra.mrb[0].mxu0 %v2704
    %v7883 = vpop.f32.mrb[0].mxu0
    %v7884 = vadd.f32 %v7843, %v7883
    %v7885 = vpop.f32.mrb[0].mxu0
    %v7886 = vadd.f32 %v7845, %v7885
    %v7887 = vpop.f32.mrb[0].mxu0
    %v7888 = vpop.f32.mrb[0].mxu0
    %7889 = vdwg.mxu0
    %7890 = vmatprep.subr.bf16.mxu0 %v5918
    %7891 = vmatpush1.bf16.msra.mxu0 %v5917
    %7892 = vmatprep.subr.bf16.mxu0 %v5922
    %7893 = vmatpush1.bf16.msra.mxu0 %v5921
    %7894 = vmatprep.subr.bf16.mxu0 %v5926
    %7895 = vmatpush1.bf16.msra.mxu0 %v5925
    %7896 = vmatprep.subr.bf16.mxu0 %v5930
    %7897 = vmatpush1.bf16.msra.mxu0 %v5929
    %7898 = vmatprep.subr.bf16.mxu0 %v5934
    %7899 = vmatpush1.bf16.msra.mxu0 %v5933
    %7900 = vmatprep.subr.bf16.mxu0 %v5938
    %7901 = vmatpush1.bf16.msra.mxu0 %v5937
    %7902 = vmatprep.subr.bf16.mxu0 %v5942
    %7903 = vmatpush1.bf16.msra.mxu0 %v5941
    %7904 = vmatprep.subr.bf16.mxu0 %v5946
    %7905 = vmatpush1.bf16.msra.mxu0 %v5945
    %7906 = vmatprep.subr.bf16.mxu0 %v5950
    %7907 = vmatpush1.bf16.msra.mxu0 %v5949
    %7908 = vmatprep.subr.bf16.mxu0 %v5954
    %7909 = vmatpush1.bf16.msra.mxu0 %v5953
    %7910 = vmatprep.subr.bf16.mxu0 %v5958
    %7911 = vmatpush1.bf16.msra.mxu0 %v5957
    %7912 = vmatprep.subr.bf16.mxu0 %v5962
    %7913 = vmatpush1.bf16.msra.mxu0 %v5961
    %7914 = vmatprep.subr.bf16.mxu0 %v5966
    %7915 = vmatpush1.bf16.msra.mxu0 %v5965
    %7916 = vmatprep.subr.bf16.mxu0 %v5970
    %7917 = vmatpush1.bf16.msra.mxu0 %v5969
    %7918 = vmatprep.subr.bf16.mxu0 %v5974
    %7919 = vmatpush1.bf16.msra.mxu0 %v5973
    %7920 = vmatprep.subr.bf16.mxu0 %v5978
    %7921 = vmatpush1.bf16.msra.mxu0 %v5977
    %7922 = vmatprep.mubr.bf16.mxu0 %v2707
    %7923 = vmatmul.mubr.bf16.gmra.mrb[0].mxu0 %v2706
    %v7924 = vpop.f32.mrb[0].mxu0
    %v7925 = vadd.f32 %v7884, %v7924
    %v7926 = vpop.f32.mrb[0].mxu0
    %v7927 = vadd.f32 %v7886, %v7926
    %v7928 = vpop.f32.mrb[0].mxu0
    %v7929 = vpop.f32.mrb[0].mxu0
    %7930 = vdwg.mxu0
    %7931 = vmatprep.subr.bf16.mxu0 %v5982
    %7932 = vmatpush1.bf16.msra.mxu0 %v5981
    %7933 = vmatprep.subr.bf16.mxu0 %v5986
    %7934 = vmatpush1.bf16.msra.mxu0 %v5985
    %7935 = vmatprep.subr.bf16.mxu0 %v5990
    %7936 = vmatpush1.bf16.msra.mxu0 %v5989
    %7937 = vmatprep.subr.bf16.mxu0 %v5994
    %7938 = vmatpush1.bf16.msra.mxu0 %v5993
    %7939 = vmatprep.subr.bf16.mxu0 %v5998
    %7940 = vmatpush1.bf16.msra.mxu0 %v5997
    %7941 = vmatprep.subr.bf16.mxu0 %v6002
    %7942 = vmatpush1.bf16.msra.mxu0 %v6001
    %7943 = vmatprep.subr.bf16.mxu0 %v6006
    %7944 = vmatpush1.bf16.msra.mxu0 %v6005
    %7945 = vmatprep.subr.bf16.mxu0 %v6010
    %7946 = vmatpush1.bf16.msra.mxu0 %v6009
    %7947 = vmatprep.subr.bf16.mxu0 %v6014
    %7948 = vmatpush1.bf16.msra.mxu0 %v6013
    %7949 = vmatprep.subr.bf16.mxu0 %v6018
    %7950 = vmatpush1.bf16.msra.mxu0 %v6017
    %7951 = vmatprep.subr.bf16.mxu0 %v6022
    %7952 = vmatpush1.bf16.msra.mxu0 %v6021
    %7953 = vmatprep.subr.bf16.mxu0 %v6026
    %7954 = vmatpush1.bf16.msra.mxu0 %v6025
    %7955 = vmatprep.subr.bf16.mxu0 %v6030
    %7956 = vmatpush1.bf16.msra.mxu0 %v6029
    %7957 = vmatprep.subr.bf16.mxu0 %v6034
    %7958 = vmatpush1.bf16.msra.mxu0 %v6033
    %7959 = vmatprep.subr.bf16.mxu0 %v6038
    %7960 = vmatpush1.bf16.msra.mxu0 %v6037
    %7961 = vmatprep.subr.bf16.mxu0 %v6042
    %7962 = vmatpush1.bf16.msra.mxu0 %v6041
    %7963 = vmatprep.mubr.bf16.mxu0 %v2709
    %7964 = vmatmul.mubr.bf16.gmra.mrb[0].mxu0 %v2708
    %v7965 = vpop.f32.mrb[0].mxu0
    %v7966 = vadd.f32 %v7925, %v7965
    %v7967 = vpop.f32.mrb[0].mxu0
    %v7968 = vadd.f32 %v7927, %v7967
    %v7969 = vpop.f32.mrb[0].mxu0
    %v7970 = vpop.f32.mrb[0].mxu0
    %7971 = vdwg.mxu0
    %7972 = vmatprep.subr.bf16.mxu0 %v6046
    %7973 = vmatpush1.bf16.msra.mxu0 %v6045
    %7974 = vmatprep.subr.bf16.mxu0 %v6050
    %7975 = vmatpush1.bf16.msra.mxu0 %v6049
    %7976 = vmatprep.subr.bf16.mxu0 %v6054
    %7977 = vmatpush1.bf16.msra.mxu0 %v6053
    %7978 = vmatprep.subr.bf16.mxu0 %v6058
    %7979 = vmatpush1.bf16.msra.mxu0 %v6057
    %7980 = vmatprep.subr.bf16.mxu0 %v6062
    %7981 = vmatpush1.bf16.msra.mxu0 %v6061
    %7982 = vmatprep.subr.bf16.mxu0 %v6066
    %7983 = vmatpush1.bf16.msra.mxu0 %v6065
    %7984 = vmatprep.subr.bf16.mxu0 %v6070
    %7985 = vmatpush1.bf16.msra.mxu0 %v6069
    %7986 = vmatprep.subr.bf16.mxu0 %v6074
    %7987 = vmatpush1.bf16.msra.mxu0 %v6073
    %7988 = vmatprep.subr.bf16.mxu0 %v6078
    %7989 = vmatpush1.bf16.msra.mxu0 %v6077
    %7990 = vmatprep.subr.bf16.mxu0 %v6082
    %7991 = vmatpush1.bf16.msra.mxu0 %v6081
    %7992 = vmatprep.subr.bf16.mxu0 %v6086
    %7993 = vmatpush1.bf16.msra.mxu0 %v6085
    %7994 = vmatprep.subr.bf16.mxu0 %v6090
    %7995 = vmatpush1.bf16.msra.mxu0 %v6089
    %7996 = vmatprep.subr.bf16.mxu0 %v6094
    %7997 = vmatpush1.bf16.msra.mxu0 %v6093
    %7998 = vmatprep.subr.bf16.mxu0 %v6098
    %7999 = vmatpush1.bf16.msra.mxu0 %v6097
    %8000 = vmatprep.subr.bf16.mxu0 %v6102
    %8001 = vmatpush1.bf16.msra.mxu0 %v6101
    %8002 = vmatprep.subr.bf16.mxu0 %v6106
    %8003 = vmatpush1.bf16.msra.mxu0 %v6105
    %8004 = vmatprep.mubr.bf16.mxu0 %v2711
    %8005 = vmatmul.mubr.bf16.gmra.mrb[0].mxu0 %v2710
    %v8006 = vpop.f32.mrb[0].mxu0
    %v8007 = vadd.f32 %v7966, %v8006
    %v8008 = vpop.f32.mrb[0].mxu0
    %v8009 = vadd.f32 %v7968, %v8008
    %v8010 = vpop.f32.mrb[0].mxu0
    %v8011 = vpop.f32.mrb[0].mxu0
    %8012 = vdwg.mxu0
    %8013 = vmatprep.subr.bf16.mxu0 %v6110
    %8014 = vmatpush1.bf16.msra.mxu0 %v6109
    %8015 = vmatprep.subr.bf16.mxu0 %v6114
    %8016 = vmatpush1.bf16.msra.mxu0 %v6113
    %8017 = vmatprep.subr.bf16.mxu0 %v6118
    %8018 = vmatpush1.bf16.msra.mxu0 %v6117
    %8019 = vmatprep.subr.bf16.mxu0 %v6122
    %8020 = vmatpush1.bf16.msra.mxu0 %v6121
    %8021 = vmatprep.subr.bf16.mxu0 %v6126
    %8022 = vmatpush1.bf16.msra.mxu0 %v6125
    %8023 = vmatprep.subr.bf16.mxu0 %v6130
    %8024 = vmatpush1.bf16.msra.mxu0 %v6129
    %8025 = vmatprep.subr.bf16.mxu0 %v6134
    %8026 = vmatpush1.bf16.msra.mxu0 %v6133
    %8027 = vmatprep.subr.bf16.mxu0 %v6138
    %8028 = vmatpush1.bf16.msra.mxu0 %v6137
    %8029 = vmatprep.subr.bf16.mxu0 %v6142
    %8030 = vmatpush1.bf16.msra.mxu0 %v6141
    %8031 = vmatprep.subr.bf16.mxu0 %v6146
    %8032 = vmatpush1.bf16.msra.mxu0 %v6145
    %8033 = vmatprep.subr.bf16.mxu0 %v6150
    %8034 = vmatpush1.bf16.msra.mxu0 %v6149
    %8035 = vmatprep.subr.bf16.mxu0 %v6154
    %8036 = vmatpush1.bf16.msra.mxu0 %v6153
    %8037 = vmatprep.subr.bf16.mxu0 %v6158
    %8038 = vmatpush1.bf16.msra.mxu0 %v6157
    %8039 = vmatprep.subr.bf16.mxu0 %v6162
    %8040 = vmatpush1.bf16.msra.mxu0 %v6161
    %8041 = vmatprep.subr.bf16.mxu0 %v6166
    %8042 = vmatpush1.bf16.msra.mxu0 %v6165
    %8043 = vmatprep.subr.bf16.mxu0 %v6170
    %8044 = vmatpush1.bf16.msra.mxu0 %v6169
    %8045 = vmatprep.mubr.bf16.mxu0 %v2713
    %8046 = vmatmul.mubr.bf16.gmra.mrb[0].mxu0 %v2712
    %v8047 = vpop.f32.mrb[0].mxu0
    %v8048 = vadd.f32 %v8007, %v8047
    %v8049 = vpop.f32.mrb[0].mxu0
    %v8050 = vadd.f32 %v8009, %v8049
    %v8051 = vpop.f32.mrb[0].mxu0
    %v8052 = vpop.f32.mrb[0].mxu0
    %8053 = vdwg.mxu0
    %8054 = vmatprep.subr.bf16.mxu0 %v6174
    %8055 = vmatpush1.bf16.msra.mxu0 %v6173
    %8056 = vmatprep.subr.bf16.mxu0 %v6178
    %8057 = vmatpush1.bf16.msra.mxu0 %v6177
    %8058 = vmatprep.subr.bf16.mxu0 %v6182
    %8059 = vmatpush1.bf16.msra.mxu0 %v6181
    %8060 = vmatprep.subr.bf16.mxu0 %v6186
    %8061 = vmatpush1.bf16.msra.mxu0 %v6185
    %8062 = vmatprep.subr.bf16.mxu0 %v6190
    %8063 = vmatpush1.bf16.msra.mxu0 %v6189
    %8064 = vmatprep.subr.bf16.mxu0 %v6194
    %8065 = vmatpush1.bf16.msra.mxu0 %v6193
    %8066 = vmatprep.subr.bf16.mxu0 %v6198
    %8067 = vmatpush1.bf16.msra.mxu0 %v6197
    %8068 = vmatprep.subr.bf16.mxu0 %v6202
    %8069 = vmatpush1.bf16.msra.mxu0 %v6201
    %8070 = vmatprep.subr.bf16.mxu0 %v6206
    %8071 = vmatpush1.bf16.msra.mxu0 %v6205
    %8072 = vmatprep.subr.bf16.mxu0 %v6210
    %8073 = vmatpush1.bf16.msra.mxu0 %v6209
    %8074 = vmatprep.subr.bf16.mxu0 %v6214
    %8075 = vmatpush1.bf16.msra.mxu0 %v6213
    %8076 = vmatprep.subr.bf16.mxu0 %v6218
    %8077 = vmatpush1.bf16.msra.mxu0 %v6217
    %8078 = vmatprep.subr.bf16.mxu0 %v6222
    %8079 = vmatpush1.bf16.msra.mxu0 %v6221
    %8080 = vmatprep.subr.bf16.mxu0 %v6226
    %8081 = vmatpush1.bf16.msra.mxu0 %v6225
    %8082 = vmatprep.subr.bf16.mxu0 %v6230
    %8083 = vmatpush1.bf16.msra.mxu0 %v6229
    %8084 = vmatprep.subr.bf16.mxu0 %v6234
    %8085 = vmatpush1.bf16.msra.mxu0 %v6233
    %8086 = vmatprep.mubr.bf16.mxu0 %v2715
    %8087 = vmatmul.mubr.bf16.gmra.mrb[0].mxu0 %v2714
    %v8088 = vpop.f32.mrb[0].mxu0
    %v8089 = vadd.f32 %v8048, %v8088
    %v8090 = vpop.f32.mrb[0].mxu0
    %v8091 = vadd.f32 %v8050, %v8090
    %v8092 = vpop.f32.mrb[0].mxu0
    %v8093 = vpop.f32.mrb[0].mxu0
    %8094 = vdwg.mxu0
    %8095 = vmatprep.subr.bf16.mxu0 %v6238
    %8096 = vmatpush1.bf16.msra.mxu0 %v6237
    %8097 = vmatprep.subr.bf16.mxu0 %v6242
    %8098 = vmatpush1.bf16.msra.mxu0 %v6241
    %8099 = vmatprep.subr.bf16.mxu0 %v6246
    %8100 = vmatpush1.bf16.msra.mxu0 %v6245
    %8101 = vmatprep.subr.bf16.mxu0 %v6250
    %8102 = vmatpush1.bf16.msra.mxu0 %v6249
    %8103 = vmatprep.subr.bf16.mxu0 %v6254
    %8104 = vmatpush1.bf16.msra.mxu0 %v6253
    %8105 = vmatprep.subr.bf16.mxu0 %v6258
    %8106 = vmatpush1.bf16.msra.mxu0 %v6257
    %8107 = vmatprep.subr.bf16.mxu0 %v6262
    %8108 = vmatpush1.bf16.msra.mxu0 %v6261
    %8109 = vmatprep.subr.bf16.mxu0 %v6266
    %8110 = vmatpush1.bf16.msra.mxu0 %v6265
    %8111 = vmatprep.subr.bf16.mxu0 %v6270
    %8112 = vmatpush1.bf16.msra.mxu0 %v6269
    %8113 = vmatprep.subr.bf16.mxu0 %v6274
    %8114 = vmatpush1.bf16.msra.mxu0 %v6273
    %8115 = vmatprep.subr.bf16.mxu0 %v6278
    %8116 = vmatpush1.bf16.msra.mxu0 %v6277
    %8117 = vmatprep.subr.bf16.mxu0 %v6282
    %8118 = vmatpush1.bf16.msra.mxu0 %v6281
    %8119 = vmatprep.subr.bf16.mxu0 %v6286
    %8120 = vmatpush1.bf16.msra.mxu0 %v6285
    %8121 = vmatprep.subr.bf16.mxu0 %v6290
    %8122 = vmatpush1.bf16.msra.mxu0 %v6289
    %8123 = vmatprep.subr.bf16.mxu0 %v6294
    %8124 = vmatpush1.bf16.msra.mxu0 %v6293
    %8125 = vmatprep.subr.bf16.mxu0 %v6298
    %8126 = vmatpush1.bf16.msra.mxu0 %v6297
    %8127 = vmatprep.mubr.bf16.mxu0 %v2717
    %8128 = vmatmul.mubr.bf16.gmra.mrb[0].mxu0 %v2716
    %v8129 = vpop.f32.mrb[0].mxu0
    %v8130 = vadd.f32 %v8089, %v8129
    %v8131 = vpop.f32.mrb[0].mxu0
    %v8132 = vadd.f32 %v8091, %v8131
    %v8133 = vpop.f32.mrb[0].mxu0
    %v8134 = vpop.f32.mrb[0].mxu0
    %8135 = vdwg.mxu0
    %8136 = vmatprep.subr.bf16.mxu0 %v6302
    %8137 = vmatpush1.bf16.msra.mxu0 %v6301
    %8138 = vmatprep.subr.bf16.mxu0 %v6306
    %8139 = vmatpush1.bf16.msra.mxu0 %v6305
    %8140 = vmatprep.subr.bf16.mxu0 %v6310
    %8141 = vmatpush1.bf16.msra.mxu0 %v6309
    %8142 = vmatprep.subr.bf16.mxu0 %v6314
    %8143 = vmatpush1.bf16.msra.mxu0 %v6313
    %8144 = vmatprep.subr.bf16.mxu0 %v6318
    %8145 = vmatpush1.bf16.msra.mxu0 %v6317
    %8146 = vmatprep.subr.bf16.mxu0 %v6322
    %8147 = vmatpush1.bf16.msra.mxu0 %v6321
    %8148 = vmatprep.subr.bf16.mxu0 %v6326
    %8149 = vmatpush1.bf16.msra.mxu0 %v6325
    %8150 = vmatprep.subr.bf16.mxu0 %v6330
    %8151 = vmatpush1.bf16.msra.mxu0 %v6329
    %8152 = vmatprep.subr.bf16.mxu0 %v6334
    %8153 = vmatpush1.bf16.msra.mxu0 %v6333
    %8154 = vmatprep.subr.bf16.mxu0 %v6338
    %8155 = vmatpush1.bf16.msra.mxu0 %v6337
    %8156 = vmatprep.subr.bf16.mxu0 %v6342
    %8157 = vmatpush1.bf16.msra.mxu0 %v6341
    %8158 = vmatprep.subr.bf16.mxu0 %v6346
    %8159 = vmatpush1.bf16.msra.mxu0 %v6345
    %8160 = vmatprep.subr.bf16.mxu0 %v6350
    %8161 = vmatpush1.bf16.msra.mxu0 %v6349
    %8162 = vmatprep.subr.bf16.mxu0 %v6354
    %8163 = vmatpush1.bf16.msra.mxu0 %v6353
    %8164 = vmatprep.subr.bf16.mxu0 %v6358
    %8165 = vmatpush1.bf16.msra.mxu0 %v6357
    %8166 = vmatprep.subr.bf16.mxu0 %v6362
    %8167 = vmatpush1.bf16.msra.mxu0 %v6361
    %8168 = vmatprep.mubr.bf16.mxu0 %v2719
    %8169 = vmatmul.mubr.bf16.gmra.mrb[0].mxu0 %v2718
    %v8170 = vpop.f32.mrb[0].mxu0
    %v8171 = vadd.f32 %v8130, %v8170
    %v8172 = vpop.f32.mrb[0].mxu0
    %v8173 = vadd.f32 %v8132, %v8172
    %v8174 = vpop.f32.mrb[0].mxu0
    %v8175 = vpop.f32.mrb[0].mxu0
    %8176 = vdwg.mxu0
    %8177 = vmatprep.subr.bf16.mxu0 %v6366
    %8178 = vmatpush1.bf16.msra.mxu0 %v6365
    %8179 = vmatprep.subr.bf16.mxu0 %v6370
    %8180 = vmatpush1.bf16.msra.mxu0 %v6369
    %8181 = vmatprep.subr.bf16.mxu0 %v6374
    %8182 = vmatpush1.bf16.msra.mxu0 %v6373
    %8183 = vmatprep.subr.bf16.mxu0 %v6378
    %8184 = vmatpush1.bf16.msra.mxu0 %v6377
    %8185 = vmatprep.subr.bf16.mxu0 %v6382
    %8186 = vmatpush1.bf16.msra.mxu0 %v6381
    %8187 = vmatprep.subr.bf16.mxu0 %v6386
    %8188 = vmatpush1.bf16.msra.mxu0 %v6385
    %8189 = vmatprep.subr.bf16.mxu0 %v6390
    %8190 = vmatpush1.bf16.msra.mxu0 %v6389
    %8191 = vmatprep.subr.bf16.mxu0 %v6394
    %8192 = vmatpush1.bf16.msra.mxu0 %v6393
    %8193 = vmatprep.subr.bf16.mxu0 %v6398
    %8194 = vmatpush1.bf16.msra.mxu0 %v6397
    %8195 = vmatprep.subr.bf16.mxu0 %v6402
    %8196 = vmatpush1.bf16.msra.mxu0 %v6401
    %8197 = vmatprep.subr.bf16.mxu0 %v6406
    %8198 = vmatpush1.bf16.msra.mxu0 %v6405
    %8199 = vmatprep.subr.bf16.mxu0 %v6410
    %8200 = vmatpush1.bf16.msra.mxu0 %v6409
    %8201 = vmatprep.subr.bf16.mxu0 %v6414
    %8202 = vmatpush1.bf16.msra.mxu0 %v6413
    %8203 = vmatprep.subr.bf16.mxu0 %v6418
    %8204 = vmatpush1.bf16.msra.mxu0 %v6417
    %8205 = vmatprep.subr.bf16.mxu0 %v6422
    %8206 = vmatpush1.bf16.msra.mxu0 %v6421
    %8207 = vmatprep.subr.bf16.mxu0 %v6426
    %8208 = vmatpush1.bf16.msra.mxu0 %v6425
    %8209 = vmatprep.mubr.bf16.mxu0 %v2721
    %8210 = vmatmul.mubr.bf16.gmra.mrb[0].mxu0 %v2720
    %v8211 = vpop.f32.mrb[0].mxu0
    %v8212 = vadd.f32 %v8171, %v8211
    %v8213 = vpop.f32.mrb[0].mxu0
    %v8214 = vadd.f32 %v8173, %v8213
    %v8215 = vpop.f32.mrb[0].mxu0
    %v8216 = vpop.f32.mrb[0].mxu0
    %8217 = vdwg.mxu0
    %8218 = vmatprep.subr.bf16.mxu0 %v6430
    %8219 = vmatpush1.bf16.msra.mxu0 %v6429
    %8220 = vmatprep.subr.bf16.mxu0 %v6434
    %8221 = vmatpush1.bf16.msra.mxu0 %v6433
    %8222 = vmatprep.subr.bf16.mxu0 %v6438
    %8223 = vmatpush1.bf16.msra.mxu0 %v6437
    %8224 = vmatprep.subr.bf16.mxu0 %v6442
    %8225 = vmatpush1.bf16.msra.mxu0 %v6441
    %8226 = vmatprep.subr.bf16.mxu0 %v6446
    %8227 = vmatpush1.bf16.msra.mxu0 %v6445
    %8228 = vmatprep.subr.bf16.mxu0 %v6450
    %8229 = vmatpush1.bf16.msra.mxu0 %v6449
    %8230 = vmatprep.subr.bf16.mxu0 %v6454
    %8231 = vmatpush1.bf16.msra.mxu0 %v6453
    %8232 = vmatprep.subr.bf16.mxu0 %v6458
    %8233 = vmatpush1.bf16.msra.mxu0 %v6457
    %8234 = vmatprep.subr.bf16.mxu0 %v6462
    %8235 = vmatpush1.bf16.msra.mxu0 %v6461
    %8236 = vmatprep.subr.bf16.mxu0 %v6466
    %8237 = vmatpush1.bf16.msra.mxu0 %v6465
    %8238 = vmatprep.subr.bf16.mxu0 %v6470
    %8239 = vmatpush1.bf16.msra.mxu0 %v6469
    %8240 = vmatprep.subr.bf16.mxu0 %v6474
    %8241 = vmatpush1.bf16.msra.mxu0 %v6473
    %8242 = vmatprep.subr.bf16.mxu0 %v6478
    %8243 = vmatpush1.bf16.msra.mxu0 %v6477
    %8244 = vmatprep.subr.bf16.mxu0 %v6482
    %8245 = vmatpush1.bf16.msra.mxu0 %v6481
    %8246 = vmatprep.subr.bf16.mxu0 %v6486
    %8247 = vmatpush1.bf16.msra.mxu0 %v6485
    %8248 = vmatprep.subr.bf16.mxu0 %v6490
    %8249 = vmatpush1.bf16.msra.mxu0 %v6489
    %8250 = vmatprep.mubr.bf16.mxu0 %v2723
    %8251 = vmatmul.mubr.bf16.gmra.mrb[0].mxu0 %v2722
    %v8252 = vpop.f32.mrb[0].mxu0
    %v8253 = vadd.f32 %v8212, %v8252
    %v8254 = vpop.f32.mrb[0].mxu0
    %v8255 = vadd.f32 %v8214, %v8254
    %v8256 = vpop.f32.mrb[0].mxu0
    %v8257 = vpop.f32.mrb[0].mxu0
    %8258 = vdwg.mxu0
    %8259 = vmatprep.subr.bf16.mxu0 %v6494
    %8260 = vmatpush1.bf16.msra.mxu0 %v6493
    %8261 = vmatprep.subr.bf16.mxu0 %v6498
    %8262 = vmatpush1.bf16.msra.mxu0 %v6497
    %8263 = vmatprep.subr.bf16.mxu0 %v6502
    %8264 = vmatpush1.bf16.msra.mxu0 %v6501
    %8265 = vmatprep.subr.bf16.mxu0 %v6506
    %8266 = vmatpush1.bf16.msra.mxu0 %v6505
    %8267 = vmatprep.subr.bf16.mxu0 %v6510
    %8268 = vmatpush1.bf16.msra.mxu0 %v6509
    %8269 = vmatprep.subr.bf16.mxu0 %v6514
    %8270 = vmatpush1.bf16.msra.mxu0 %v6513
    %8271 = vmatprep.subr.bf16.mxu0 %v6518
    %8272 = vmatpush1.bf16.msra.mxu0 %v6517
    %8273 = vmatprep.subr.bf16.mxu0 %v6522
    %8274 = vmatpush1.bf16.msra.mxu0 %v6521
    %8275 = vmatprep.subr.bf16.mxu0 %v6526
    %8276 = vmatpush1.bf16.msra.mxu0 %v6525
    %8277 = vmatprep.subr.bf16.mxu0 %v6530
    %8278 = vmatpush1.bf16.msra.mxu0 %v6529
    %8279 = vmatprep.subr.bf16.mxu0 %v6534
    %8280 = vmatpush1.bf16.msra.mxu0 %v6533
    %8281 = vmatprep.subr.bf16.mxu0 %v6538
    %8282 = vmatpush1.bf16.msra.mxu0 %v6537
    %8283 = vmatprep.subr.bf16.mxu0 %v6542
    %8284 = vmatpush1.bf16.msra.mxu0 %v6541
    %8285 = vmatprep.subr.bf16.mxu0 %v6546
    %8286 = vmatpush1.bf16.msra.mxu0 %v6545
    %8287 = vmatprep.subr.bf16.mxu0 %v6550
    %8288 = vmatpush1.bf16.msra.mxu0 %v6549
    %8289 = vmatprep.subr.bf16.mxu0 %v6554
    %8290 = vmatpush1.bf16.msra.mxu0 %v6553
    %8291 = vmatprep.mubr.bf16.mxu0 %v2725
    %8292 = vmatmul.mubr.bf16.gmra.mrb[0].mxu0 %v2724
    %v8293 = vpop.f32.mrb[0].mxu0
    %v8294 = vadd.f32 %v8253, %v8293
    %v8295 = vpop.f32.mrb[0].mxu0
    %v8296 = vadd.f32 %v8255, %v8295
    %v8297 = vpop.f32.mrb[0].mxu0
    %v8298 = vpop.f32.mrb[0].mxu0
    %8299 = vdwg.mxu0
    %8300 = vmatprep.subr.bf16.mxu0 %v6558
    %8301 = vmatpush1.bf16.msra.mxu0 %v6557
    %8302 = vmatprep.subr.bf16.mxu0 %v6562
    %8303 = vmatpush1.bf16.msra.mxu0 %v6561
    %8304 = vmatprep.subr.bf16.mxu0 %v6566
    %8305 = vmatpush1.bf16.msra.mxu0 %v6565
    %8306 = vmatprep.subr.bf16.mxu0 %v6570
    %8307 = vmatpush1.bf16.msra.mxu0 %v6569
    %8308 = vmatprep.subr.bf16.mxu0 %v6574
    %8309 = vmatpush1.bf16.msra.mxu0 %v6573
    %8310 = vmatprep.subr.bf16.mxu0 %v6578
    %8311 = vmatpush1.bf16.msra.mxu0 %v6577
    %8312 = vmatprep.subr.bf16.mxu0 %v6582
    %8313 = vmatpush1.bf16.msra.mxu0 %v6581
    %8314 = vmatprep.subr.bf16.mxu0 %v6586
    %8315 = vmatpush1.bf16.msra.mxu0 %v6585
    %8316 = vmatprep.subr.bf16.mxu0 %v6590
    %8317 = vmatpush1.bf16.msra.mxu0 %v6589
    %8318 = vmatprep.subr.bf16.mxu0 %v6594
    %8319 = vmatpush1.bf16.msra.mxu0 %v6593
    %8320 = vmatprep.subr.bf16.mxu0 %v6598
    %8321 = vmatpush1.bf16.msra.mxu0 %v6597
    %8322 = vmatprep.subr.bf16.mxu0 %v6602
    %8323 = vmatpush1.bf16.msra.mxu0 %v6601
    %8324 = vmatprep.subr.bf16.mxu0 %v6606
    %8325 = vmatpush1.bf16.msra.mxu0 %v6605
    %8326 = vmatprep.subr.bf16.mxu0 %v6610
    %8327 = vmatpush1.bf16.msra.mxu0 %v6609
    %8328 = vmatprep.subr.bf16.mxu0 %v6614
    %8329 = vmatpush1.bf16.msra.mxu0 %v6613
    %8330 = vmatprep.subr.bf16.mxu0 %v6618
    %8331 = vmatpush1.bf16.msra.mxu0 %v6617
    %8332 = vmatprep.mubr.bf16.mxu0 %v2727
    %8333 = vmatmul.mubr.bf16.gmra.mrb[0].mxu0 %v2726
    %v8334 = vpop.f32.mrb[0].mxu0
    %v8335 = vadd.f32 %v8294, %v8334
    %v8336 = vpop.f32.mrb[0].mxu0
    %v8337 = vadd.f32 %v8296, %v8336
    %v8338 = vpop.f32.mrb[0].mxu0
    %v8339 = vpop.f32.mrb[0].mxu0
    %8340 = vdwg.mxu0
    %8341 = vmatprep.subr.bf16.mxu0 %v6622
    %8342 = vmatpush1.bf16.msra.mxu0 %v6621
    %8343 = vmatprep.subr.bf16.mxu0 %v6626
    %8344 = vmatpush1.bf16.msra.mxu0 %v6625
    %8345 = vmatprep.subr.bf16.mxu0 %v6630
    %8346 = vmatpush1.bf16.msra.mxu0 %v6629
    %8347 = vmatprep.subr.bf16.mxu0 %v6634
    %8348 = vmatpush1.bf16.msra.mxu0 %v6633
    %8349 = vmatprep.subr.bf16.mxu0 %v6638
    %8350 = vmatpush1.bf16.msra.mxu0 %v6637
    %8351 = vmatprep.subr.bf16.mxu0 %v6642
    %8352 = vmatpush1.bf16.msra.mxu0 %v6641
    %8353 = vmatprep.subr.bf16.mxu0 %v6646
    %8354 = vmatpush1.bf16.msra.mxu0 %v6645
    %8355 = vmatprep.subr.bf16.mxu0 %v6650
    %8356 = vmatpush1.bf16.msra.mxu0 %v6649
    %8357 = vmatprep.subr.bf16.mxu0 %v6654
    %8358 = vmatpush1.bf16.msra.mxu0 %v6653
    %8359 = vmatprep.subr.bf16.mxu0 %v6658
    %8360 = vmatpush1.bf16.msra.mxu0 %v6657
    %8361 = vmatprep.subr.bf16.mxu0 %v6662
    %8362 = vmatpush1.bf16.msra.mxu0 %v6661
    %8363 = vmatprep.subr.bf16.mxu0 %v6666
    %8364 = vmatpush1.bf16.msra.mxu0 %v6665
    %8365 = vmatprep.subr.bf16.mxu0 %v6670
    %8366 = vmatpush1.bf16.msra.mxu0 %v6669
    %8367 = vmatprep.subr.bf16.mxu0 %v6674
    %8368 = vmatpush1.bf16.msra.mxu0 %v6673
    %8369 = vmatprep.subr.bf16.mxu0 %v6678
    %8370 = vmatpush1.bf16.msra.mxu0 %v6677
    %8371 = vmatprep.subr.bf16.mxu0 %v6682
    %8372 = vmatpush1.bf16.msra.mxu0 %v6681
    %8373 = vmatprep.mubr.bf16.mxu0 %v2729
    %8374 = vmatmul.mubr.bf16.gmra.mrb[0].mxu0 %v2728
    %v8375 = vpop.f32.mrb[0].mxu0
    %v8376 = vadd.f32 %v8335, %v8375
    %v8377 = vpop.f32.mrb[0].mxu0
    %v8378 = vadd.f32 %v8337, %v8377
    %v8379 = vpop.f32.mrb[0].mxu0
    %v8380 = vpop.f32.mrb[0].mxu0
    %8381 = vdwg.mxu0
    %8382 = vmatprep.subr.bf16.mxu0 %v6686
    %8383 = vmatpush1.bf16.msra.mxu0 %v6685
    %8384 = vmatprep.subr.bf16.mxu0 %v6690
    %8385 = vmatpush1.bf16.msra.mxu0 %v6689
    %8386 = vmatprep.subr.bf16.mxu0 %v6694
    %8387 = vmatpush1.bf16.msra.mxu0 %v6693
    %8388 = vmatprep.subr.bf16.mxu0 %v6698
    %8389 = vmatpush1.bf16.msra.mxu0 %v6697
    %8390 = vmatprep.subr.bf16.mxu0 %v6702
    %8391 = vmatpush1.bf16.msra.mxu0 %v6701
    %8392 = vmatprep.subr.bf16.mxu0 %v6706
    %8393 = vmatpush1.bf16.msra.mxu0 %v6705
    %8394 = vmatprep.subr.bf16.mxu0 %v6710
    %8395 = vmatpush1.bf16.msra.mxu0 %v6709
    %8396 = vmatprep.subr.bf16.mxu0 %v6714
    %8397 = vmatpush1.bf16.msra.mxu0 %v6713
    %8398 = vmatprep.subr.bf16.mxu0 %v6718
    %8399 = vmatpush1.bf16.msra.mxu0 %v6717
    %8400 = vmatprep.subr.bf16.mxu0 %v6722
    %8401 = vmatpush1.bf16.msra.mxu0 %v6721
    %8402 = vmatprep.subr.bf16.mxu0 %v6726
    %8403 = vmatpush1.bf16.msra.mxu0 %v6725
    %8404 = vmatprep.subr.bf16.mxu0 %v6730
    %8405 = vmatpush1.bf16.msra.mxu0 %v6729
    %8406 = vmatprep.subr.bf16.mxu0 %v6734
    %8407 = vmatpush1.bf16.msra.mxu0 %v6733
    %8408 = vmatprep.subr.bf16.mxu0 %v6738
    %8409 = vmatpush1.bf16.msra.mxu0 %v6737
    %8410 = vmatprep.subr.bf16.mxu0 %v6742
    %8411 = vmatpush1.bf16.msra.mxu0 %v6741
    %8412 = vmatprep.subr.bf16.mxu0 %v6746
    %8413 = vmatpush1.bf16.msra.mxu0 %v6745
    %8414 = vmatprep.mubr.bf16.mxu0 %v2731
    %8415 = vmatmul.mubr.bf16.gmra.mrb[0].mxu0 %v2730
    %v8416 = vpop.f32.mrb[0].mxu0
    %v8417 = vadd.f32 %v8376, %v8416
    %v8418 = vpop.f32.mrb[0].mxu0
    %v8419 = vadd.f32 %v8378, %v8418
    %v8420 = vpop.f32.mrb[0].mxu0
    %v8421 = vpop.f32.mrb[0].mxu0
    %8422 = vdwg.mxu0
    %8423 = vmatprep.subr.bf16.mxu0 %v6750
    %8424 = vmatpush1.bf16.msra.mxu0 %v6749
    %8425 = vmatprep.subr.bf16.mxu0 %v6754
    %8426 = vmatpush1.bf16.msra.mxu0 %v6753
    %8427 = vmatprep.subr.bf16.mxu0 %v6758
    %8428 = vmatpush1.bf16.msra.mxu0 %v6757
    %8429 = vmatprep.subr.bf16.mxu0 %v6762
    %8430 = vmatpush1.bf16.msra.mxu0 %v6761
    %8431 = vmatprep.subr.bf16.mxu0 %v6766
    %8432 = vmatpush1.bf16.msra.mxu0 %v6765
    %8433 = vmatprep.subr.bf16.mxu0 %v6770
    %8434 = vmatpush1.bf16.msra.mxu0 %v6769
    %8435 = vmatprep.subr.bf16.mxu0 %v6774
    %8436 = vmatpush1.bf16.msra.mxu0 %v6773
    %8437 = vmatprep.subr.bf16.mxu0 %v6778
    %8438 = vmatpush1.bf16.msra.mxu0 %v6777
    %8439 = vmatprep.subr.bf16.mxu0 %v6782
    %8440 = vmatpush1.bf16.msra.mxu0 %v6781
    %8441 = vmatprep.subr.bf16.mxu0 %v6786
    %8442 = vmatpush1.bf16.msra.mxu0 %v6785
    %8443 = vmatprep.subr.bf16.mxu0 %v6790
    %8444 = vmatpush1.bf16.msra.mxu0 %v6789
    %8445 = vmatprep.subr.bf16.mxu0 %v6794
    %8446 = vmatpush1.bf16.msra.mxu0 %v6793
    %8447 = vmatprep.subr.bf16.mxu0 0
    %8448 = vmatpush1.bf16.msra.mxu0 0
    %8449 = vmatprep.subr.bf16.mxu0 0
    %8450 = vmatpush1.bf16.msra.mxu0 0
    %8451 = vmatprep.subr.bf16.mxu0 0
    %8452 = vmatpush1.bf16.msra.mxu0 0
    %8453 = vmatprep.subr.bf16.mxu0 0
    %8454 = vmatpush1.bf16.msra.mxu0 0
    %8455 = vmatprep.mubr.bf16.mxu0 %v7806
    %8456 = vmatmul.mubr.bf16.gmra.mrb[0].mxu0 %v2732
    %v8457 = vpop.f32.mrb[0].mxu0
    %v8458 = vadd.f32 %v8417, %v8457
    %v8459 = vpop.f32.mrb[0].mxu0
    %v8460 = vadd.f32 %v8419, %v8459
    %v8461 = vpop.f32.mrb[0].mxu0
    %v8462 = vpop.f32.mrb[0].mxu0
    %8463 = vdwg.mxu0
    %8464 = vmatprep.subr.bf16.mxu0 %v5792
    %8465 = vmatpush1.bf16.msra.mxu0 %v5791
    %8466 = vmatprep.subr.bf16.mxu0 %v5796
    %8467 = vmatpush1.bf16.msra.mxu0 %v5795
    %8468 = vmatprep.subr.bf16.mxu0 %v5800
    %8469 = vmatpush1.bf16.msra.mxu0 %v5799
    %8470 = vmatprep.subr.bf16.mxu0 %v5804
    %8471 = vmatpush1.bf16.msra.mxu0 %v5803
    %8472 = vmatprep.subr.bf16.mxu0 %v5808
    %8473 = vmatpush1.bf16.msra.mxu0 %v5807
    %8474 = vmatprep.subr.bf16.mxu0 %v5812
    %8475 = vmatpush1.bf16.msra.mxu0 %v5811
    %8476 = vmatprep.subr.bf16.mxu0 %v5816
    %8477 = vmatpush1.bf16.msra.mxu0 %v5815
    %8478 = vmatprep.subr.bf16.mxu0 %v5820
    %8479 = vmatpush1.bf16.msra.mxu0 %v5819
    %8480 = vmatprep.subr.bf16.mxu0 %v5824
    %8481 = vmatpush1.bf16.msra.mxu0 %v5823
    %8482 = vmatprep.subr.bf16.mxu0 %v5828
    %8483 = vmatpush1.bf16.msra.mxu0 %v5827
    %8484 = vmatprep.subr.bf16.mxu0 %v5832
    %8485 = vmatpush1.bf16.msra.mxu0 %v5831
    %8486 = vmatprep.subr.bf16.mxu0 %v5836
    %8487 = vmatpush1.bf16.msra.mxu0 %v5835
    %8488 = vmatprep.subr.bf16.mxu0 %v5840
    %8489 = vmatpush1.bf16.msra.mxu0 %v5839
    %8490 = vmatprep.subr.bf16.mxu0 %v5844
    %8491 = vmatpush1.bf16.msra.mxu0 %v5843
    %8492 = vmatprep.subr.bf16.mxu0 %v5848
    %8493 = vmatpush1.bf16.msra.mxu0 %v5847
    %8494 = vmatprep.subr.bf16.mxu0 %v5852
    %8495 = vmatpush1.bf16.msra.mxu0 %v5851
    %8496 = vmatprep.mubr.bf16.mxu0 %v2703
    %8497 = vmatmul.mubr.bf16.gmra.mrb[0].mxu0 %v2702
    %v8498 = vpop.f32.mrb[0].mxu0
    %v8499 = vadd.f32 %v2532, %v8498
    %v8500 = vpop.f32.mrb[0].mxu0
    %v8501 = vadd.f32 %v2536, %v8500
    %v8502 = vpop.f32.mrb[0].mxu0
    %v8503 = vpop.f32.mrb[0].mxu0
    %8504 = vdwg.mxu0
    %8505 = vmatprep.subr.bf16.mxu0 %v5856
    %8506 = vmatpush1.bf16.msra.mxu0 %v5855
    %8507 = vmatprep.subr.bf16.mxu0 %v5860
    %8508 = vmatpush1.bf16.msra.mxu0 %v5859
    %8509 = vmatprep.subr.bf16.mxu0 %v5864
    %8510 = vmatpush1.bf16.msra.mxu0 %v5863
    %8511 = vmatprep.subr.bf16.mxu0 %v5868
    %8512 = vmatpush1.bf16.msra.mxu0 %v5867
    %8513 = vmatprep.subr.bf16.mxu0 %v5872
    %8514 = vmatpush1.bf16.msra.mxu0 %v5871
    %8515 = vmatprep.subr.bf16.mxu0 %v5876
    %8516 = vmatpush1.bf16.msra.mxu0 %v5875
    %8517 = vmatprep.subr.bf16.mxu0 %v5880
    %8518 = vmatpush1.bf16.msra.mxu0 %v5879
    %8519 = vmatprep.subr.bf16.mxu0 %v5884
    %8520 = vmatpush1.bf16.msra.mxu0 %v5883
    %8521 = vmatprep.subr.bf16.mxu0 %v5888
    %8522 = vmatpush1.bf16.msra.mxu0 %v5887
    %8523 = vmatprep.subr.bf16.mxu0 %v5892
    %8524 = vmatpush1.bf16.msra.mxu0 %v5891
    %8525 = vmatprep.subr.bf16.mxu0 %v5896
    %8526 = vmatpush1.bf16.msra.mxu0 %v5895
    %8527 = vmatprep.subr.bf16.mxu0 %v5900
    %8528 = vmatpush1.bf16.msra.mxu0 %v5899
    %8529 = vmatprep.subr.bf16.mxu0 %v5904
    %8530 = vmatpush1.bf16.msra.mxu0 %v5903
    %8531 = vmatprep.subr.bf16.mxu0 %v5908
    %8532 = vmatpush1.bf16.msra.mxu0 %v5907
    %8533 = vmatprep.subr.bf16.mxu0 %v5912
    %8534 = vmatpush1.bf16.msra.mxu0 %v5911
    %8535 = vmatprep.subr.bf16.mxu0 %v5916
    %8536 = vmatpush1.bf16.msra.mxu0 %v5915
    %8537 = vmatprep.mubr.bf16.mxu0 %v2705
    %8538 = vmatmul.mubr.bf16.gmra.mrb[0].mxu0 %v2704
    %v8539 = vpop.f32.mrb[0].mxu0
    %v8540 = vadd.f32 %v8499, %v8539
    %v8541 = vpop.f32.mrb[0].mxu0
    %v8542 = vadd.f32 %v8501, %v8541
    %v8543 = vpop.f32.mrb[0].mxu0
    %v8544 = vpop.f32.mrb[0].mxu0
    %8545 = vdwg.mxu0
    %8546 = vmatprep.subr.bf16.mxu0 %v5920
    %8547 = vmatpush1.bf16.msra.mxu0 %v5919
    %8548 = vmatprep.subr.bf16.mxu0 %v5924
    %8549 = vmatpush1.bf16.msra.mxu0 %v5923
    %8550 = vmatprep.subr.bf16.mxu0 %v5928
    %8551 = vmatpush1.bf16.msra.mxu0 %v5927
    %8552 = vmatprep.subr.bf16.mxu0 %v5932
    %8553 = vmatpush1.bf16.msra.mxu0 %v5931
    %8554 = vmatprep.subr.bf16.mxu0 %v5936
    %8555 = vmatpush1.bf16.msra.mxu0 %v5935
    %8556 = vmatprep.subr.bf16.mxu0 %v5940
    %8557 = vmatpush1.bf16.msra.mxu0 %v5939
    %8558 = vmatprep.subr.bf16.mxu0 %v5944
    %8559 = vmatpush1.bf16.msra.mxu0 %v5943
    %8560 = vmatprep.subr.bf16.mxu0 %v5948
    %8561 = vmatpush1.bf16.msra.mxu0 %v5947
    %8562 = vmatprep.subr.bf16.mxu0 %v5952
    %8563 = vmatpush1.bf16.msra.mxu0 %v5951
    %8564 = vmatprep.subr.bf16.mxu0 %v5956
    %8565 = vmatpush1.bf16.msra.mxu0 %v5955
    %8566 = vmatprep.subr.bf16.mxu0 %v5960
    %8567 = vmatpush1.bf16.msra.mxu0 %v5959
    %8568 = vmatprep.subr.bf16.mxu0 %v5964
    %8569 = vmatpush1.bf16.msra.mxu0 %v5963
    %8570 = vmatprep.subr.bf16.mxu0 %v5968
    %8571 = vmatpush1.bf16.msra.mxu0 %v5967
    %8572 = vmatprep.subr.bf16.mxu0 %v5972
    %8573 = vmatpush1.bf16.msra.mxu0 %v5971
    %8574 = vmatprep.subr.bf16.mxu0 %v5976
    %8575 = vmatpush1.bf16.msra.mxu0 %v5975
    %8576 = vmatprep.subr.bf16.mxu0 %v5980
    %8577 = vmatpush1.bf16.msra.mxu0 %v5979
    %8578 = vmatprep.mubr.bf16.mxu0 %v2707
    %8579 = vmatmul.mubr.bf16.gmra.mrb[0].mxu0 %v2706
    %v8580 = vpop.f32.mrb[0].mxu0
    %v8581 = vadd.f32 %v8540, %v8580
    %v8582 = vpop.f32.mrb[0].mxu0
    %v8583 = vadd.f32 %v8542, %v8582
    %v8584 = vpop.f32.mrb[0].mxu0
    %v8585 = vpop.f32.mrb[0].mxu0
    %8586 = vdwg.mxu0
    %8587 = vmatprep.subr.bf16.mxu0 %v5984
    %8588 = vmatpush1.bf16.msra.mxu0 %v5983
    %8589 = vmatprep.subr.bf16.mxu0 %v5988
    %8590 = vmatpush1.bf16.msra.mxu0 %v5987
    %8591 = vmatprep.subr.bf16.mxu0 %v5992
    %8592 = vmatpush1.bf16.msra.mxu0 %v5991
    %8593 = vmatprep.subr.bf16.mxu0 %v5996
    %8594 = vmatpush1.bf16.msra.mxu0 %v5995
    %8595 = vmatprep.subr.bf16.mxu0 %v6000
    %8596 = vmatpush1.bf16.msra.mxu0 %v5999
    %8597 = vmatprep.subr.bf16.mxu0 %v6004
    %8598 = vmatpush1.bf16.msra.mxu0 %v6003
    %8599 = vmatprep.subr.bf16.mxu0 %v6008
    %8600 = vmatpush1.bf16.msra.mxu0 %v6007
    %8601 = vmatprep.subr.bf16.mxu0 %v6012
    %8602 = vmatpush1.bf16.msra.mxu0 %v6011
    %8603 = vmatprep.subr.bf16.mxu0 %v6016
    %8604 = vmatpush1.bf16.msra.mxu0 %v6015
    %8605 = vmatprep.subr.bf16.mxu0 %v6020
    %8606 = vmatpush1.bf16.msra.mxu0 %v6019
    %8607 = vmatprep.subr.bf16.mxu0 %v6024
    %8608 = vmatpush1.bf16.msra.mxu0 %v6023
    %8609 = vmatprep.subr.bf16.mxu0 %v6028
    %8610 = vmatpush1.bf16.msra.mxu0 %v6027
    %8611 = vmatprep.subr.bf16.mxu0 %v6032
    %8612 = vmatpush1.bf16.msra.mxu0 %v6031
    %8613 = vmatprep.subr.bf16.mxu0 %v6036
    %8614 = vmatpush1.bf16.msra.mxu0 %v6035
    %8615 = vmatprep.subr.bf16.mxu0 %v6040
    %8616 = vmatpush1.bf16.msra.mxu0 %v6039
    %8617 = vmatprep.subr.bf16.mxu0 %v6044
    %8618 = vmatpush1.bf16.msra.mxu0 %v6043
    %8619 = vmatprep.mubr.bf16.mxu0 %v2709
    %8620 = vmatmul.mubr.bf16.gmra.mrb[0].mxu0 %v2708
    %v8621 = vpop.f32.mrb[0].mxu0
    %v8622 = vadd.f32 %v8581, %v8621
    %v8623 = vpop.f32.mrb[0].mxu0
    %v8624 = vadd.f32 %v8583, %v8623
    %v8625 = vpop.f32.mrb[0].mxu0
    %v8626 = vpop.f32.mrb[0].mxu0
    %8627 = vdwg.mxu0
    %8628 = vmatprep.subr.bf16.mxu0 %v6048
    %8629 = vmatpush1.bf16.msra.mxu0 %v6047
    %8630 = vmatprep.subr.bf16.mxu0 %v6052
    %8631 = vmatpush1.bf16.msra.mxu0 %v6051
    %8632 = vmatprep.subr.bf16.mxu0 %v6056
    %8633 = vmatpush1.bf16.msra.mxu0 %v6055
    %8634 = vmatprep.subr.bf16.mxu0 %v6060
    %8635 = vmatpush1.bf16.msra.mxu0 %v6059
    %8636 = vmatprep.subr.bf16.mxu0 %v6064
    %8637 = vmatpush1.bf16.msra.mxu0 %v6063
    %8638 = vmatprep.subr.bf16.mxu0 %v6068
    %8639 = vmatpush1.bf16.msra.mxu0 %v6067
    %8640 = vmatprep.subr.bf16.mxu0 %v6072
    %8641 = vmatpush1.bf16.msra.mxu0 %v6071
    %8642 = vmatprep.subr.bf16.mxu0 %v6076
    %8643 = vmatpush1.bf16.msra.mxu0 %v6075
    %8644 = vmatprep.subr.bf16.mxu0 %v6080
    %8645 = vmatpush1.bf16.msra.mxu0 %v6079
    %8646 = vmatprep.subr.bf16.mxu0 %v6084
    %8647 = vmatpush1.bf16.msra.mxu0 %v6083
    %8648 = vmatprep.subr.bf16.mxu0 %v6088
    %8649 = vmatpush1.bf16.msra.mxu0 %v6087
    %8650 = vmatprep.subr.bf16.mxu0 %v6092
    %8651 = vmatpush1.bf16.msra.mxu0 %v6091
    %8652 = vmatprep.subr.bf16.mxu0 %v6096
    %8653 = vmatpush1.bf16.msra.mxu0 %v6095
    %8654 = vmatprep.subr.bf16.mxu0 %v6100
    %8655 = vmatpush1.bf16.msra.mxu0 %v6099
    %8656 = vmatprep.subr.bf16.mxu0 %v6104
    %8657 = vmatpush1.bf16.msra.mxu0 %v6103
    %8658 = vmatprep.subr.bf16.mxu0 %v6108
    %8659 = vmatpush1.bf16.msra.mxu0 %v6107
    %8660 = vmatprep.mubr.bf16.mxu0 %v2711
    %8661 = vmatmul.mubr.bf16.gmra.mrb[0].mxu0 %v2710
    %v8662 = vpop.f32.mrb[0].mxu0
    %v8663 = vadd.f32 %v8622, %v8662
    %v8664 = vpop.f32.mrb[0].mxu0
    %v8665 = vadd.f32 %v8624, %v8664
    %v8666 = vpop.f32.mrb[0].mxu0
    %v8667 = vpop.f32.mrb[0].mxu0
    %8668 = vdwg.mxu0
    %8669 = vmatprep.subr.bf16.mxu0 %v6112
    %8670 = vmatpush1.bf16.msra.mxu0 %v6111
    %8671 = vmatprep.subr.bf16.mxu0 %v6116
    %8672 = vmatpush1.bf16.msra.mxu0 %v6115
    %8673 = vmatprep.subr.bf16.mxu0 %v6120
    %8674 = vmatpush1.bf16.msra.mxu0 %v6119
    %8675 = vmatprep.subr.bf16.mxu0 %v6124
    %8676 = vmatpush1.bf16.msra.mxu0 %v6123
    %8677 = vmatprep.subr.bf16.mxu0 %v6128
    %8678 = vmatpush1.bf16.msra.mxu0 %v6127
    %8679 = vmatprep.subr.bf16.mxu0 %v6132
    %8680 = vmatpush1.bf16.msra.mxu0 %v6131
    %8681 = vmatprep.subr.bf16.mxu0 %v6136
    %8682 = vmatpush1.bf16.msra.mxu0 %v6135
    %8683 = vmatprep.subr.bf16.mxu0 %v6140
    %8684 = vmatpush1.bf16.msra.mxu0 %v6139
    %8685 = vmatprep.subr.bf16.mxu0 %v6144
    %8686 = vmatpush1.bf16.msra.mxu0 %v6143
    %8687 = vmatprep.subr.bf16.mxu0 %v6148
    %8688 = vmatpush1.bf16.msra.mxu0 %v6147
    %8689 = vmatprep.subr.bf16.mxu0 %v6152
    %8690 = vmatpush1.bf16.msra.mxu0 %v6151
    %8691 = vmatprep.subr.bf16.mxu0 %v6156
    %8692 = vmatpush1.bf16.msra.mxu0 %v6155
    %8693 = vmatprep.subr.bf16.mxu0 %v6160
    %8694 = vmatpush1.bf16.msra.mxu0 %v6159
    %8695 = vmatprep.subr.bf16.mxu0 %v6164
    %8696 = vmatpush1.bf16.msra.mxu0 %v6163
    %8697 = vmatprep.subr.bf16.mxu0 %v6168
    %8698 = vmatpush1.bf16.msra.mxu0 %v6167
    %8699 = vmatprep.subr.bf16.mxu0 %v6172
    %8700 = vmatpush1.bf16.msra.mxu0 %v6171
    %8701 = vmatprep.mubr.bf16.mxu0 %v2713
    %8702 = vmatmul.mubr.bf16.gmra.mrb[0].mxu0 %v2712
    %v8703 = vpop.f32.mrb[0].mxu0
    %v8704 = vadd.f32 %v8663, %v8703
    %v8705 = vpop.f32.mrb[0].mxu0
    %v8706 = vadd.f32 %v8665, %v8705
    %v8707 = vpop.f32.mrb[0].mxu0
    %v8708 = vpop.f32.mrb[0].mxu0
    %8709 = vdwg.mxu0
    %8710 = vmatprep.subr.bf16.mxu0 %v6176
    %8711 = vmatpush1.bf16.msra.mxu0 %v6175
    %8712 = vmatprep.subr.bf16.mxu0 %v6180
    %8713 = vmatpush1.bf16.msra.mxu0 %v6179
    %8714 = vmatprep.subr.bf16.mxu0 %v6184
    %8715 = vmatpush1.bf16.msra.mxu0 %v6183
    %8716 = vmatprep.subr.bf16.mxu0 %v6188
    %8717 = vmatpush1.bf16.msra.mxu0 %v6187
    %8718 = vmatprep.subr.bf16.mxu0 %v6192
    %8719 = vmatpush1.bf16.msra.mxu0 %v6191
    %8720 = vmatprep.subr.bf16.mxu0 %v6196
    %8721 = vmatpush1.bf16.msra.mxu0 %v6195
    %8722 = vmatprep.subr.bf16.mxu0 %v6200
    %8723 = vmatpush1.bf16.msra.mxu0 %v6199
    %8724 = vmatprep.subr.bf16.mxu0 %v6204
    %8725 = vmatpush1.bf16.msra.mxu0 %v6203
    %8726 = vmatprep.subr.bf16.mxu0 %v6208
    %8727 = vmatpush1.bf16.msra.mxu0 %v6207
    %8728 = vmatprep.subr.bf16.mxu0 %v6212
    %8729 = vmatpush1.bf16.msra.mxu0 %v6211
    %8730 = vmatprep.subr.bf16.mxu0 %v6216
    %8731 = vmatpush1.bf16.msra.mxu0 %v6215
    %8732 = vmatprep.subr.bf16.mxu0 %v6220
    %8733 = vmatpush1.bf16.msra.mxu0 %v6219
    %8734 = vmatprep.subr.bf16.mxu0 %v6224
    %8735 = vmatpush1.bf16.msra.mxu0 %v6223
    %8736 = vmatprep.subr.bf16.mxu0 %v6228
    %8737 = vmatpush1.bf16.msra.mxu0 %v6227
    %8738 = vmatprep.subr.bf16.mxu0 %v6232
    %8739 = vmatpush1.bf16.msra.mxu0 %v6231
    %8740 = vmatprep.subr.bf16.mxu0 %v6236
    %8741 = vmatpush1.bf16.msra.mxu0 %v6235
    %8742 = vmatprep.mubr.bf16.mxu0 %v2715
    %8743 = vmatmul.mubr.bf16.gmra.mrb[0].mxu0 %v2714
    %v8744 = vpop.f32.mrb[0].mxu0
    %v8745 = vadd.f32 %v8704, %v8744
    %v8746 = vpop.f32.mrb[0].mxu0
    %v8747 = vadd.f32 %v8706, %v8746
    %v8748 = vpop.f32.mrb[0].mxu0
    %v8749 = vpop.f32.mrb[0].mxu0
    %8750 = vdwg.mxu0
    %8751 = vmatprep.subr.bf16.mxu0 %v6240
    %8752 = vmatpush1.bf16.msra.mxu0 %v6239
    %8753 = vmatprep.subr.bf16.mxu0 %v6244
    %8754 = vmatpush1.bf16.msra.mxu0 %v6243
    %8755 = vmatprep.subr.bf16.mxu0 %v6248
    %8756 = vmatpush1.bf16.msra.mxu0 %v6247
    %8757 = vmatprep.subr.bf16.mxu0 %v6252
    %8758 = vmatpush1.bf16.msra.mxu0 %v6251
    %8759 = vmatprep.subr.bf16.mxu0 %v6256
    %8760 = vmatpush1.bf16.msra.mxu0 %v6255
    %8761 = vmatprep.subr.bf16.mxu0 %v6260
    %8762 = vmatpush1.bf16.msra.mxu0 %v6259
    %8763 = vmatprep.subr.bf16.mxu0 %v6264
    %8764 = vmatpush1.bf16.msra.mxu0 %v6263
    %8765 = vmatprep.subr.bf16.mxu0 %v6268
    %8766 = vmatpush1.bf16.msra.mxu0 %v6267
    %8767 = vmatprep.subr.bf16.mxu0 %v6272
    %8768 = vmatpush1.bf16.msra.mxu0 %v6271
    %8769 = vmatprep.subr.bf16.mxu0 %v6276
    %8770 = vmatpush1.bf16.msra.mxu0 %v6275
    %8771 = vmatprep.subr.bf16.mxu0 %v6280
    %8772 = vmatpush1.bf16.msra.mxu0 %v6279
    %8773 = vmatprep.subr.bf16.mxu0 %v6284
    %8774 = vmatpush1.bf16.msra.mxu0 %v6283
    %8775 = vmatprep.subr.bf16.mxu0 %v6288
    %8776 = vmatpush1.bf16.msra.mxu0 %v6287
    %8777 = vmatprep.subr.bf16.mxu0 %v6292
    %8778 = vmatpush1.bf16.msra.mxu0 %v6291
    %8779 = vmatprep.subr.bf16.mxu0 %v6296
    %8780 = vmatpush1.bf16.msra.mxu0 %v6295
    %8781 = vmatprep.subr.bf16.mxu0 %v6300
    %8782 = vmatpush1.bf16.msra.mxu0 %v6299
    %8783 = vmatprep.mubr.bf16.mxu0 %v2717
    %8784 = vmatmul.mubr.bf16.gmra.mrb[0].mxu0 %v2716
    %v8785 = vpop.f32.mrb[0].mxu0
    %v8786 = vadd.f32 %v8745, %v8785
    %v8787 = vpop.f32.mrb[0].mxu0
    %v8788 = vadd.f32 %v8747, %v8787
    %v8789 = vpop.f32.mrb[0].mxu0
    %v8790 = vpop.f32.mrb[0].mxu0
    %8791 = vdwg.mxu0
    %8792 = vmatprep.subr.bf16.mxu0 %v6304
    %8793 = vmatpush1.bf16.msra.mxu0 %v6303
    %8794 = vmatprep.subr.bf16.mxu0 %v6308
    %8795 = vmatpush1.bf16.msra.mxu0 %v6307
    %8796 = vmatprep.subr.bf16.mxu0 %v6312
    %8797 = vmatpush1.bf16.msra.mxu0 %v6311
    %8798 = vmatprep.subr.bf16.mxu0 %v6316
    %8799 = vmatpush1.bf16.msra.mxu0 %v6315
    %8800 = vmatprep.subr.bf16.mxu0 %v6320
    %8801 = vmatpush1.bf16.msra.mxu0 %v6319
    %8802 = vmatprep.subr.bf16.mxu0 %v6324
    %8803 = vmatpush1.bf16.msra.mxu0 %v6323
    %8804 = vmatprep.subr.bf16.mxu0 %v6328
    %8805 = vmatpush1.bf16.msra.mxu0 %v6327
    %8806 = vmatprep.subr.bf16.mxu0 %v6332
    %8807 = vmatpush1.bf16.msra.mxu0 %v6331
    %8808 = vmatprep.subr.bf16.mxu0 %v6336
    %8809 = vmatpush1.bf16.msra.mxu0 %v6335
    %8810 = vmatprep.subr.bf16.mxu0 %v6340
    %8811 = vmatpush1.bf16.msra.mxu0 %v6339
    %8812 = vmatprep.subr.bf16.mxu0 %v6344
    %8813 = vmatpush1.bf16.msra.mxu0 %v6343
    %8814 = vmatprep.subr.bf16.mxu0 %v6348
    %8815 = vmatpush1.bf16.msra.mxu0 %v6347
    %8816 = vmatprep.subr.bf16.mxu0 %v6352
    %8817 = vmatpush1.bf16.msra.mxu0 %v6351
    %8818 = vmatprep.subr.bf16.mxu0 %v6356
    %8819 = vmatpush1.bf16.msra.mxu0 %v6355
    %8820 = vmatprep.subr.bf16.mxu0 %v6360
    %8821 = vmatpush1.bf16.msra.mxu0 %v6359
    %8822 = vmatprep.subr.bf16.mxu0 %v6364
    %8823 = vmatpush1.bf16.msra.mxu0 %v6363
    %8824 = vmatprep.mubr.bf16.mxu0 %v2719
    %8825 = vmatmul.mubr.bf16.gmra.mrb[0].mxu0 %v2718
    %v8826 = vpop.f32.mrb[0].mxu0
    %v8827 = vadd.f32 %v8786, %v8826
    %v8828 = vpop.f32.mrb[0].mxu0
    %v8829 = vadd.f32 %v8788, %v8828
    %v8830 = vpop.f32.mrb[0].mxu0
    %v8831 = vpop.f32.mrb[0].mxu0
    %8832 = vdwg.mxu0
    %8833 = vmatprep.subr.bf16.mxu0 %v6368
    %8834 = vmatpush1.bf16.msra.mxu0 %v6367
    %8835 = vmatprep.subr.bf16.mxu0 %v6372
    %8836 = vmatpush1.bf16.msra.mxu0 %v6371
    %8837 = vmatprep.subr.bf16.mxu0 %v6376
    %8838 = vmatpush1.bf16.msra.mxu0 %v6375
    %8839 = vmatprep.subr.bf16.mxu0 %v6380
    %8840 = vmatpush1.bf16.msra.mxu0 %v6379
    %8841 = vmatprep.subr.bf16.mxu0 %v6384
    %8842 = vmatpush1.bf16.msra.mxu0 %v6383
    %8843 = vmatprep.subr.bf16.mxu0 %v6388
    %8844 = vmatpush1.bf16.msra.mxu0 %v6387
    %8845 = vmatprep.subr.bf16.mxu0 %v6392
    %8846 = vmatpush1.bf16.msra.mxu0 %v6391
    %8847 = vmatprep.subr.bf16.mxu0 %v6396
    %8848 = vmatpush1.bf16.msra.mxu0 %v6395
    %8849 = vmatprep.subr.bf16.mxu0 %v6400
    %8850 = vmatpush1.bf16.msra.mxu0 %v6399
    %8851 = vmatprep.subr.bf16.mxu0 %v6404
    %8852 = vmatpush1.bf16.msra.mxu0 %v6403
    %8853 = vmatprep.subr.bf16.mxu0 %v6408
    %8854 = vmatpush1.bf16.msra.mxu0 %v6407
    %8855 = vmatprep.subr.bf16.mxu0 %v6412
    %8856 = vmatpush1.bf16.msra.mxu0 %v6411
    %8857 = vmatprep.subr.bf16.mxu0 %v6416
    %8858 = vmatpush1.bf16.msra.mxu0 %v6415
    %8859 = vmatprep.subr.bf16.mxu0 %v6420
    %8860 = vmatpush1.bf16.msra.mxu0 %v6419
    %8861 = vmatprep.subr.bf16.mxu0 %v6424
    %8862 = vmatpush1.bf16.msra.mxu0 %v6423
    %8863 = vmatprep.subr.bf16.mxu0 %v6428
    %8864 = vmatpush1.bf16.msra.mxu0 %v6427
    %8865 = vmatprep.mubr.bf16.mxu0 %v2721
    %8866 = vmatmul.mubr.bf16.gmra.mrb[0].mxu0 %v2720
    %v8867 = vpop.f32.mrb[0].mxu0
    %v8868 = vadd.f32 %v8827, %v8867
    %v8869 = vpop.f32.mrb[0].mxu0
    %v8870 = vadd.f32 %v8829, %v8869
    %v8871 = vpop.f32.mrb[0].mxu0
    %v8872 = vpop.f32.mrb[0].mxu0
    %8873 = vdwg.mxu0
    %8874 = vmatprep.subr.bf16.mxu0 %v6432
    %8875 = vmatpush1.bf16.msra.mxu0 %v6431
    %8876 = vmatprep.subr.bf16.mxu0 %v6436
    %8877 = vmatpush1.bf16.msra.mxu0 %v6435
    %8878 = vmatprep.subr.bf16.mxu0 %v6440
    %8879 = vmatpush1.bf16.msra.mxu0 %v6439
    %8880 = vmatprep.subr.bf16.mxu0 %v6444
    %8881 = vmatpush1.bf16.msra.mxu0 %v6443
    %8882 = vmatprep.subr.bf16.mxu0 %v6448
    %8883 = vmatpush1.bf16.msra.mxu0 %v6447
    %8884 = vmatprep.subr.bf16.mxu0 %v6452
    %8885 = vmatpush1.bf16.msra.mxu0 %v6451
    %8886 = vmatprep.subr.bf16.mxu0 %v6456
    %8887 = vmatpush1.bf16.msra.mxu0 %v6455
    %8888 = vmatprep.subr.bf16.mxu0 %v6460
    %8889 = vmatpush1.bf16.msra.mxu0 %v6459
    %8890 = vmatprep.subr.bf16.mxu0 %v6464
    %8891 = vmatpush1.bf16.msra.mxu0 %v6463
    %8892 = vmatprep.subr.bf16.mxu0 %v6468
    %8893 = vmatpush1.bf16.msra.mxu0 %v6467
    %8894 = vmatprep.subr.bf16.mxu0 %v6472
    %8895 = vmatpush1.bf16.msra.mxu0 %v6471
    %8896 = vmatprep.subr.bf16.mxu0 %v6476
    %8897 = vmatpush1.bf16.msra.mxu0 %v6475
    %8898 = vmatprep.subr.bf16.mxu0 %v6480
    %8899 = vmatpush1.bf16.msra.mxu0 %v6479
    %8900 = vmatprep.subr.bf16.mxu0 %v6484
    %8901 = vmatpush1.bf16.msra.mxu0 %v6483
    %8902 = vmatprep.subr.bf16.mxu0 %v6488
    %8903 = vmatpush1.bf16.msra.mxu0 %v6487
    %8904 = vmatprep.subr.bf16.mxu0 %v6492
    %8905 = vmatpush1.bf16.msra.mxu0 %v6491
    %8906 = vmatprep.mubr.bf16.mxu0 %v2723
    %8907 = vmatmul.mubr.bf16.gmra.mrb[0].mxu0 %v2722
    %v8908 = vpop.f32.mrb[0].mxu0
    %v8909 = vadd.f32 %v8868, %v8908
    %v8910 = vpop.f32.mrb[0].mxu0
    %v8911 = vadd.f32 %v8870, %v8910
    %v8912 = vpop.f32.mrb[0].mxu0
    %v8913 = vpop.f32.mrb[0].mxu0
    %8914 = vdwg.mxu0
    %8915 = vmatprep.subr.bf16.mxu0 %v6496
    %8916 = vmatpush1.bf16.msra.mxu0 %v6495
    %8917 = vmatprep.subr.bf16.mxu0 %v6500
    %8918 = vmatpush1.bf16.msra.mxu0 %v6499
    %8919 = vmatprep.subr.bf16.mxu0 %v6504
    %8920 = vmatpush1.bf16.msra.mxu0 %v6503
    %8921 = vmatprep.subr.bf16.mxu0 %v6508
    %8922 = vmatpush1.bf16.msra.mxu0 %v6507
    %8923 = vmatprep.subr.bf16.mxu0 %v6512
    %8924 = vmatpush1.bf16.msra.mxu0 %v6511
    %8925 = vmatprep.subr.bf16.mxu0 %v6516
    %8926 = vmatpush1.bf16.msra.mxu0 %v6515
    %8927 = vmatprep.subr.bf16.mxu0 %v6520
    %8928 = vmatpush1.bf16.msra.mxu0 %v6519
    %8929 = vmatprep.subr.bf16.mxu0 %v6524
    %8930 = vmatpush1.bf16.msra.mxu0 %v6523
    %8931 = vmatprep.subr.bf16.mxu0 %v6528
    %8932 = vmatpush1.bf16.msra.mxu0 %v6527
    %8933 = vmatprep.subr.bf16.mxu0 %v6532
    %8934 = vmatpush1.bf16.msra.mxu0 %v6531
    %8935 = vmatprep.subr.bf16.mxu0 %v6536
    %8936 = vmatpush1.bf16.msra.mxu0 %v6535
    %8937 = vmatprep.subr.bf16.mxu0 %v6540
    %8938 = vmatpush1.bf16.msra.mxu0 %v6539
    %8939 = vmatprep.subr.bf16.mxu0 %v6544
    %8940 = vmatpush1.bf16.msra.mxu0 %v6543
    %8941 = vmatprep.subr.bf16.mxu0 %v6548
    %8942 = vmatpush1.bf16.msra.mxu0 %v6547
    %8943 = vmatprep.subr.bf16.mxu0 %v6552
    %8944 = vmatpush1.bf16.msra.mxu0 %v6551
    %8945 = vmatprep.subr.bf16.mxu0 %v6556
    %8946 = vmatpush1.bf16.msra.mxu0 %v6555
    %8947 = vmatprep.mubr.bf16.mxu0 %v2725
    %8948 = vmatmul.mubr.bf16.gmra.mrb[0].mxu0 %v2724
    %v8949 = vpop.f32.mrb[0].mxu0
    %v8950 = vadd.f32 %v8909, %v8949
    %v8951 = vpop.f32.mrb[0].mxu0
    %v8952 = vadd.f32 %v8911, %v8951
    %v8953 = vpop.f32.mrb[0].mxu0
    %v8954 = vpop.f32.mrb[0].mxu0
    %8955 = vdwg.mxu0
    %8956 = vmatprep.subr.bf16.mxu0 %v6560
    %8957 = vmatpush1.bf16.msra.mxu0 %v6559
    %8958 = vmatprep.subr.bf16.mxu0 %v6564
    %8959 = vmatpush1.bf16.msra.mxu0 %v6563
    %8960 = vmatprep.subr.bf16.mxu0 %v6568
    %8961 = vmatpush1.bf16.msra.mxu0 %v6567
    %8962 = vmatprep.subr.bf16.mxu0 %v6572
    %8963 = vmatpush1.bf16.msra.mxu0 %v6571
    %8964 = vmatprep.subr.bf16.mxu0 %v6576
    %8965 = vmatpush1.bf16.msra.mxu0 %v6575
    %8966 = vmatprep.subr.bf16.mxu0 %v6580
    %8967 = vmatpush1.bf16.msra.mxu0 %v6579
    %8968 = vmatprep.subr.bf16.mxu0 %v6584
    %8969 = vmatpush1.bf16.msra.mxu0 %v6583
    %8970 = vmatprep.subr.bf16.mxu0 %v6588
    %8971 = vmatpush1.bf16.msra.mxu0 %v6587
    %8972 = vmatprep.subr.bf16.mxu0 %v6592
    %8973 = vmatpush1.bf16.msra.mxu0 %v6591
    %8974 = vmatprep.subr.bf16.mxu0 %v6596
    %8975 = vmatpush1.bf16.msra.mxu0 %v6595
    %8976 = vmatprep.subr.bf16.mxu0 %v6600
    %8977 = vmatpush1.bf16.msra.mxu0 %v6599
    %8978 = vmatprep.subr.bf16.mxu0 %v6604
    %8979 = vmatpush1.bf16.msra.mxu0 %v6603
    %8980 = vmatprep.subr.bf16.mxu0 %v6608
    %8981 = vmatpush1.bf16.msra.mxu0 %v6607
    %8982 = vmatprep.subr.bf16.mxu0 %v6612
    %8983 = vmatpush1.bf16.msra.mxu0 %v6611
    %8984 = vmatprep.subr.bf16.mxu0 %v6616
    %8985 = vmatpush1.bf16.msra.mxu0 %v6615
    %8986 = vmatprep.subr.bf16.mxu0 %v6620
    %8987 = vmatpush1.bf16.msra.mxu0 %v6619
    %8988 = vmatprep.mubr.bf16.mxu0 %v2727
    %8989 = vmatmul.mubr.bf16.gmra.mrb[0].mxu0 %v2726
    %v8990 = vpop.f32.mrb[0].mxu0
    %v8991 = vadd.f32 %v8950, %v8990
    %v8992 = vpop.f32.mrb[0].mxu0
    %v8993 = vadd.f32 %v8952, %v8992
    %v8994 = vpop.f32.mrb[0].mxu0
    %v8995 = vpop.f32.mrb[0].mxu0
    %8996 = vdwg.mxu0
    %8997 = vmatprep.subr.bf16.mxu0 %v6624
    %8998 = vmatpush1.bf16.msra.mxu0 %v6623
    %8999 = vmatprep.subr.bf16.mxu0 %v6628
    %9000 = vmatpush1.bf16.msra.mxu0 %v6627
    %9001 = vmatprep.subr.bf16.mxu0 %v6632
    %9002 = vmatpush1.bf16.msra.mxu0 %v6631
    %9003 = vmatprep.subr.bf16.mxu0 %v6636
    %9004 = vmatpush1.bf16.msra.mxu0 %v6635
    %9005 = vmatprep.subr.bf16.mxu0 %v6640
    %9006 = vmatpush1.bf16.msra.mxu0 %v6639
    %9007 = vmatprep.subr.bf16.mxu0 %v6644
    %9008 = vmatpush1.bf16.msra.mxu0 %v6643
    %9009 = vmatprep.subr.bf16.mxu0 %v6648
    %9010 = vmatpush1.bf16.msra.mxu0 %v6647
    %9011 = vmatprep.subr.bf16.mxu0 %v6652
    %9012 = vmatpush1.bf16.msra.mxu0 %v6651
    %9013 = vmatprep.subr.bf16.mxu0 %v6656
    %9014 = vmatpush1.bf16.msra.mxu0 %v6655
    %9015 = vmatprep.subr.bf16.mxu0 %v6660
    %9016 = vmatpush1.bf16.msra.mxu0 %v6659
    %9017 = vmatprep.subr.bf16.mxu0 %v6664
    %9018 = vmatpush1.bf16.msra.mxu0 %v6663
    %9019 = vmatprep.subr.bf16.mxu0 %v6668
    %9020 = vmatpush1.bf16.msra.mxu0 %v6667
    %9021 = vmatprep.subr.bf16.mxu0 %v6672
    %9022 = vmatpush1.bf16.msra.mxu0 %v6671
    %9023 = vmatprep.subr.bf16.mxu0 %v6676
    %9024 = vmatpush1.bf16.msra.mxu0 %v6675
    %9025 = vmatprep.subr.bf16.mxu0 %v6680
    %9026 = vmatpush1.bf16.msra.mxu0 %v6679
    %9027 = vmatprep.subr.bf16.mxu0 %v6684
    %9028 = vmatpush1.bf16.msra.mxu0 %v6683
    %9029 = vmatprep.mubr.bf16.mxu0 %v2729
    %9030 = vmatmul.mubr.bf16.gmra.mrb[0].mxu0 %v2728
    %v9031 = vpop.f32.mrb[0].mxu0
    %v9032 = vadd.f32 %v8991, %v9031
    %v9033 = vpop.f32.mrb[0].mxu0
    %v9034 = vadd.f32 %v8993, %v9033
    %v9035 = vpop.f32.mrb[0].mxu0
    %v9036 = vpop.f32.mrb[0].mxu0
    %9037 = vdwg.mxu0
    %9038 = vmatprep.subr.bf16.mxu0 %v6688
    %9039 = vmatpush1.bf16.msra.mxu0 %v6687
    %9040 = vmatprep.subr.bf16.mxu0 %v6692
    %9041 = vmatpush1.bf16.msra.mxu0 %v6691
    %9042 = vmatprep.subr.bf16.mxu0 %v6696
    %9043 = vmatpush1.bf16.msra.mxu0 %v6695
    %9044 = vmatprep.subr.bf16.mxu0 %v6700
    %9045 = vmatpush1.bf16.msra.mxu0 %v6699
    %9046 = vmatprep.subr.bf16.mxu0 %v6704
    %9047 = vmatpush1.bf16.msra.mxu0 %v6703
    %9048 = vmatprep.subr.bf16.mxu0 %v6708
    %9049 = vmatpush1.bf16.msra.mxu0 %v6707
    %9050 = vmatprep.subr.bf16.mxu0 %v6712
    %9051 = vmatpush1.bf16.msra.mxu0 %v6711
    %9052 = vmatprep.subr.bf16.mxu0 %v6716
    %9053 = vmatpush1.bf16.msra.mxu0 %v6715
    %9054 = vmatprep.subr.bf16.mxu0 %v6720
    %9055 = vmatpush1.bf16.msra.mxu0 %v6719
    %9056 = vmatprep.subr.bf16.mxu0 %v6724
    %9057 = vmatpush1.bf16.msra.mxu0 %v6723
    %9058 = vmatprep.subr.bf16.mxu0 %v6728
    %9059 = vmatpush1.bf16.msra.mxu0 %v6727
    %9060 = vmatprep.subr.bf16.mxu0 %v6732
    %9061 = vmatpush1.bf16.msra.mxu0 %v6731
    %9062 = vmatprep.subr.bf16.mxu0 %v6736
    %9063 = vmatpush1.bf16.msra.mxu0 %v6735
    %9064 = vmatprep.subr.bf16.mxu0 %v6740
    %9065 = vmatpush1.bf16.msra.mxu0 %v6739
    %9066 = vmatprep.subr.bf16.mxu0 %v6744
    %9067 = vmatpush1.bf16.msra.mxu0 %v6743
    %9068 = vmatprep.subr.bf16.mxu0 %v6748
    %9069 = vmatpush1.bf16.msra.mxu0 %v6747
    %9070 = vmatprep.mubr.bf16.mxu0 %v2731
    %9071 = vmatmul.mubr.bf16.gmra.mrb[0].mxu0 %v2730
    %v9072 = vpop.f32.mrb[0].mxu0
    %v9073 = vadd.f32 %v9032, %v9072
    %v9074 = vpop.f32.mrb[0].mxu0
    %v9075 = vadd.f32 %v9034, %v9074
    %v9076 = vpop.f32.mrb[0].mxu0
    %v9077 = vpop.f32.mrb[0].mxu0
    %9078 = vdwg.mxu0
    %9079 = vmatprep.subr.bf16.mxu0 %v6752
    %9080 = vmatpush1.bf16.msra.mxu0 %v6751
    %9081 = vmatprep.subr.bf16.mxu0 %v6756
    %9082 = vmatpush1.bf16.msra.mxu0 %v6755
    %9083 = vmatprep.subr.bf16.mxu0 %v6760
    %9084 = vmatpush1.bf16.msra.mxu0 %v6759
    %9085 = vmatprep.subr.bf16.mxu0 %v6764
    %9086 = vmatpush1.bf16.msra.mxu0 %v6763
    %9087 = vmatprep.subr.bf16.mxu0 %v6768
    %9088 = vmatpush1.bf16.msra.mxu0 %v6767
    %9089 = vmatprep.subr.bf16.mxu0 %v6772
    %9090 = vmatpush1.bf16.msra.mxu0 %v6771
    %9091 = vmatprep.subr.bf16.mxu0 %v6776
    %9092 = vmatpush1.bf16.msra.mxu0 %v6775
    %9093 = vmatprep.subr.bf16.mxu0 %v6780
    %9094 = vmatpush1.bf16.msra.mxu0 %v6779
    %9095 = vmatprep.subr.bf16.mxu0 %v6784
    %9096 = vmatpush1.bf16.msra.mxu0 %v6783
    %9097 = vmatprep.subr.bf16.mxu0 %v6788
    %9098 = vmatpush1.bf16.msra.mxu0 %v6787
    %9099 = vmatprep.subr.bf16.mxu0 %v6792
    %9100 = vmatpush1.bf16.msra.mxu0 %v6791
    %9101 = vmatprep.subr.bf16.mxu0 %v6796
    %9102 = vmatpush1.bf16.msra.mxu0 %v6795
    %9103 = vmatprep.subr.bf16.mxu0 0
    %9104 = vmatpush1.bf16.msra.mxu0 0
    %9105 = vmatprep.subr.bf16.mxu0 0
    %9106 = vmatpush1.bf16.msra.mxu0 0
    %9107 = vmatprep.subr.bf16.mxu0 0
    %9108 = vmatpush1.bf16.msra.mxu0 0
    %9109 = vmatprep.subr.bf16.mxu0 0
    %9110 = vmatpush1.bf16.msra.mxu0 0
    %9111 = vmatprep.mubr.bf16.mxu0 %v7806
    %9112 = vmatmul.mubr.bf16.gmra.mrb[0].mxu0 %v2732
    %v9113 = vpop.f32.mrb[0].mxu0
    %v9114 = vadd.f32 %v9073, %v9113
    %v9115 = vpop.f32.mrb[0].mxu0
    %v9116 = vadd.f32 %v9075, %v9115
    %v9117 = vpop.f32.mrb[0].mxu0
    %v9118 = vpop.f32.mrb[0].mxu0
    %9119 = vdwg.mxu0
    %v9120 = vpack.c.bf16 %v8458, %v8458
    %v9121 = vpack.c.bf16 %v8460, %v8460
    %v9122 = vpack.c.bf16 %v9114, %v9114
    %v9123 = vpack.c.bf16 %v9116, %v9116
    %v9124 = vld [vmem:[#allocation8] sm:$0xf]
    %v9125 = vld [vmem:[#allocation8 + $0x4] sm:$0xf]
    %v9126 = vld [vmem:[#allocation8 + $0x8] sm:$0xf]
    %v9127 = vld [vmem:[#allocation8 + $0xc] sm:$0xf]
    %v9128 = vld [vmem:[#allocation8 + $0x10] sm:$0xf]
    %v9129 = vld [vmem:[#allocation8 + $0x14] sm:$0xf]
    %v9130 = vld [vmem:[#allocation8 + $0x18] sm:$0xf]
    %v9131 = vld [vmem:[#allocation8 + $0x1c] sm:$0xf]
    %v9132 = vld [vmem:[#allocation8 + $0x20] sm:$0xf]
    %v9133 = vld [vmem:[#allocation8 + $0x24] sm:$0xf]
    %v9134 = vld [vmem:[#allocation8 + $0x28] sm:$0xf]
    %v9135 = vld [vmem:[#allocation8 + $0x2c] sm:$0xf]
    %v9136 = vld [vmem:[#allocation8 + $0x30] sm:$0xf]
    %v9137 = vld [vmem:[#allocation8 + $0x34] sm:$0xf]
    %v9138 = vld [vmem:[#allocation8 + $0x38] sm:$0xf]
    %v9139 = vld [vmem:[#allocation8 + $0x3c] sm:$0xf]
    %v9140 = vld [vmem:[#allocation8 + $0x40] sm:$0xf]
    %v9141 = vld [vmem:[#allocation8 + $0x44] sm:$0xf]
    %v9142 = vld [vmem:[#allocation8 + $0x48] sm:$0xf]
    %v9143 = vld [vmem:[#allocation8 + $0x4c] sm:$0xf]
    %v9144 = vld [vmem:[#allocation8 + $0x50] sm:$0xf]
    %v9145 = vld [vmem:[#allocation8 + $0x54] sm:$0xf]
    %v9146 = vld [vmem:[#allocation8 + $0x58] sm:$0xf]
    %v9147 = vld [vmem:[#allocation8 + $0x5c] sm:$0xf]
    %v9148 = vld [vmem:[#allocation8 + $0x60] sm:$0xf]
    %v9149 = vld [vmem:[#allocation8 + $0x64] sm:$0xf]
    %v9150 = vld [vmem:[#allocation8 + $0x68] sm:$0xf]
    %v9151 = vld [vmem:[#allocation8 + $0x6c] sm:$0xf]
    %v9152 = vld [vmem:[#allocation8 + $0x70] sm:$0xf]
    %v9153 = vld [vmem:[#allocation8 + $0x74] sm:$0xf]
    %v9154 = vld [vmem:[#allocation8 + $0x78] sm:$0xf]
    %v9155 = vld [vmem:[#allocation8 + $0x7c] sm:$0xf]
    %v9156 = vld [vmem:[#allocation8 + $0x80] sm:$0xf]
    %v9157 = vld [vmem:[#allocation8 + $0x84] sm:$0xf]
    %v9158 = vld [vmem:[#allocation8 + $0x88] sm:$0xf]
    %v9159 = vld [vmem:[#allocation8 + $0x8c] sm:$0xf]
    %v9160 = vld [vmem:[#allocation8 + $0x90] sm:$0xf]
    %v9161 = vld [vmem:[#allocation8 + $0x94] sm:$0xf]
    %v9162 = vld [vmem:[#allocation8 + $0x98] sm:$0xf]
    %v9163 = vld [vmem:[#allocation8 + $0x9c] sm:$0xf]
    %v9164 = vld [vmem:[#allocation8 + $0xa0] sm:$0xf]
    %v9165 = vld [vmem:[#allocation8 + $0xa4] sm:$0xf]
    %v9166 = vld [vmem:[#allocation8 + $0xa8] sm:$0xf]
    %v9167 = vld [vmem:[#allocation8 + $0xac] sm:$0xf]
    %v9168 = vld [vmem:[#allocation8 + $0xb0] sm:$0xf]
    %v9169 = vld [vmem:[#allocation8 + $0xb4] sm:$0xf]
    %v9170 = vld [vmem:[#allocation8 + $0xb8] sm:$0xf]
    %v9171 = vld [vmem:[#allocation8 + $0xbc] sm:$0xf]
    %v9172 = vld [vmem:[#allocation8 + $0xc0] sm:$0xf]
    %v9173 = vld [vmem:[#allocation8 + $0xc4] sm:$0xf]
    %v9174 = vld [vmem:[#allocation8 + $0xc8] sm:$0xf]
    %v9175 = vld [vmem:[#allocation8 + $0xcc] sm:$0xf]
    %v9176 = vld [vmem:[#allocation8 + $0xd0] sm:$0xf]
    %v9177 = vld [vmem:[#allocation8 + $0xd4] sm:$0xf]
    %v9178 = vld [vmem:[#allocation8 + $0xd8] sm:$0xf]
    %v9179 = vld [vmem:[#allocation8 + $0xdc] sm:$0xf]
    %v9180 = vld [vmem:[#allocation8 + $0xe0] sm:$0xf]
    %v9181 = vld [vmem:[#allocation8 + $0xe4] sm:$0xf]
    %v9182 = vld [vmem:[#allocation8 + $0xe8] sm:$0xf]
    %v9183 = vld [vmem:[#allocation8 + $0xec] sm:$0xf]
    %v9184 = vld [vmem:[#allocation8 + $0xf0] sm:$0xf]
    %v9185 = vld [vmem:[#allocation8 + $0xf4] sm:$0xf]
    %v9186 = vld [vmem:[#allocation8 + $0xf8] sm:$0xf]
    %v9187 = vld [vmem:[#allocation8 + $0xfc] sm:$0xf]
    %v9188 = vld [vmem:[#allocation10] sm:$0x1]
    %v9190 = vlaneseq
    %v9191 = vshrl.u32 %v9190, 7
    %v9192 = vsub.s32 0, %v9191
    %v9193 = vrot.slane %v9188, %v9192
    %v9259 = vunpack.c.l.b16 %v9124
    %v9260 = vunpack.c.l.b16 %v9125
    %v9261 = vunpack.c.l.b16 %v9126
    %v9262 = vunpack.c.l.b16 %v9127
    %v9263 = vunpack.c.l.b16 %v9128
    %v9264 = vunpack.c.l.b16 %v9129
    %v9265 = vunpack.c.l.b16 %v9130
    %v9266 = vunpack.c.l.b16 %v9131
    %v9267 = vunpack.c.l.b16 %v9132
    %v9268 = vunpack.c.l.b16 %v9133
    %v9269 = vunpack.c.l.b16 %v9134
    %v9270 = vunpack.c.l.b16 %v9135
    %v9271 = vunpack.c.l.b16 %v9136
    %v9272 = vunpack.c.l.b16 %v9137
    %v9273 = vunpack.c.l.b16 %v9138
    %v9274 = vunpack.c.l.b16 %v9139
    %v9275 = vunpack.c.l.b16 %v9140
    %v9276 = vunpack.c.l.b16 %v9141
    %v9277 = vunpack.c.l.b16 %v9142
    %v9278 = vunpack.c.l.b16 %v9143
    %v9279 = vunpack.c.l.b16 %v9144
    %v9280 = vunpack.c.l.b16 %v9145
    %v9281 = vunpack.c.l.b16 %v9146
    %v9282 = vunpack.c.l.b16 %v9147
    %v9283 = vunpack.c.l.b16 %v9148
    %v9284 = vunpack.c.l.b16 %v9149
    %v9285 = vunpack.c.l.b16 %v9150
    %v9286 = vunpack.c.l.b16 %v9151
    %v9287 = vunpack.c.l.b16 %v9152
    %v9288 = vunpack.c.l.b16 %v9153
    %v9289 = vunpack.c.l.b16 %v9154
    %v9290 = vunpack.c.l.b16 %v9155
    %v9291 = vunpack.c.l.b16 %v9156
    %v9292 = vunpack.c.l.b16 %v9157
    %v9293 = vunpack.c.l.b16 %v9158
    %v9294 = vunpack.c.l.b16 %v9159
    %v9295 = vunpack.c.l.b16 %v9160
    %v9296 = vunpack.c.l.b16 %v9161
    %v9297 = vunpack.c.l.b16 %v9162
    %v9298 = vunpack.c.l.b16 %v9163
    %v9299 = vunpack.c.l.b16 %v9164
    %v9300 = vunpack.c.l.b16 %v9165
    %v9301 = vunpack.c.l.b16 %v9166
    %v9302 = vunpack.c.l.b16 %v9167
    %v9303 = vunpack.c.l.b16 %v9168
    %v9304 = vunpack.c.l.b16 %v9169
    %v9305 = vunpack.c.l.b16 %v9170
    %v9306 = vunpack.c.l.b16 %v9171
    %v9307 = vunpack.c.l.b16 %v9172
    %v9308 = vunpack.c.l.b16 %v9173
    %v9309 = vunpack.c.l.b16 %v9174
    %v9310 = vunpack.c.l.b16 %v9175
    %v9311 = vunpack.c.l.b16 %v9176
    %v9312 = vunpack.c.l.b16 %v9177
    %v9313 = vunpack.c.l.b16 %v9178
    %v9314 = vunpack.c.l.b16 %v9179
    %v9315 = vunpack.c.l.b16 %v9180
    %v9316 = vunpack.c.l.b16 %v9181
    %v9317 = vunpack.c.l.b16 %v9182
    %v9318 = vunpack.c.l.b16 %v9183
    %v9319 = vunpack.c.l.b16 %v9184
    %v9320 = vunpack.c.l.b16 %v9185
    %v9321 = vunpack.c.l.b16 %v9186
    %v9322 = vunpack.c.l.b16 %v9187
    %v9323 = vpack.c.b16 %v9260, %v9259
    %v9324 = vpack.c.b16 %v9262, %v9261
    %v9325 = vpack.c.b16 %v9264, %v9263
    %v9326 = vpack.c.b16 %v9266, %v9265
    %v9327 = vpack.c.b16 %v9268, %v9267
    %v9328 = vpack.c.b16 %v9270, %v9269
    %v9329 = vpack.c.b16 %v9272, %v9271
    %v9330 = vpack.c.b16 %v9274, %v9273
    %v9331 = vpack.c.b16 %v9276, %v9275
    %v9332 = vpack.c.b16 %v9278, %v9277
    %v9333 = vpack.c.b16 %v9280, %v9279
    %v9334 = vpack.c.b16 %v9282, %v9281
    %v9335 = vpack.c.b16 %v9284, %v9283
    %v9336 = vpack.c.b16 %v9286, %v9285
    %v9337 = vpack.c.b16 %v9288, %v9287
    %v9338 = vpack.c.b16 %v9290, %v9289
    %v9339 = vpack.c.b16 %v9292, %v9291
    %v9340 = vpack.c.b16 %v9294, %v9293
    %v9341 = vpack.c.b16 %v9296, %v9295
    %v9342 = vpack.c.b16 %v9298, %v9297
    %v9343 = vpack.c.b16 %v9300, %v9299
    %v9344 = vpack.c.b16 %v9302, %v9301
    %v9345 = vpack.c.b16 %v9304, %v9303
    %v9346 = vpack.c.b16 %v9306, %v9305
    %v9347 = vpack.c.b16 %v9308, %v9307
    %v9348 = vpack.c.b16 %v9310, %v9309
    %v9349 = vpack.c.b16 %v9312, %v9311
    %v9350 = vpack.c.b16 %v9314, %v9313
    %v9351 = vpack.c.b16 %v9316, %v9315
    %v9352 = vpack.c.b16 %v9318, %v9317
    %v9353 = vpack.c.b16 %v9320, %v9319
    %v9354 = vpack.c.b16 %v9322, %v9321
    %9387 = vmatprep.subr.bf16.mxu0 0
    %9388 = vmatpush1.bf16.msra.mxu0 %v9323
    %9389 = vmatprep.subr.bf16.mxu0 0
    %9390 = vmatpush1.bf16.msra.mxu0 %v9324
    %9391 = vmatprep.subr.bf16.mxu0 0
    %9392 = vmatpush1.bf16.msra.mxu0 %v9325
    %9393 = vmatprep.subr.bf16.mxu0 0
    %9394 = vmatpush1.bf16.msra.mxu0 %v9326
    %9395 = vmatprep.subr.bf16.mxu0 0
    %9396 = vmatpush1.bf16.msra.mxu0 %v9327
    %9397 = vmatprep.subr.bf16.mxu0 0
    %9398 = vmatpush1.bf16.msra.mxu0 %v9328
    %9399 = vmatprep.subr.bf16.mxu0 0
    %9400 = vmatpush1.bf16.msra.mxu0 %v9329
    %9401 = vmatprep.subr.bf16.mxu0 0
    %9402 = vmatpush1.bf16.msra.mxu0 %v9330
    %9403 = vmatprep.subr.bf16.mxu0 0
    %9404 = vmatpush1.bf16.msra.mxu0 %v9331
    %9405 = vmatprep.subr.bf16.mxu0 0
    %9406 = vmatpush1.bf16.msra.mxu0 %v9332
    %9407 = vmatprep.subr.bf16.mxu0 0
    %9408 = vmatpush1.bf16.msra.mxu0 %v9333
    %9409 = vmatprep.subr.bf16.mxu0 0
    %9410 = vmatpush1.bf16.msra.mxu0 %v9334
    %9411 = vmatprep.subr.bf16.mxu0 0
    %9412 = vmatpush1.bf16.msra.mxu0 %v9335
    %9413 = vmatprep.subr.bf16.mxu0 0
    %9414 = vmatpush1.bf16.msra.mxu0 %v9336
    %9415 = vmatprep.subr.bf16.mxu0 0
    %9416 = vmatpush1.bf16.msra.mxu0 %v9337
    %9417 = vmatprep.subr.bf16.mxu0 0
    %9418 = vmatpush1.bf16.msra.mxu0 %v9338
    %9419 = vmatprep.mubr.bf16.mxu0 %v9121
    %9420 = vmatmul.mubr.bf16.gmra.mrb[0].mxu0 %v9120
    %v9421 = vpop.f32.mrb[0].mxu0
    %v9422 = vadd.f32 %v9193, %v9421
    %v9423 = vpop.f32.mrb[0].mxu0
    %v9424 = vpop.f32.mrb[0].mxu0
    %v9425 = vpop.f32.mrb[0].mxu0
    %9426 = vdwg.mxu0
    %9427 = vmatprep.subr.bf16.mxu0 0
    %9428 = vmatpush1.bf16.msra.mxu0 %v9339
    %9429 = vmatprep.subr.bf16.mxu0 0
    %9430 = vmatpush1.bf16.msra.mxu0 %v9340
    %9431 = vmatprep.subr.bf16.mxu0 0
    %9432 = vmatpush1.bf16.msra.mxu0 %v9341
    %9433 = vmatprep.subr.bf16.mxu0 0
    %9434 = vmatpush1.bf16.msra.mxu0 %v9342
    %9435 = vmatprep.subr.bf16.mxu0 0
    %9436 = vmatpush1.bf16.msra.mxu0 %v9343
    %9437 = vmatprep.subr.bf16.mxu0 0
    %9438 = vmatpush1.bf16.msra.mxu0 %v9344
    %9439 = vmatprep.subr.bf16.mxu0 0
    %9440 = vmatpush1.bf16.msra.mxu0 %v9345
    %9441 = vmatprep.subr.bf16.mxu0 0
    %9442 = vmatpush1.bf16.msra.mxu0 %v9346
    %9443 = vmatprep.subr.bf16.mxu0 0
    %9444 = vmatpush1.bf16.msra.mxu0 %v9347
    %9445 = vmatprep.subr.bf16.mxu0 0
    %9446 = vmatpush1.bf16.msra.mxu0 %v9348
    %9447 = vmatprep.subr.bf16.mxu0 0
    %9448 = vmatpush1.bf16.msra.mxu0 %v9349
    %9449 = vmatprep.subr.bf16.mxu0 0
    %9450 = vmatpush1.bf16.msra.mxu0 %v9350
    %9451 = vmatprep.subr.bf16.mxu0 0
    %9452 = vmatpush1.bf16.msra.mxu0 %v9351
    %9453 = vmatprep.subr.bf16.mxu0 0
    %9454 = vmatpush1.bf16.msra.mxu0 %v9352
    %9455 = vmatprep.subr.bf16.mxu0 0
    %9456 = vmatpush1.bf16.msra.mxu0 %v9353
    %9457 = vmatprep.subr.bf16.mxu0 0
    %9458 = vmatpush1.bf16.msra.mxu0 %v9354
    %9459 = vmatprep.mubr.bf16.mxu0 %v9123
    %9460 = vmatmul.mubr.bf16.gmra.mrb[0].mxu0 %v9122
    %v9461 = vpop.f32.mrb[0].mxu0
    %v9462 = vadd.f32 %v9422, %v9461
    %v9463 = vpop.f32.mrb[0].mxu0
    %v9464 = vpop.f32.mrb[0].mxu0
    %v9465 = vpop.f32.mrb[0].mxu0
    %9466 = vdwg.mxu0
    %9467 = vst [vmem:[#allocation11] sm:$0x3] %v9462
    // Predicated region
    $region42: #{tpu_custom_call.1} parent=1 // pred_check
      _
    $region43: #{tpu_custom_call.1} parent=1 // pred_check_branch
      %9469 = sbr.rel (0) target = $region45
    $region44: #{tpu_custom_call.1} parent=1 // pred_region
      %s9471 = ssub.s32 32, 32
      %9472 = vsyncadd [#allocation4], %s9471
      %s9474 = sshll.u32 [#allocation11], 4
      %s9475 = int_to_ptr.vmem [resolvable:$true] %s9474
      %9477 = dma.vmem_to_hbm [thread:$0]  %s9475, 32, %s5, [#allocation4]
    $region45: #{tpu_custom_call.1} parent=1 // pred_fallthru
      _
    // Predicated region
    $region46: #{tpu_custom_call.1} parent=1 // pred_check
      _
    $region47: #{tpu_custom_call.1} parent=1 // pred_check_branch
      %9479 = sbr.rel (0) target = $region49
    $region48: #{tpu_custom_call.1} parent=1 // pred_region
      %9480 = dma.done [#allocation4], 32
    $region49: #{tpu_custom_call.1} parent=1 // pred_fallthru
      _
    %9481 = vsyncpa [#allocation3], 1
    %9482 = vsyncpa [#allocation6], 1
    %9483 = vsyncpa [#allocation9], 1
    %9484 = vsyncpa [#allocation4], 1

</llo_original>
